<compile_context>
chip_gen: v7x
topology: tpu7x:2x2x1
jax: 0.10.0
libtpu: 0.0.40
codegen_flags: <defaults>
</compile_context>

<pallas_src>
import math

import jax
import jax.numpy as jnp
from jax import lax
from jax.experimental import pallas as pl
from jax.experimental.pallas import tpu as pltpu


def _make_freq_tables(token_dim, temperature):
    """Permuted inverse frequencies + phase offsets, shape [D, 1] each.

    Output column j of the torch module is
        j <  ceil(D/2):  sin(pos / T^(2*j/D))
        j >= ceil(D/2):  cos(pos / T^(2*k/D)),  k = j - ceil(D/2)
    The sin/cos choice is folded into a phase (cos(x) = sin(x + pi/2)) so the
    kernel needs exactly one EUP transcendental per element.
    """
    g = jnp.arange(token_dim, dtype=jnp.float32)
    g = 2.0 * jnp.floor(g / 2.0) / float(token_dim)
    grid_dim = jnp.float32(temperature) ** g                  # [D]
    idx_sin = jnp.arange(0, token_dim, 2)                     # even cols -> sin
    idx_cos = jnp.arange(1, token_dim, 2)                     # odd  cols -> cos
    perm = jnp.concatenate([idx_sin, idx_cos])
    inv_freq = (1.0 / grid_dim)[perm]                         # [D], permuted
    phase = jnp.concatenate([
        jnp.zeros(idx_sin.shape, jnp.float32),
        jnp.full(idx_cos.shape, math.pi / 2.0, jnp.float32),
    ])
    return inv_freq.reshape(token_dim, 1), phase.reshape(token_dim, 1)


def _pick_lane_tile(n, max_lanes=8192):
    """Largest lane tile <= max_lanes that divides n and is a multiple of 128.

    Falls back to the full extent (block == full dim is always legal).  The
    cap keeps the double-buffered output block a few MiB at most, which fits
    the scoped-VMEM default on v5e/v6e/v7x alike.
    """
    if n <= max_lanes:
        return n
    t = (max_lanes // 128) * 128
    while t >= 128:
        if n % t == 0:
            return t
        t -= 128
    return n


def position_encoding(x, dim, token_dim, temperature):
    """Pallas equivalent of PositionEncoding.forward(x, dim, token_dim)."""
    assert x.ndim == 5, "the object of position encoding requires 5-dim tensor!"
    assert len(dim) >= 1 and all(d in (2, 3, 4) for d in dim), \
        "only spatial axes (2, 3, 4) are encoded"

    D = int(token_dim)
    use_a, use_h, use_w = (2 in dim), (3 in dim), (4 in dim)
    A_out = x.shape[2] if use_a else 1
    H_out = x.shape[3] if use_h else 1
    W_out = x.shape[4] if use_w else 1
    N = A_out * H_out * W_out                  # flat spatial extent (lane axis)
    scale = 1.0 / float(len(dim))

    TN = _pick_lane_tile(N)
    grid = (N // TN,)

    inv_freq, phase = _make_freq_tables(D, temperature)

    hw_f = float(H_out * W_out)
    w_f = float(W_out)

    def kernel(inv_ref, phase_ref, out_ref):
        inv = inv_ref[...]                     # [D, 1] permuted inverse freqs
        ph = phase_ref[...]                    # [D, 1] 0 (sin) or pi/2 (cos)

        # Flat output index n = a*H*W + h*W + w for every lane of this tile.
        # (f32 index math is exact for n < 2^24, same regime as the torch ref.)
        n0 = (pl.program_id(0) * TN).astype(jnp.float32)
        n = n0 + lax.broadcasted_iota(jnp.int32, (D, TN), 1).astype(jnp.float32)

        a_pos = jnp.floor(n / hw_f)
        rem = n - a_pos * hw_f
        h_pos = jnp.floor(rem / w_f)
        w_pos = rem - h_pos * w_f

        def enc(pos):                          # one transcendental per element
            return jnp.sin(pos * inv + ph)

        encs = []
        if use_a:
            encs.append(enc(a_pos))
        if use_h:
            encs.append(enc(h_pos))
        if use_w:
            encs.append(enc(w_pos))
        total = encs[0]
        for e in encs[1:]:
            total = total + e

        out_ref[...] = total * scale           # lane-dense, unmasked store

    out = pl.pallas_call(
        kernel,
        out_shape=jax.ShapeDtypeStruct((D, N), jnp.float32),
        grid_spec=pltpu.PrefetchScalarGridSpec(
            num_scalar_prefetch=0,
            grid=grid,
            in_specs=[pl.BlockSpec((D, 1), lambda i: (0, 0)),
                      pl.BlockSpec((D, 1), lambda i: (0, 0))],
            out_specs=pl.BlockSpec((D, TN), lambda i: (0, i)),
        ),
        compiler_params=pltpu.CompilerParams(
            dimension_semantics=("parallel",)),
    )(inv_freq, phase)

    # (D, A*H*W) -> (1, D, A, H, W): contiguous reshape, no extra HBM pass.
    return out.reshape(1, D, A_out, H_out, W_out)


def position_encoding_ref(x, dim, token_dim, temperature):
    """Pure-JAX transliteration of the PyTorch forward, for verification."""
    g = jnp.arange(token_dim, dtype=jnp.float32)
    g = 2.0 * jnp.floor(g / 2.0) / float(token_dim)
    grid_dim = jnp.float32(temperature) ** g
    position = None
    for d in dim:
        pos_size = [1, 1, 1, 1, 1, token_dim]
        length = x.shape[d]
        pos_size[d] = length
        pos = jnp.arange(length, dtype=jnp.float32).reshape(-1, 1) / grid_dim
        pos = jnp.concatenate([jnp.sin(pos[:, 0::2]), jnp.cos(pos[:, 1::2])], axis=1)
        pos = pos.reshape(pos_size)
        position = pos if position is None else position + pos
    # 'b 1 a h w dim -> b dim a h w'
    position = jnp.transpose(position[:, 0], (0, 4, 1, 2, 3))
    return position / float(len(dim))


if __name__ == "__main__":
    key = jax.random.PRNGKey(0)
    # x: [batch, channels, angular, height, width] — only its shape along `dim`
    # matters (as in the torch module).
    x = jax.random.normal(key, (2, 8, 4, 16, 16), dtype=jnp.float32)
    token_dim = 32
    temperature = 10000.0

    # Full 3-axis encoding.
    dim = [2, 3, 4]
    out = position_encoding(x, dim, token_dim, temperature)
    out = jax.block_until_ready(out)
    assert out.shape == (1, token_dim, x.shape[2], x.shape[3], x.shape[4]), out.shape
    ref = position_encoding_ref(x, dim, token_dim, temperature)
    err = float(jnp.max(jnp.abs(out - ref)))
    assert jnp.allclose(out, ref, atol=5e-5, rtol=5e-5), err

    # Subset of axes (unused axes collapse to extent 1, as in torch).
    dim2 = [3, 4]
    out2 = jax.block_until_ready(position_encoding(x, dim2, token_dim, temperature))
    ref2 = position_encoding_ref(x, dim2, token_dim, temperature)
    assert out2.shape == (1, token_dim, 1, x.shape[3], x.shape[4]), out2.shape
    err2 = float(jnp.max(jnp.abs(out2 - ref2)))
    assert jnp.allclose(out2, ref2, atol=5e-5, rtol=5e-5), err2

    print("KERNEL_OK")
</pallas_src>

<mosaic_0001>
module attributes {stable_mosaic.version = 11 : i64} {
  func.func @kernel(%arg0: i32, %arg1: memref<32x1xf32, #tpu.memory_space<vmem>>, %arg2: memref<32x1xf32, #tpu.memory_space<vmem>>, %arg3: memref<32x1024xf32, #tpu.memory_space<vmem>>) attributes {dimension_semantics = [#tpu.dimension_semantics<parallel>], iteration_bounds = array<i64: 1>, scalar_prefetch = 0 : i64, scratch_operands = 0 : i64, tpu.core_type = #tpu.core_type<tc>, window_params = [{pipeline_mode = #tpu.pipeline_mode<synchronous>, transform_indices = @transform_0, window_bounds = array<i64: 32, 1>}, {pipeline_mode = #tpu.pipeline_mode<synchronous>, transform_indices = @transform_1, window_bounds = array<i64: 32, 1>}, {transform_indices = @transform_2, window_bounds = array<i64: 32, 1024>}]} {
    %c0 = arith.constant 0 : index
    %c0_0 = arith.constant 0 : index
    %0 = vector.load %arg1[%c0, %c0_0] : memref<32x1xf32, #tpu.memory_space<vmem>>, vector<32x1xf32>
    %c0_1 = arith.constant 0 : index
    %c0_2 = arith.constant 0 : index
    %1 = vector.load %arg2[%c0_1, %c0_2] : memref<32x1xf32, #tpu.memory_space<vmem>>, vector<32x1xf32>
    %c1024_i32 = arith.constant 1024 : i32
    %2 = arith.muli %arg0, %c1024_i32 : i32
    %3 = arith.sitofp %2 : i32 to f32
    %4 = tpu.iota {dimensions = array<i32: 1>} : vector<32x1024xi32>
    %5 = arith.sitofp %4 : vector<32x1024xi32> to vector<32x1024xf32>
    %6 = vector.broadcast %3 : f32 to vector<32x1024xf32>
    %7 = arith.addf %6, %5 : vector<32x1024xf32>
    %cst = arith.constant 2.560000e+02 : f32
    %8 = vector.broadcast %cst : f32 to vector<32x1024xf32>
    %9 = arith.divf %7, %8 : vector<32x1024xf32>
    %10 = math.floor %9 : vector<32x1024xf32>
    %cst_3 = arith.constant 2.560000e+02 : f32
    %11 = vector.broadcast %cst_3 : f32 to vector<32x1024xf32>
    %12 = arith.mulf %10, %11 : vector<32x1024xf32>
    %13 = arith.subf %7, %12 : vector<32x1024xf32>
    %cst_4 = arith.constant 1.600000e+01 : f32
    %14 = vector.broadcast %cst_4 : f32 to vector<32x1024xf32>
    %15 = arith.divf %13, %14 : vector<32x1024xf32>
    %16 = math.floor %15 : vector<32x1024xf32>
    %cst_5 = arith.constant 1.600000e+01 : f32
    %17 = vector.broadcast %cst_5 : f32 to vector<32x1024xf32>
    %18 = arith.mulf %16, %17 : vector<32x1024xf32>
    %19 = arith.subf %13, %18 : vector<32x1024xf32>
    %20 = vector.broadcast %0 : vector<32x1xf32> to vector<32x1024xf32>
    %21 = arith.mulf %10, %20 : vector<32x1024xf32>
    %22 = vector.broadcast %1 : vector<32x1xf32> to vector<32x1024xf32>
    %23 = arith.addf %21, %22 : vector<32x1024xf32>
    %24 = math.sin %23 : vector<32x1024xf32>
    %25 = vector.broadcast %0 : vector<32x1xf32> to vector<32x1024xf32>
    %26 = arith.mulf %16, %25 : vector<32x1024xf32>
    %27 = vector.broadcast %1 : vector<32x1xf32> to vector<32x1024xf32>
    %28 = arith.addf %26, %27 : vector<32x1024xf32>
    %29 = math.sin %28 : vector<32x1024xf32>
    %30 = vector.broadcast %0 : vector<32x1xf32> to vector<32x1024xf32>
    %31 = arith.mulf %19, %30 : vector<32x1024xf32>
    %32 = vector.broadcast %1 : vector<32x1xf32> to vector<32x1024xf32>
    %33 = arith.addf %31, %32 : vector<32x1024xf32>
    %34 = math.sin %33 : vector<32x1024xf32>
    %35 = arith.addf %24, %29 : vector<32x1024xf32>
    %36 = arith.addf %35, %34 : vector<32x1024xf32>
    %cst_6 = arith.constant 0.333333343 : f32
    %37 = vector.broadcast %cst_6 : f32 to vector<32x1024xf32>
    %38 = arith.mulf %36, %37 : vector<32x1024xf32>
    %c0_7 = arith.constant 0 : index
    %c0_8 = arith.constant 0 : index
    %39 = vector.load %arg3[%c0_7, %c0_8] : memref<32x1024xf32, #tpu.memory_space<vmem>>, vector<32x1024xf32>
    tpu.vector_store %arg3[%c0_7, %c0_8], %38 {strides = array<i32>} : memref<32x1024xf32, #tpu.memory_space<vmem>>, vector<32x1024xf32>,
    return
  }
  func.func @transform_0(%arg0: i32) -> (i32, i32) {
    %c0_i32 = arith.constant 0 : i32
    %c0_i32_0 = arith.constant 0 : i32
    %c0_i32_1 = arith.constant 0 : i32
    return %c0_i32, %c0_i32_0 : i32, i32
  }
  func.func @transform_1(%arg0: i32) -> (i32, i32) {
    %c0_i32 = arith.constant 0 : i32
    %c0_i32_0 = arith.constant 0 : i32
    %c0_i32_1 = arith.constant 0 : i32
    return %c0_i32, %c0_i32_0 : i32, i32
  }
  func.func @transform_2(%arg0: i32) -> (i32, i32) {
    %c0_i32 = arith.constant 0 : i32
    %c0_i32_0 = arith.constant 0 : i32
    return %c0_i32, %arg0 : i32, i32
  }
}

</mosaic_0001>

<llo_original>
// kernel: tpu_custom_call.1
$region0: #{tpu_custom_call.1}
  #allocation0 [shape = 'u32[]', space=smem, size = 0x4, offset = 0x4, fixed_abs, tag = 'smem constant byte address 0x4 - core index']
  #allocation1 [shape = 'u32[144,128]{1,0:T(1,128)}', space=vmem, size = 0x12000, scoped, tag = 'internal scratch']
  %s0 = inlined_call_operand.vmem [shape: f32[32,1], index: 0, kind: input, shape index: {}]
  %s1 = inlined_call_operand.vmem [shape: f32[32,1], index: 1, kind: input, shape index: {}]
  %s2 = inlined_call_operand.hbm [shape: f32[32,1024], index: 2, kind: output, shape index: {}]
  %s3 = sld [smem:[#allocation0]]
  $region18: #{tpu_custom_call.1} parent=0
    _
  %s5 = ssub.s32 1, %s3
  %s6 = scalar_select 0, %s5, %s3
  $region1: #{tpu_custom_call.1} parent=0
    #allocation2 [shape = 'u8[131072]{0}', space=vmem, size = 0x20000, scoped, tag = 'output window, operand 0, single buffered']
    #allocation3 [shape = 's32[1]{0}', space=sflag, size = 0x4, scoped, tag = 'scoped memory for tpu_custom_call.1']
    %7 = vsyncpa [#allocation3], 0
    // Predicated region
    $region2: #{tpu_custom_call.1} parent=1 // pred_check
      _
    $region3: #{tpu_custom_call.1} parent=1 // pred_check_branch
      %9 = sbr.rel (0) target = $region5
    $region4: #{tpu_custom_call.1} parent=1 // pred_region
      _
    $region5: #{tpu_custom_call.1} parent=1 // pred_fallthru
      _
    // Predicated region
    $region6: #{tpu_custom_call.1} parent=1 // pred_check
      _
    $region7: #{tpu_custom_call.1} parent=1 // pred_check_branch
      %11 = sbr.rel (0) target = $region9
    $region8: #{tpu_custom_call.1} parent=1 // pred_region
      _
    $region9: #{tpu_custom_call.1} parent=1 // pred_fallthru
      _
    %v12 = vld [vmem:[%s0] sm:$0xff]
    %v13 = vld [vmem:[%s0 + $0x8] sm:$0xff]
    %v14 = vld [vmem:[%s0 + $0x10] sm:$0xff]
    %v15 = vld [vmem:[%s0 + $0x18] sm:$0xff]
    %v16 = vld [vmem:[%s1] sm:$0xff]
    %v17 = vld [vmem:[%s1 + $0x8] sm:$0xff]
    %v18 = vld [vmem:[%s1 + $0x10] sm:$0xff]
    %v19 = vld [vmem:[%s1 + $0x18] sm:$0xff]
    %s20 = smul.u32 0, 1024
    %s21 = scvt.s32.f32 %s20
    %v22 = vlaneseq
    %v23 = vand.u32 %v22, 127
    %v24 = vadd.s32 %v23, 128
    %v25 = vadd.s32 %v23, 256
    %v26 = vadd.s32 %v23, 384
    %v27 = vadd.s32 %v23, 512
    %v28 = vadd.s32 %v23, 640
    %v29 = vadd.s32 %v23, 768
    %v30 = vadd.s32 %v23, 896
    %v31 = vcvt.s32.f32 %v23
    %v32 = vcvt.s32.f32 %v24
    %v33 = vcvt.s32.f32 %v25
    %v34 = vcvt.s32.f32 %v26
    %v35 = vcvt.s32.f32 %v27
    %v36 = vcvt.s32.f32 %v28
    %v37 = vcvt.s32.f32 %v29
    %v38 = vcvt.s32.f32 %v30
    %v39 = vstv %s21
    %v40 = vadd.f32 %v39, %v31
    %v41 = vadd.f32 %v39, %v32
    %v42 = vadd.f32 %v39, %v33
    %v43 = vadd.f32 %v39, %v34
    %v44 = vadd.f32 %v39, %v35
    %v45 = vadd.f32 %v39, %v36
    %v46 = vadd.f32 %v39, %v37
    %v47 = vadd.f32 %v39, %v38
    %v48 = vrcp.pop 256.0
    %v49 = vmul.f32 %v40, %v48
    %v50 = vmul.f32 %v41, %v48
    %v51 = vmul.f32 %v42, %v48
    %v52 = vmul.f32 %v43, %v48
    %v53 = vmul.f32 %v44, %v48
    %v54 = vmul.f32 %v45, %v48
    %v55 = vmul.f32 %v46, %v48
    %v56 = vmul.f32 %v47, %v48
    %v57 = vfloor.f32 %v49
    %v58 = vfloor.f32 %v50
    %v59 = vfloor.f32 %v51
    %v60 = vfloor.f32 %v52
    %v61 = vfloor.f32 %v53
    %v62 = vfloor.f32 %v54
    %v63 = vfloor.f32 %v55
    %v64 = vfloor.f32 %v56
    %v65 = vmul.f32 %v57, 256.0
    %v66 = vmul.f32 %v58, 256.0
    %v67 = vmul.f32 %v59, 256.0
    %v68 = vmul.f32 %v60, 256.0
    %v69 = vmul.f32 %v61, 256.0
    %v70 = vmul.f32 %v62, 256.0
    %v71 = vmul.f32 %v63, 256.0
    %v72 = vmul.f32 %v64, 256.0
    %v73 = vsub.f32 %v40, %v65
    %v74 = vsub.f32 %v41, %v66
    %v75 = vsub.f32 %v42, %v67
    %v76 = vsub.f32 %v43, %v68
    %v77 = vsub.f32 %v44, %v69
    %v78 = vsub.f32 %v45, %v70
    %v79 = vsub.f32 %v46, %v71
    %v80 = vsub.f32 %v47, %v72
    %v81 = vrcp.pop 16.0
    %v82 = vmul.f32 %v73, %v81
    %v83 = vmul.f32 %v74, %v81
    %v84 = vmul.f32 %v75, %v81
    %v85 = vmul.f32 %v76, %v81
    %v86 = vmul.f32 %v77, %v81
    %v87 = vmul.f32 %v78, %v81
    %v88 = vmul.f32 %v79, %v81
    %v89 = vmul.f32 %v80, %v81
    %v90 = vfloor.f32 %v82
    %v91 = vfloor.f32 %v83
    %v92 = vfloor.f32 %v84
    %v93 = vfloor.f32 %v85
    %v94 = vfloor.f32 %v86
    %v95 = vfloor.f32 %v87
    %v96 = vfloor.f32 %v88
    %v97 = vfloor.f32 %v89
    %v98 = vmul.f32 %v90, 16.0
    %v99 = vmul.f32 %v91, 16.0
    %v100 = vmul.f32 %v92, 16.0
    %v101 = vmul.f32 %v93, 16.0
    %v102 = vmul.f32 %v94, 16.0
    %v103 = vmul.f32 %v95, 16.0
    %v104 = vmul.f32 %v96, 16.0
    %v105 = vmul.f32 %v97, 16.0
    %v106 = vsub.f32 %v73, %v98
    %v107 = vsub.f32 %v74, %v99
    %v108 = vsub.f32 %v75, %v100
    %v109 = vsub.f32 %v76, %v101
    %v110 = vsub.f32 %v77, %v102
    %v111 = vsub.f32 %v78, %v103
    %v112 = vsub.f32 %v79, %v104
    %v113 = vsub.f32 %v80, %v105
    %115 = vset.pattern.permute.xlu0 0
    %116 = vperm.xlu0 %115, %v12
    %v117 = vpop.permute.xlu0 %116
    %120 = vset.pattern.permute.xlu0 0
    %121 = vperm.xlu0 %120, %v13
    %v122 = vpop.permute.xlu0 %121
    %125 = vset.pattern.permute.xlu0 0
    %126 = vperm.xlu0 %125, %v14
    %v127 = vpop.permute.xlu0 %126
    %130 = vset.pattern.permute.xlu0 0
    %131 = vperm.xlu0 %130, %v15
    %v132 = vpop.permute.xlu0 %131
    %v134 = vmul.f32 %v57, %v117
    %v135 = vmul.f32 %v58, %v117
    %v136 = vmul.f32 %v59, %v117
    %v137 = vmul.f32 %v60, %v117
    %v138 = vmul.f32 %v61, %v117
    %v139 = vmul.f32 %v62, %v117
    %v140 = vmul.f32 %v63, %v117
    %v141 = vmul.f32 %v64, %v117
    %v142 = vmul.f32 %v57, %v122
    %v143 = vmul.f32 %v58, %v122
    %v144 = vmul.f32 %v59, %v122
    %v145 = vmul.f32 %v60, %v122
    %v146 = vmul.f32 %v61, %v122
    %v147 = vmul.f32 %v62, %v122
    %v148 = vmul.f32 %v63, %v122
    %v149 = vmul.f32 %v64, %v122
    %v150 = vmul.f32 %v57, %v127
    %v151 = vmul.f32 %v58, %v127
    %v152 = vmul.f32 %v59, %v127
    %v153 = vmul.f32 %v60, %v127
    %v154 = vmul.f32 %v61, %v127
    %v155 = vmul.f32 %v62, %v127
    %v156 = vmul.f32 %v63, %v127
    %v157 = vmul.f32 %v64, %v127
    %v158 = vmul.f32 %v57, %v132
    %v159 = vmul.f32 %v58, %v132
    %v160 = vmul.f32 %v59, %v132
    %v161 = vmul.f32 %v60, %v132
    %v162 = vmul.f32 %v61, %v132
    %v163 = vmul.f32 %v62, %v132
    %v164 = vmul.f32 %v63, %v132
    %v165 = vmul.f32 %v64, %v132
    %167 = vset.pattern.permute.xlu0 0
    %168 = vperm.xlu0 %167, %v16
    %v169 = vpop.permute.xlu0 %168
    %172 = vset.pattern.permute.xlu0 0
    %173 = vperm.xlu0 %172, %v17
    %v174 = vpop.permute.xlu0 %173
    %177 = vset.pattern.permute.xlu0 0
    %178 = vperm.xlu0 %177, %v18
    %v179 = vpop.permute.xlu0 %178
    %182 = vset.pattern.permute.xlu0 0
    %183 = vperm.xlu0 %182, %v19
    %v184 = vpop.permute.xlu0 %183
    %v186 = vadd.f32 %v134, %v169
    %v187 = vadd.f32 %v135, %v169
    %v188 = vadd.f32 %v136, %v169
    %v189 = vadd.f32 %v137, %v169
    %v190 = vadd.f32 %v138, %v169
    %v191 = vadd.f32 %v139, %v169
    %v192 = vadd.f32 %v140, %v169
    %v193 = vadd.f32 %v141, %v169
    %v194 = vadd.f32 %v142, %v174
    %v195 = vadd.f32 %v143, %v174
    %v196 = vadd.f32 %v144, %v174
    %v197 = vadd.f32 %v145, %v174
    %v198 = vadd.f32 %v146, %v174
    %v199 = vadd.f32 %v147, %v174
    %v200 = vadd.f32 %v148, %v174
    %v201 = vadd.f32 %v149, %v174
    %v202 = vadd.f32 %v150, %v179
    %v203 = vadd.f32 %v151, %v179
    %v204 = vadd.f32 %v152, %v179
    %v205 = vadd.f32 %v153, %v179
    %v206 = vadd.f32 %v154, %v179
    %v207 = vadd.f32 %v155, %v179
    %v208 = vadd.f32 %v156, %v179
    %v209 = vadd.f32 %v157, %v179
    %v210 = vadd.f32 %v158, %v184
    %v211 = vadd.f32 %v159, %v184
    %v212 = vadd.f32 %v160, %v184
    %v213 = vadd.f32 %v161, %v184
    %v214 = vadd.f32 %v162, %v184
    %v215 = vadd.f32 %v163, %v184
    %v216 = vadd.f32 %v164, %v184
    %v217 = vadd.f32 %v165, %v184
    %v218 = vand.u32 2147483647, %v186
    %vm219 = vcmp.le.f32.partialorder %v218, 0.7853982
    %vm220 = vcmp.lt.s32.totalorder %v186, 0
    %v221 = vand.u32 %v186, 2139095040
    %v222 = vshrl.u32 %v221, 23
    %v223 = vsub.s32 %v222, 127
    %v224 = vand.u32 2147483647, %v186
    %v225 = vand.u32 %v224, 8388607
    %v226 = vor.u32 %v225, 8388608
    %v227 = vsub.s32 0, %v226
    %v228 = vadd.s32 %v223, 1
    %vm229 = vcmp.gt.s32.totalorder %v228, 0
    %v230 = vsel %vm229, %v228, 0
    %v231 = vshrl.u32 %v230, 5
    %v232 = vand.u32 %v230, 31
    %v233 = vsub.s32 32, %v232
    %v234 = vshrl.u32 683565275, %v233
    %v235 = vshll.u32 683565275, %v232
    %v236 = vshrl.u32 2475754826, %v233
    %v237 = vor.u32 %v235, %v236
    %v238 = vshll.u32 2475754826, %v232
    %v239 = vshrl.u32 2131351028, %v233
    %v240 = vor.u32 %v238, %v239
    %v241 = vshll.u32 2131351028, %v232
    %v242 = vshrl.u32 2102212464, %v233
    %v243 = vor.u32 %v241, %v242
    %v244 = vshll.u32 2102212464, %v232
    %v245 = vshrl.u32 920167782, %v233
    %v246 = vor.u32 %v244, %v245
    %v247 = vshll.u32 920167782, %v232
    %v248 = vshrl.u32 1326507024, %v233
    %v249 = vor.u32 %v247, %v248
    %vm250 = vcmp.lt.s32.totalorder %v231, 1
    %vm251 = vcmp.lt.s32.totalorder %v231, 2
    %vm252 = vcmp.lt.s32.totalorder %v231, 3
    %vm253 = vcmp.lt.s32.totalorder %v231, 4
    %v254 = vsel %vm250, %v234, %v237
    %v255 = vsel %vm253, %v243, 2102212464
    %v256 = vsel %vm252, %v240, %v255
    %v257 = vsel %vm251, %v254, %v256
    %v258 = vsel %vm250, %v237, %v240
    %v259 = vsel %vm253, %v246, 920167782
    %v260 = vsel %vm252, %v243, %v259
    %v261 = vsel %vm251, %v258, %v260
    %v262 = vsel %vm250, %v240, %v243
    %v263 = vsel %vm253, %v249, 1326507024
    %v264 = vsel %vm252, %v246, %v263
    %v265 = vsel %vm251, %v262, %v264
    %v266 = vshll.u32 %v226, 8
    %v267 = vmul.u32.u64.compose %v266, %v265
    %v268 = vextract.low.u32 %v267
    %v269 = vextract.high.u32 %v267
    %v270 = vmul.u32.u64.compose %v266, %v261
    %v271 = vextract.low.u32 %v270
    %v272 = vextract.high.u32 %v270
    %v273 = vmul.u32 %v266, %v257
    %v274 = vadd.s32 %v269, %v271
    %vm275 = vc.u32 %v269, %v271
    %v276 = vadd.s32 %v272, 1
    %v277 = vsel %vm275, %v276, %v272
    %v278 = vadd.s32 %v273, %v277
    %v279 = vadd.s32 %v278, 536870912
    %v280 = vshrl.u32 %v279, 30
    %v281 = vshll.u32 %v280, 30
    %v282 = vsub.s32 %v278, %v281
    %vm283 = vcmp.lt.s32.totalorder %v282, 0
    %v284 = vsub.s32 0, %v282
    %v285 = vsel %vm283, %v284, %v282
    %v286 = vclz %v285
    %v287 = vsub.s32 %v286, 2
    %vm288 = vcmp.gt.s32.totalorder 0, %v287
    %v289 = vsel %vm288, 0, %v287
    %v290 = vsub.s32 32, %v289
    %v291 = vshll.u32 %v282, %v289
    %v292 = vshrl.u32 %v274, %v290
    %v293 = vor.u32 %v291, %v292
    %v294 = vsub.s32 4294967266, %v289
    %v295 = vadd.s32 %v294, 127
    %v296 = vshll.u32 %v295, 23
    %v297 = vor.u32 4788187, %v296
    %v298 = vand.u32 2147483647, %v297
    %v300 = vcvt.s32.f32 %v293
    %v301 = vmul.f32 %v300, %v298
    %v302 = vxor.u32 %v301, 2147483648
    %v303 = vsel %vm220, %v302, %v301
    %v304 = vsub.s32 4, %v280
    %v305 = vsel %vm220, %v304, %v280
    %v306 = vsel %vm219, %v186, %v303
    %v307 = vsel %vm219, 0, %v305
    %v308 = vcosq.f32.pop %v306
    %v309 = vsinq.f32.pop %v306
    %vm310 = vweird.f32 %v186
    %v311 = vadd.s32 %v307, 3
    %v312 = vand.u32 %v311, 3
    %vm313 = vcmp.lt.s32.totalorder %v312, 2
    %vm314 = vcmp.eq.s32.totalorder %v312, 0
    %v315 = vxor.u32 %v309, 2147483648
    %v316 = vsel %vm314, %v308, %v315
    %vm317 = vcmp.eq.s32.totalorder %v312, 2
    %v318 = vxor.u32 %v308, 2147483648
    %v319 = vsel %vm317, %v318, %v309
    %v320 = vsel %vm313, %v316, %v319
    %v321 = vsel %vm310, nan, %v320
    %v322 = vand.u32 2147483647, %v187
    %vm323 = vcmp.le.f32.partialorder %v322, 0.7853982
    %vm324 = vcmp.lt.s32.totalorder %v187, 0
    %v325 = vand.u32 %v187, 2139095040
    %v326 = vshrl.u32 %v325, 23
    %v327 = vsub.s32 %v326, 127
    %v328 = vand.u32 2147483647, %v187
    %v329 = vand.u32 %v328, 8388607
    %v330 = vor.u32 %v329, 8388608
    %v331 = vsub.s32 0, %v330
    %v332 = vadd.s32 %v327, 1
    %vm333 = vcmp.gt.s32.totalorder %v332, 0
    %v334 = vsel %vm333, %v332, 0
    %v335 = vshrl.u32 %v334, 5
    %v336 = vand.u32 %v334, 31
    %v337 = vsub.s32 32, %v336
    %v338 = vshrl.u32 683565275, %v337
    %v339 = vshll.u32 683565275, %v336
    %v340 = vshrl.u32 2475754826, %v337
    %v341 = vor.u32 %v339, %v340
    %v342 = vshll.u32 2475754826, %v336
    %v343 = vshrl.u32 2131351028, %v337
    %v344 = vor.u32 %v342, %v343
    %v345 = vshll.u32 2131351028, %v336
    %v346 = vshrl.u32 2102212464, %v337
    %v347 = vor.u32 %v345, %v346
    %v348 = vshll.u32 2102212464, %v336
    %v349 = vshrl.u32 920167782, %v337
    %v350 = vor.u32 %v348, %v349
    %v351 = vshll.u32 920167782, %v336
    %v352 = vshrl.u32 1326507024, %v337
    %v353 = vor.u32 %v351, %v352
    %vm354 = vcmp.lt.s32.totalorder %v335, 1
    %vm355 = vcmp.lt.s32.totalorder %v335, 2
    %vm356 = vcmp.lt.s32.totalorder %v335, 3
    %vm357 = vcmp.lt.s32.totalorder %v335, 4
    %v358 = vsel %vm354, %v338, %v341
    %v359 = vsel %vm357, %v347, 2102212464
    %v360 = vsel %vm356, %v344, %v359
    %v361 = vsel %vm355, %v358, %v360
    %v362 = vsel %vm354, %v341, %v344
    %v363 = vsel %vm357, %v350, 920167782
    %v364 = vsel %vm356, %v347, %v363
    %v365 = vsel %vm355, %v362, %v364
    %v366 = vsel %vm354, %v344, %v347
    %v367 = vsel %vm357, %v353, 1326507024
    %v368 = vsel %vm356, %v350, %v367
    %v369 = vsel %vm355, %v366, %v368
    %v370 = vshll.u32 %v330, 8
    %v371 = vmul.u32.u64.compose %v370, %v369
    %v372 = vextract.low.u32 %v371
    %v373 = vextract.high.u32 %v371
    %v374 = vmul.u32.u64.compose %v370, %v365
    %v375 = vextract.low.u32 %v374
    %v376 = vextract.high.u32 %v374
    %v377 = vmul.u32 %v370, %v361
    %v378 = vadd.s32 %v373, %v375
    %vm379 = vc.u32 %v373, %v375
    %v380 = vadd.s32 %v376, 1
    %v381 = vsel %vm379, %v380, %v376
    %v382 = vadd.s32 %v377, %v381
    %v383 = vadd.s32 %v382, 536870912
    %v384 = vshrl.u32 %v383, 30
    %v385 = vshll.u32 %v384, 30
    %v386 = vsub.s32 %v382, %v385
    %vm387 = vcmp.lt.s32.totalorder %v386, 0
    %v388 = vsub.s32 0, %v386
    %v389 = vsel %vm387, %v388, %v386
    %v390 = vclz %v389
    %v391 = vsub.s32 %v390, 2
    %vm392 = vcmp.gt.s32.totalorder 0, %v391
    %v393 = vsel %vm392, 0, %v391
    %v394 = vsub.s32 32, %v393
    %v395 = vshll.u32 %v386, %v393
    %v396 = vshrl.u32 %v378, %v394
    %v397 = vor.u32 %v395, %v396
    %v398 = vsub.s32 4294967266, %v393
    %v399 = vadd.s32 %v398, 127
    %v400 = vshll.u32 %v399, 23
    %v401 = vor.u32 4788187, %v400
    %v402 = vand.u32 2147483647, %v401
    %v404 = vcvt.s32.f32 %v397
    %v405 = vmul.f32 %v404, %v402
    %v406 = vxor.u32 %v405, 2147483648
    %v407 = vsel %vm324, %v406, %v405
    %v408 = vsub.s32 4, %v384
    %v409 = vsel %vm324, %v408, %v384
    %v410 = vsel %vm323, %v187, %v407
    %v411 = vsel %vm323, 0, %v409
    %v412 = vcosq.f32.pop %v410
    %v413 = vsinq.f32.pop %v410
    %vm414 = vweird.f32 %v187
    %v415 = vadd.s32 %v411, 3
    %v416 = vand.u32 %v415, 3
    %vm417 = vcmp.lt.s32.totalorder %v416, 2
    %vm418 = vcmp.eq.s32.totalorder %v416, 0
    %v419 = vxor.u32 %v413, 2147483648
    %v420 = vsel %vm418, %v412, %v419
    %vm421 = vcmp.eq.s32.totalorder %v416, 2
    %v422 = vxor.u32 %v412, 2147483648
    %v423 = vsel %vm421, %v422, %v413
    %v424 = vsel %vm417, %v420, %v423
    %v425 = vsel %vm414, nan, %v424
    %v426 = vand.u32 2147483647, %v188
    %vm427 = vcmp.le.f32.partialorder %v426, 0.7853982
    %vm428 = vcmp.lt.s32.totalorder %v188, 0
    %v429 = vand.u32 %v188, 2139095040
    %v430 = vshrl.u32 %v429, 23
    %v431 = vsub.s32 %v430, 127
    %v432 = vand.u32 2147483647, %v188
    %v433 = vand.u32 %v432, 8388607
    %v434 = vor.u32 %v433, 8388608
    %v435 = vsub.s32 0, %v434
    %v436 = vadd.s32 %v431, 1
    %vm437 = vcmp.gt.s32.totalorder %v436, 0
    %v438 = vsel %vm437, %v436, 0
    %v439 = vshrl.u32 %v438, 5
    %v440 = vand.u32 %v438, 31
    %v441 = vsub.s32 32, %v440
    %v442 = vshrl.u32 683565275, %v441
    %v443 = vshll.u32 683565275, %v440
    %v444 = vshrl.u32 2475754826, %v441
    %v445 = vor.u32 %v443, %v444
    %v446 = vshll.u32 2475754826, %v440
    %v447 = vshrl.u32 2131351028, %v441
    %v448 = vor.u32 %v446, %v447
    %v449 = vshll.u32 2131351028, %v440
    %v450 = vshrl.u32 2102212464, %v441
    %v451 = vor.u32 %v449, %v450
    %v452 = vshll.u32 2102212464, %v440
    %v453 = vshrl.u32 920167782, %v441
    %v454 = vor.u32 %v452, %v453
    %v455 = vshll.u32 920167782, %v440
    %v456 = vshrl.u32 1326507024, %v441
    %v457 = vor.u32 %v455, %v456
    %vm458 = vcmp.lt.s32.totalorder %v439, 1
    %vm459 = vcmp.lt.s32.totalorder %v439, 2
    %vm460 = vcmp.lt.s32.totalorder %v439, 3
    %vm461 = vcmp.lt.s32.totalorder %v439, 4
    %v462 = vsel %vm458, %v442, %v445
    %v463 = vsel %vm461, %v451, 2102212464
    %v464 = vsel %vm460, %v448, %v463
    %v465 = vsel %vm459, %v462, %v464
    %v466 = vsel %vm458, %v445, %v448
    %v467 = vsel %vm461, %v454, 920167782
    %v468 = vsel %vm460, %v451, %v467
    %v469 = vsel %vm459, %v466, %v468
    %v470 = vsel %vm458, %v448, %v451
    %v471 = vsel %vm461, %v457, 1326507024
    %v472 = vsel %vm460, %v454, %v471
    %v473 = vsel %vm459, %v470, %v472
    %v474 = vshll.u32 %v434, 8
    %v475 = vmul.u32.u64.compose %v474, %v473
    %v476 = vextract.low.u32 %v475
    %v477 = vextract.high.u32 %v475
    %v478 = vmul.u32.u64.compose %v474, %v469
    %v479 = vextract.low.u32 %v478
    %v480 = vextract.high.u32 %v478
    %v481 = vmul.u32 %v474, %v465
    %v482 = vadd.s32 %v477, %v479
    %vm483 = vc.u32 %v477, %v479
    %v484 = vadd.s32 %v480, 1
    %v485 = vsel %vm483, %v484, %v480
    %v486 = vadd.s32 %v481, %v485
    %v487 = vadd.s32 %v486, 536870912
    %v488 = vshrl.u32 %v487, 30
    %v489 = vshll.u32 %v488, 30
    %v490 = vsub.s32 %v486, %v489
    %vm491 = vcmp.lt.s32.totalorder %v490, 0
    %v492 = vsub.s32 0, %v490
    %v493 = vsel %vm491, %v492, %v490
    %v494 = vclz %v493
    %v495 = vsub.s32 %v494, 2
    %vm496 = vcmp.gt.s32.totalorder 0, %v495
    %v497 = vsel %vm496, 0, %v495
    %v498 = vsub.s32 32, %v497
    %v499 = vshll.u32 %v490, %v497
    %v500 = vshrl.u32 %v482, %v498
    %v501 = vor.u32 %v499, %v500
    %v502 = vsub.s32 4294967266, %v497
    %v503 = vadd.s32 %v502, 127
    %v504 = vshll.u32 %v503, 23
    %v505 = vor.u32 4788187, %v504
    %v506 = vand.u32 2147483647, %v505
    %v508 = vcvt.s32.f32 %v501
    %v509 = vmul.f32 %v508, %v506
    %v510 = vxor.u32 %v509, 2147483648
    %v511 = vsel %vm428, %v510, %v509
    %v512 = vsub.s32 4, %v488
    %v513 = vsel %vm428, %v512, %v488
    %v514 = vsel %vm427, %v188, %v511
    %v515 = vsel %vm427, 0, %v513
    %v516 = vcosq.f32.pop %v514
    %v517 = vsinq.f32.pop %v514
    %vm518 = vweird.f32 %v188
    %v519 = vadd.s32 %v515, 3
    %v520 = vand.u32 %v519, 3
    %vm521 = vcmp.lt.s32.totalorder %v520, 2
    %vm522 = vcmp.eq.s32.totalorder %v520, 0
    %v523 = vxor.u32 %v517, 2147483648
    %v524 = vsel %vm522, %v516, %v523
    %vm525 = vcmp.eq.s32.totalorder %v520, 2
    %v526 = vxor.u32 %v516, 2147483648
    %v527 = vsel %vm525, %v526, %v517
    %v528 = vsel %vm521, %v524, %v527
    %v529 = vsel %vm518, nan, %v528
    %v530 = vand.u32 2147483647, %v189
    %vm531 = vcmp.le.f32.partialorder %v530, 0.7853982
    %vm532 = vcmp.lt.s32.totalorder %v189, 0
    %v533 = vand.u32 %v189, 2139095040
    %v534 = vshrl.u32 %v533, 23
    %v535 = vsub.s32 %v534, 127
    %v536 = vand.u32 2147483647, %v189
    %v537 = vand.u32 %v536, 8388607
    %v538 = vor.u32 %v537, 8388608
    %v539 = vsub.s32 0, %v538
    %v540 = vadd.s32 %v535, 1
    %vm541 = vcmp.gt.s32.totalorder %v540, 0
    %v542 = vsel %vm541, %v540, 0
    %v543 = vshrl.u32 %v542, 5
    %v544 = vand.u32 %v542, 31
    %v545 = vsub.s32 32, %v544
    %v546 = vshrl.u32 683565275, %v545
    %v547 = vshll.u32 683565275, %v544
    %v548 = vshrl.u32 2475754826, %v545
    %v549 = vor.u32 %v547, %v548
    %v550 = vshll.u32 2475754826, %v544
    %v551 = vshrl.u32 2131351028, %v545
    %v552 = vor.u32 %v550, %v551
    %v553 = vshll.u32 2131351028, %v544
    %v554 = vshrl.u32 2102212464, %v545
    %v555 = vor.u32 %v553, %v554
    %v556 = vshll.u32 2102212464, %v544
    %v557 = vshrl.u32 920167782, %v545
    %v558 = vor.u32 %v556, %v557
    %v559 = vshll.u32 920167782, %v544
    %v560 = vshrl.u32 1326507024, %v545
    %v561 = vor.u32 %v559, %v560
    %vm562 = vcmp.lt.s32.totalorder %v543, 1
    %vm563 = vcmp.lt.s32.totalorder %v543, 2
    %vm564 = vcmp.lt.s32.totalorder %v543, 3
    %vm565 = vcmp.lt.s32.totalorder %v543, 4
    %v566 = vsel %vm562, %v546, %v549
    %v567 = vsel %vm565, %v555, 2102212464
    %v568 = vsel %vm564, %v552, %v567
    %v569 = vsel %vm563, %v566, %v568
    %v570 = vsel %vm562, %v549, %v552
    %v571 = vsel %vm565, %v558, 920167782
    %v572 = vsel %vm564, %v555, %v571
    %v573 = vsel %vm563, %v570, %v572
    %v574 = vsel %vm562, %v552, %v555
    %v575 = vsel %vm565, %v561, 1326507024
    %v576 = vsel %vm564, %v558, %v575
    %v577 = vsel %vm563, %v574, %v576
    %v578 = vshll.u32 %v538, 8
    %v579 = vmul.u32.u64.compose %v578, %v577
    %v580 = vextract.low.u32 %v579
    %v581 = vextract.high.u32 %v579
    %v582 = vmul.u32.u64.compose %v578, %v573
    %v583 = vextract.low.u32 %v582
    %v584 = vextract.high.u32 %v582
    %v585 = vmul.u32 %v578, %v569
    %v586 = vadd.s32 %v581, %v583
    %vm587 = vc.u32 %v581, %v583
    %v588 = vadd.s32 %v584, 1
    %v589 = vsel %vm587, %v588, %v584
    %v590 = vadd.s32 %v585, %v589
    %v591 = vadd.s32 %v590, 536870912
    %v592 = vshrl.u32 %v591, 30
    %v593 = vshll.u32 %v592, 30
    %v594 = vsub.s32 %v590, %v593
    %vm595 = vcmp.lt.s32.totalorder %v594, 0
    %v596 = vsub.s32 0, %v594
    %v597 = vsel %vm595, %v596, %v594
    %v598 = vclz %v597
    %v599 = vsub.s32 %v598, 2
    %vm600 = vcmp.gt.s32.totalorder 0, %v599
    %v601 = vsel %vm600, 0, %v599
    %v602 = vsub.s32 32, %v601
    %v603 = vshll.u32 %v594, %v601
    %v604 = vshrl.u32 %v586, %v602
    %v605 = vor.u32 %v603, %v604
    %v606 = vsub.s32 4294967266, %v601
    %v607 = vadd.s32 %v606, 127
    %v608 = vshll.u32 %v607, 23
    %v609 = vor.u32 4788187, %v608
    %v610 = vand.u32 2147483647, %v609
    %v612 = vcvt.s32.f32 %v605
    %v613 = vmul.f32 %v612, %v610
    %v614 = vxor.u32 %v613, 2147483648
    %v615 = vsel %vm532, %v614, %v613
    %v616 = vsub.s32 4, %v592
    %v617 = vsel %vm532, %v616, %v592
    %v618 = vsel %vm531, %v189, %v615
    %v619 = vsel %vm531, 0, %v617
    %v620 = vcosq.f32.pop %v618
    %v621 = vsinq.f32.pop %v618
    %vm622 = vweird.f32 %v189
    %v623 = vadd.s32 %v619, 3
    %v624 = vand.u32 %v623, 3
    %vm625 = vcmp.lt.s32.totalorder %v624, 2
    %vm626 = vcmp.eq.s32.totalorder %v624, 0
    %v627 = vxor.u32 %v621, 2147483648
    %v628 = vsel %vm626, %v620, %v627
    %vm629 = vcmp.eq.s32.totalorder %v624, 2
    %v630 = vxor.u32 %v620, 2147483648
    %v631 = vsel %vm629, %v630, %v621
    %v632 = vsel %vm625, %v628, %v631
    %v633 = vsel %vm622, nan, %v632
    %v634 = vand.u32 2147483647, %v190
    %vm635 = vcmp.le.f32.partialorder %v634, 0.7853982
    %vm636 = vcmp.lt.s32.totalorder %v190, 0
    %v637 = vand.u32 %v190, 2139095040
    %v638 = vshrl.u32 %v637, 23
    %v639 = vsub.s32 %v638, 127
    %v640 = vand.u32 2147483647, %v190
    %v641 = vand.u32 %v640, 8388607
    %v642 = vor.u32 %v641, 8388608
    %v643 = vsub.s32 0, %v642
    %v644 = vadd.s32 %v639, 1
    %vm645 = vcmp.gt.s32.totalorder %v644, 0
    %v646 = vsel %vm645, %v644, 0
    %v647 = vshrl.u32 %v646, 5
    %v648 = vand.u32 %v646, 31
    %v649 = vsub.s32 32, %v648
    %v650 = vshrl.u32 683565275, %v649
    %v651 = vshll.u32 683565275, %v648
    %v652 = vshrl.u32 2475754826, %v649
    %v653 = vor.u32 %v651, %v652
    %v654 = vshll.u32 2475754826, %v648
    %v655 = vshrl.u32 2131351028, %v649
    %v656 = vor.u32 %v654, %v655
    %v657 = vshll.u32 2131351028, %v648
    %v658 = vshrl.u32 2102212464, %v649
    %v659 = vor.u32 %v657, %v658
    %v660 = vshll.u32 2102212464, %v648
    %v661 = vshrl.u32 920167782, %v649
    %v662 = vor.u32 %v660, %v661
    %v663 = vshll.u32 920167782, %v648
    %v664 = vshrl.u32 1326507024, %v649
    %v665 = vor.u32 %v663, %v664
    %vm666 = vcmp.lt.s32.totalorder %v647, 1
    %vm667 = vcmp.lt.s32.totalorder %v647, 2
    %vm668 = vcmp.lt.s32.totalorder %v647, 3
    %vm669 = vcmp.lt.s32.totalorder %v647, 4
    %v670 = vsel %vm666, %v650, %v653
    %v671 = vsel %vm669, %v659, 2102212464
    %v672 = vsel %vm668, %v656, %v671
    %v673 = vsel %vm667, %v670, %v672
    %v674 = vsel %vm666, %v653, %v656
    %v675 = vsel %vm669, %v662, 920167782
    %v676 = vsel %vm668, %v659, %v675
    %v677 = vsel %vm667, %v674, %v676
    %v678 = vsel %vm666, %v656, %v659
    %v679 = vsel %vm669, %v665, 1326507024
    %v680 = vsel %vm668, %v662, %v679
    %v681 = vsel %vm667, %v678, %v680
    %v682 = vshll.u32 %v642, 8
    %v683 = vmul.u32.u64.compose %v682, %v681
    %v684 = vextract.low.u32 %v683
    %v685 = vextract.high.u32 %v683
    %v686 = vmul.u32.u64.compose %v682, %v677
    %v687 = vextract.low.u32 %v686
    %v688 = vextract.high.u32 %v686
    %v689 = vmul.u32 %v682, %v673
    %v690 = vadd.s32 %v685, %v687
    %vm691 = vc.u32 %v685, %v687
    %v692 = vadd.s32 %v688, 1
    %v693 = vsel %vm691, %v692, %v688
    %v694 = vadd.s32 %v689, %v693
    %v695 = vadd.s32 %v694, 536870912
    %v696 = vshrl.u32 %v695, 30
    %v697 = vshll.u32 %v696, 30
    %v698 = vsub.s32 %v694, %v697
    %vm699 = vcmp.lt.s32.totalorder %v698, 0
    %v700 = vsub.s32 0, %v698
    %v701 = vsel %vm699, %v700, %v698
    %v702 = vclz %v701
    %v703 = vsub.s32 %v702, 2
    %vm704 = vcmp.gt.s32.totalorder 0, %v703
    %v705 = vsel %vm704, 0, %v703
    %v706 = vsub.s32 32, %v705
    %v707 = vshll.u32 %v698, %v705
    %v708 = vshrl.u32 %v690, %v706
    %v709 = vor.u32 %v707, %v708
    %v710 = vsub.s32 4294967266, %v705
    %v711 = vadd.s32 %v710, 127
    %v712 = vshll.u32 %v711, 23
    %v713 = vor.u32 4788187, %v712
    %v714 = vand.u32 2147483647, %v713
    %v716 = vcvt.s32.f32 %v709
    %v717 = vmul.f32 %v716, %v714
    %v718 = vxor.u32 %v717, 2147483648
    %v719 = vsel %vm636, %v718, %v717
    %v720 = vsub.s32 4, %v696
    %v721 = vsel %vm636, %v720, %v696
    %v722 = vsel %vm635, %v190, %v719
    %v723 = vsel %vm635, 0, %v721
    %v724 = vcosq.f32.pop %v722
    %v725 = vsinq.f32.pop %v722
    %vm726 = vweird.f32 %v190
    %v727 = vadd.s32 %v723, 3
    %v728 = vand.u32 %v727, 3
    %vm729 = vcmp.lt.s32.totalorder %v728, 2
    %vm730 = vcmp.eq.s32.totalorder %v728, 0
    %v731 = vxor.u32 %v725, 2147483648
    %v732 = vsel %vm730, %v724, %v731
    %vm733 = vcmp.eq.s32.totalorder %v728, 2
    %v734 = vxor.u32 %v724, 2147483648
    %v735 = vsel %vm733, %v734, %v725
    %v736 = vsel %vm729, %v732, %v735
    %v737 = vsel %vm726, nan, %v736
    %v738 = vand.u32 2147483647, %v191
    %vm739 = vcmp.le.f32.partialorder %v738, 0.7853982
    %vm740 = vcmp.lt.s32.totalorder %v191, 0
    %v741 = vand.u32 %v191, 2139095040
    %v742 = vshrl.u32 %v741, 23
    %v743 = vsub.s32 %v742, 127
    %v744 = vand.u32 2147483647, %v191
    %v745 = vand.u32 %v744, 8388607
    %v746 = vor.u32 %v745, 8388608
    %v747 = vsub.s32 0, %v746
    %v748 = vadd.s32 %v743, 1
    %vm749 = vcmp.gt.s32.totalorder %v748, 0
    %v750 = vsel %vm749, %v748, 0
    %v751 = vshrl.u32 %v750, 5
    %v752 = vand.u32 %v750, 31
    %v753 = vsub.s32 32, %v752
    %v754 = vshrl.u32 683565275, %v753
    %v755 = vshll.u32 683565275, %v752
    %v756 = vshrl.u32 2475754826, %v753
    %v757 = vor.u32 %v755, %v756
    %v758 = vshll.u32 2475754826, %v752
    %v759 = vshrl.u32 2131351028, %v753
    %v760 = vor.u32 %v758, %v759
    %v761 = vshll.u32 2131351028, %v752
    %v762 = vshrl.u32 2102212464, %v753
    %v763 = vor.u32 %v761, %v762
    %v764 = vshll.u32 2102212464, %v752
    %v765 = vshrl.u32 920167782, %v753
    %v766 = vor.u32 %v764, %v765
    %v767 = vshll.u32 920167782, %v752
    %v768 = vshrl.u32 1326507024, %v753
    %v769 = vor.u32 %v767, %v768
    %vm770 = vcmp.lt.s32.totalorder %v751, 1
    %vm771 = vcmp.lt.s32.totalorder %v751, 2
    %vm772 = vcmp.lt.s32.totalorder %v751, 3
    %vm773 = vcmp.lt.s32.totalorder %v751, 4
    %v774 = vsel %vm770, %v754, %v757
    %v775 = vsel %vm773, %v763, 2102212464
    %v776 = vsel %vm772, %v760, %v775
    %v777 = vsel %vm771, %v774, %v776
    %v778 = vsel %vm770, %v757, %v760
    %v779 = vsel %vm773, %v766, 920167782
    %v780 = vsel %vm772, %v763, %v779
    %v781 = vsel %vm771, %v778, %v780
    %v782 = vsel %vm770, %v760, %v763
    %v783 = vsel %vm773, %v769, 1326507024
    %v784 = vsel %vm772, %v766, %v783
    %v785 = vsel %vm771, %v782, %v784
    %v786 = vshll.u32 %v746, 8
    %v787 = vmul.u32.u64.compose %v786, %v785
    %v788 = vextract.low.u32 %v787
    %v789 = vextract.high.u32 %v787
    %v790 = vmul.u32.u64.compose %v786, %v781
    %v791 = vextract.low.u32 %v790
    %v792 = vextract.high.u32 %v790
    %v793 = vmul.u32 %v786, %v777
    %v794 = vadd.s32 %v789, %v791
    %vm795 = vc.u32 %v789, %v791
    %v796 = vadd.s32 %v792, 1
    %v797 = vsel %vm795, %v796, %v792
    %v798 = vadd.s32 %v793, %v797
    %v799 = vadd.s32 %v798, 536870912
    %v800 = vshrl.u32 %v799, 30
    %v801 = vshll.u32 %v800, 30
    %v802 = vsub.s32 %v798, %v801
    %vm803 = vcmp.lt.s32.totalorder %v802, 0
    %v804 = vsub.s32 0, %v802
    %v805 = vsel %vm803, %v804, %v802
    %v806 = vclz %v805
    %v807 = vsub.s32 %v806, 2
    %vm808 = vcmp.gt.s32.totalorder 0, %v807
    %v809 = vsel %vm808, 0, %v807
    %v810 = vsub.s32 32, %v809
    %v811 = vshll.u32 %v802, %v809
    %v812 = vshrl.u32 %v794, %v810
    %v813 = vor.u32 %v811, %v812
    %v814 = vsub.s32 4294967266, %v809
    %v815 = vadd.s32 %v814, 127
    %v816 = vshll.u32 %v815, 23
    %v817 = vor.u32 4788187, %v816
    %v818 = vand.u32 2147483647, %v817
    %v820 = vcvt.s32.f32 %v813
    %v821 = vmul.f32 %v820, %v818
    %v822 = vxor.u32 %v821, 2147483648
    %v823 = vsel %vm740, %v822, %v821
    %v824 = vsub.s32 4, %v800
    %v825 = vsel %vm740, %v824, %v800
    %v826 = vsel %vm739, %v191, %v823
    %v827 = vsel %vm739, 0, %v825
    %v828 = vcosq.f32.pop %v826
    %v829 = vsinq.f32.pop %v826
    %vm830 = vweird.f32 %v191
    %v831 = vadd.s32 %v827, 3
    %v832 = vand.u32 %v831, 3
    %vm833 = vcmp.lt.s32.totalorder %v832, 2
    %vm834 = vcmp.eq.s32.totalorder %v832, 0
    %v835 = vxor.u32 %v829, 2147483648
    %v836 = vsel %vm834, %v828, %v835
    %vm837 = vcmp.eq.s32.totalorder %v832, 2
    %v838 = vxor.u32 %v828, 2147483648
    %v839 = vsel %vm837, %v838, %v829
    %v840 = vsel %vm833, %v836, %v839
    %v841 = vsel %vm830, nan, %v840
    %v842 = vand.u32 2147483647, %v192
    %vm843 = vcmp.le.f32.partialorder %v842, 0.7853982
    %vm844 = vcmp.lt.s32.totalorder %v192, 0
    %v845 = vand.u32 %v192, 2139095040
    %v846 = vshrl.u32 %v845, 23
    %v847 = vsub.s32 %v846, 127
    %v848 = vand.u32 2147483647, %v192
    %v849 = vand.u32 %v848, 8388607
    %v850 = vor.u32 %v849, 8388608
    %v851 = vsub.s32 0, %v850
    %v852 = vadd.s32 %v847, 1
    %vm853 = vcmp.gt.s32.totalorder %v852, 0
    %v854 = vsel %vm853, %v852, 0
    %v855 = vshrl.u32 %v854, 5
    %v856 = vand.u32 %v854, 31
    %v857 = vsub.s32 32, %v856
    %v858 = vshrl.u32 683565275, %v857
    %v859 = vshll.u32 683565275, %v856
    %v860 = vshrl.u32 2475754826, %v857
    %v861 = vor.u32 %v859, %v860
    %v862 = vshll.u32 2475754826, %v856
    %v863 = vshrl.u32 2131351028, %v857
    %v864 = vor.u32 %v862, %v863
    %v865 = vshll.u32 2131351028, %v856
    %v866 = vshrl.u32 2102212464, %v857
    %v867 = vor.u32 %v865, %v866
    %v868 = vshll.u32 2102212464, %v856
    %v869 = vshrl.u32 920167782, %v857
    %v870 = vor.u32 %v868, %v869
    %v871 = vshll.u32 920167782, %v856
    %v872 = vshrl.u32 1326507024, %v857
    %v873 = vor.u32 %v871, %v872
    %vm874 = vcmp.lt.s32.totalorder %v855, 1
    %vm875 = vcmp.lt.s32.totalorder %v855, 2
    %vm876 = vcmp.lt.s32.totalorder %v855, 3
    %vm877 = vcmp.lt.s32.totalorder %v855, 4
    %v878 = vsel %vm874, %v858, %v861
    %v879 = vsel %vm877, %v867, 2102212464
    %v880 = vsel %vm876, %v864, %v879
    %v881 = vsel %vm875, %v878, %v880
    %v882 = vsel %vm874, %v861, %v864
    %v883 = vsel %vm877, %v870, 920167782
    %v884 = vsel %vm876, %v867, %v883
    %v885 = vsel %vm875, %v882, %v884
    %v886 = vsel %vm874, %v864, %v867
    %v887 = vsel %vm877, %v873, 1326507024
    %v888 = vsel %vm876, %v870, %v887
    %v889 = vsel %vm875, %v886, %v888
    %v890 = vshll.u32 %v850, 8
    %v891 = vmul.u32.u64.compose %v890, %v889
    %v892 = vextract.low.u32 %v891
    %v893 = vextract.high.u32 %v891
    %v894 = vmul.u32.u64.compose %v890, %v885
    %v895 = vextract.low.u32 %v894
    %v896 = vextract.high.u32 %v894
    %v897 = vmul.u32 %v890, %v881
    %v898 = vadd.s32 %v893, %v895
    %vm899 = vc.u32 %v893, %v895
    %v900 = vadd.s32 %v896, 1
    %v901 = vsel %vm899, %v900, %v896
    %v902 = vadd.s32 %v897, %v901
    %v903 = vadd.s32 %v902, 536870912
    %v904 = vshrl.u32 %v903, 30
    %v905 = vshll.u32 %v904, 30
    %v906 = vsub.s32 %v902, %v905
    %vm907 = vcmp.lt.s32.totalorder %v906, 0
    %v908 = vsub.s32 0, %v906
    %v909 = vsel %vm907, %v908, %v906
    %v910 = vclz %v909
    %v911 = vsub.s32 %v910, 2
    %vm912 = vcmp.gt.s32.totalorder 0, %v911
    %v913 = vsel %vm912, 0, %v911
    %v914 = vsub.s32 32, %v913
    %v915 = vshll.u32 %v906, %v913
    %v916 = vshrl.u32 %v898, %v914
    %v917 = vor.u32 %v915, %v916
    %v918 = vsub.s32 4294967266, %v913
    %v919 = vadd.s32 %v918, 127
    %v920 = vshll.u32 %v919, 23
    %v921 = vor.u32 4788187, %v920
    %v922 = vand.u32 2147483647, %v921
    %v924 = vcvt.s32.f32 %v917
    %v925 = vmul.f32 %v924, %v922
    %v926 = vxor.u32 %v925, 2147483648
    %v927 = vsel %vm844, %v926, %v925
    %v928 = vsub.s32 4, %v904
    %v929 = vsel %vm844, %v928, %v904
    %v930 = vsel %vm843, %v192, %v927
    %v931 = vsel %vm843, 0, %v929
    %v932 = vcosq.f32.pop %v930
    %v933 = vsinq.f32.pop %v930
    %vm934 = vweird.f32 %v192
    %v935 = vadd.s32 %v931, 3
    %v936 = vand.u32 %v935, 3
    %vm937 = vcmp.lt.s32.totalorder %v936, 2
    %vm938 = vcmp.eq.s32.totalorder %v936, 0
    %v939 = vxor.u32 %v933, 2147483648
    %v940 = vsel %vm938, %v932, %v939
    %vm941 = vcmp.eq.s32.totalorder %v936, 2
    %v942 = vxor.u32 %v932, 2147483648
    %v943 = vsel %vm941, %v942, %v933
    %v944 = vsel %vm937, %v940, %v943
    %v945 = vsel %vm934, nan, %v944
    %v946 = vand.u32 2147483647, %v193
    %vm947 = vcmp.le.f32.partialorder %v946, 0.7853982
    %vm948 = vcmp.lt.s32.totalorder %v193, 0
    %v949 = vand.u32 %v193, 2139095040
    %v950 = vshrl.u32 %v949, 23
    %v951 = vsub.s32 %v950, 127
    %v952 = vand.u32 2147483647, %v193
    %v953 = vand.u32 %v952, 8388607
    %v954 = vor.u32 %v953, 8388608
    %v955 = vsub.s32 0, %v954
    %v956 = vadd.s32 %v951, 1
    %vm957 = vcmp.gt.s32.totalorder %v956, 0
    %v958 = vsel %vm957, %v956, 0
    %v959 = vshrl.u32 %v958, 5
    %v960 = vand.u32 %v958, 31
    %v961 = vsub.s32 32, %v960
    %v962 = vshrl.u32 683565275, %v961
    %v963 = vshll.u32 683565275, %v960
    %v964 = vshrl.u32 2475754826, %v961
    %v965 = vor.u32 %v963, %v964
    %v966 = vshll.u32 2475754826, %v960
    %v967 = vshrl.u32 2131351028, %v961
    %v968 = vor.u32 %v966, %v967
    %v969 = vshll.u32 2131351028, %v960
    %v970 = vshrl.u32 2102212464, %v961
    %v971 = vor.u32 %v969, %v970
    %v972 = vshll.u32 2102212464, %v960
    %v973 = vshrl.u32 920167782, %v961
    %v974 = vor.u32 %v972, %v973
    %v975 = vshll.u32 920167782, %v960
    %v976 = vshrl.u32 1326507024, %v961
    %v977 = vor.u32 %v975, %v976
    %vm978 = vcmp.lt.s32.totalorder %v959, 1
    %vm979 = vcmp.lt.s32.totalorder %v959, 2
    %vm980 = vcmp.lt.s32.totalorder %v959, 3
    %vm981 = vcmp.lt.s32.totalorder %v959, 4
    %v982 = vsel %vm978, %v962, %v965
    %v983 = vsel %vm981, %v971, 2102212464
    %v984 = vsel %vm980, %v968, %v983
    %v985 = vsel %vm979, %v982, %v984
    %v986 = vsel %vm978, %v965, %v968
    %v987 = vsel %vm981, %v974, 920167782
    %v988 = vsel %vm980, %v971, %v987
    %v989 = vsel %vm979, %v986, %v988
    %v990 = vsel %vm978, %v968, %v971
    %v991 = vsel %vm981, %v977, 1326507024
    %v992 = vsel %vm980, %v974, %v991
    %v993 = vsel %vm979, %v990, %v992
    %v994 = vshll.u32 %v954, 8
    %v995 = vmul.u32.u64.compose %v994, %v993
    %v996 = vextract.low.u32 %v995
    %v997 = vextract.high.u32 %v995
    %v998 = vmul.u32.u64.compose %v994, %v989
    %v999 = vextract.low.u32 %v998
    %v1000 = vextract.high.u32 %v998
    %v1001 = vmul.u32 %v994, %v985
    %v1002 = vadd.s32 %v997, %v999
    %vm1003 = vc.u32 %v997, %v999
    %v1004 = vadd.s32 %v1000, 1
    %v1005 = vsel %vm1003, %v1004, %v1000
    %v1006 = vadd.s32 %v1001, %v1005
    %v1007 = vadd.s32 %v1006, 536870912
    %v1008 = vshrl.u32 %v1007, 30
    %v1009 = vshll.u32 %v1008, 30
    %v1010 = vsub.s32 %v1006, %v1009
    %vm1011 = vcmp.lt.s32.totalorder %v1010, 0
    %v1012 = vsub.s32 0, %v1010
    %v1013 = vsel %vm1011, %v1012, %v1010
    %v1014 = vclz %v1013
    %v1015 = vsub.s32 %v1014, 2
    %vm1016 = vcmp.gt.s32.totalorder 0, %v1015
    %v1017 = vsel %vm1016, 0, %v1015
    %v1018 = vsub.s32 32, %v1017
    %v1019 = vshll.u32 %v1010, %v1017
    %v1020 = vshrl.u32 %v1002, %v1018
    %v1021 = vor.u32 %v1019, %v1020
    %v1022 = vsub.s32 4294967266, %v1017
    %v1023 = vadd.s32 %v1022, 127
    %v1024 = vshll.u32 %v1023, 23
    %v1025 = vor.u32 4788187, %v1024
    %v1026 = vand.u32 2147483647, %v1025
    %v1028 = vcvt.s32.f32 %v1021
    %v1029 = vmul.f32 %v1028, %v1026
    %v1030 = vxor.u32 %v1029, 2147483648
    %v1031 = vsel %vm948, %v1030, %v1029
    %v1032 = vsub.s32 4, %v1008
    %v1033 = vsel %vm948, %v1032, %v1008
    %v1034 = vsel %vm947, %v193, %v1031
    %v1035 = vsel %vm947, 0, %v1033
    %v1036 = vcosq.f32.pop %v1034
    %v1037 = vsinq.f32.pop %v1034
    %vm1038 = vweird.f32 %v193
    %v1039 = vadd.s32 %v1035, 3
    %v1040 = vand.u32 %v1039, 3
    %vm1041 = vcmp.lt.s32.totalorder %v1040, 2
    %vm1042 = vcmp.eq.s32.totalorder %v1040, 0
    %v1043 = vxor.u32 %v1037, 2147483648
    %v1044 = vsel %vm1042, %v1036, %v1043
    %vm1045 = vcmp.eq.s32.totalorder %v1040, 2
    %v1046 = vxor.u32 %v1036, 2147483648
    %v1047 = vsel %vm1045, %v1046, %v1037
    %v1048 = vsel %vm1041, %v1044, %v1047
    %v1049 = vsel %vm1038, nan, %v1048
    %v1050 = vand.u32 2147483647, %v194
    %vm1051 = vcmp.le.f32.partialorder %v1050, 0.7853982
    %vm1052 = vcmp.lt.s32.totalorder %v194, 0
    %v1053 = vand.u32 %v194, 2139095040
    %v1054 = vshrl.u32 %v1053, 23
    %v1055 = vsub.s32 %v1054, 127
    %v1056 = vand.u32 2147483647, %v194
    %v1057 = vand.u32 %v1056, 8388607
    %v1058 = vor.u32 %v1057, 8388608
    %v1059 = vsub.s32 0, %v1058
    %v1060 = vadd.s32 %v1055, 1
    %vm1061 = vcmp.gt.s32.totalorder %v1060, 0
    %v1062 = vsel %vm1061, %v1060, 0
    %v1063 = vshrl.u32 %v1062, 5
    %v1064 = vand.u32 %v1062, 31
    %v1065 = vsub.s32 32, %v1064
    %v1066 = vshrl.u32 683565275, %v1065
    %v1067 = vshll.u32 683565275, %v1064
    %v1068 = vshrl.u32 2475754826, %v1065
    %v1069 = vor.u32 %v1067, %v1068
    %v1070 = vshll.u32 2475754826, %v1064
    %v1071 = vshrl.u32 2131351028, %v1065
    %v1072 = vor.u32 %v1070, %v1071
    %v1073 = vshll.u32 2131351028, %v1064
    %v1074 = vshrl.u32 2102212464, %v1065
    %v1075 = vor.u32 %v1073, %v1074
    %v1076 = vshll.u32 2102212464, %v1064
    %v1077 = vshrl.u32 920167782, %v1065
    %v1078 = vor.u32 %v1076, %v1077
    %v1079 = vshll.u32 920167782, %v1064
    %v1080 = vshrl.u32 1326507024, %v1065
    %v1081 = vor.u32 %v1079, %v1080
    %vm1082 = vcmp.lt.s32.totalorder %v1063, 1
    %vm1083 = vcmp.lt.s32.totalorder %v1063, 2
    %vm1084 = vcmp.lt.s32.totalorder %v1063, 3
    %vm1085 = vcmp.lt.s32.totalorder %v1063, 4
    %v1086 = vsel %vm1082, %v1066, %v1069
    %v1087 = vsel %vm1085, %v1075, 2102212464
    %v1088 = vsel %vm1084, %v1072, %v1087
    %v1089 = vsel %vm1083, %v1086, %v1088
    %v1090 = vsel %vm1082, %v1069, %v1072
    %v1091 = vsel %vm1085, %v1078, 920167782
    %v1092 = vsel %vm1084, %v1075, %v1091
    %v1093 = vsel %vm1083, %v1090, %v1092
    %v1094 = vsel %vm1082, %v1072, %v1075
    %v1095 = vsel %vm1085, %v1081, 1326507024
    %v1096 = vsel %vm1084, %v1078, %v1095
    %v1097 = vsel %vm1083, %v1094, %v1096
    %v1098 = vshll.u32 %v1058, 8
    %v1099 = vmul.u32.u64.compose %v1098, %v1097
    %v1100 = vextract.low.u32 %v1099
    %v1101 = vextract.high.u32 %v1099
    %v1102 = vmul.u32.u64.compose %v1098, %v1093
    %v1103 = vextract.low.u32 %v1102
    %v1104 = vextract.high.u32 %v1102
    %v1105 = vmul.u32 %v1098, %v1089
    %v1106 = vadd.s32 %v1101, %v1103
    %vm1107 = vc.u32 %v1101, %v1103
    %v1108 = vadd.s32 %v1104, 1
    %v1109 = vsel %vm1107, %v1108, %v1104
    %v1110 = vadd.s32 %v1105, %v1109
    %v1111 = vadd.s32 %v1110, 536870912
    %v1112 = vshrl.u32 %v1111, 30
    %v1113 = vshll.u32 %v1112, 30
    %v1114 = vsub.s32 %v1110, %v1113
    %vm1115 = vcmp.lt.s32.totalorder %v1114, 0
    %v1116 = vsub.s32 0, %v1114
    %v1117 = vsel %vm1115, %v1116, %v1114
    %v1118 = vclz %v1117
    %v1119 = vsub.s32 %v1118, 2
    %vm1120 = vcmp.gt.s32.totalorder 0, %v1119
    %v1121 = vsel %vm1120, 0, %v1119
    %v1122 = vsub.s32 32, %v1121
    %v1123 = vshll.u32 %v1114, %v1121
    %v1124 = vshrl.u32 %v1106, %v1122
    %v1125 = vor.u32 %v1123, %v1124
    %v1126 = vsub.s32 4294967266, %v1121
    %v1127 = vadd.s32 %v1126, 127
    %v1128 = vshll.u32 %v1127, 23
    %v1129 = vor.u32 4788187, %v1128
    %v1130 = vand.u32 2147483647, %v1129
    %v1132 = vcvt.s32.f32 %v1125
    %v1133 = vmul.f32 %v1132, %v1130
    %v1134 = vxor.u32 %v1133, 2147483648
    %v1135 = vsel %vm1052, %v1134, %v1133
    %v1136 = vsub.s32 4, %v1112
    %v1137 = vsel %vm1052, %v1136, %v1112
    %v1138 = vsel %vm1051, %v194, %v1135
    %v1139 = vsel %vm1051, 0, %v1137
    %v1140 = vcosq.f32.pop %v1138
    %v1141 = vsinq.f32.pop %v1138
    %vm1142 = vweird.f32 %v194
    %v1143 = vadd.s32 %v1139, 3
    %v1144 = vand.u32 %v1143, 3
    %vm1145 = vcmp.lt.s32.totalorder %v1144, 2
    %vm1146 = vcmp.eq.s32.totalorder %v1144, 0
    %v1147 = vxor.u32 %v1141, 2147483648
    %v1148 = vsel %vm1146, %v1140, %v1147
    %vm1149 = vcmp.eq.s32.totalorder %v1144, 2
    %v1150 = vxor.u32 %v1140, 2147483648
    %v1151 = vsel %vm1149, %v1150, %v1141
    %v1152 = vsel %vm1145, %v1148, %v1151
    %v1153 = vsel %vm1142, nan, %v1152
    %v1154 = vand.u32 2147483647, %v195
    %vm1155 = vcmp.le.f32.partialorder %v1154, 0.7853982
    %vm1156 = vcmp.lt.s32.totalorder %v195, 0
    %v1157 = vand.u32 %v195, 2139095040
    %v1158 = vshrl.u32 %v1157, 23
    %v1159 = vsub.s32 %v1158, 127
    %v1160 = vand.u32 2147483647, %v195
    %v1161 = vand.u32 %v1160, 8388607
    %v1162 = vor.u32 %v1161, 8388608
    %v1163 = vsub.s32 0, %v1162
    %v1164 = vadd.s32 %v1159, 1
    %vm1165 = vcmp.gt.s32.totalorder %v1164, 0
    %v1166 = vsel %vm1165, %v1164, 0
    %v1167 = vshrl.u32 %v1166, 5
    %v1168 = vand.u32 %v1166, 31
    %v1169 = vsub.s32 32, %v1168
    %v1170 = vshrl.u32 683565275, %v1169
    %v1171 = vshll.u32 683565275, %v1168
    %v1172 = vshrl.u32 2475754826, %v1169
    %v1173 = vor.u32 %v1171, %v1172
    %v1174 = vshll.u32 2475754826, %v1168
    %v1175 = vshrl.u32 2131351028, %v1169
    %v1176 = vor.u32 %v1174, %v1175
    %v1177 = vshll.u32 2131351028, %v1168
    %v1178 = vshrl.u32 2102212464, %v1169
    %v1179 = vor.u32 %v1177, %v1178
    %v1180 = vshll.u32 2102212464, %v1168
    %v1181 = vshrl.u32 920167782, %v1169
    %v1182 = vor.u32 %v1180, %v1181
    %v1183 = vshll.u32 920167782, %v1168
    %v1184 = vshrl.u32 1326507024, %v1169
    %v1185 = vor.u32 %v1183, %v1184
    %vm1186 = vcmp.lt.s32.totalorder %v1167, 1
    %vm1187 = vcmp.lt.s32.totalorder %v1167, 2
    %vm1188 = vcmp.lt.s32.totalorder %v1167, 3
    %vm1189 = vcmp.lt.s32.totalorder %v1167, 4
    %v1190 = vsel %vm1186, %v1170, %v1173
    %v1191 = vsel %vm1189, %v1179, 2102212464
    %v1192 = vsel %vm1188, %v1176, %v1191
    %v1193 = vsel %vm1187, %v1190, %v1192
    %v1194 = vsel %vm1186, %v1173, %v1176
    %v1195 = vsel %vm1189, %v1182, 920167782
    %v1196 = vsel %vm1188, %v1179, %v1195
    %v1197 = vsel %vm1187, %v1194, %v1196
    %v1198 = vsel %vm1186, %v1176, %v1179
    %v1199 = vsel %vm1189, %v1185, 1326507024
    %v1200 = vsel %vm1188, %v1182, %v1199
    %v1201 = vsel %vm1187, %v1198, %v1200
    %v1202 = vshll.u32 %v1162, 8
    %v1203 = vmul.u32.u64.compose %v1202, %v1201
    %v1204 = vextract.low.u32 %v1203
    %v1205 = vextract.high.u32 %v1203
    %v1206 = vmul.u32.u64.compose %v1202, %v1197
    %v1207 = vextract.low.u32 %v1206
    %v1208 = vextract.high.u32 %v1206
    %v1209 = vmul.u32 %v1202, %v1193
    %v1210 = vadd.s32 %v1205, %v1207
    %vm1211 = vc.u32 %v1205, %v1207
    %v1212 = vadd.s32 %v1208, 1
    %v1213 = vsel %vm1211, %v1212, %v1208
    %v1214 = vadd.s32 %v1209, %v1213
    %v1215 = vadd.s32 %v1214, 536870912
    %v1216 = vshrl.u32 %v1215, 30
    %v1217 = vshll.u32 %v1216, 30
    %v1218 = vsub.s32 %v1214, %v1217
    %vm1219 = vcmp.lt.s32.totalorder %v1218, 0
    %v1220 = vsub.s32 0, %v1218
    %v1221 = vsel %vm1219, %v1220, %v1218
    %v1222 = vclz %v1221
    %v1223 = vsub.s32 %v1222, 2
    %vm1224 = vcmp.gt.s32.totalorder 0, %v1223
    %v1225 = vsel %vm1224, 0, %v1223
    %v1226 = vsub.s32 32, %v1225
    %v1227 = vshll.u32 %v1218, %v1225
    %v1228 = vshrl.u32 %v1210, %v1226
    %v1229 = vor.u32 %v1227, %v1228
    %v1230 = vsub.s32 4294967266, %v1225
    %v1231 = vadd.s32 %v1230, 127
    %v1232 = vshll.u32 %v1231, 23
    %v1233 = vor.u32 4788187, %v1232
    %v1234 = vand.u32 2147483647, %v1233
    %v1236 = vcvt.s32.f32 %v1229
    %v1237 = vmul.f32 %v1236, %v1234
    %v1238 = vxor.u32 %v1237, 2147483648
    %v1239 = vsel %vm1156, %v1238, %v1237
    %v1240 = vsub.s32 4, %v1216
    %v1241 = vsel %vm1156, %v1240, %v1216
    %v1242 = vsel %vm1155, %v195, %v1239
    %v1243 = vsel %vm1155, 0, %v1241
    %v1244 = vcosq.f32.pop %v1242
    %v1245 = vsinq.f32.pop %v1242
    %vm1246 = vweird.f32 %v195
    %v1247 = vadd.s32 %v1243, 3
    %v1248 = vand.u32 %v1247, 3
    %vm1249 = vcmp.lt.s32.totalorder %v1248, 2
    %vm1250 = vcmp.eq.s32.totalorder %v1248, 0
    %v1251 = vxor.u32 %v1245, 2147483648
    %v1252 = vsel %vm1250, %v1244, %v1251
    %vm1253 = vcmp.eq.s32.totalorder %v1248, 2
    %v1254 = vxor.u32 %v1244, 2147483648
    %v1255 = vsel %vm1253, %v1254, %v1245
    %v1256 = vsel %vm1249, %v1252, %v1255
    %v1257 = vsel %vm1246, nan, %v1256
    %v1258 = vand.u32 2147483647, %v196
    %vm1259 = vcmp.le.f32.partialorder %v1258, 0.7853982
    %vm1260 = vcmp.lt.s32.totalorder %v196, 0
    %v1261 = vand.u32 %v196, 2139095040
    %v1262 = vshrl.u32 %v1261, 23
    %v1263 = vsub.s32 %v1262, 127
    %v1264 = vand.u32 2147483647, %v196
    %v1265 = vand.u32 %v1264, 8388607
    %v1266 = vor.u32 %v1265, 8388608
    %v1267 = vsub.s32 0, %v1266
    %v1268 = vadd.s32 %v1263, 1
    %vm1269 = vcmp.gt.s32.totalorder %v1268, 0
    %v1270 = vsel %vm1269, %v1268, 0
    %v1271 = vshrl.u32 %v1270, 5
    %v1272 = vand.u32 %v1270, 31
    %v1273 = vsub.s32 32, %v1272
    %v1274 = vshrl.u32 683565275, %v1273
    %v1275 = vshll.u32 683565275, %v1272
    %v1276 = vshrl.u32 2475754826, %v1273
    %v1277 = vor.u32 %v1275, %v1276
    %v1278 = vshll.u32 2475754826, %v1272
    %v1279 = vshrl.u32 2131351028, %v1273
    %v1280 = vor.u32 %v1278, %v1279
    %v1281 = vshll.u32 2131351028, %v1272
    %v1282 = vshrl.u32 2102212464, %v1273
    %v1283 = vor.u32 %v1281, %v1282
    %v1284 = vshll.u32 2102212464, %v1272
    %v1285 = vshrl.u32 920167782, %v1273
    %v1286 = vor.u32 %v1284, %v1285
    %v1287 = vshll.u32 920167782, %v1272
    %v1288 = vshrl.u32 1326507024, %v1273
    %v1289 = vor.u32 %v1287, %v1288
    %vm1290 = vcmp.lt.s32.totalorder %v1271, 1
    %vm1291 = vcmp.lt.s32.totalorder %v1271, 2
    %vm1292 = vcmp.lt.s32.totalorder %v1271, 3
    %vm1293 = vcmp.lt.s32.totalorder %v1271, 4
    %v1294 = vsel %vm1290, %v1274, %v1277
    %v1295 = vsel %vm1293, %v1283, 2102212464
    %v1296 = vsel %vm1292, %v1280, %v1295
    %v1297 = vsel %vm1291, %v1294, %v1296
    %v1298 = vsel %vm1290, %v1277, %v1280
    %v1299 = vsel %vm1293, %v1286, 920167782
    %v1300 = vsel %vm1292, %v1283, %v1299
    %v1301 = vsel %vm1291, %v1298, %v1300
    %v1302 = vsel %vm1290, %v1280, %v1283
    %v1303 = vsel %vm1293, %v1289, 1326507024
    %v1304 = vsel %vm1292, %v1286, %v1303
    %v1305 = vsel %vm1291, %v1302, %v1304
    %v1306 = vshll.u32 %v1266, 8
    %v1307 = vmul.u32.u64.compose %v1306, %v1305
    %v1308 = vextract.low.u32 %v1307
    %v1309 = vextract.high.u32 %v1307
    %v1310 = vmul.u32.u64.compose %v1306, %v1301
    %v1311 = vextract.low.u32 %v1310
    %v1312 = vextract.high.u32 %v1310
    %v1313 = vmul.u32 %v1306, %v1297
    %v1314 = vadd.s32 %v1309, %v1311
    %vm1315 = vc.u32 %v1309, %v1311
    %v1316 = vadd.s32 %v1312, 1
    %v1317 = vsel %vm1315, %v1316, %v1312
    %v1318 = vadd.s32 %v1313, %v1317
    %v1319 = vadd.s32 %v1318, 536870912
    %v1320 = vshrl.u32 %v1319, 30
    %v1321 = vshll.u32 %v1320, 30
    %v1322 = vsub.s32 %v1318, %v1321
    %vm1323 = vcmp.lt.s32.totalorder %v1322, 0
    %v1324 = vsub.s32 0, %v1322
    %v1325 = vsel %vm1323, %v1324, %v1322
    %v1326 = vclz %v1325
    %v1327 = vsub.s32 %v1326, 2
    %vm1328 = vcmp.gt.s32.totalorder 0, %v1327
    %v1329 = vsel %vm1328, 0, %v1327
    %v1330 = vsub.s32 32, %v1329
    %v1331 = vshll.u32 %v1322, %v1329
    %v1332 = vshrl.u32 %v1314, %v1330
    %v1333 = vor.u32 %v1331, %v1332
    %v1334 = vsub.s32 4294967266, %v1329
    %v1335 = vadd.s32 %v1334, 127
    %v1336 = vshll.u32 %v1335, 23
    %v1337 = vor.u32 4788187, %v1336
    %v1338 = vand.u32 2147483647, %v1337
    %v1340 = vcvt.s32.f32 %v1333
    %v1341 = vmul.f32 %v1340, %v1338
    %v1342 = vxor.u32 %v1341, 2147483648
    %v1343 = vsel %vm1260, %v1342, %v1341
    %v1344 = vsub.s32 4, %v1320
    %v1345 = vsel %vm1260, %v1344, %v1320
    %v1346 = vsel %vm1259, %v196, %v1343
    %v1347 = vsel %vm1259, 0, %v1345
    %v1348 = vcosq.f32.pop %v1346
    %v1349 = vsinq.f32.pop %v1346
    %vm1350 = vweird.f32 %v196
    %v1351 = vadd.s32 %v1347, 3
    %v1352 = vand.u32 %v1351, 3
    %vm1353 = vcmp.lt.s32.totalorder %v1352, 2
    %vm1354 = vcmp.eq.s32.totalorder %v1352, 0
    %v1355 = vxor.u32 %v1349, 2147483648
    %v1356 = vsel %vm1354, %v1348, %v1355
    %vm1357 = vcmp.eq.s32.totalorder %v1352, 2
    %v1358 = vxor.u32 %v1348, 2147483648
    %v1359 = vsel %vm1357, %v1358, %v1349
    %v1360 = vsel %vm1353, %v1356, %v1359
    %v1361 = vsel %vm1350, nan, %v1360
    %v1362 = vand.u32 2147483647, %v197
    %vm1363 = vcmp.le.f32.partialorder %v1362, 0.7853982
    %vm1364 = vcmp.lt.s32.totalorder %v197, 0
    %v1365 = vand.u32 %v197, 2139095040
    %v1366 = vshrl.u32 %v1365, 23
    %v1367 = vsub.s32 %v1366, 127
    %v1368 = vand.u32 2147483647, %v197
    %v1369 = vand.u32 %v1368, 8388607
    %v1370 = vor.u32 %v1369, 8388608
    %v1371 = vsub.s32 0, %v1370
    %v1372 = vadd.s32 %v1367, 1
    %vm1373 = vcmp.gt.s32.totalorder %v1372, 0
    %v1374 = vsel %vm1373, %v1372, 0
    %v1375 = vshrl.u32 %v1374, 5
    %v1376 = vand.u32 %v1374, 31
    %v1377 = vsub.s32 32, %v1376
    %v1378 = vshrl.u32 683565275, %v1377
    %v1379 = vshll.u32 683565275, %v1376
    %v1380 = vshrl.u32 2475754826, %v1377
    %v1381 = vor.u32 %v1379, %v1380
    %v1382 = vshll.u32 2475754826, %v1376
    %v1383 = vshrl.u32 2131351028, %v1377
    %v1384 = vor.u32 %v1382, %v1383
    %v1385 = vshll.u32 2131351028, %v1376
    %v1386 = vshrl.u32 2102212464, %v1377
    %v1387 = vor.u32 %v1385, %v1386
    %v1388 = vshll.u32 2102212464, %v1376
    %v1389 = vshrl.u32 920167782, %v1377
    %v1390 = vor.u32 %v1388, %v1389
    %v1391 = vshll.u32 920167782, %v1376
    %v1392 = vshrl.u32 1326507024, %v1377
    %v1393 = vor.u32 %v1391, %v1392
    %vm1394 = vcmp.lt.s32.totalorder %v1375, 1
    %vm1395 = vcmp.lt.s32.totalorder %v1375, 2
    %vm1396 = vcmp.lt.s32.totalorder %v1375, 3
    %vm1397 = vcmp.lt.s32.totalorder %v1375, 4
    %v1398 = vsel %vm1394, %v1378, %v1381
    %v1399 = vsel %vm1397, %v1387, 2102212464
    %v1400 = vsel %vm1396, %v1384, %v1399
    %v1401 = vsel %vm1395, %v1398, %v1400
    %v1402 = vsel %vm1394, %v1381, %v1384
    %v1403 = vsel %vm1397, %v1390, 920167782
    %v1404 = vsel %vm1396, %v1387, %v1403
    %v1405 = vsel %vm1395, %v1402, %v1404
    %v1406 = vsel %vm1394, %v1384, %v1387
    %v1407 = vsel %vm1397, %v1393, 1326507024
    %v1408 = vsel %vm1396, %v1390, %v1407
    %v1409 = vsel %vm1395, %v1406, %v1408
    %v1410 = vshll.u32 %v1370, 8
    %v1411 = vmul.u32.u64.compose %v1410, %v1409
    %v1412 = vextract.low.u32 %v1411
    %v1413 = vextract.high.u32 %v1411
    %v1414 = vmul.u32.u64.compose %v1410, %v1405
    %v1415 = vextract.low.u32 %v1414
    %v1416 = vextract.high.u32 %v1414
    %v1417 = vmul.u32 %v1410, %v1401
    %v1418 = vadd.s32 %v1413, %v1415
    %vm1419 = vc.u32 %v1413, %v1415
    %v1420 = vadd.s32 %v1416, 1
    %v1421 = vsel %vm1419, %v1420, %v1416
    %v1422 = vadd.s32 %v1417, %v1421
    %v1423 = vadd.s32 %v1422, 536870912
    %v1424 = vshrl.u32 %v1423, 30
    %v1425 = vshll.u32 %v1424, 30
    %v1426 = vsub.s32 %v1422, %v1425
    %vm1427 = vcmp.lt.s32.totalorder %v1426, 0
    %v1428 = vsub.s32 0, %v1426
    %v1429 = vsel %vm1427, %v1428, %v1426
    %v1430 = vclz %v1429
    %v1431 = vsub.s32 %v1430, 2
    %vm1432 = vcmp.gt.s32.totalorder 0, %v1431
    %v1433 = vsel %vm1432, 0, %v1431
    %v1434 = vsub.s32 32, %v1433
    %v1435 = vshll.u32 %v1426, %v1433
    %v1436 = vshrl.u32 %v1418, %v1434
    %v1437 = vor.u32 %v1435, %v1436
    %v1438 = vsub.s32 4294967266, %v1433
    %v1439 = vadd.s32 %v1438, 127
    %v1440 = vshll.u32 %v1439, 23
    %v1441 = vor.u32 4788187, %v1440
    %v1442 = vand.u32 2147483647, %v1441
    %v1444 = vcvt.s32.f32 %v1437
    %v1445 = vmul.f32 %v1444, %v1442
    %v1446 = vxor.u32 %v1445, 2147483648
    %v1447 = vsel %vm1364, %v1446, %v1445
    %v1448 = vsub.s32 4, %v1424
    %v1449 = vsel %vm1364, %v1448, %v1424
    %v1450 = vsel %vm1363, %v197, %v1447
    %v1451 = vsel %vm1363, 0, %v1449
    %v1452 = vcosq.f32.pop %v1450
    %v1453 = vsinq.f32.pop %v1450
    %vm1454 = vweird.f32 %v197
    %v1455 = vadd.s32 %v1451, 3
    %v1456 = vand.u32 %v1455, 3
    %vm1457 = vcmp.lt.s32.totalorder %v1456, 2
    %vm1458 = vcmp.eq.s32.totalorder %v1456, 0
    %v1459 = vxor.u32 %v1453, 2147483648
    %v1460 = vsel %vm1458, %v1452, %v1459
    %vm1461 = vcmp.eq.s32.totalorder %v1456, 2
    %v1462 = vxor.u32 %v1452, 2147483648
    %v1463 = vsel %vm1461, %v1462, %v1453
    %v1464 = vsel %vm1457, %v1460, %v1463
    %v1465 = vsel %vm1454, nan, %v1464
    %v1466 = vand.u32 2147483647, %v198
    %vm1467 = vcmp.le.f32.partialorder %v1466, 0.7853982
    %vm1468 = vcmp.lt.s32.totalorder %v198, 0
    %v1469 = vand.u32 %v198, 2139095040
    %v1470 = vshrl.u32 %v1469, 23
    %v1471 = vsub.s32 %v1470, 127
    %v1472 = vand.u32 2147483647, %v198
    %v1473 = vand.u32 %v1472, 8388607
    %v1474 = vor.u32 %v1473, 8388608
    %v1475 = vsub.s32 0, %v1474
    %v1476 = vadd.s32 %v1471, 1
    %vm1477 = vcmp.gt.s32.totalorder %v1476, 0
    %v1478 = vsel %vm1477, %v1476, 0
    %v1479 = vshrl.u32 %v1478, 5
    %v1480 = vand.u32 %v1478, 31
    %v1481 = vsub.s32 32, %v1480
    %v1482 = vshrl.u32 683565275, %v1481
    %v1483 = vshll.u32 683565275, %v1480
    %v1484 = vshrl.u32 2475754826, %v1481
    %v1485 = vor.u32 %v1483, %v1484
    %v1486 = vshll.u32 2475754826, %v1480
    %v1487 = vshrl.u32 2131351028, %v1481
    %v1488 = vor.u32 %v1486, %v1487
    %v1489 = vshll.u32 2131351028, %v1480
    %v1490 = vshrl.u32 2102212464, %v1481
    %v1491 = vor.u32 %v1489, %v1490
    %v1492 = vshll.u32 2102212464, %v1480
    %v1493 = vshrl.u32 920167782, %v1481
    %v1494 = vor.u32 %v1492, %v1493
    %v1495 = vshll.u32 920167782, %v1480
    %v1496 = vshrl.u32 1326507024, %v1481
    %v1497 = vor.u32 %v1495, %v1496
    %vm1498 = vcmp.lt.s32.totalorder %v1479, 1
    %vm1499 = vcmp.lt.s32.totalorder %v1479, 2
    %vm1500 = vcmp.lt.s32.totalorder %v1479, 3
    %vm1501 = vcmp.lt.s32.totalorder %v1479, 4
    %v1502 = vsel %vm1498, %v1482, %v1485
    %v1503 = vsel %vm1501, %v1491, 2102212464
    %v1504 = vsel %vm1500, %v1488, %v1503
    %v1505 = vsel %vm1499, %v1502, %v1504
    %v1506 = vsel %vm1498, %v1485, %v1488
    %v1507 = vsel %vm1501, %v1494, 920167782
    %v1508 = vsel %vm1500, %v1491, %v1507
    %v1509 = vsel %vm1499, %v1506, %v1508
    %v1510 = vsel %vm1498, %v1488, %v1491
    %v1511 = vsel %vm1501, %v1497, 1326507024
    %v1512 = vsel %vm1500, %v1494, %v1511
    %v1513 = vsel %vm1499, %v1510, %v1512
    %v1514 = vshll.u32 %v1474, 8
    %v1515 = vmul.u32.u64.compose %v1514, %v1513
    %v1516 = vextract.low.u32 %v1515
    %v1517 = vextract.high.u32 %v1515
    %v1518 = vmul.u32.u64.compose %v1514, %v1509
    %v1519 = vextract.low.u32 %v1518
    %v1520 = vextract.high.u32 %v1518
    %v1521 = vmul.u32 %v1514, %v1505
    %v1522 = vadd.s32 %v1517, %v1519
    %vm1523 = vc.u32 %v1517, %v1519
    %v1524 = vadd.s32 %v1520, 1
    %v1525 = vsel %vm1523, %v1524, %v1520
    %v1526 = vadd.s32 %v1521, %v1525
    %v1527 = vadd.s32 %v1526, 536870912
    %v1528 = vshrl.u32 %v1527, 30
    %v1529 = vshll.u32 %v1528, 30
    %v1530 = vsub.s32 %v1526, %v1529
    %vm1531 = vcmp.lt.s32.totalorder %v1530, 0
    %v1532 = vsub.s32 0, %v1530
    %v1533 = vsel %vm1531, %v1532, %v1530
    %v1534 = vclz %v1533
    %v1535 = vsub.s32 %v1534, 2
    %vm1536 = vcmp.gt.s32.totalorder 0, %v1535
    %v1537 = vsel %vm1536, 0, %v1535
    %v1538 = vsub.s32 32, %v1537
    %v1539 = vshll.u32 %v1530, %v1537
    %v1540 = vshrl.u32 %v1522, %v1538
    %v1541 = vor.u32 %v1539, %v1540
    %v1542 = vsub.s32 4294967266, %v1537
    %v1543 = vadd.s32 %v1542, 127
    %v1544 = vshll.u32 %v1543, 23
    %v1545 = vor.u32 4788187, %v1544
    %v1546 = vand.u32 2147483647, %v1545
    %v1548 = vcvt.s32.f32 %v1541
    %v1549 = vmul.f32 %v1548, %v1546
    %v1550 = vxor.u32 %v1549, 2147483648
    %v1551 = vsel %vm1468, %v1550, %v1549
    %v1552 = vsub.s32 4, %v1528
    %v1553 = vsel %vm1468, %v1552, %v1528
    %v1554 = vsel %vm1467, %v198, %v1551
    %v1555 = vsel %vm1467, 0, %v1553
    %v1556 = vcosq.f32.pop %v1554
    %v1557 = vsinq.f32.pop %v1554
    %vm1558 = vweird.f32 %v198
    %v1559 = vadd.s32 %v1555, 3
    %v1560 = vand.u32 %v1559, 3
    %vm1561 = vcmp.lt.s32.totalorder %v1560, 2
    %vm1562 = vcmp.eq.s32.totalorder %v1560, 0
    %v1563 = vxor.u32 %v1557, 2147483648
    %v1564 = vsel %vm1562, %v1556, %v1563
    %vm1565 = vcmp.eq.s32.totalorder %v1560, 2
    %v1566 = vxor.u32 %v1556, 2147483648
    %v1567 = vsel %vm1565, %v1566, %v1557
    %v1568 = vsel %vm1561, %v1564, %v1567
    %v1569 = vsel %vm1558, nan, %v1568
    %v1570 = vand.u32 2147483647, %v199
    %vm1571 = vcmp.le.f32.partialorder %v1570, 0.7853982
    %vm1572 = vcmp.lt.s32.totalorder %v199, 0
    %v1573 = vand.u32 %v199, 2139095040
    %v1574 = vshrl.u32 %v1573, 23
    %v1575 = vsub.s32 %v1574, 127
    %v1576 = vand.u32 2147483647, %v199
    %v1577 = vand.u32 %v1576, 8388607
    %v1578 = vor.u32 %v1577, 8388608
    %v1579 = vsub.s32 0, %v1578
    %v1580 = vadd.s32 %v1575, 1
    %vm1581 = vcmp.gt.s32.totalorder %v1580, 0
    %v1582 = vsel %vm1581, %v1580, 0
    %v1583 = vshrl.u32 %v1582, 5
    %v1584 = vand.u32 %v1582, 31
    %v1585 = vsub.s32 32, %v1584
    %v1586 = vshrl.u32 683565275, %v1585
    %v1587 = vshll.u32 683565275, %v1584
    %v1588 = vshrl.u32 2475754826, %v1585
    %v1589 = vor.u32 %v1587, %v1588
    %v1590 = vshll.u32 2475754826, %v1584
    %v1591 = vshrl.u32 2131351028, %v1585
    %v1592 = vor.u32 %v1590, %v1591
    %v1593 = vshll.u32 2131351028, %v1584
    %v1594 = vshrl.u32 2102212464, %v1585
    %v1595 = vor.u32 %v1593, %v1594
    %v1596 = vshll.u32 2102212464, %v1584
    %v1597 = vshrl.u32 920167782, %v1585
    %v1598 = vor.u32 %v1596, %v1597
    %v1599 = vshll.u32 920167782, %v1584
    %v1600 = vshrl.u32 1326507024, %v1585
    %v1601 = vor.u32 %v1599, %v1600
    %vm1602 = vcmp.lt.s32.totalorder %v1583, 1
    %vm1603 = vcmp.lt.s32.totalorder %v1583, 2
    %vm1604 = vcmp.lt.s32.totalorder %v1583, 3
    %vm1605 = vcmp.lt.s32.totalorder %v1583, 4
    %v1606 = vsel %vm1602, %v1586, %v1589
    %v1607 = vsel %vm1605, %v1595, 2102212464
    %v1608 = vsel %vm1604, %v1592, %v1607
    %v1609 = vsel %vm1603, %v1606, %v1608
    %v1610 = vsel %vm1602, %v1589, %v1592
    %v1611 = vsel %vm1605, %v1598, 920167782
    %v1612 = vsel %vm1604, %v1595, %v1611
    %v1613 = vsel %vm1603, %v1610, %v1612
    %v1614 = vsel %vm1602, %v1592, %v1595
    %v1615 = vsel %vm1605, %v1601, 1326507024
    %v1616 = vsel %vm1604, %v1598, %v1615
    %v1617 = vsel %vm1603, %v1614, %v1616
    %v1618 = vshll.u32 %v1578, 8
    %v1619 = vmul.u32.u64.compose %v1618, %v1617
    %v1620 = vextract.low.u32 %v1619
    %v1621 = vextract.high.u32 %v1619
    %v1622 = vmul.u32.u64.compose %v1618, %v1613
    %v1623 = vextract.low.u32 %v1622
    %v1624 = vextract.high.u32 %v1622
    %v1625 = vmul.u32 %v1618, %v1609
    %v1626 = vadd.s32 %v1621, %v1623
    %vm1627 = vc.u32 %v1621, %v1623
    %v1628 = vadd.s32 %v1624, 1
    %v1629 = vsel %vm1627, %v1628, %v1624
    %v1630 = vadd.s32 %v1625, %v1629
    %v1631 = vadd.s32 %v1630, 536870912
    %v1632 = vshrl.u32 %v1631, 30
    %v1633 = vshll.u32 %v1632, 30
    %v1634 = vsub.s32 %v1630, %v1633
    %vm1635 = vcmp.lt.s32.totalorder %v1634, 0
    %v1636 = vsub.s32 0, %v1634
    %v1637 = vsel %vm1635, %v1636, %v1634
    %v1638 = vclz %v1637
    %v1639 = vsub.s32 %v1638, 2
    %vm1640 = vcmp.gt.s32.totalorder 0, %v1639
    %v1641 = vsel %vm1640, 0, %v1639
    %v1642 = vsub.s32 32, %v1641
    %v1643 = vshll.u32 %v1634, %v1641
    %v1644 = vshrl.u32 %v1626, %v1642
    %v1645 = vor.u32 %v1643, %v1644
    %v1646 = vsub.s32 4294967266, %v1641
    %v1647 = vadd.s32 %v1646, 127
    %v1648 = vshll.u32 %v1647, 23
    %v1649 = vor.u32 4788187, %v1648
    %v1650 = vand.u32 2147483647, %v1649
    %v1652 = vcvt.s32.f32 %v1645
    %v1653 = vmul.f32 %v1652, %v1650
    %v1654 = vxor.u32 %v1653, 2147483648
    %v1655 = vsel %vm1572, %v1654, %v1653
    %v1656 = vsub.s32 4, %v1632
    %v1657 = vsel %vm1572, %v1656, %v1632
    %v1658 = vsel %vm1571, %v199, %v1655
    %v1659 = vsel %vm1571, 0, %v1657
    %v1660 = vcosq.f32.pop %v1658
    %v1661 = vsinq.f32.pop %v1658
    %vm1662 = vweird.f32 %v199
    %v1663 = vadd.s32 %v1659, 3
    %v1664 = vand.u32 %v1663, 3
    %vm1665 = vcmp.lt.s32.totalorder %v1664, 2
    %vm1666 = vcmp.eq.s32.totalorder %v1664, 0
    %v1667 = vxor.u32 %v1661, 2147483648
    %v1668 = vsel %vm1666, %v1660, %v1667
    %vm1669 = vcmp.eq.s32.totalorder %v1664, 2
    %v1670 = vxor.u32 %v1660, 2147483648
    %v1671 = vsel %vm1669, %v1670, %v1661
    %v1672 = vsel %vm1665, %v1668, %v1671
    %v1673 = vsel %vm1662, nan, %v1672
    %v1674 = vand.u32 2147483647, %v200
    %vm1675 = vcmp.le.f32.partialorder %v1674, 0.7853982
    %vm1676 = vcmp.lt.s32.totalorder %v200, 0
    %v1677 = vand.u32 %v200, 2139095040
    %v1678 = vshrl.u32 %v1677, 23
    %v1679 = vsub.s32 %v1678, 127
    %v1680 = vand.u32 2147483647, %v200
    %v1681 = vand.u32 %v1680, 8388607
    %v1682 = vor.u32 %v1681, 8388608
    %v1683 = vsub.s32 0, %v1682
    %v1684 = vadd.s32 %v1679, 1
    %vm1685 = vcmp.gt.s32.totalorder %v1684, 0
    %v1686 = vsel %vm1685, %v1684, 0
    %v1687 = vshrl.u32 %v1686, 5
    %v1688 = vand.u32 %v1686, 31
    %v1689 = vsub.s32 32, %v1688
    %v1690 = vshrl.u32 683565275, %v1689
    %v1691 = vshll.u32 683565275, %v1688
    %v1692 = vshrl.u32 2475754826, %v1689
    %v1693 = vor.u32 %v1691, %v1692
    %v1694 = vshll.u32 2475754826, %v1688
    %v1695 = vshrl.u32 2131351028, %v1689
    %v1696 = vor.u32 %v1694, %v1695
    %v1697 = vshll.u32 2131351028, %v1688
    %v1698 = vshrl.u32 2102212464, %v1689
    %v1699 = vor.u32 %v1697, %v1698
    %v1700 = vshll.u32 2102212464, %v1688
    %v1701 = vshrl.u32 920167782, %v1689
    %v1702 = vor.u32 %v1700, %v1701
    %v1703 = vshll.u32 920167782, %v1688
    %v1704 = vshrl.u32 1326507024, %v1689
    %v1705 = vor.u32 %v1703, %v1704
    %vm1706 = vcmp.lt.s32.totalorder %v1687, 1
    %vm1707 = vcmp.lt.s32.totalorder %v1687, 2
    %vm1708 = vcmp.lt.s32.totalorder %v1687, 3
    %vm1709 = vcmp.lt.s32.totalorder %v1687, 4
    %v1710 = vsel %vm1706, %v1690, %v1693
    %v1711 = vsel %vm1709, %v1699, 2102212464
    %v1712 = vsel %vm1708, %v1696, %v1711
    %v1713 = vsel %vm1707, %v1710, %v1712
    %v1714 = vsel %vm1706, %v1693, %v1696
    %v1715 = vsel %vm1709, %v1702, 920167782
    %v1716 = vsel %vm1708, %v1699, %v1715
    %v1717 = vsel %vm1707, %v1714, %v1716
    %v1718 = vsel %vm1706, %v1696, %v1699
    %v1719 = vsel %vm1709, %v1705, 1326507024
    %v1720 = vsel %vm1708, %v1702, %v1719
    %v1721 = vsel %vm1707, %v1718, %v1720
    %v1722 = vshll.u32 %v1682, 8
    %v1723 = vmul.u32.u64.compose %v1722, %v1721
    %v1724 = vextract.low.u32 %v1723
    %v1725 = vextract.high.u32 %v1723
    %v1726 = vmul.u32.u64.compose %v1722, %v1717
    %v1727 = vextract.low.u32 %v1726
    %v1728 = vextract.high.u32 %v1726
    %v1729 = vmul.u32 %v1722, %v1713
    %v1730 = vadd.s32 %v1725, %v1727
    %vm1731 = vc.u32 %v1725, %v1727
    %v1732 = vadd.s32 %v1728, 1
    %v1733 = vsel %vm1731, %v1732, %v1728
    %v1734 = vadd.s32 %v1729, %v1733
    %v1735 = vadd.s32 %v1734, 536870912
    %v1736 = vshrl.u32 %v1735, 30
    %v1737 = vshll.u32 %v1736, 30
    %v1738 = vsub.s32 %v1734, %v1737
    %vm1739 = vcmp.lt.s32.totalorder %v1738, 0
    %v1740 = vsub.s32 0, %v1738
    %v1741 = vsel %vm1739, %v1740, %v1738
    %v1742 = vclz %v1741
    %v1743 = vsub.s32 %v1742, 2
    %vm1744 = vcmp.gt.s32.totalorder 0, %v1743
    %v1745 = vsel %vm1744, 0, %v1743
    %v1746 = vsub.s32 32, %v1745
    %v1747 = vshll.u32 %v1738, %v1745
    %v1748 = vshrl.u32 %v1730, %v1746
    %v1749 = vor.u32 %v1747, %v1748
    %v1750 = vsub.s32 4294967266, %v1745
    %v1751 = vadd.s32 %v1750, 127
    %v1752 = vshll.u32 %v1751, 23
    %v1753 = vor.u32 4788187, %v1752
    %v1754 = vand.u32 2147483647, %v1753
    %v1756 = vcvt.s32.f32 %v1749
    %v1757 = vmul.f32 %v1756, %v1754
    %v1758 = vxor.u32 %v1757, 2147483648
    %v1759 = vsel %vm1676, %v1758, %v1757
    %v1760 = vsub.s32 4, %v1736
    %v1761 = vsel %vm1676, %v1760, %v1736
    %v1762 = vsel %vm1675, %v200, %v1759
    %v1763 = vsel %vm1675, 0, %v1761
    %v1764 = vcosq.f32.pop %v1762
    %v1765 = vsinq.f32.pop %v1762
    %vm1766 = vweird.f32 %v200
    %v1767 = vadd.s32 %v1763, 3
    %v1768 = vand.u32 %v1767, 3
    %vm1769 = vcmp.lt.s32.totalorder %v1768, 2
    %vm1770 = vcmp.eq.s32.totalorder %v1768, 0
    %v1771 = vxor.u32 %v1765, 2147483648
    %v1772 = vsel %vm1770, %v1764, %v1771
    %vm1773 = vcmp.eq.s32.totalorder %v1768, 2
    %v1774 = vxor.u32 %v1764, 2147483648
    %v1775 = vsel %vm1773, %v1774, %v1765
    %v1776 = vsel %vm1769, %v1772, %v1775
    %v1777 = vsel %vm1766, nan, %v1776
    %v1778 = vand.u32 2147483647, %v201
    %vm1779 = vcmp.le.f32.partialorder %v1778, 0.7853982
    %vm1780 = vcmp.lt.s32.totalorder %v201, 0
    %v1781 = vand.u32 %v201, 2139095040
    %v1782 = vshrl.u32 %v1781, 23
    %v1783 = vsub.s32 %v1782, 127
    %v1784 = vand.u32 2147483647, %v201
    %v1785 = vand.u32 %v1784, 8388607
    %v1786 = vor.u32 %v1785, 8388608
    %v1787 = vsub.s32 0, %v1786
    %v1788 = vadd.s32 %v1783, 1
    %vm1789 = vcmp.gt.s32.totalorder %v1788, 0
    %v1790 = vsel %vm1789, %v1788, 0
    %v1791 = vshrl.u32 %v1790, 5
    %v1792 = vand.u32 %v1790, 31
    %v1793 = vsub.s32 32, %v1792
    %v1794 = vshrl.u32 683565275, %v1793
    %v1795 = vshll.u32 683565275, %v1792
    %v1796 = vshrl.u32 2475754826, %v1793
    %v1797 = vor.u32 %v1795, %v1796
    %v1798 = vshll.u32 2475754826, %v1792
    %v1799 = vshrl.u32 2131351028, %v1793
    %v1800 = vor.u32 %v1798, %v1799
    %v1801 = vshll.u32 2131351028, %v1792
    %v1802 = vshrl.u32 2102212464, %v1793
    %v1803 = vor.u32 %v1801, %v1802
    %v1804 = vshll.u32 2102212464, %v1792
    %v1805 = vshrl.u32 920167782, %v1793
    %v1806 = vor.u32 %v1804, %v1805
    %v1807 = vshll.u32 920167782, %v1792
    %v1808 = vshrl.u32 1326507024, %v1793
    %v1809 = vor.u32 %v1807, %v1808
    %vm1810 = vcmp.lt.s32.totalorder %v1791, 1
    %vm1811 = vcmp.lt.s32.totalorder %v1791, 2
    %vm1812 = vcmp.lt.s32.totalorder %v1791, 3
    %vm1813 = vcmp.lt.s32.totalorder %v1791, 4
    %v1814 = vsel %vm1810, %v1794, %v1797
    %v1815 = vsel %vm1813, %v1803, 2102212464
    %v1816 = vsel %vm1812, %v1800, %v1815
    %v1817 = vsel %vm1811, %v1814, %v1816
    %v1818 = vsel %vm1810, %v1797, %v1800
    %v1819 = vsel %vm1813, %v1806, 920167782
    %v1820 = vsel %vm1812, %v1803, %v1819
    %v1821 = vsel %vm1811, %v1818, %v1820
    %v1822 = vsel %vm1810, %v1800, %v1803
    %v1823 = vsel %vm1813, %v1809, 1326507024
    %v1824 = vsel %vm1812, %v1806, %v1823
    %v1825 = vsel %vm1811, %v1822, %v1824
    %v1826 = vshll.u32 %v1786, 8
    %v1827 = vmul.u32.u64.compose %v1826, %v1825
    %v1828 = vextract.low.u32 %v1827
    %v1829 = vextract.high.u32 %v1827
    %v1830 = vmul.u32.u64.compose %v1826, %v1821
    %v1831 = vextract.low.u32 %v1830
    %v1832 = vextract.high.u32 %v1830
    %v1833 = vmul.u32 %v1826, %v1817
    %v1834 = vadd.s32 %v1829, %v1831
    %vm1835 = vc.u32 %v1829, %v1831
    %v1836 = vadd.s32 %v1832, 1
    %v1837 = vsel %vm1835, %v1836, %v1832
    %v1838 = vadd.s32 %v1833, %v1837
    %v1839 = vadd.s32 %v1838, 536870912
    %v1840 = vshrl.u32 %v1839, 30
    %v1841 = vshll.u32 %v1840, 30
    %v1842 = vsub.s32 %v1838, %v1841
    %vm1843 = vcmp.lt.s32.totalorder %v1842, 0
    %v1844 = vsub.s32 0, %v1842
    %v1845 = vsel %vm1843, %v1844, %v1842
    %v1846 = vclz %v1845
    %v1847 = vsub.s32 %v1846, 2
    %vm1848 = vcmp.gt.s32.totalorder 0, %v1847
    %v1849 = vsel %vm1848, 0, %v1847
    %v1850 = vsub.s32 32, %v1849
    %v1851 = vshll.u32 %v1842, %v1849
    %v1852 = vshrl.u32 %v1834, %v1850
    %v1853 = vor.u32 %v1851, %v1852
    %v1854 = vsub.s32 4294967266, %v1849
    %v1855 = vadd.s32 %v1854, 127
    %v1856 = vshll.u32 %v1855, 23
    %v1857 = vor.u32 4788187, %v1856
    %v1858 = vand.u32 2147483647, %v1857
    %v1860 = vcvt.s32.f32 %v1853
    %v1861 = vmul.f32 %v1860, %v1858
    %v1862 = vxor.u32 %v1861, 2147483648
    %v1863 = vsel %vm1780, %v1862, %v1861
    %v1864 = vsub.s32 4, %v1840
    %v1865 = vsel %vm1780, %v1864, %v1840
    %v1866 = vsel %vm1779, %v201, %v1863
    %v1867 = vsel %vm1779, 0, %v1865
    %v1868 = vcosq.f32.pop %v1866
    %v1869 = vsinq.f32.pop %v1866
    %vm1870 = vweird.f32 %v201
    %v1871 = vadd.s32 %v1867, 3
    %v1872 = vand.u32 %v1871, 3
    %vm1873 = vcmp.lt.s32.totalorder %v1872, 2
    %vm1874 = vcmp.eq.s32.totalorder %v1872, 0
    %v1875 = vxor.u32 %v1869, 2147483648
    %v1876 = vsel %vm1874, %v1868, %v1875
    %vm1877 = vcmp.eq.s32.totalorder %v1872, 2
    %v1878 = vxor.u32 %v1868, 2147483648
    %v1879 = vsel %vm1877, %v1878, %v1869
    %v1880 = vsel %vm1873, %v1876, %v1879
    %v1881 = vsel %vm1870, nan, %v1880
    %v1882 = vand.u32 2147483647, %v202
    %vm1883 = vcmp.le.f32.partialorder %v1882, 0.7853982
    %vm1884 = vcmp.lt.s32.totalorder %v202, 0
    %v1885 = vand.u32 %v202, 2139095040
    %v1886 = vshrl.u32 %v1885, 23
    %v1887 = vsub.s32 %v1886, 127
    %v1888 = vand.u32 2147483647, %v202
    %v1889 = vand.u32 %v1888, 8388607
    %v1890 = vor.u32 %v1889, 8388608
    %v1891 = vsub.s32 0, %v1890
    %v1892 = vadd.s32 %v1887, 1
    %vm1893 = vcmp.gt.s32.totalorder %v1892, 0
    %v1894 = vsel %vm1893, %v1892, 0
    %v1895 = vshrl.u32 %v1894, 5
    %v1896 = vand.u32 %v1894, 31
    %v1897 = vsub.s32 32, %v1896
    %v1898 = vshrl.u32 683565275, %v1897
    %v1899 = vshll.u32 683565275, %v1896
    %v1900 = vshrl.u32 2475754826, %v1897
    %v1901 = vor.u32 %v1899, %v1900
    %v1902 = vshll.u32 2475754826, %v1896
    %v1903 = vshrl.u32 2131351028, %v1897
    %v1904 = vor.u32 %v1902, %v1903
    %v1905 = vshll.u32 2131351028, %v1896
    %v1906 = vshrl.u32 2102212464, %v1897
    %v1907 = vor.u32 %v1905, %v1906
    %v1908 = vshll.u32 2102212464, %v1896
    %v1909 = vshrl.u32 920167782, %v1897
    %v1910 = vor.u32 %v1908, %v1909
    %v1911 = vshll.u32 920167782, %v1896
    %v1912 = vshrl.u32 1326507024, %v1897
    %v1913 = vor.u32 %v1911, %v1912
    %vm1914 = vcmp.lt.s32.totalorder %v1895, 1
    %vm1915 = vcmp.lt.s32.totalorder %v1895, 2
    %vm1916 = vcmp.lt.s32.totalorder %v1895, 3
    %vm1917 = vcmp.lt.s32.totalorder %v1895, 4
    %v1918 = vsel %vm1914, %v1898, %v1901
    %v1919 = vsel %vm1917, %v1907, 2102212464
    %v1920 = vsel %vm1916, %v1904, %v1919
    %v1921 = vsel %vm1915, %v1918, %v1920
    %v1922 = vsel %vm1914, %v1901, %v1904
    %v1923 = vsel %vm1917, %v1910, 920167782
    %v1924 = vsel %vm1916, %v1907, %v1923
    %v1925 = vsel %vm1915, %v1922, %v1924
    %v1926 = vsel %vm1914, %v1904, %v1907
    %v1927 = vsel %vm1917, %v1913, 1326507024
    %v1928 = vsel %vm1916, %v1910, %v1927
    %v1929 = vsel %vm1915, %v1926, %v1928
    %v1930 = vshll.u32 %v1890, 8
    %v1931 = vmul.u32.u64.compose %v1930, %v1929
    %v1932 = vextract.low.u32 %v1931
    %v1933 = vextract.high.u32 %v1931
    %v1934 = vmul.u32.u64.compose %v1930, %v1925
    %v1935 = vextract.low.u32 %v1934
    %v1936 = vextract.high.u32 %v1934
    %v1937 = vmul.u32 %v1930, %v1921
    %v1938 = vadd.s32 %v1933, %v1935
    %vm1939 = vc.u32 %v1933, %v1935
    %v1940 = vadd.s32 %v1936, 1
    %v1941 = vsel %vm1939, %v1940, %v1936
    %v1942 = vadd.s32 %v1937, %v1941
    %v1943 = vadd.s32 %v1942, 536870912
    %v1944 = vshrl.u32 %v1943, 30
    %v1945 = vshll.u32 %v1944, 30
    %v1946 = vsub.s32 %v1942, %v1945
    %vm1947 = vcmp.lt.s32.totalorder %v1946, 0
    %v1948 = vsub.s32 0, %v1946
    %v1949 = vsel %vm1947, %v1948, %v1946
    %v1950 = vclz %v1949
    %v1951 = vsub.s32 %v1950, 2
    %vm1952 = vcmp.gt.s32.totalorder 0, %v1951
    %v1953 = vsel %vm1952, 0, %v1951
    %v1954 = vsub.s32 32, %v1953
    %v1955 = vshll.u32 %v1946, %v1953
    %v1956 = vshrl.u32 %v1938, %v1954
    %v1957 = vor.u32 %v1955, %v1956
    %v1958 = vsub.s32 4294967266, %v1953
    %v1959 = vadd.s32 %v1958, 127
    %v1960 = vshll.u32 %v1959, 23
    %v1961 = vor.u32 4788187, %v1960
    %v1962 = vand.u32 2147483647, %v1961
    %v1964 = vcvt.s32.f32 %v1957
    %v1965 = vmul.f32 %v1964, %v1962
    %v1966 = vxor.u32 %v1965, 2147483648
    %v1967 = vsel %vm1884, %v1966, %v1965
    %v1968 = vsub.s32 4, %v1944
    %v1969 = vsel %vm1884, %v1968, %v1944
    %v1970 = vsel %vm1883, %v202, %v1967
    %v1971 = vsel %vm1883, 0, %v1969
    %v1972 = vcosq.f32.pop %v1970
    %v1973 = vsinq.f32.pop %v1970
    %vm1974 = vweird.f32 %v202
    %v1975 = vadd.s32 %v1971, 3
    %v1976 = vand.u32 %v1975, 3
    %vm1977 = vcmp.lt.s32.totalorder %v1976, 2
    %vm1978 = vcmp.eq.s32.totalorder %v1976, 0
    %v1979 = vxor.u32 %v1973, 2147483648
    %v1980 = vsel %vm1978, %v1972, %v1979
    %vm1981 = vcmp.eq.s32.totalorder %v1976, 2
    %v1982 = vxor.u32 %v1972, 2147483648
    %v1983 = vsel %vm1981, %v1982, %v1973
    %v1984 = vsel %vm1977, %v1980, %v1983
    %v1985 = vsel %vm1974, nan, %v1984
    %v1986 = vand.u32 2147483647, %v203
    %vm1987 = vcmp.le.f32.partialorder %v1986, 0.7853982
    %vm1988 = vcmp.lt.s32.totalorder %v203, 0
    %v1989 = vand.u32 %v203, 2139095040
    %v1990 = vshrl.u32 %v1989, 23
    %v1991 = vsub.s32 %v1990, 127
    %v1992 = vand.u32 2147483647, %v203
    %v1993 = vand.u32 %v1992, 8388607
    %v1994 = vor.u32 %v1993, 8388608
    %v1995 = vsub.s32 0, %v1994
    %v1996 = vadd.s32 %v1991, 1
    %vm1997 = vcmp.gt.s32.totalorder %v1996, 0
    %v1998 = vsel %vm1997, %v1996, 0
    %v1999 = vshrl.u32 %v1998, 5
    %v2000 = vand.u32 %v1998, 31
    %v2001 = vsub.s32 32, %v2000
    %v2002 = vshrl.u32 683565275, %v2001
    %v2003 = vshll.u32 683565275, %v2000
    %v2004 = vshrl.u32 2475754826, %v2001
    %v2005 = vor.u32 %v2003, %v2004
    %v2006 = vshll.u32 2475754826, %v2000
    %v2007 = vshrl.u32 2131351028, %v2001
    %v2008 = vor.u32 %v2006, %v2007
    %v2009 = vshll.u32 2131351028, %v2000
    %v2010 = vshrl.u32 2102212464, %v2001
    %v2011 = vor.u32 %v2009, %v2010
    %v2012 = vshll.u32 2102212464, %v2000
    %v2013 = vshrl.u32 920167782, %v2001
    %v2014 = vor.u32 %v2012, %v2013
    %v2015 = vshll.u32 920167782, %v2000
    %v2016 = vshrl.u32 1326507024, %v2001
    %v2017 = vor.u32 %v2015, %v2016
    %vm2018 = vcmp.lt.s32.totalorder %v1999, 1
    %vm2019 = vcmp.lt.s32.totalorder %v1999, 2
    %vm2020 = vcmp.lt.s32.totalorder %v1999, 3
    %vm2021 = vcmp.lt.s32.totalorder %v1999, 4
    %v2022 = vsel %vm2018, %v2002, %v2005
    %v2023 = vsel %vm2021, %v2011, 2102212464
    %v2024 = vsel %vm2020, %v2008, %v2023
    %v2025 = vsel %vm2019, %v2022, %v2024
    %v2026 = vsel %vm2018, %v2005, %v2008
    %v2027 = vsel %vm2021, %v2014, 920167782
    %v2028 = vsel %vm2020, %v2011, %v2027
    %v2029 = vsel %vm2019, %v2026, %v2028
    %v2030 = vsel %vm2018, %v2008, %v2011
    %v2031 = vsel %vm2021, %v2017, 1326507024
    %v2032 = vsel %vm2020, %v2014, %v2031
    %v2033 = vsel %vm2019, %v2030, %v2032
    %v2034 = vshll.u32 %v1994, 8
    %v2035 = vmul.u32.u64.compose %v2034, %v2033
    %v2036 = vextract.low.u32 %v2035
    %v2037 = vextract.high.u32 %v2035
    %v2038 = vmul.u32.u64.compose %v2034, %v2029
    %v2039 = vextract.low.u32 %v2038
    %v2040 = vextract.high.u32 %v2038
    %v2041 = vmul.u32 %v2034, %v2025
    %v2042 = vadd.s32 %v2037, %v2039
    %vm2043 = vc.u32 %v2037, %v2039
    %v2044 = vadd.s32 %v2040, 1
    %v2045 = vsel %vm2043, %v2044, %v2040
    %v2046 = vadd.s32 %v2041, %v2045
    %v2047 = vadd.s32 %v2046, 536870912
    %v2048 = vshrl.u32 %v2047, 30
    %v2049 = vshll.u32 %v2048, 30
    %v2050 = vsub.s32 %v2046, %v2049
    %vm2051 = vcmp.lt.s32.totalorder %v2050, 0
    %v2052 = vsub.s32 0, %v2050
    %v2053 = vsel %vm2051, %v2052, %v2050
    %v2054 = vclz %v2053
    %v2055 = vsub.s32 %v2054, 2
    %vm2056 = vcmp.gt.s32.totalorder 0, %v2055
    %v2057 = vsel %vm2056, 0, %v2055
    %v2058 = vsub.s32 32, %v2057
    %v2059 = vshll.u32 %v2050, %v2057
    %v2060 = vshrl.u32 %v2042, %v2058
    %v2061 = vor.u32 %v2059, %v2060
    %v2062 = vsub.s32 4294967266, %v2057
    %v2063 = vadd.s32 %v2062, 127
    %v2064 = vshll.u32 %v2063, 23
    %v2065 = vor.u32 4788187, %v2064
    %v2066 = vand.u32 2147483647, %v2065
    %v2068 = vcvt.s32.f32 %v2061
    %v2069 = vmul.f32 %v2068, %v2066
    %v2070 = vxor.u32 %v2069, 2147483648
    %v2071 = vsel %vm1988, %v2070, %v2069
    %v2072 = vsub.s32 4, %v2048
    %v2073 = vsel %vm1988, %v2072, %v2048
    %v2074 = vsel %vm1987, %v203, %v2071
    %v2075 = vsel %vm1987, 0, %v2073
    %v2076 = vcosq.f32.pop %v2074
    %v2077 = vsinq.f32.pop %v2074
    %vm2078 = vweird.f32 %v203
    %v2079 = vadd.s32 %v2075, 3
    %v2080 = vand.u32 %v2079, 3
    %vm2081 = vcmp.lt.s32.totalorder %v2080, 2
    %vm2082 = vcmp.eq.s32.totalorder %v2080, 0
    %v2083 = vxor.u32 %v2077, 2147483648
    %v2084 = vsel %vm2082, %v2076, %v2083
    %vm2085 = vcmp.eq.s32.totalorder %v2080, 2
    %v2086 = vxor.u32 %v2076, 2147483648
    %v2087 = vsel %vm2085, %v2086, %v2077
    %v2088 = vsel %vm2081, %v2084, %v2087
    %v2089 = vsel %vm2078, nan, %v2088
    %v2090 = vand.u32 2147483647, %v204
    %vm2091 = vcmp.le.f32.partialorder %v2090, 0.7853982
    %vm2092 = vcmp.lt.s32.totalorder %v204, 0
    %v2093 = vand.u32 %v204, 2139095040
    %v2094 = vshrl.u32 %v2093, 23
    %v2095 = vsub.s32 %v2094, 127
    %v2096 = vand.u32 2147483647, %v204
    %v2097 = vand.u32 %v2096, 8388607
    %v2098 = vor.u32 %v2097, 8388608
    %v2099 = vsub.s32 0, %v2098
    %v2100 = vadd.s32 %v2095, 1
    %vm2101 = vcmp.gt.s32.totalorder %v2100, 0
    %v2102 = vsel %vm2101, %v2100, 0
    %v2103 = vshrl.u32 %v2102, 5
    %v2104 = vand.u32 %v2102, 31
    %v2105 = vsub.s32 32, %v2104
    %v2106 = vshrl.u32 683565275, %v2105
    %v2107 = vshll.u32 683565275, %v2104
    %v2108 = vshrl.u32 2475754826, %v2105
    %v2109 = vor.u32 %v2107, %v2108
    %v2110 = vshll.u32 2475754826, %v2104
    %v2111 = vshrl.u32 2131351028, %v2105
    %v2112 = vor.u32 %v2110, %v2111
    %v2113 = vshll.u32 2131351028, %v2104
    %v2114 = vshrl.u32 2102212464, %v2105
    %v2115 = vor.u32 %v2113, %v2114
    %v2116 = vshll.u32 2102212464, %v2104
    %v2117 = vshrl.u32 920167782, %v2105
    %v2118 = vor.u32 %v2116, %v2117
    %v2119 = vshll.u32 920167782, %v2104
    %v2120 = vshrl.u32 1326507024, %v2105
    %v2121 = vor.u32 %v2119, %v2120
    %vm2122 = vcmp.lt.s32.totalorder %v2103, 1
    %vm2123 = vcmp.lt.s32.totalorder %v2103, 2
    %vm2124 = vcmp.lt.s32.totalorder %v2103, 3
    %vm2125 = vcmp.lt.s32.totalorder %v2103, 4
    %v2126 = vsel %vm2122, %v2106, %v2109
    %v2127 = vsel %vm2125, %v2115, 2102212464
    %v2128 = vsel %vm2124, %v2112, %v2127
    %v2129 = vsel %vm2123, %v2126, %v2128
    %v2130 = vsel %vm2122, %v2109, %v2112
    %v2131 = vsel %vm2125, %v2118, 920167782
    %v2132 = vsel %vm2124, %v2115, %v2131
    %v2133 = vsel %vm2123, %v2130, %v2132
    %v2134 = vsel %vm2122, %v2112, %v2115
    %v2135 = vsel %vm2125, %v2121, 1326507024
    %v2136 = vsel %vm2124, %v2118, %v2135
    %v2137 = vsel %vm2123, %v2134, %v2136
    %v2138 = vshll.u32 %v2098, 8
    %v2139 = vmul.u32.u64.compose %v2138, %v2137
    %v2140 = vextract.low.u32 %v2139
    %v2141 = vextract.high.u32 %v2139
    %v2142 = vmul.u32.u64.compose %v2138, %v2133
    %v2143 = vextract.low.u32 %v2142
    %v2144 = vextract.high.u32 %v2142
    %v2145 = vmul.u32 %v2138, %v2129
    %v2146 = vadd.s32 %v2141, %v2143
    %vm2147 = vc.u32 %v2141, %v2143
    %v2148 = vadd.s32 %v2144, 1
    %v2149 = vsel %vm2147, %v2148, %v2144
    %v2150 = vadd.s32 %v2145, %v2149
    %v2151 = vadd.s32 %v2150, 536870912
    %v2152 = vshrl.u32 %v2151, 30
    %v2153 = vshll.u32 %v2152, 30
    %v2154 = vsub.s32 %v2150, %v2153
    %vm2155 = vcmp.lt.s32.totalorder %v2154, 0
    %v2156 = vsub.s32 0, %v2154
    %v2157 = vsel %vm2155, %v2156, %v2154
    %v2158 = vclz %v2157
    %v2159 = vsub.s32 %v2158, 2
    %vm2160 = vcmp.gt.s32.totalorder 0, %v2159
    %v2161 = vsel %vm2160, 0, %v2159
    %v2162 = vsub.s32 32, %v2161
    %v2163 = vshll.u32 %v2154, %v2161
    %v2164 = vshrl.u32 %v2146, %v2162
    %v2165 = vor.u32 %v2163, %v2164
    %v2166 = vsub.s32 4294967266, %v2161
    %v2167 = vadd.s32 %v2166, 127
    %v2168 = vshll.u32 %v2167, 23
    %v2169 = vor.u32 4788187, %v2168
    %v2170 = vand.u32 2147483647, %v2169
    %v2172 = vcvt.s32.f32 %v2165
    %v2173 = vmul.f32 %v2172, %v2170
    %v2174 = vxor.u32 %v2173, 2147483648
    %v2175 = vsel %vm2092, %v2174, %v2173
    %v2176 = vsub.s32 4, %v2152
    %v2177 = vsel %vm2092, %v2176, %v2152
    %v2178 = vsel %vm2091, %v204, %v2175
    %v2179 = vsel %vm2091, 0, %v2177
    %v2180 = vcosq.f32.pop %v2178
    %v2181 = vsinq.f32.pop %v2178
    %vm2182 = vweird.f32 %v204
    %v2183 = vadd.s32 %v2179, 3
    %v2184 = vand.u32 %v2183, 3
    %vm2185 = vcmp.lt.s32.totalorder %v2184, 2
    %vm2186 = vcmp.eq.s32.totalorder %v2184, 0
    %v2187 = vxor.u32 %v2181, 2147483648
    %v2188 = vsel %vm2186, %v2180, %v2187
    %vm2189 = vcmp.eq.s32.totalorder %v2184, 2
    %v2190 = vxor.u32 %v2180, 2147483648
    %v2191 = vsel %vm2189, %v2190, %v2181
    %v2192 = vsel %vm2185, %v2188, %v2191
    %v2193 = vsel %vm2182, nan, %v2192
    %v2194 = vand.u32 2147483647, %v205
    %vm2195 = vcmp.le.f32.partialorder %v2194, 0.7853982
    %vm2196 = vcmp.lt.s32.totalorder %v205, 0
    %v2197 = vand.u32 %v205, 2139095040
    %v2198 = vshrl.u32 %v2197, 23
    %v2199 = vsub.s32 %v2198, 127
    %v2200 = vand.u32 2147483647, %v205
    %v2201 = vand.u32 %v2200, 8388607
    %v2202 = vor.u32 %v2201, 8388608
    %v2203 = vsub.s32 0, %v2202
    %v2204 = vadd.s32 %v2199, 1
    %vm2205 = vcmp.gt.s32.totalorder %v2204, 0
    %v2206 = vsel %vm2205, %v2204, 0
    %v2207 = vshrl.u32 %v2206, 5
    %v2208 = vand.u32 %v2206, 31
    %v2209 = vsub.s32 32, %v2208
    %v2210 = vshrl.u32 683565275, %v2209
    %v2211 = vshll.u32 683565275, %v2208
    %v2212 = vshrl.u32 2475754826, %v2209
    %v2213 = vor.u32 %v2211, %v2212
    %v2214 = vshll.u32 2475754826, %v2208
    %v2215 = vshrl.u32 2131351028, %v2209
    %v2216 = vor.u32 %v2214, %v2215
    %v2217 = vshll.u32 2131351028, %v2208
    %v2218 = vshrl.u32 2102212464, %v2209
    %v2219 = vor.u32 %v2217, %v2218
    %v2220 = vshll.u32 2102212464, %v2208
    %v2221 = vshrl.u32 920167782, %v2209
    %v2222 = vor.u32 %v2220, %v2221
    %v2223 = vshll.u32 920167782, %v2208
    %v2224 = vshrl.u32 1326507024, %v2209
    %v2225 = vor.u32 %v2223, %v2224
    %vm2226 = vcmp.lt.s32.totalorder %v2207, 1
    %vm2227 = vcmp.lt.s32.totalorder %v2207, 2
    %vm2228 = vcmp.lt.s32.totalorder %v2207, 3
    %vm2229 = vcmp.lt.s32.totalorder %v2207, 4
    %v2230 = vsel %vm2226, %v2210, %v2213
    %v2231 = vsel %vm2229, %v2219, 2102212464
    %v2232 = vsel %vm2228, %v2216, %v2231
    %v2233 = vsel %vm2227, %v2230, %v2232
    %v2234 = vsel %vm2226, %v2213, %v2216
    %v2235 = vsel %vm2229, %v2222, 920167782
    %v2236 = vsel %vm2228, %v2219, %v2235
    %v2237 = vsel %vm2227, %v2234, %v2236
    %v2238 = vsel %vm2226, %v2216, %v2219
    %v2239 = vsel %vm2229, %v2225, 1326507024
    %v2240 = vsel %vm2228, %v2222, %v2239
    %v2241 = vsel %vm2227, %v2238, %v2240
    %v2242 = vshll.u32 %v2202, 8
    %v2243 = vmul.u32.u64.compose %v2242, %v2241
    %v2244 = vextract.low.u32 %v2243
    %v2245 = vextract.high.u32 %v2243
    %v2246 = vmul.u32.u64.compose %v2242, %v2237
    %v2247 = vextract.low.u32 %v2246
    %v2248 = vextract.high.u32 %v2246
    %v2249 = vmul.u32 %v2242, %v2233
    %v2250 = vadd.s32 %v2245, %v2247
    %vm2251 = vc.u32 %v2245, %v2247
    %v2252 = vadd.s32 %v2248, 1
    %v2253 = vsel %vm2251, %v2252, %v2248
    %v2254 = vadd.s32 %v2249, %v2253
    %v2255 = vadd.s32 %v2254, 536870912
    %v2256 = vshrl.u32 %v2255, 30
    %v2257 = vshll.u32 %v2256, 30
    %v2258 = vsub.s32 %v2254, %v2257
    %vm2259 = vcmp.lt.s32.totalorder %v2258, 0
    %v2260 = vsub.s32 0, %v2258
    %v2261 = vsel %vm2259, %v2260, %v2258
    %v2262 = vclz %v2261
    %v2263 = vsub.s32 %v2262, 2
    %vm2264 = vcmp.gt.s32.totalorder 0, %v2263
    %v2265 = vsel %vm2264, 0, %v2263
    %v2266 = vsub.s32 32, %v2265
    %v2267 = vshll.u32 %v2258, %v2265
    %v2268 = vshrl.u32 %v2250, %v2266
    %v2269 = vor.u32 %v2267, %v2268
    %v2270 = vsub.s32 4294967266, %v2265
    %v2271 = vadd.s32 %v2270, 127
    %v2272 = vshll.u32 %v2271, 23
    %v2273 = vor.u32 4788187, %v2272
    %v2274 = vand.u32 2147483647, %v2273
    %v2276 = vcvt.s32.f32 %v2269
    %v2277 = vmul.f32 %v2276, %v2274
    %v2278 = vxor.u32 %v2277, 2147483648
    %v2279 = vsel %vm2196, %v2278, %v2277
    %v2280 = vsub.s32 4, %v2256
    %v2281 = vsel %vm2196, %v2280, %v2256
    %v2282 = vsel %vm2195, %v205, %v2279
    %v2283 = vsel %vm2195, 0, %v2281
    %v2284 = vcosq.f32.pop %v2282
    %v2285 = vsinq.f32.pop %v2282
    %vm2286 = vweird.f32 %v205
    %v2287 = vadd.s32 %v2283, 3
    %v2288 = vand.u32 %v2287, 3
    %vm2289 = vcmp.lt.s32.totalorder %v2288, 2
    %vm2290 = vcmp.eq.s32.totalorder %v2288, 0
    %v2291 = vxor.u32 %v2285, 2147483648
    %v2292 = vsel %vm2290, %v2284, %v2291
    %vm2293 = vcmp.eq.s32.totalorder %v2288, 2
    %v2294 = vxor.u32 %v2284, 2147483648
    %v2295 = vsel %vm2293, %v2294, %v2285
    %v2296 = vsel %vm2289, %v2292, %v2295
    %v2297 = vsel %vm2286, nan, %v2296
    %v2298 = vand.u32 2147483647, %v206
    %vm2299 = vcmp.le.f32.partialorder %v2298, 0.7853982
    %vm2300 = vcmp.lt.s32.totalorder %v206, 0
    %v2301 = vand.u32 %v206, 2139095040
    %v2302 = vshrl.u32 %v2301, 23
    %v2303 = vsub.s32 %v2302, 127
    %v2304 = vand.u32 2147483647, %v206
    %v2305 = vand.u32 %v2304, 8388607
    %v2306 = vor.u32 %v2305, 8388608
    %v2307 = vsub.s32 0, %v2306
    %v2308 = vadd.s32 %v2303, 1
    %vm2309 = vcmp.gt.s32.totalorder %v2308, 0
    %v2310 = vsel %vm2309, %v2308, 0
    %v2311 = vshrl.u32 %v2310, 5
    %v2312 = vand.u32 %v2310, 31
    %v2313 = vsub.s32 32, %v2312
    %v2314 = vshrl.u32 683565275, %v2313
    %v2315 = vshll.u32 683565275, %v2312
    %v2316 = vshrl.u32 2475754826, %v2313
    %v2317 = vor.u32 %v2315, %v2316
    %v2318 = vshll.u32 2475754826, %v2312
    %v2319 = vshrl.u32 2131351028, %v2313
    %v2320 = vor.u32 %v2318, %v2319
    %v2321 = vshll.u32 2131351028, %v2312
    %v2322 = vshrl.u32 2102212464, %v2313
    %v2323 = vor.u32 %v2321, %v2322
    %v2324 = vshll.u32 2102212464, %v2312
    %v2325 = vshrl.u32 920167782, %v2313
    %v2326 = vor.u32 %v2324, %v2325
    %v2327 = vshll.u32 920167782, %v2312
    %v2328 = vshrl.u32 1326507024, %v2313
    %v2329 = vor.u32 %v2327, %v2328
    %vm2330 = vcmp.lt.s32.totalorder %v2311, 1
    %vm2331 = vcmp.lt.s32.totalorder %v2311, 2
    %vm2332 = vcmp.lt.s32.totalorder %v2311, 3
    %vm2333 = vcmp.lt.s32.totalorder %v2311, 4
    %v2334 = vsel %vm2330, %v2314, %v2317
    %v2335 = vsel %vm2333, %v2323, 2102212464
    %v2336 = vsel %vm2332, %v2320, %v2335
    %v2337 = vsel %vm2331, %v2334, %v2336
    %v2338 = vsel %vm2330, %v2317, %v2320
    %v2339 = vsel %vm2333, %v2326, 920167782
    %v2340 = vsel %vm2332, %v2323, %v2339
    %v2341 = vsel %vm2331, %v2338, %v2340
    %v2342 = vsel %vm2330, %v2320, %v2323
    %v2343 = vsel %vm2333, %v2329, 1326507024
    %v2344 = vsel %vm2332, %v2326, %v2343
    %v2345 = vsel %vm2331, %v2342, %v2344
    %v2346 = vshll.u32 %v2306, 8
    %v2347 = vmul.u32.u64.compose %v2346, %v2345
    %v2348 = vextract.low.u32 %v2347
    %v2349 = vextract.high.u32 %v2347
    %v2350 = vmul.u32.u64.compose %v2346, %v2341
    %v2351 = vextract.low.u32 %v2350
    %v2352 = vextract.high.u32 %v2350
    %v2353 = vmul.u32 %v2346, %v2337
    %v2354 = vadd.s32 %v2349, %v2351
    %vm2355 = vc.u32 %v2349, %v2351
    %v2356 = vadd.s32 %v2352, 1
    %v2357 = vsel %vm2355, %v2356, %v2352
    %v2358 = vadd.s32 %v2353, %v2357
    %v2359 = vadd.s32 %v2358, 536870912
    %v2360 = vshrl.u32 %v2359, 30
    %v2361 = vshll.u32 %v2360, 30
    %v2362 = vsub.s32 %v2358, %v2361
    %vm2363 = vcmp.lt.s32.totalorder %v2362, 0
    %v2364 = vsub.s32 0, %v2362
    %v2365 = vsel %vm2363, %v2364, %v2362
    %v2366 = vclz %v2365
    %v2367 = vsub.s32 %v2366, 2
    %vm2368 = vcmp.gt.s32.totalorder 0, %v2367
    %v2369 = vsel %vm2368, 0, %v2367
    %v2370 = vsub.s32 32, %v2369
    %v2371 = vshll.u32 %v2362, %v2369
    %v2372 = vshrl.u32 %v2354, %v2370
    %v2373 = vor.u32 %v2371, %v2372
    %v2374 = vsub.s32 4294967266, %v2369
    %v2375 = vadd.s32 %v2374, 127
    %v2376 = vshll.u32 %v2375, 23
    %v2377 = vor.u32 4788187, %v2376
    %v2378 = vand.u32 2147483647, %v2377
    %v2380 = vcvt.s32.f32 %v2373
    %v2381 = vmul.f32 %v2380, %v2378
    %v2382 = vxor.u32 %v2381, 2147483648
    %v2383 = vsel %vm2300, %v2382, %v2381
    %v2384 = vsub.s32 4, %v2360
    %v2385 = vsel %vm2300, %v2384, %v2360
    %v2386 = vsel %vm2299, %v206, %v2383
    %v2387 = vsel %vm2299, 0, %v2385
    %v2388 = vcosq.f32.pop %v2386
    %v2389 = vsinq.f32.pop %v2386
    %vm2390 = vweird.f32 %v206
    %v2391 = vadd.s32 %v2387, 3
    %v2392 = vand.u32 %v2391, 3
    %vm2393 = vcmp.lt.s32.totalorder %v2392, 2
    %vm2394 = vcmp.eq.s32.totalorder %v2392, 0
    %v2395 = vxor.u32 %v2389, 2147483648
    %v2396 = vsel %vm2394, %v2388, %v2395
    %vm2397 = vcmp.eq.s32.totalorder %v2392, 2
    %v2398 = vxor.u32 %v2388, 2147483648
    %v2399 = vsel %vm2397, %v2398, %v2389
    %v2400 = vsel %vm2393, %v2396, %v2399
    %v2401 = vsel %vm2390, nan, %v2400
    %v2402 = vand.u32 2147483647, %v207
    %vm2403 = vcmp.le.f32.partialorder %v2402, 0.7853982
    %vm2404 = vcmp.lt.s32.totalorder %v207, 0
    %v2405 = vand.u32 %v207, 2139095040
    %v2406 = vshrl.u32 %v2405, 23
    %v2407 = vsub.s32 %v2406, 127
    %v2408 = vand.u32 2147483647, %v207
    %v2409 = vand.u32 %v2408, 8388607
    %v2410 = vor.u32 %v2409, 8388608
    %v2411 = vsub.s32 0, %v2410
    %v2412 = vadd.s32 %v2407, 1
    %vm2413 = vcmp.gt.s32.totalorder %v2412, 0
    %v2414 = vsel %vm2413, %v2412, 0
    %v2415 = vshrl.u32 %v2414, 5
    %v2416 = vand.u32 %v2414, 31
    %v2417 = vsub.s32 32, %v2416
    %v2418 = vshrl.u32 683565275, %v2417
    %v2419 = vshll.u32 683565275, %v2416
    %v2420 = vshrl.u32 2475754826, %v2417
    %v2421 = vor.u32 %v2419, %v2420
    %v2422 = vshll.u32 2475754826, %v2416
    %v2423 = vshrl.u32 2131351028, %v2417
    %v2424 = vor.u32 %v2422, %v2423
    %v2425 = vshll.u32 2131351028, %v2416
    %v2426 = vshrl.u32 2102212464, %v2417
    %v2427 = vor.u32 %v2425, %v2426
    %v2428 = vshll.u32 2102212464, %v2416
    %v2429 = vshrl.u32 920167782, %v2417
    %v2430 = vor.u32 %v2428, %v2429
    %v2431 = vshll.u32 920167782, %v2416
    %v2432 = vshrl.u32 1326507024, %v2417
    %v2433 = vor.u32 %v2431, %v2432
    %vm2434 = vcmp.lt.s32.totalorder %v2415, 1
    %vm2435 = vcmp.lt.s32.totalorder %v2415, 2
    %vm2436 = vcmp.lt.s32.totalorder %v2415, 3
    %vm2437 = vcmp.lt.s32.totalorder %v2415, 4
    %v2438 = vsel %vm2434, %v2418, %v2421
    %v2439 = vsel %vm2437, %v2427, 2102212464
    %v2440 = vsel %vm2436, %v2424, %v2439
    %v2441 = vsel %vm2435, %v2438, %v2440
    %v2442 = vsel %vm2434, %v2421, %v2424
    %v2443 = vsel %vm2437, %v2430, 920167782
    %v2444 = vsel %vm2436, %v2427, %v2443
    %v2445 = vsel %vm2435, %v2442, %v2444
    %v2446 = vsel %vm2434, %v2424, %v2427
    %v2447 = vsel %vm2437, %v2433, 1326507024
    %v2448 = vsel %vm2436, %v2430, %v2447
    %v2449 = vsel %vm2435, %v2446, %v2448
    %v2450 = vshll.u32 %v2410, 8
    %v2451 = vmul.u32.u64.compose %v2450, %v2449
    %v2452 = vextract.low.u32 %v2451
    %v2453 = vextract.high.u32 %v2451
    %v2454 = vmul.u32.u64.compose %v2450, %v2445
    %v2455 = vextract.low.u32 %v2454
    %v2456 = vextract.high.u32 %v2454
    %v2457 = vmul.u32 %v2450, %v2441
    %v2458 = vadd.s32 %v2453, %v2455
    %vm2459 = vc.u32 %v2453, %v2455
    %v2460 = vadd.s32 %v2456, 1
    %v2461 = vsel %vm2459, %v2460, %v2456
    %v2462 = vadd.s32 %v2457, %v2461
    %v2463 = vadd.s32 %v2462, 536870912
    %v2464 = vshrl.u32 %v2463, 30
    %v2465 = vshll.u32 %v2464, 30
    %v2466 = vsub.s32 %v2462, %v2465
    %vm2467 = vcmp.lt.s32.totalorder %v2466, 0
    %v2468 = vsub.s32 0, %v2466
    %v2469 = vsel %vm2467, %v2468, %v2466
    %v2470 = vclz %v2469
    %v2471 = vsub.s32 %v2470, 2
    %vm2472 = vcmp.gt.s32.totalorder 0, %v2471
    %v2473 = vsel %vm2472, 0, %v2471
    %v2474 = vsub.s32 32, %v2473
    %v2475 = vshll.u32 %v2466, %v2473
    %v2476 = vshrl.u32 %v2458, %v2474
    %v2477 = vor.u32 %v2475, %v2476
    %v2478 = vsub.s32 4294967266, %v2473
    %v2479 = vadd.s32 %v2478, 127
    %v2480 = vshll.u32 %v2479, 23
    %v2481 = vor.u32 4788187, %v2480
    %v2482 = vand.u32 2147483647, %v2481
    %v2484 = vcvt.s32.f32 %v2477
    %v2485 = vmul.f32 %v2484, %v2482
    %v2486 = vxor.u32 %v2485, 2147483648
    %v2487 = vsel %vm2404, %v2486, %v2485
    %v2488 = vsub.s32 4, %v2464
    %v2489 = vsel %vm2404, %v2488, %v2464
    %v2490 = vsel %vm2403, %v207, %v2487
    %v2491 = vsel %vm2403, 0, %v2489
    %v2492 = vcosq.f32.pop %v2490
    %v2493 = vsinq.f32.pop %v2490
    %vm2494 = vweird.f32 %v207
    %v2495 = vadd.s32 %v2491, 3
    %v2496 = vand.u32 %v2495, 3
    %vm2497 = vcmp.lt.s32.totalorder %v2496, 2
    %vm2498 = vcmp.eq.s32.totalorder %v2496, 0
    %v2499 = vxor.u32 %v2493, 2147483648
    %v2500 = vsel %vm2498, %v2492, %v2499
    %vm2501 = vcmp.eq.s32.totalorder %v2496, 2
    %v2502 = vxor.u32 %v2492, 2147483648
    %v2503 = vsel %vm2501, %v2502, %v2493
    %v2504 = vsel %vm2497, %v2500, %v2503
    %v2505 = vsel %vm2494, nan, %v2504
    %v2506 = vand.u32 2147483647, %v208
    %vm2507 = vcmp.le.f32.partialorder %v2506, 0.7853982
    %vm2508 = vcmp.lt.s32.totalorder %v208, 0
    %v2509 = vand.u32 %v208, 2139095040
    %v2510 = vshrl.u32 %v2509, 23
    %v2511 = vsub.s32 %v2510, 127
    %v2512 = vand.u32 2147483647, %v208
    %v2513 = vand.u32 %v2512, 8388607
    %v2514 = vor.u32 %v2513, 8388608
    %v2515 = vsub.s32 0, %v2514
    %v2516 = vadd.s32 %v2511, 1
    %vm2517 = vcmp.gt.s32.totalorder %v2516, 0
    %v2518 = vsel %vm2517, %v2516, 0
    %v2519 = vshrl.u32 %v2518, 5
    %v2520 = vand.u32 %v2518, 31
    %v2521 = vsub.s32 32, %v2520
    %v2522 = vshrl.u32 683565275, %v2521
    %v2523 = vshll.u32 683565275, %v2520
    %v2524 = vshrl.u32 2475754826, %v2521
    %v2525 = vor.u32 %v2523, %v2524
    %v2526 = vshll.u32 2475754826, %v2520
    %v2527 = vshrl.u32 2131351028, %v2521
    %v2528 = vor.u32 %v2526, %v2527
    %v2529 = vshll.u32 2131351028, %v2520
    %v2530 = vshrl.u32 2102212464, %v2521
    %v2531 = vor.u32 %v2529, %v2530
    %v2532 = vshll.u32 2102212464, %v2520
    %v2533 = vshrl.u32 920167782, %v2521
    %v2534 = vor.u32 %v2532, %v2533
    %v2535 = vshll.u32 920167782, %v2520
    %v2536 = vshrl.u32 1326507024, %v2521
    %v2537 = vor.u32 %v2535, %v2536
    %vm2538 = vcmp.lt.s32.totalorder %v2519, 1
    %vm2539 = vcmp.lt.s32.totalorder %v2519, 2
    %vm2540 = vcmp.lt.s32.totalorder %v2519, 3
    %vm2541 = vcmp.lt.s32.totalorder %v2519, 4
    %v2542 = vsel %vm2538, %v2522, %v2525
    %v2543 = vsel %vm2541, %v2531, 2102212464
    %v2544 = vsel %vm2540, %v2528, %v2543
    %v2545 = vsel %vm2539, %v2542, %v2544
    %v2546 = vsel %vm2538, %v2525, %v2528
    %v2547 = vsel %vm2541, %v2534, 920167782
    %v2548 = vsel %vm2540, %v2531, %v2547
    %v2549 = vsel %vm2539, %v2546, %v2548
    %v2550 = vsel %vm2538, %v2528, %v2531
    %v2551 = vsel %vm2541, %v2537, 1326507024
    %v2552 = vsel %vm2540, %v2534, %v2551
    %v2553 = vsel %vm2539, %v2550, %v2552
    %v2554 = vshll.u32 %v2514, 8
    %v2555 = vmul.u32.u64.compose %v2554, %v2553
    %v2556 = vextract.low.u32 %v2555
    %v2557 = vextract.high.u32 %v2555
    %v2558 = vmul.u32.u64.compose %v2554, %v2549
    %v2559 = vextract.low.u32 %v2558
    %v2560 = vextract.high.u32 %v2558
    %v2561 = vmul.u32 %v2554, %v2545
    %v2562 = vadd.s32 %v2557, %v2559
    %vm2563 = vc.u32 %v2557, %v2559
    %v2564 = vadd.s32 %v2560, 1
    %v2565 = vsel %vm2563, %v2564, %v2560
    %v2566 = vadd.s32 %v2561, %v2565
    %v2567 = vadd.s32 %v2566, 536870912
    %v2568 = vshrl.u32 %v2567, 30
    %v2569 = vshll.u32 %v2568, 30
    %v2570 = vsub.s32 %v2566, %v2569
    %vm2571 = vcmp.lt.s32.totalorder %v2570, 0
    %v2572 = vsub.s32 0, %v2570
    %v2573 = vsel %vm2571, %v2572, %v2570
    %v2574 = vclz %v2573
    %v2575 = vsub.s32 %v2574, 2
    %vm2576 = vcmp.gt.s32.totalorder 0, %v2575
    %v2577 = vsel %vm2576, 0, %v2575
    %v2578 = vsub.s32 32, %v2577
    %v2579 = vshll.u32 %v2570, %v2577
    %v2580 = vshrl.u32 %v2562, %v2578
    %v2581 = vor.u32 %v2579, %v2580
    %v2582 = vsub.s32 4294967266, %v2577
    %v2583 = vadd.s32 %v2582, 127
    %v2584 = vshll.u32 %v2583, 23
    %v2585 = vor.u32 4788187, %v2584
    %v2586 = vand.u32 2147483647, %v2585
    %v2588 = vcvt.s32.f32 %v2581
    %v2589 = vmul.f32 %v2588, %v2586
    %v2590 = vxor.u32 %v2589, 2147483648
    %v2591 = vsel %vm2508, %v2590, %v2589
    %v2592 = vsub.s32 4, %v2568
    %v2593 = vsel %vm2508, %v2592, %v2568
    %v2594 = vsel %vm2507, %v208, %v2591
    %v2595 = vsel %vm2507, 0, %v2593
    %v2596 = vcosq.f32.pop %v2594
    %v2597 = vsinq.f32.pop %v2594
    %vm2598 = vweird.f32 %v208
    %v2599 = vadd.s32 %v2595, 3
    %v2600 = vand.u32 %v2599, 3
    %vm2601 = vcmp.lt.s32.totalorder %v2600, 2
    %vm2602 = vcmp.eq.s32.totalorder %v2600, 0
    %v2603 = vxor.u32 %v2597, 2147483648
    %v2604 = vsel %vm2602, %v2596, %v2603
    %vm2605 = vcmp.eq.s32.totalorder %v2600, 2
    %v2606 = vxor.u32 %v2596, 2147483648
    %v2607 = vsel %vm2605, %v2606, %v2597
    %v2608 = vsel %vm2601, %v2604, %v2607
    %v2609 = vsel %vm2598, nan, %v2608
    %v2610 = vand.u32 2147483647, %v209
    %vm2611 = vcmp.le.f32.partialorder %v2610, 0.7853982
    %vm2612 = vcmp.lt.s32.totalorder %v209, 0
    %v2613 = vand.u32 %v209, 2139095040
    %v2614 = vshrl.u32 %v2613, 23
    %v2615 = vsub.s32 %v2614, 127
    %v2616 = vand.u32 2147483647, %v209
    %v2617 = vand.u32 %v2616, 8388607
    %v2618 = vor.u32 %v2617, 8388608
    %v2619 = vsub.s32 0, %v2618
    %v2620 = vadd.s32 %v2615, 1
    %vm2621 = vcmp.gt.s32.totalorder %v2620, 0
    %v2622 = vsel %vm2621, %v2620, 0
    %v2623 = vshrl.u32 %v2622, 5
    %v2624 = vand.u32 %v2622, 31
    %v2625 = vsub.s32 32, %v2624
    %v2626 = vshrl.u32 683565275, %v2625
    %v2627 = vshll.u32 683565275, %v2624
    %v2628 = vshrl.u32 2475754826, %v2625
    %v2629 = vor.u32 %v2627, %v2628
    %v2630 = vshll.u32 2475754826, %v2624
    %v2631 = vshrl.u32 2131351028, %v2625
    %v2632 = vor.u32 %v2630, %v2631
    %v2633 = vshll.u32 2131351028, %v2624
    %v2634 = vshrl.u32 2102212464, %v2625
    %v2635 = vor.u32 %v2633, %v2634
    %v2636 = vshll.u32 2102212464, %v2624
    %v2637 = vshrl.u32 920167782, %v2625
    %v2638 = vor.u32 %v2636, %v2637
    %v2639 = vshll.u32 920167782, %v2624
    %v2640 = vshrl.u32 1326507024, %v2625
    %v2641 = vor.u32 %v2639, %v2640
    %vm2642 = vcmp.lt.s32.totalorder %v2623, 1
    %vm2643 = vcmp.lt.s32.totalorder %v2623, 2
    %vm2644 = vcmp.lt.s32.totalorder %v2623, 3
    %vm2645 = vcmp.lt.s32.totalorder %v2623, 4
    %v2646 = vsel %vm2642, %v2626, %v2629
    %v2647 = vsel %vm2645, %v2635, 2102212464
    %v2648 = vsel %vm2644, %v2632, %v2647
    %v2649 = vsel %vm2643, %v2646, %v2648
    %v2650 = vsel %vm2642, %v2629, %v2632
    %v2651 = vsel %vm2645, %v2638, 920167782
    %v2652 = vsel %vm2644, %v2635, %v2651
    %v2653 = vsel %vm2643, %v2650, %v2652
    %v2654 = vsel %vm2642, %v2632, %v2635
    %v2655 = vsel %vm2645, %v2641, 1326507024
    %v2656 = vsel %vm2644, %v2638, %v2655
    %v2657 = vsel %vm2643, %v2654, %v2656
    %v2658 = vshll.u32 %v2618, 8
    %v2659 = vmul.u32.u64.compose %v2658, %v2657
    %v2660 = vextract.low.u32 %v2659
    %v2661 = vextract.high.u32 %v2659
    %v2662 = vmul.u32.u64.compose %v2658, %v2653
    %v2663 = vextract.low.u32 %v2662
    %v2664 = vextract.high.u32 %v2662
    %v2665 = vmul.u32 %v2658, %v2649
    %v2666 = vadd.s32 %v2661, %v2663
    %vm2667 = vc.u32 %v2661, %v2663
    %v2668 = vadd.s32 %v2664, 1
    %v2669 = vsel %vm2667, %v2668, %v2664
    %v2670 = vadd.s32 %v2665, %v2669
    %v2671 = vadd.s32 %v2670, 536870912
    %v2672 = vshrl.u32 %v2671, 30
    %v2673 = vshll.u32 %v2672, 30
    %v2674 = vsub.s32 %v2670, %v2673
    %vm2675 = vcmp.lt.s32.totalorder %v2674, 0
    %v2676 = vsub.s32 0, %v2674
    %v2677 = vsel %vm2675, %v2676, %v2674
    %v2678 = vclz %v2677
    %v2679 = vsub.s32 %v2678, 2
    %vm2680 = vcmp.gt.s32.totalorder 0, %v2679
    %v2681 = vsel %vm2680, 0, %v2679
    %v2682 = vsub.s32 32, %v2681
    %v2683 = vshll.u32 %v2674, %v2681
    %v2684 = vshrl.u32 %v2666, %v2682
    %v2685 = vor.u32 %v2683, %v2684
    %v2686 = vsub.s32 4294967266, %v2681
    %v2687 = vadd.s32 %v2686, 127
    %v2688 = vshll.u32 %v2687, 23
    %v2689 = vor.u32 4788187, %v2688
    %v2690 = vand.u32 2147483647, %v2689
    %v2692 = vcvt.s32.f32 %v2685
    %v2693 = vmul.f32 %v2692, %v2690
    %v2694 = vxor.u32 %v2693, 2147483648
    %v2695 = vsel %vm2612, %v2694, %v2693
    %v2696 = vsub.s32 4, %v2672
    %v2697 = vsel %vm2612, %v2696, %v2672
    %v2698 = vsel %vm2611, %v209, %v2695
    %v2699 = vsel %vm2611, 0, %v2697
    %v2700 = vcosq.f32.pop %v2698
    %v2701 = vsinq.f32.pop %v2698
    %vm2702 = vweird.f32 %v209
    %v2703 = vadd.s32 %v2699, 3
    %v2704 = vand.u32 %v2703, 3
    %vm2705 = vcmp.lt.s32.totalorder %v2704, 2
    %vm2706 = vcmp.eq.s32.totalorder %v2704, 0
    %v2707 = vxor.u32 %v2701, 2147483648
    %v2708 = vsel %vm2706, %v2700, %v2707
    %vm2709 = vcmp.eq.s32.totalorder %v2704, 2
    %v2710 = vxor.u32 %v2700, 2147483648
    %v2711 = vsel %vm2709, %v2710, %v2701
    %v2712 = vsel %vm2705, %v2708, %v2711
    %v2713 = vsel %vm2702, nan, %v2712
    %v2714 = vand.u32 2147483647, %v210
    %vm2715 = vcmp.le.f32.partialorder %v2714, 0.7853982
    %vm2716 = vcmp.lt.s32.totalorder %v210, 0
    %v2717 = vand.u32 %v210, 2139095040
    %v2718 = vshrl.u32 %v2717, 23
    %v2719 = vsub.s32 %v2718, 127
    %v2720 = vand.u32 2147483647, %v210
    %v2721 = vand.u32 %v2720, 8388607
    %v2722 = vor.u32 %v2721, 8388608
    %v2723 = vsub.s32 0, %v2722
    %v2724 = vadd.s32 %v2719, 1
    %vm2725 = vcmp.gt.s32.totalorder %v2724, 0
    %v2726 = vsel %vm2725, %v2724, 0
    %v2727 = vshrl.u32 %v2726, 5
    %v2728 = vand.u32 %v2726, 31
    %v2729 = vsub.s32 32, %v2728
    %v2730 = vshrl.u32 683565275, %v2729
    %v2731 = vshll.u32 683565275, %v2728
    %v2732 = vshrl.u32 2475754826, %v2729
    %v2733 = vor.u32 %v2731, %v2732
    %v2734 = vshll.u32 2475754826, %v2728
    %v2735 = vshrl.u32 2131351028, %v2729
    %v2736 = vor.u32 %v2734, %v2735
    %v2737 = vshll.u32 2131351028, %v2728
    %v2738 = vshrl.u32 2102212464, %v2729
    %v2739 = vor.u32 %v2737, %v2738
    %v2740 = vshll.u32 2102212464, %v2728
    %v2741 = vshrl.u32 920167782, %v2729
    %v2742 = vor.u32 %v2740, %v2741
    %v2743 = vshll.u32 920167782, %v2728
    %v2744 = vshrl.u32 1326507024, %v2729
    %v2745 = vor.u32 %v2743, %v2744
    %vm2746 = vcmp.lt.s32.totalorder %v2727, 1
    %vm2747 = vcmp.lt.s32.totalorder %v2727, 2
    %vm2748 = vcmp.lt.s32.totalorder %v2727, 3
    %vm2749 = vcmp.lt.s32.totalorder %v2727, 4
    %v2750 = vsel %vm2746, %v2730, %v2733
    %v2751 = vsel %vm2749, %v2739, 2102212464
    %v2752 = vsel %vm2748, %v2736, %v2751
    %v2753 = vsel %vm2747, %v2750, %v2752
    %v2754 = vsel %vm2746, %v2733, %v2736
    %v2755 = vsel %vm2749, %v2742, 920167782
    %v2756 = vsel %vm2748, %v2739, %v2755
    %v2757 = vsel %vm2747, %v2754, %v2756
    %v2758 = vsel %vm2746, %v2736, %v2739
    %v2759 = vsel %vm2749, %v2745, 1326507024
    %v2760 = vsel %vm2748, %v2742, %v2759
    %v2761 = vsel %vm2747, %v2758, %v2760
    %v2762 = vshll.u32 %v2722, 8
    %v2763 = vmul.u32.u64.compose %v2762, %v2761
    %v2764 = vextract.low.u32 %v2763
    %v2765 = vextract.high.u32 %v2763
    %v2766 = vmul.u32.u64.compose %v2762, %v2757
    %v2767 = vextract.low.u32 %v2766
    %v2768 = vextract.high.u32 %v2766
    %v2769 = vmul.u32 %v2762, %v2753
    %v2770 = vadd.s32 %v2765, %v2767
    %vm2771 = vc.u32 %v2765, %v2767
    %v2772 = vadd.s32 %v2768, 1
    %v2773 = vsel %vm2771, %v2772, %v2768
    %v2774 = vadd.s32 %v2769, %v2773
    %v2775 = vadd.s32 %v2774, 536870912
    %v2776 = vshrl.u32 %v2775, 30
    %v2777 = vshll.u32 %v2776, 30
    %v2778 = vsub.s32 %v2774, %v2777
    %vm2779 = vcmp.lt.s32.totalorder %v2778, 0
    %v2780 = vsub.s32 0, %v2778
    %v2781 = vsel %vm2779, %v2780, %v2778
    %v2782 = vclz %v2781
    %v2783 = vsub.s32 %v2782, 2
    %vm2784 = vcmp.gt.s32.totalorder 0, %v2783
    %v2785 = vsel %vm2784, 0, %v2783
    %v2786 = vsub.s32 32, %v2785
    %v2787 = vshll.u32 %v2778, %v2785
    %v2788 = vshrl.u32 %v2770, %v2786
    %v2789 = vor.u32 %v2787, %v2788
    %v2790 = vsub.s32 4294967266, %v2785
    %v2791 = vadd.s32 %v2790, 127
    %v2792 = vshll.u32 %v2791, 23
    %v2793 = vor.u32 4788187, %v2792
    %v2794 = vand.u32 2147483647, %v2793
    %v2796 = vcvt.s32.f32 %v2789
    %v2797 = vmul.f32 %v2796, %v2794
    %v2798 = vxor.u32 %v2797, 2147483648
    %v2799 = vsel %vm2716, %v2798, %v2797
    %v2800 = vsub.s32 4, %v2776
    %v2801 = vsel %vm2716, %v2800, %v2776
    %v2802 = vsel %vm2715, %v210, %v2799
    %v2803 = vsel %vm2715, 0, %v2801
    %v2804 = vcosq.f32.pop %v2802
    %v2805 = vsinq.f32.pop %v2802
    %vm2806 = vweird.f32 %v210
    %v2807 = vadd.s32 %v2803, 3
    %v2808 = vand.u32 %v2807, 3
    %vm2809 = vcmp.lt.s32.totalorder %v2808, 2
    %vm2810 = vcmp.eq.s32.totalorder %v2808, 0
    %v2811 = vxor.u32 %v2805, 2147483648
    %v2812 = vsel %vm2810, %v2804, %v2811
    %vm2813 = vcmp.eq.s32.totalorder %v2808, 2
    %v2814 = vxor.u32 %v2804, 2147483648
    %v2815 = vsel %vm2813, %v2814, %v2805
    %v2816 = vsel %vm2809, %v2812, %v2815
    %v2817 = vsel %vm2806, nan, %v2816
    %v2818 = vand.u32 2147483647, %v211
    %vm2819 = vcmp.le.f32.partialorder %v2818, 0.7853982
    %vm2820 = vcmp.lt.s32.totalorder %v211, 0
    %v2821 = vand.u32 %v211, 2139095040
    %v2822 = vshrl.u32 %v2821, 23
    %v2823 = vsub.s32 %v2822, 127
    %v2824 = vand.u32 2147483647, %v211
    %v2825 = vand.u32 %v2824, 8388607
    %v2826 = vor.u32 %v2825, 8388608
    %v2827 = vsub.s32 0, %v2826
    %v2828 = vadd.s32 %v2823, 1
    %vm2829 = vcmp.gt.s32.totalorder %v2828, 0
    %v2830 = vsel %vm2829, %v2828, 0
    %v2831 = vshrl.u32 %v2830, 5
    %v2832 = vand.u32 %v2830, 31
    %v2833 = vsub.s32 32, %v2832
    %v2834 = vshrl.u32 683565275, %v2833
    %v2835 = vshll.u32 683565275, %v2832
    %v2836 = vshrl.u32 2475754826, %v2833
    %v2837 = vor.u32 %v2835, %v2836
    %v2838 = vshll.u32 2475754826, %v2832
    %v2839 = vshrl.u32 2131351028, %v2833
    %v2840 = vor.u32 %v2838, %v2839
    %v2841 = vshll.u32 2131351028, %v2832
    %v2842 = vshrl.u32 2102212464, %v2833
    %v2843 = vor.u32 %v2841, %v2842
    %v2844 = vshll.u32 2102212464, %v2832
    %v2845 = vshrl.u32 920167782, %v2833
    %v2846 = vor.u32 %v2844, %v2845
    %v2847 = vshll.u32 920167782, %v2832
    %v2848 = vshrl.u32 1326507024, %v2833
    %v2849 = vor.u32 %v2847, %v2848
    %vm2850 = vcmp.lt.s32.totalorder %v2831, 1
    %vm2851 = vcmp.lt.s32.totalorder %v2831, 2
    %vm2852 = vcmp.lt.s32.totalorder %v2831, 3
    %vm2853 = vcmp.lt.s32.totalorder %v2831, 4
    %v2854 = vsel %vm2850, %v2834, %v2837
    %v2855 = vsel %vm2853, %v2843, 2102212464
    %v2856 = vsel %vm2852, %v2840, %v2855
    %v2857 = vsel %vm2851, %v2854, %v2856
    %v2858 = vsel %vm2850, %v2837, %v2840
    %v2859 = vsel %vm2853, %v2846, 920167782
    %v2860 = vsel %vm2852, %v2843, %v2859
    %v2861 = vsel %vm2851, %v2858, %v2860
    %v2862 = vsel %vm2850, %v2840, %v2843
    %v2863 = vsel %vm2853, %v2849, 1326507024
    %v2864 = vsel %vm2852, %v2846, %v2863
    %v2865 = vsel %vm2851, %v2862, %v2864
    %v2866 = vshll.u32 %v2826, 8
    %v2867 = vmul.u32.u64.compose %v2866, %v2865
    %v2868 = vextract.low.u32 %v2867
    %v2869 = vextract.high.u32 %v2867
    %v2870 = vmul.u32.u64.compose %v2866, %v2861
    %v2871 = vextract.low.u32 %v2870
    %v2872 = vextract.high.u32 %v2870
    %v2873 = vmul.u32 %v2866, %v2857
    %v2874 = vadd.s32 %v2869, %v2871
    %vm2875 = vc.u32 %v2869, %v2871
    %v2876 = vadd.s32 %v2872, 1
    %v2877 = vsel %vm2875, %v2876, %v2872
    %v2878 = vadd.s32 %v2873, %v2877
    %v2879 = vadd.s32 %v2878, 536870912
    %v2880 = vshrl.u32 %v2879, 30
    %v2881 = vshll.u32 %v2880, 30
    %v2882 = vsub.s32 %v2878, %v2881
    %vm2883 = vcmp.lt.s32.totalorder %v2882, 0
    %v2884 = vsub.s32 0, %v2882
    %v2885 = vsel %vm2883, %v2884, %v2882
    %v2886 = vclz %v2885
    %v2887 = vsub.s32 %v2886, 2
    %vm2888 = vcmp.gt.s32.totalorder 0, %v2887
    %v2889 = vsel %vm2888, 0, %v2887
    %v2890 = vsub.s32 32, %v2889
    %v2891 = vshll.u32 %v2882, %v2889
    %v2892 = vshrl.u32 %v2874, %v2890
    %v2893 = vor.u32 %v2891, %v2892
    %v2894 = vsub.s32 4294967266, %v2889
    %v2895 = vadd.s32 %v2894, 127
    %v2896 = vshll.u32 %v2895, 23
    %v2897 = vor.u32 4788187, %v2896
    %v2898 = vand.u32 2147483647, %v2897
    %v2900 = vcvt.s32.f32 %v2893
    %v2901 = vmul.f32 %v2900, %v2898
    %v2902 = vxor.u32 %v2901, 2147483648
    %v2903 = vsel %vm2820, %v2902, %v2901
    %v2904 = vsub.s32 4, %v2880
    %v2905 = vsel %vm2820, %v2904, %v2880
    %v2906 = vsel %vm2819, %v211, %v2903
    %v2907 = vsel %vm2819, 0, %v2905
    %v2908 = vcosq.f32.pop %v2906
    %v2909 = vsinq.f32.pop %v2906
    %vm2910 = vweird.f32 %v211
    %v2911 = vadd.s32 %v2907, 3
    %v2912 = vand.u32 %v2911, 3
    %vm2913 = vcmp.lt.s32.totalorder %v2912, 2
    %vm2914 = vcmp.eq.s32.totalorder %v2912, 0
    %v2915 = vxor.u32 %v2909, 2147483648
    %v2916 = vsel %vm2914, %v2908, %v2915
    %vm2917 = vcmp.eq.s32.totalorder %v2912, 2
    %v2918 = vxor.u32 %v2908, 2147483648
    %v2919 = vsel %vm2917, %v2918, %v2909
    %v2920 = vsel %vm2913, %v2916, %v2919
    %v2921 = vsel %vm2910, nan, %v2920
    %v2922 = vand.u32 2147483647, %v212
    %vm2923 = vcmp.le.f32.partialorder %v2922, 0.7853982
    %vm2924 = vcmp.lt.s32.totalorder %v212, 0
    %v2925 = vand.u32 %v212, 2139095040
    %v2926 = vshrl.u32 %v2925, 23
    %v2927 = vsub.s32 %v2926, 127
    %v2928 = vand.u32 2147483647, %v212
    %v2929 = vand.u32 %v2928, 8388607
    %v2930 = vor.u32 %v2929, 8388608
    %v2931 = vsub.s32 0, %v2930
    %v2932 = vadd.s32 %v2927, 1
    %vm2933 = vcmp.gt.s32.totalorder %v2932, 0
    %v2934 = vsel %vm2933, %v2932, 0
    %v2935 = vshrl.u32 %v2934, 5
    %v2936 = vand.u32 %v2934, 31
    %v2937 = vsub.s32 32, %v2936
    %v2938 = vshrl.u32 683565275, %v2937
    %v2939 = vshll.u32 683565275, %v2936
    %v2940 = vshrl.u32 2475754826, %v2937
    %v2941 = vor.u32 %v2939, %v2940
    %v2942 = vshll.u32 2475754826, %v2936
    %v2943 = vshrl.u32 2131351028, %v2937
    %v2944 = vor.u32 %v2942, %v2943
    %v2945 = vshll.u32 2131351028, %v2936
    %v2946 = vshrl.u32 2102212464, %v2937
    %v2947 = vor.u32 %v2945, %v2946
    %v2948 = vshll.u32 2102212464, %v2936
    %v2949 = vshrl.u32 920167782, %v2937
    %v2950 = vor.u32 %v2948, %v2949
    %v2951 = vshll.u32 920167782, %v2936
    %v2952 = vshrl.u32 1326507024, %v2937
    %v2953 = vor.u32 %v2951, %v2952
    %vm2954 = vcmp.lt.s32.totalorder %v2935, 1
    %vm2955 = vcmp.lt.s32.totalorder %v2935, 2
    %vm2956 = vcmp.lt.s32.totalorder %v2935, 3
    %vm2957 = vcmp.lt.s32.totalorder %v2935, 4
    %v2958 = vsel %vm2954, %v2938, %v2941
    %v2959 = vsel %vm2957, %v2947, 2102212464
    %v2960 = vsel %vm2956, %v2944, %v2959
    %v2961 = vsel %vm2955, %v2958, %v2960
    %v2962 = vsel %vm2954, %v2941, %v2944
    %v2963 = vsel %vm2957, %v2950, 920167782
    %v2964 = vsel %vm2956, %v2947, %v2963
    %v2965 = vsel %vm2955, %v2962, %v2964
    %v2966 = vsel %vm2954, %v2944, %v2947
    %v2967 = vsel %vm2957, %v2953, 1326507024
    %v2968 = vsel %vm2956, %v2950, %v2967
    %v2969 = vsel %vm2955, %v2966, %v2968
    %v2970 = vshll.u32 %v2930, 8
    %v2971 = vmul.u32.u64.compose %v2970, %v2969
    %v2972 = vextract.low.u32 %v2971
    %v2973 = vextract.high.u32 %v2971
    %v2974 = vmul.u32.u64.compose %v2970, %v2965
    %v2975 = vextract.low.u32 %v2974
    %v2976 = vextract.high.u32 %v2974
    %v2977 = vmul.u32 %v2970, %v2961
    %v2978 = vadd.s32 %v2973, %v2975
    %vm2979 = vc.u32 %v2973, %v2975
    %v2980 = vadd.s32 %v2976, 1
    %v2981 = vsel %vm2979, %v2980, %v2976
    %v2982 = vadd.s32 %v2977, %v2981
    %v2983 = vadd.s32 %v2982, 536870912
    %v2984 = vshrl.u32 %v2983, 30
    %v2985 = vshll.u32 %v2984, 30
    %v2986 = vsub.s32 %v2982, %v2985
    %vm2987 = vcmp.lt.s32.totalorder %v2986, 0
    %v2988 = vsub.s32 0, %v2986
    %v2989 = vsel %vm2987, %v2988, %v2986
    %v2990 = vclz %v2989
    %v2991 = vsub.s32 %v2990, 2
    %vm2992 = vcmp.gt.s32.totalorder 0, %v2991
    %v2993 = vsel %vm2992, 0, %v2991
    %v2994 = vsub.s32 32, %v2993
    %v2995 = vshll.u32 %v2986, %v2993
    %v2996 = vshrl.u32 %v2978, %v2994
    %v2997 = vor.u32 %v2995, %v2996
    %v2998 = vsub.s32 4294967266, %v2993
    %v2999 = vadd.s32 %v2998, 127
    %v3000 = vshll.u32 %v2999, 23
    %v3001 = vor.u32 4788187, %v3000
    %v3002 = vand.u32 2147483647, %v3001
    %v3004 = vcvt.s32.f32 %v2997
    %v3005 = vmul.f32 %v3004, %v3002
    %v3006 = vxor.u32 %v3005, 2147483648
    %v3007 = vsel %vm2924, %v3006, %v3005
    %v3008 = vsub.s32 4, %v2984
    %v3009 = vsel %vm2924, %v3008, %v2984
    %v3010 = vsel %vm2923, %v212, %v3007
    %v3011 = vsel %vm2923, 0, %v3009
    %v3012 = vcosq.f32.pop %v3010
    %v3013 = vsinq.f32.pop %v3010
    %vm3014 = vweird.f32 %v212
    %v3015 = vadd.s32 %v3011, 3
    %v3016 = vand.u32 %v3015, 3
    %vm3017 = vcmp.lt.s32.totalorder %v3016, 2
    %vm3018 = vcmp.eq.s32.totalorder %v3016, 0
    %v3019 = vxor.u32 %v3013, 2147483648
    %v3020 = vsel %vm3018, %v3012, %v3019
    %vm3021 = vcmp.eq.s32.totalorder %v3016, 2
    %v3022 = vxor.u32 %v3012, 2147483648
    %v3023 = vsel %vm3021, %v3022, %v3013
    %v3024 = vsel %vm3017, %v3020, %v3023
    %v3025 = vsel %vm3014, nan, %v3024
    %v3026 = vand.u32 2147483647, %v213
    %vm3027 = vcmp.le.f32.partialorder %v3026, 0.7853982
    %vm3028 = vcmp.lt.s32.totalorder %v213, 0
    %v3029 = vand.u32 %v213, 2139095040
    %v3030 = vshrl.u32 %v3029, 23
    %v3031 = vsub.s32 %v3030, 127
    %v3032 = vand.u32 2147483647, %v213
    %v3033 = vand.u32 %v3032, 8388607
    %v3034 = vor.u32 %v3033, 8388608
    %v3035 = vsub.s32 0, %v3034
    %v3036 = vadd.s32 %v3031, 1
    %vm3037 = vcmp.gt.s32.totalorder %v3036, 0
    %v3038 = vsel %vm3037, %v3036, 0
    %v3039 = vshrl.u32 %v3038, 5
    %v3040 = vand.u32 %v3038, 31
    %v3041 = vsub.s32 32, %v3040
    %v3042 = vshrl.u32 683565275, %v3041
    %v3043 = vshll.u32 683565275, %v3040
    %v3044 = vshrl.u32 2475754826, %v3041
    %v3045 = vor.u32 %v3043, %v3044
    %v3046 = vshll.u32 2475754826, %v3040
    %v3047 = vshrl.u32 2131351028, %v3041
    %v3048 = vor.u32 %v3046, %v3047
    %v3049 = vshll.u32 2131351028, %v3040
    %v3050 = vshrl.u32 2102212464, %v3041
    %v3051 = vor.u32 %v3049, %v3050
    %v3052 = vshll.u32 2102212464, %v3040
    %v3053 = vshrl.u32 920167782, %v3041
    %v3054 = vor.u32 %v3052, %v3053
    %v3055 = vshll.u32 920167782, %v3040
    %v3056 = vshrl.u32 1326507024, %v3041
    %v3057 = vor.u32 %v3055, %v3056
    %vm3058 = vcmp.lt.s32.totalorder %v3039, 1
    %vm3059 = vcmp.lt.s32.totalorder %v3039, 2
    %vm3060 = vcmp.lt.s32.totalorder %v3039, 3
    %vm3061 = vcmp.lt.s32.totalorder %v3039, 4
    %v3062 = vsel %vm3058, %v3042, %v3045
    %v3063 = vsel %vm3061, %v3051, 2102212464
    %v3064 = vsel %vm3060, %v3048, %v3063
    %v3065 = vsel %vm3059, %v3062, %v3064
    %v3066 = vsel %vm3058, %v3045, %v3048
    %v3067 = vsel %vm3061, %v3054, 920167782
    %v3068 = vsel %vm3060, %v3051, %v3067
    %v3069 = vsel %vm3059, %v3066, %v3068
    %v3070 = vsel %vm3058, %v3048, %v3051
    %v3071 = vsel %vm3061, %v3057, 1326507024
    %v3072 = vsel %vm3060, %v3054, %v3071
    %v3073 = vsel %vm3059, %v3070, %v3072
    %v3074 = vshll.u32 %v3034, 8
    %v3075 = vmul.u32.u64.compose %v3074, %v3073
    %v3076 = vextract.low.u32 %v3075
    %v3077 = vextract.high.u32 %v3075
    %v3078 = vmul.u32.u64.compose %v3074, %v3069
    %v3079 = vextract.low.u32 %v3078
    %v3080 = vextract.high.u32 %v3078
    %v3081 = vmul.u32 %v3074, %v3065
    %v3082 = vadd.s32 %v3077, %v3079
    %vm3083 = vc.u32 %v3077, %v3079
    %v3084 = vadd.s32 %v3080, 1
    %v3085 = vsel %vm3083, %v3084, %v3080
    %v3086 = vadd.s32 %v3081, %v3085
    %v3087 = vadd.s32 %v3086, 536870912
    %v3088 = vshrl.u32 %v3087, 30
    %v3089 = vshll.u32 %v3088, 30
    %v3090 = vsub.s32 %v3086, %v3089
    %vm3091 = vcmp.lt.s32.totalorder %v3090, 0
    %v3092 = vsub.s32 0, %v3090
    %v3093 = vsel %vm3091, %v3092, %v3090
    %v3094 = vclz %v3093
    %v3095 = vsub.s32 %v3094, 2
    %vm3096 = vcmp.gt.s32.totalorder 0, %v3095
    %v3097 = vsel %vm3096, 0, %v3095
    %v3098 = vsub.s32 32, %v3097
    %v3099 = vshll.u32 %v3090, %v3097
    %v3100 = vshrl.u32 %v3082, %v3098
    %v3101 = vor.u32 %v3099, %v3100
    %v3102 = vsub.s32 4294967266, %v3097
    %v3103 = vadd.s32 %v3102, 127
    %v3104 = vshll.u32 %v3103, 23
    %v3105 = vor.u32 4788187, %v3104
    %v3106 = vand.u32 2147483647, %v3105
    %v3108 = vcvt.s32.f32 %v3101
    %v3109 = vmul.f32 %v3108, %v3106
    %v3110 = vxor.u32 %v3109, 2147483648
    %v3111 = vsel %vm3028, %v3110, %v3109
    %v3112 = vsub.s32 4, %v3088
    %v3113 = vsel %vm3028, %v3112, %v3088
    %v3114 = vsel %vm3027, %v213, %v3111
    %v3115 = vsel %vm3027, 0, %v3113
    %v3116 = vcosq.f32.pop %v3114
    %v3117 = vsinq.f32.pop %v3114
    %vm3118 = vweird.f32 %v213
    %v3119 = vadd.s32 %v3115, 3
    %v3120 = vand.u32 %v3119, 3
    %vm3121 = vcmp.lt.s32.totalorder %v3120, 2
    %vm3122 = vcmp.eq.s32.totalorder %v3120, 0
    %v3123 = vxor.u32 %v3117, 2147483648
    %v3124 = vsel %vm3122, %v3116, %v3123
    %vm3125 = vcmp.eq.s32.totalorder %v3120, 2
    %v3126 = vxor.u32 %v3116, 2147483648
    %v3127 = vsel %vm3125, %v3126, %v3117
    %v3128 = vsel %vm3121, %v3124, %v3127
    %v3129 = vsel %vm3118, nan, %v3128
    %v3130 = vand.u32 2147483647, %v214
    %vm3131 = vcmp.le.f32.partialorder %v3130, 0.7853982
    %vm3132 = vcmp.lt.s32.totalorder %v214, 0
    %v3133 = vand.u32 %v214, 2139095040
    %v3134 = vshrl.u32 %v3133, 23
    %v3135 = vsub.s32 %v3134, 127
    %v3136 = vand.u32 2147483647, %v214
    %v3137 = vand.u32 %v3136, 8388607
    %v3138 = vor.u32 %v3137, 8388608
    %v3139 = vsub.s32 0, %v3138
    %v3140 = vadd.s32 %v3135, 1
    %vm3141 = vcmp.gt.s32.totalorder %v3140, 0
    %v3142 = vsel %vm3141, %v3140, 0
    %v3143 = vshrl.u32 %v3142, 5
    %v3144 = vand.u32 %v3142, 31
    %v3145 = vsub.s32 32, %v3144
    %v3146 = vshrl.u32 683565275, %v3145
    %v3147 = vshll.u32 683565275, %v3144
    %v3148 = vshrl.u32 2475754826, %v3145
    %v3149 = vor.u32 %v3147, %v3148
    %v3150 = vshll.u32 2475754826, %v3144
    %v3151 = vshrl.u32 2131351028, %v3145
    %v3152 = vor.u32 %v3150, %v3151
    %v3153 = vshll.u32 2131351028, %v3144
    %v3154 = vshrl.u32 2102212464, %v3145
    %v3155 = vor.u32 %v3153, %v3154
    %v3156 = vshll.u32 2102212464, %v3144
    %v3157 = vshrl.u32 920167782, %v3145
    %v3158 = vor.u32 %v3156, %v3157
    %v3159 = vshll.u32 920167782, %v3144
    %v3160 = vshrl.u32 1326507024, %v3145
    %v3161 = vor.u32 %v3159, %v3160
    %vm3162 = vcmp.lt.s32.totalorder %v3143, 1
    %vm3163 = vcmp.lt.s32.totalorder %v3143, 2
    %vm3164 = vcmp.lt.s32.totalorder %v3143, 3
    %vm3165 = vcmp.lt.s32.totalorder %v3143, 4
    %v3166 = vsel %vm3162, %v3146, %v3149
    %v3167 = vsel %vm3165, %v3155, 2102212464
    %v3168 = vsel %vm3164, %v3152, %v3167
    %v3169 = vsel %vm3163, %v3166, %v3168
    %v3170 = vsel %vm3162, %v3149, %v3152
    %v3171 = vsel %vm3165, %v3158, 920167782
    %v3172 = vsel %vm3164, %v3155, %v3171
    %v3173 = vsel %vm3163, %v3170, %v3172
    %v3174 = vsel %vm3162, %v3152, %v3155
    %v3175 = vsel %vm3165, %v3161, 1326507024
    %v3176 = vsel %vm3164, %v3158, %v3175
    %v3177 = vsel %vm3163, %v3174, %v3176
    %v3178 = vshll.u32 %v3138, 8
    %v3179 = vmul.u32.u64.compose %v3178, %v3177
    %v3180 = vextract.low.u32 %v3179
    %v3181 = vextract.high.u32 %v3179
    %v3182 = vmul.u32.u64.compose %v3178, %v3173
    %v3183 = vextract.low.u32 %v3182
    %v3184 = vextract.high.u32 %v3182
    %v3185 = vmul.u32 %v3178, %v3169
    %v3186 = vadd.s32 %v3181, %v3183
    %vm3187 = vc.u32 %v3181, %v3183
    %v3188 = vadd.s32 %v3184, 1
    %v3189 = vsel %vm3187, %v3188, %v3184
    %v3190 = vadd.s32 %v3185, %v3189
    %v3191 = vadd.s32 %v3190, 536870912
    %v3192 = vshrl.u32 %v3191, 30
    %v3193 = vshll.u32 %v3192, 30
    %v3194 = vsub.s32 %v3190, %v3193
    %vm3195 = vcmp.lt.s32.totalorder %v3194, 0
    %v3196 = vsub.s32 0, %v3194
    %v3197 = vsel %vm3195, %v3196, %v3194
    %v3198 = vclz %v3197
    %v3199 = vsub.s32 %v3198, 2
    %vm3200 = vcmp.gt.s32.totalorder 0, %v3199
    %v3201 = vsel %vm3200, 0, %v3199
    %v3202 = vsub.s32 32, %v3201
    %v3203 = vshll.u32 %v3194, %v3201
    %v3204 = vshrl.u32 %v3186, %v3202
    %v3205 = vor.u32 %v3203, %v3204
    %v3206 = vsub.s32 4294967266, %v3201
    %v3207 = vadd.s32 %v3206, 127
    %v3208 = vshll.u32 %v3207, 23
    %v3209 = vor.u32 4788187, %v3208
    %v3210 = vand.u32 2147483647, %v3209
    %v3212 = vcvt.s32.f32 %v3205
    %v3213 = vmul.f32 %v3212, %v3210
    %v3214 = vxor.u32 %v3213, 2147483648
    %v3215 = vsel %vm3132, %v3214, %v3213
    %v3216 = vsub.s32 4, %v3192
    %v3217 = vsel %vm3132, %v3216, %v3192
    %v3218 = vsel %vm3131, %v214, %v3215
    %v3219 = vsel %vm3131, 0, %v3217
    %v3220 = vcosq.f32.pop %v3218
    %v3221 = vsinq.f32.pop %v3218
    %vm3222 = vweird.f32 %v214
    %v3223 = vadd.s32 %v3219, 3
    %v3224 = vand.u32 %v3223, 3
    %vm3225 = vcmp.lt.s32.totalorder %v3224, 2
    %vm3226 = vcmp.eq.s32.totalorder %v3224, 0
    %v3227 = vxor.u32 %v3221, 2147483648
    %v3228 = vsel %vm3226, %v3220, %v3227
    %vm3229 = vcmp.eq.s32.totalorder %v3224, 2
    %v3230 = vxor.u32 %v3220, 2147483648
    %v3231 = vsel %vm3229, %v3230, %v3221
    %v3232 = vsel %vm3225, %v3228, %v3231
    %v3233 = vsel %vm3222, nan, %v3232
    %v3234 = vand.u32 2147483647, %v215
    %vm3235 = vcmp.le.f32.partialorder %v3234, 0.7853982
    %vm3236 = vcmp.lt.s32.totalorder %v215, 0
    %v3237 = vand.u32 %v215, 2139095040
    %v3238 = vshrl.u32 %v3237, 23
    %v3239 = vsub.s32 %v3238, 127
    %v3240 = vand.u32 2147483647, %v215
    %v3241 = vand.u32 %v3240, 8388607
    %v3242 = vor.u32 %v3241, 8388608
    %v3243 = vsub.s32 0, %v3242
    %v3244 = vadd.s32 %v3239, 1
    %vm3245 = vcmp.gt.s32.totalorder %v3244, 0
    %v3246 = vsel %vm3245, %v3244, 0
    %v3247 = vshrl.u32 %v3246, 5
    %v3248 = vand.u32 %v3246, 31
    %v3249 = vsub.s32 32, %v3248
    %v3250 = vshrl.u32 683565275, %v3249
    %v3251 = vshll.u32 683565275, %v3248
    %v3252 = vshrl.u32 2475754826, %v3249
    %v3253 = vor.u32 %v3251, %v3252
    %v3254 = vshll.u32 2475754826, %v3248
    %v3255 = vshrl.u32 2131351028, %v3249
    %v3256 = vor.u32 %v3254, %v3255
    %v3257 = vshll.u32 2131351028, %v3248
    %v3258 = vshrl.u32 2102212464, %v3249
    %v3259 = vor.u32 %v3257, %v3258
    %v3260 = vshll.u32 2102212464, %v3248
    %v3261 = vshrl.u32 920167782, %v3249
    %v3262 = vor.u32 %v3260, %v3261
    %v3263 = vshll.u32 920167782, %v3248
    %v3264 = vshrl.u32 1326507024, %v3249
    %v3265 = vor.u32 %v3263, %v3264
    %vm3266 = vcmp.lt.s32.totalorder %v3247, 1
    %vm3267 = vcmp.lt.s32.totalorder %v3247, 2
    %vm3268 = vcmp.lt.s32.totalorder %v3247, 3
    %vm3269 = vcmp.lt.s32.totalorder %v3247, 4
    %v3270 = vsel %vm3266, %v3250, %v3253
    %v3271 = vsel %vm3269, %v3259, 2102212464
    %v3272 = vsel %vm3268, %v3256, %v3271
    %v3273 = vsel %vm3267, %v3270, %v3272
    %v3274 = vsel %vm3266, %v3253, %v3256
    %v3275 = vsel %vm3269, %v3262, 920167782
    %v3276 = vsel %vm3268, %v3259, %v3275
    %v3277 = vsel %vm3267, %v3274, %v3276
    %v3278 = vsel %vm3266, %v3256, %v3259
    %v3279 = vsel %vm3269, %v3265, 1326507024
    %v3280 = vsel %vm3268, %v3262, %v3279
    %v3281 = vsel %vm3267, %v3278, %v3280
    %v3282 = vshll.u32 %v3242, 8
    %v3283 = vmul.u32.u64.compose %v3282, %v3281
    %v3284 = vextract.low.u32 %v3283
    %v3285 = vextract.high.u32 %v3283
    %v3286 = vmul.u32.u64.compose %v3282, %v3277
    %v3287 = vextract.low.u32 %v3286
    %v3288 = vextract.high.u32 %v3286
    %v3289 = vmul.u32 %v3282, %v3273
    %v3290 = vadd.s32 %v3285, %v3287
    %vm3291 = vc.u32 %v3285, %v3287
    %v3292 = vadd.s32 %v3288, 1
    %v3293 = vsel %vm3291, %v3292, %v3288
    %v3294 = vadd.s32 %v3289, %v3293
    %v3295 = vadd.s32 %v3294, 536870912
    %v3296 = vshrl.u32 %v3295, 30
    %v3297 = vshll.u32 %v3296, 30
    %v3298 = vsub.s32 %v3294, %v3297
    %vm3299 = vcmp.lt.s32.totalorder %v3298, 0
    %v3300 = vsub.s32 0, %v3298
    %v3301 = vsel %vm3299, %v3300, %v3298
    %v3302 = vclz %v3301
    %v3303 = vsub.s32 %v3302, 2
    %vm3304 = vcmp.gt.s32.totalorder 0, %v3303
    %v3305 = vsel %vm3304, 0, %v3303
    %v3306 = vsub.s32 32, %v3305
    %v3307 = vshll.u32 %v3298, %v3305
    %v3308 = vshrl.u32 %v3290, %v3306
    %v3309 = vor.u32 %v3307, %v3308
    %v3310 = vsub.s32 4294967266, %v3305
    %v3311 = vadd.s32 %v3310, 127
    %v3312 = vshll.u32 %v3311, 23
    %v3313 = vor.u32 4788187, %v3312
    %v3314 = vand.u32 2147483647, %v3313
    %v3316 = vcvt.s32.f32 %v3309
    %v3317 = vmul.f32 %v3316, %v3314
    %v3318 = vxor.u32 %v3317, 2147483648
    %v3319 = vsel %vm3236, %v3318, %v3317
    %v3320 = vsub.s32 4, %v3296
    %v3321 = vsel %vm3236, %v3320, %v3296
    %v3322 = vsel %vm3235, %v215, %v3319
    %v3323 = vsel %vm3235, 0, %v3321
    %v3324 = vcosq.f32.pop %v3322
    %v3325 = vsinq.f32.pop %v3322
    %vm3326 = vweird.f32 %v215
    %v3327 = vadd.s32 %v3323, 3
    %v3328 = vand.u32 %v3327, 3
    %vm3329 = vcmp.lt.s32.totalorder %v3328, 2
    %vm3330 = vcmp.eq.s32.totalorder %v3328, 0
    %v3331 = vxor.u32 %v3325, 2147483648
    %v3332 = vsel %vm3330, %v3324, %v3331
    %vm3333 = vcmp.eq.s32.totalorder %v3328, 2
    %v3334 = vxor.u32 %v3324, 2147483648
    %v3335 = vsel %vm3333, %v3334, %v3325
    %v3336 = vsel %vm3329, %v3332, %v3335
    %v3337 = vsel %vm3326, nan, %v3336
    %v3338 = vand.u32 2147483647, %v216
    %vm3339 = vcmp.le.f32.partialorder %v3338, 0.7853982
    %vm3340 = vcmp.lt.s32.totalorder %v216, 0
    %v3341 = vand.u32 %v216, 2139095040
    %v3342 = vshrl.u32 %v3341, 23
    %v3343 = vsub.s32 %v3342, 127
    %v3344 = vand.u32 2147483647, %v216
    %v3345 = vand.u32 %v3344, 8388607
    %v3346 = vor.u32 %v3345, 8388608
    %v3347 = vsub.s32 0, %v3346
    %v3348 = vadd.s32 %v3343, 1
    %vm3349 = vcmp.gt.s32.totalorder %v3348, 0
    %v3350 = vsel %vm3349, %v3348, 0
    %v3351 = vshrl.u32 %v3350, 5
    %v3352 = vand.u32 %v3350, 31
    %v3353 = vsub.s32 32, %v3352
    %v3354 = vshrl.u32 683565275, %v3353
    %v3355 = vshll.u32 683565275, %v3352
    %v3356 = vshrl.u32 2475754826, %v3353
    %v3357 = vor.u32 %v3355, %v3356
    %v3358 = vshll.u32 2475754826, %v3352
    %v3359 = vshrl.u32 2131351028, %v3353
    %v3360 = vor.u32 %v3358, %v3359
    %v3361 = vshll.u32 2131351028, %v3352
    %v3362 = vshrl.u32 2102212464, %v3353
    %v3363 = vor.u32 %v3361, %v3362
    %v3364 = vshll.u32 2102212464, %v3352
    %v3365 = vshrl.u32 920167782, %v3353
    %v3366 = vor.u32 %v3364, %v3365
    %v3367 = vshll.u32 920167782, %v3352
    %v3368 = vshrl.u32 1326507024, %v3353
    %v3369 = vor.u32 %v3367, %v3368
    %vm3370 = vcmp.lt.s32.totalorder %v3351, 1
    %vm3371 = vcmp.lt.s32.totalorder %v3351, 2
    %vm3372 = vcmp.lt.s32.totalorder %v3351, 3
    %vm3373 = vcmp.lt.s32.totalorder %v3351, 4
    %v3374 = vsel %vm3370, %v3354, %v3357
    %v3375 = vsel %vm3373, %v3363, 2102212464
    %v3376 = vsel %vm3372, %v3360, %v3375
    %v3377 = vsel %vm3371, %v3374, %v3376
    %v3378 = vsel %vm3370, %v3357, %v3360
    %v3379 = vsel %vm3373, %v3366, 920167782
    %v3380 = vsel %vm3372, %v3363, %v3379
    %v3381 = vsel %vm3371, %v3378, %v3380
    %v3382 = vsel %vm3370, %v3360, %v3363
    %v3383 = vsel %vm3373, %v3369, 1326507024
    %v3384 = vsel %vm3372, %v3366, %v3383
    %v3385 = vsel %vm3371, %v3382, %v3384
    %v3386 = vshll.u32 %v3346, 8
    %v3387 = vmul.u32.u64.compose %v3386, %v3385
    %v3388 = vextract.low.u32 %v3387
    %v3389 = vextract.high.u32 %v3387
    %v3390 = vmul.u32.u64.compose %v3386, %v3381
    %v3391 = vextract.low.u32 %v3390
    %v3392 = vextract.high.u32 %v3390
    %v3393 = vmul.u32 %v3386, %v3377
    %v3394 = vadd.s32 %v3389, %v3391
    %vm3395 = vc.u32 %v3389, %v3391
    %v3396 = vadd.s32 %v3392, 1
    %v3397 = vsel %vm3395, %v3396, %v3392
    %v3398 = vadd.s32 %v3393, %v3397
    %v3399 = vadd.s32 %v3398, 536870912
    %v3400 = vshrl.u32 %v3399, 30
    %v3401 = vshll.u32 %v3400, 30
    %v3402 = vsub.s32 %v3398, %v3401
    %vm3403 = vcmp.lt.s32.totalorder %v3402, 0
    %v3404 = vsub.s32 0, %v3402
    %v3405 = vsel %vm3403, %v3404, %v3402
    %v3406 = vclz %v3405
    %v3407 = vsub.s32 %v3406, 2
    %vm3408 = vcmp.gt.s32.totalorder 0, %v3407
    %v3409 = vsel %vm3408, 0, %v3407
    %v3410 = vsub.s32 32, %v3409
    %v3411 = vshll.u32 %v3402, %v3409
    %v3412 = vshrl.u32 %v3394, %v3410
    %v3413 = vor.u32 %v3411, %v3412
    %v3414 = vsub.s32 4294967266, %v3409
    %v3415 = vadd.s32 %v3414, 127
    %v3416 = vshll.u32 %v3415, 23
    %v3417 = vor.u32 4788187, %v3416
    %v3418 = vand.u32 2147483647, %v3417
    %v3420 = vcvt.s32.f32 %v3413
    %v3421 = vmul.f32 %v3420, %v3418
    %v3422 = vxor.u32 %v3421, 2147483648
    %v3423 = vsel %vm3340, %v3422, %v3421
    %v3424 = vsub.s32 4, %v3400
    %v3425 = vsel %vm3340, %v3424, %v3400
    %v3426 = vsel %vm3339, %v216, %v3423
    %v3427 = vsel %vm3339, 0, %v3425
    %v3428 = vcosq.f32.pop %v3426
    %v3429 = vsinq.f32.pop %v3426
    %vm3430 = vweird.f32 %v216
    %v3431 = vadd.s32 %v3427, 3
    %v3432 = vand.u32 %v3431, 3
    %vm3433 = vcmp.lt.s32.totalorder %v3432, 2
    %vm3434 = vcmp.eq.s32.totalorder %v3432, 0
    %v3435 = vxor.u32 %v3429, 2147483648
    %v3436 = vsel %vm3434, %v3428, %v3435
    %vm3437 = vcmp.eq.s32.totalorder %v3432, 2
    %v3438 = vxor.u32 %v3428, 2147483648
    %v3439 = vsel %vm3437, %v3438, %v3429
    %v3440 = vsel %vm3433, %v3436, %v3439
    %v3441 = vsel %vm3430, nan, %v3440
    %v3442 = vand.u32 2147483647, %v217
    %vm3443 = vcmp.le.f32.partialorder %v3442, 0.7853982
    %vm3444 = vcmp.lt.s32.totalorder %v217, 0
    %v3445 = vand.u32 %v217, 2139095040
    %v3446 = vshrl.u32 %v3445, 23
    %v3447 = vsub.s32 %v3446, 127
    %v3448 = vand.u32 2147483647, %v217
    %v3449 = vand.u32 %v3448, 8388607
    %v3450 = vor.u32 %v3449, 8388608
    %v3451 = vsub.s32 0, %v3450
    %v3452 = vadd.s32 %v3447, 1
    %vm3453 = vcmp.gt.s32.totalorder %v3452, 0
    %v3454 = vsel %vm3453, %v3452, 0
    %v3455 = vshrl.u32 %v3454, 5
    %v3456 = vand.u32 %v3454, 31
    %v3457 = vsub.s32 32, %v3456
    %v3458 = vshrl.u32 683565275, %v3457
    %v3459 = vshll.u32 683565275, %v3456
    %v3460 = vshrl.u32 2475754826, %v3457
    %v3461 = vor.u32 %v3459, %v3460
    %v3462 = vshll.u32 2475754826, %v3456
    %v3463 = vshrl.u32 2131351028, %v3457
    %v3464 = vor.u32 %v3462, %v3463
    %v3465 = vshll.u32 2131351028, %v3456
    %v3466 = vshrl.u32 2102212464, %v3457
    %v3467 = vor.u32 %v3465, %v3466
    %v3468 = vshll.u32 2102212464, %v3456
    %v3469 = vshrl.u32 920167782, %v3457
    %v3470 = vor.u32 %v3468, %v3469
    %v3471 = vshll.u32 920167782, %v3456
    %v3472 = vshrl.u32 1326507024, %v3457
    %v3473 = vor.u32 %v3471, %v3472
    %vm3474 = vcmp.lt.s32.totalorder %v3455, 1
    %vm3475 = vcmp.lt.s32.totalorder %v3455, 2
    %vm3476 = vcmp.lt.s32.totalorder %v3455, 3
    %vm3477 = vcmp.lt.s32.totalorder %v3455, 4
    %v3478 = vsel %vm3474, %v3458, %v3461
    %v3479 = vsel %vm3477, %v3467, 2102212464
    %v3480 = vsel %vm3476, %v3464, %v3479
    %v3481 = vsel %vm3475, %v3478, %v3480
    %v3482 = vsel %vm3474, %v3461, %v3464
    %v3483 = vsel %vm3477, %v3470, 920167782
    %v3484 = vsel %vm3476, %v3467, %v3483
    %v3485 = vsel %vm3475, %v3482, %v3484
    %v3486 = vsel %vm3474, %v3464, %v3467
    %v3487 = vsel %vm3477, %v3473, 1326507024
    %v3488 = vsel %vm3476, %v3470, %v3487
    %v3489 = vsel %vm3475, %v3486, %v3488
    %v3490 = vshll.u32 %v3450, 8
    %v3491 = vmul.u32.u64.compose %v3490, %v3489
    %v3492 = vextract.low.u32 %v3491
    %v3493 = vextract.high.u32 %v3491
    %v3494 = vmul.u32.u64.compose %v3490, %v3485
    %v3495 = vextract.low.u32 %v3494
    %v3496 = vextract.high.u32 %v3494
    %v3497 = vmul.u32 %v3490, %v3481
    %v3498 = vadd.s32 %v3493, %v3495
    %vm3499 = vc.u32 %v3493, %v3495
    %v3500 = vadd.s32 %v3496, 1
    %v3501 = vsel %vm3499, %v3500, %v3496
    %v3502 = vadd.s32 %v3497, %v3501
    %v3503 = vadd.s32 %v3502, 536870912
    %v3504 = vshrl.u32 %v3503, 30
    %v3505 = vshll.u32 %v3504, 30
    %v3506 = vsub.s32 %v3502, %v3505
    %vm3507 = vcmp.lt.s32.totalorder %v3506, 0
    %v3508 = vsub.s32 0, %v3506
    %v3509 = vsel %vm3507, %v3508, %v3506
    %v3510 = vclz %v3509
    %v3511 = vsub.s32 %v3510, 2
    %vm3512 = vcmp.gt.s32.totalorder 0, %v3511
    %v3513 = vsel %vm3512, 0, %v3511
    %v3514 = vsub.s32 32, %v3513
    %v3515 = vshll.u32 %v3506, %v3513
    %v3516 = vshrl.u32 %v3498, %v3514
    %v3517 = vor.u32 %v3515, %v3516
    %v3518 = vsub.s32 4294967266, %v3513
    %v3519 = vadd.s32 %v3518, 127
    %v3520 = vshll.u32 %v3519, 23
    %v3521 = vor.u32 4788187, %v3520
    %v3522 = vand.u32 2147483647, %v3521
    %v3524 = vcvt.s32.f32 %v3517
    %v3525 = vmul.f32 %v3524, %v3522
    %v3526 = vxor.u32 %v3525, 2147483648
    %v3527 = vsel %vm3444, %v3526, %v3525
    %v3528 = vsub.s32 4, %v3504
    %v3529 = vsel %vm3444, %v3528, %v3504
    %v3530 = vsel %vm3443, %v217, %v3527
    %v3531 = vsel %vm3443, 0, %v3529
    %v3532 = vcosq.f32.pop %v3530
    %v3533 = vsinq.f32.pop %v3530
    %vm3534 = vweird.f32 %v217
    %v3535 = vadd.s32 %v3531, 3
    %v3536 = vand.u32 %v3535, 3
    %vm3537 = vcmp.lt.s32.totalorder %v3536, 2
    %vm3538 = vcmp.eq.s32.totalorder %v3536, 0
    %v3539 = vxor.u32 %v3533, 2147483648
    %v3540 = vsel %vm3538, %v3532, %v3539
    %vm3541 = vcmp.eq.s32.totalorder %v3536, 2
    %v3542 = vxor.u32 %v3532, 2147483648
    %v3543 = vsel %vm3541, %v3542, %v3533
    %v3544 = vsel %vm3537, %v3540, %v3543
    %v3545 = vsel %vm3534, nan, %v3544
    %v3546 = vmul.f32 %v90, %v117
    %v3547 = vmul.f32 %v91, %v117
    %v3548 = vmul.f32 %v92, %v117
    %v3549 = vmul.f32 %v93, %v117
    %v3550 = vmul.f32 %v94, %v117
    %v3551 = vmul.f32 %v95, %v117
    %v3552 = vmul.f32 %v96, %v117
    %v3553 = vmul.f32 %v97, %v117
    %v3554 = vmul.f32 %v90, %v122
    %v3555 = vmul.f32 %v91, %v122
    %v3556 = vmul.f32 %v92, %v122
    %v3557 = vmul.f32 %v93, %v122
    %v3558 = vmul.f32 %v94, %v122
    %v3559 = vmul.f32 %v95, %v122
    %v3560 = vmul.f32 %v96, %v122
    %v3561 = vmul.f32 %v97, %v122
    %v3562 = vmul.f32 %v90, %v127
    %v3563 = vmul.f32 %v91, %v127
    %v3564 = vmul.f32 %v92, %v127
    %v3565 = vmul.f32 %v93, %v127
    %v3566 = vmul.f32 %v94, %v127
    %v3567 = vmul.f32 %v95, %v127
    %v3568 = vmul.f32 %v96, %v127
    %v3569 = vmul.f32 %v97, %v127
    %v3570 = vmul.f32 %v90, %v132
    %v3571 = vmul.f32 %v91, %v132
    %v3572 = vmul.f32 %v92, %v132
    %v3573 = vmul.f32 %v93, %v132
    %v3574 = vmul.f32 %v94, %v132
    %v3575 = vmul.f32 %v95, %v132
    %v3576 = vmul.f32 %v96, %v132
    %v3577 = vmul.f32 %v97, %v132
    %v3578 = vadd.f32 %v3546, %v169
    %v3579 = vadd.f32 %v3547, %v169
    %v3580 = vadd.f32 %v3548, %v169
    %v3581 = vadd.f32 %v3549, %v169
    %v3582 = vadd.f32 %v3550, %v169
    %v3583 = vadd.f32 %v3551, %v169
    %v3584 = vadd.f32 %v3552, %v169
    %v3585 = vadd.f32 %v3553, %v169
    %v3586 = vadd.f32 %v3554, %v174
    %v3587 = vadd.f32 %v3555, %v174
    %v3588 = vadd.f32 %v3556, %v174
    %v3589 = vadd.f32 %v3557, %v174
    %v3590 = vadd.f32 %v3558, %v174
    %v3591 = vadd.f32 %v3559, %v174
    %v3592 = vadd.f32 %v3560, %v174
    %v3593 = vadd.f32 %v3561, %v174
    %v3594 = vadd.f32 %v3562, %v179
    %v3595 = vadd.f32 %v3563, %v179
    %v3596 = vadd.f32 %v3564, %v179
    %v3597 = vadd.f32 %v3565, %v179
    %v3598 = vadd.f32 %v3566, %v179
    %v3599 = vadd.f32 %v3567, %v179
    %v3600 = vadd.f32 %v3568, %v179
    %v3601 = vadd.f32 %v3569, %v179
    %v3602 = vadd.f32 %v3570, %v184
    %v3603 = vadd.f32 %v3571, %v184
    %v3604 = vadd.f32 %v3572, %v184
    %v3605 = vadd.f32 %v3573, %v184
    %v3606 = vadd.f32 %v3574, %v184
    %v3607 = vadd.f32 %v3575, %v184
    %v3608 = vadd.f32 %v3576, %v184
    %v3609 = vadd.f32 %v3577, %v184
    %v3610 = vand.u32 2147483647, %v3578
    %vm3611 = vcmp.le.f32.partialorder %v3610, 0.7853982
    %vm3612 = vcmp.lt.s32.totalorder %v3578, 0
    %v3613 = vand.u32 %v3578, 2139095040
    %v3614 = vshrl.u32 %v3613, 23
    %v3615 = vsub.s32 %v3614, 127
    %v3616 = vand.u32 2147483647, %v3578
    %v3617 = vand.u32 %v3616, 8388607
    %v3618 = vor.u32 %v3617, 8388608
    %v3619 = vsub.s32 0, %v3618
    %v3620 = vadd.s32 %v3615, 1
    %vm3621 = vcmp.gt.s32.totalorder %v3620, 0
    %v3622 = vsel %vm3621, %v3620, 0
    %v3623 = vshrl.u32 %v3622, 5
    %v3624 = vand.u32 %v3622, 31
    %v3625 = vsub.s32 32, %v3624
    %v3626 = vshrl.u32 683565275, %v3625
    %v3627 = vshll.u32 683565275, %v3624
    %v3628 = vshrl.u32 2475754826, %v3625
    %v3629 = vor.u32 %v3627, %v3628
    %v3630 = vshll.u32 2475754826, %v3624
    %v3631 = vshrl.u32 2131351028, %v3625
    %v3632 = vor.u32 %v3630, %v3631
    %v3633 = vshll.u32 2131351028, %v3624
    %v3634 = vshrl.u32 2102212464, %v3625
    %v3635 = vor.u32 %v3633, %v3634
    %v3636 = vshll.u32 2102212464, %v3624
    %v3637 = vshrl.u32 920167782, %v3625
    %v3638 = vor.u32 %v3636, %v3637
    %v3639 = vshll.u32 920167782, %v3624
    %v3640 = vshrl.u32 1326507024, %v3625
    %v3641 = vor.u32 %v3639, %v3640
    %vm3642 = vcmp.lt.s32.totalorder %v3623, 1
    %vm3643 = vcmp.lt.s32.totalorder %v3623, 2
    %vm3644 = vcmp.lt.s32.totalorder %v3623, 3
    %vm3645 = vcmp.lt.s32.totalorder %v3623, 4
    %v3646 = vsel %vm3642, %v3626, %v3629
    %v3647 = vsel %vm3645, %v3635, 2102212464
    %v3648 = vsel %vm3644, %v3632, %v3647
    %v3649 = vsel %vm3643, %v3646, %v3648
    %v3650 = vsel %vm3642, %v3629, %v3632
    %v3651 = vsel %vm3645, %v3638, 920167782
    %v3652 = vsel %vm3644, %v3635, %v3651
    %v3653 = vsel %vm3643, %v3650, %v3652
    %v3654 = vsel %vm3642, %v3632, %v3635
    %v3655 = vsel %vm3645, %v3641, 1326507024
    %v3656 = vsel %vm3644, %v3638, %v3655
    %v3657 = vsel %vm3643, %v3654, %v3656
    %v3658 = vshll.u32 %v3618, 8
    %v3659 = vmul.u32.u64.compose %v3658, %v3657
    %v3660 = vextract.low.u32 %v3659
    %v3661 = vextract.high.u32 %v3659
    %v3662 = vmul.u32.u64.compose %v3658, %v3653
    %v3663 = vextract.low.u32 %v3662
    %v3664 = vextract.high.u32 %v3662
    %v3665 = vmul.u32 %v3658, %v3649
    %v3666 = vadd.s32 %v3661, %v3663
    %vm3667 = vc.u32 %v3661, %v3663
    %v3668 = vadd.s32 %v3664, 1
    %v3669 = vsel %vm3667, %v3668, %v3664
    %v3670 = vadd.s32 %v3665, %v3669
    %v3671 = vadd.s32 %v3670, 536870912
    %v3672 = vshrl.u32 %v3671, 30
    %v3673 = vshll.u32 %v3672, 30
    %v3674 = vsub.s32 %v3670, %v3673
    %vm3675 = vcmp.lt.s32.totalorder %v3674, 0
    %v3676 = vsub.s32 0, %v3674
    %v3677 = vsel %vm3675, %v3676, %v3674
    %v3678 = vclz %v3677
    %v3679 = vsub.s32 %v3678, 2
    %vm3680 = vcmp.gt.s32.totalorder 0, %v3679
    %v3681 = vsel %vm3680, 0, %v3679
    %v3682 = vsub.s32 32, %v3681
    %v3683 = vshll.u32 %v3674, %v3681
    %v3684 = vshrl.u32 %v3666, %v3682
    %v3685 = vor.u32 %v3683, %v3684
    %v3686 = vsub.s32 4294967266, %v3681
    %v3687 = vadd.s32 %v3686, 127
    %v3688 = vshll.u32 %v3687, 23
    %v3689 = vor.u32 4788187, %v3688
    %v3690 = vand.u32 2147483647, %v3689
    %v3692 = vcvt.s32.f32 %v3685
    %v3693 = vmul.f32 %v3692, %v3690
    %v3694 = vxor.u32 %v3693, 2147483648
    %v3695 = vsel %vm3612, %v3694, %v3693
    %v3696 = vsub.s32 4, %v3672
    %v3697 = vsel %vm3612, %v3696, %v3672
    %v3698 = vsel %vm3611, %v3578, %v3695
    %v3699 = vsel %vm3611, 0, %v3697
    %v3700 = vcosq.f32.pop %v3698
    %v3701 = vsinq.f32.pop %v3698
    %vm3702 = vweird.f32 %v3578
    %v3703 = vadd.s32 %v3699, 3
    %v3704 = vand.u32 %v3703, 3
    %vm3705 = vcmp.lt.s32.totalorder %v3704, 2
    %vm3706 = vcmp.eq.s32.totalorder %v3704, 0
    %v3707 = vxor.u32 %v3701, 2147483648
    %v3708 = vsel %vm3706, %v3700, %v3707
    %vm3709 = vcmp.eq.s32.totalorder %v3704, 2
    %v3710 = vxor.u32 %v3700, 2147483648
    %v3711 = vsel %vm3709, %v3710, %v3701
    %v3712 = vsel %vm3705, %v3708, %v3711
    %v3713 = vsel %vm3702, nan, %v3712
    %v3714 = vand.u32 2147483647, %v3579
    %vm3715 = vcmp.le.f32.partialorder %v3714, 0.7853982
    %vm3716 = vcmp.lt.s32.totalorder %v3579, 0
    %v3717 = vand.u32 %v3579, 2139095040
    %v3718 = vshrl.u32 %v3717, 23
    %v3719 = vsub.s32 %v3718, 127
    %v3720 = vand.u32 2147483647, %v3579
    %v3721 = vand.u32 %v3720, 8388607
    %v3722 = vor.u32 %v3721, 8388608
    %v3723 = vsub.s32 0, %v3722
    %v3724 = vadd.s32 %v3719, 1
    %vm3725 = vcmp.gt.s32.totalorder %v3724, 0
    %v3726 = vsel %vm3725, %v3724, 0
    %v3727 = vshrl.u32 %v3726, 5
    %v3728 = vand.u32 %v3726, 31
    %v3729 = vsub.s32 32, %v3728
    %v3730 = vshrl.u32 683565275, %v3729
    %v3731 = vshll.u32 683565275, %v3728
    %v3732 = vshrl.u32 2475754826, %v3729
    %v3733 = vor.u32 %v3731, %v3732
    %v3734 = vshll.u32 2475754826, %v3728
    %v3735 = vshrl.u32 2131351028, %v3729
    %v3736 = vor.u32 %v3734, %v3735
    %v3737 = vshll.u32 2131351028, %v3728
    %v3738 = vshrl.u32 2102212464, %v3729
    %v3739 = vor.u32 %v3737, %v3738
    %v3740 = vshll.u32 2102212464, %v3728
    %v3741 = vshrl.u32 920167782, %v3729
    %v3742 = vor.u32 %v3740, %v3741
    %v3743 = vshll.u32 920167782, %v3728
    %v3744 = vshrl.u32 1326507024, %v3729
    %v3745 = vor.u32 %v3743, %v3744
    %vm3746 = vcmp.lt.s32.totalorder %v3727, 1
    %vm3747 = vcmp.lt.s32.totalorder %v3727, 2
    %vm3748 = vcmp.lt.s32.totalorder %v3727, 3
    %vm3749 = vcmp.lt.s32.totalorder %v3727, 4
    %v3750 = vsel %vm3746, %v3730, %v3733
    %v3751 = vsel %vm3749, %v3739, 2102212464
    %v3752 = vsel %vm3748, %v3736, %v3751
    %v3753 = vsel %vm3747, %v3750, %v3752
    %v3754 = vsel %vm3746, %v3733, %v3736
    %v3755 = vsel %vm3749, %v3742, 920167782
    %v3756 = vsel %vm3748, %v3739, %v3755
    %v3757 = vsel %vm3747, %v3754, %v3756
    %v3758 = vsel %vm3746, %v3736, %v3739
    %v3759 = vsel %vm3749, %v3745, 1326507024
    %v3760 = vsel %vm3748, %v3742, %v3759
    %v3761 = vsel %vm3747, %v3758, %v3760
    %v3762 = vshll.u32 %v3722, 8
    %v3763 = vmul.u32.u64.compose %v3762, %v3761
    %v3764 = vextract.low.u32 %v3763
    %v3765 = vextract.high.u32 %v3763
    %v3766 = vmul.u32.u64.compose %v3762, %v3757
    %v3767 = vextract.low.u32 %v3766
    %v3768 = vextract.high.u32 %v3766
    %v3769 = vmul.u32 %v3762, %v3753
    %v3770 = vadd.s32 %v3765, %v3767
    %vm3771 = vc.u32 %v3765, %v3767
    %v3772 = vadd.s32 %v3768, 1
    %v3773 = vsel %vm3771, %v3772, %v3768
    %v3774 = vadd.s32 %v3769, %v3773
    %v3775 = vadd.s32 %v3774, 536870912
    %v3776 = vshrl.u32 %v3775, 30
    %v3777 = vshll.u32 %v3776, 30
    %v3778 = vsub.s32 %v3774, %v3777
    %vm3779 = vcmp.lt.s32.totalorder %v3778, 0
    %v3780 = vsub.s32 0, %v3778
    %v3781 = vsel %vm3779, %v3780, %v3778
    %v3782 = vclz %v3781
    %v3783 = vsub.s32 %v3782, 2
    %vm3784 = vcmp.gt.s32.totalorder 0, %v3783
    %v3785 = vsel %vm3784, 0, %v3783
    %v3786 = vsub.s32 32, %v3785
    %v3787 = vshll.u32 %v3778, %v3785
    %v3788 = vshrl.u32 %v3770, %v3786
    %v3789 = vor.u32 %v3787, %v3788
    %v3790 = vsub.s32 4294967266, %v3785
    %v3791 = vadd.s32 %v3790, 127
    %v3792 = vshll.u32 %v3791, 23
    %v3793 = vor.u32 4788187, %v3792
    %v3794 = vand.u32 2147483647, %v3793
    %v3796 = vcvt.s32.f32 %v3789
    %v3797 = vmul.f32 %v3796, %v3794
    %v3798 = vxor.u32 %v3797, 2147483648
    %v3799 = vsel %vm3716, %v3798, %v3797
    %v3800 = vsub.s32 4, %v3776
    %v3801 = vsel %vm3716, %v3800, %v3776
    %v3802 = vsel %vm3715, %v3579, %v3799
    %v3803 = vsel %vm3715, 0, %v3801
    %v3804 = vcosq.f32.pop %v3802
    %v3805 = vsinq.f32.pop %v3802
    %vm3806 = vweird.f32 %v3579
    %v3807 = vadd.s32 %v3803, 3
    %v3808 = vand.u32 %v3807, 3
    %vm3809 = vcmp.lt.s32.totalorder %v3808, 2
    %vm3810 = vcmp.eq.s32.totalorder %v3808, 0
    %v3811 = vxor.u32 %v3805, 2147483648
    %v3812 = vsel %vm3810, %v3804, %v3811
    %vm3813 = vcmp.eq.s32.totalorder %v3808, 2
    %v3814 = vxor.u32 %v3804, 2147483648
    %v3815 = vsel %vm3813, %v3814, %v3805
    %v3816 = vsel %vm3809, %v3812, %v3815
    %v3817 = vsel %vm3806, nan, %v3816
    %v3818 = vand.u32 2147483647, %v3580
    %vm3819 = vcmp.le.f32.partialorder %v3818, 0.7853982
    %vm3820 = vcmp.lt.s32.totalorder %v3580, 0
    %v3821 = vand.u32 %v3580, 2139095040
    %v3822 = vshrl.u32 %v3821, 23
    %v3823 = vsub.s32 %v3822, 127
    %v3824 = vand.u32 2147483647, %v3580
    %v3825 = vand.u32 %v3824, 8388607
    %v3826 = vor.u32 %v3825, 8388608
    %v3827 = vsub.s32 0, %v3826
    %v3828 = vadd.s32 %v3823, 1
    %vm3829 = vcmp.gt.s32.totalorder %v3828, 0
    %v3830 = vsel %vm3829, %v3828, 0
    %v3831 = vshrl.u32 %v3830, 5
    %v3832 = vand.u32 %v3830, 31
    %v3833 = vsub.s32 32, %v3832
    %v3834 = vshrl.u32 683565275, %v3833
    %v3835 = vshll.u32 683565275, %v3832
    %v3836 = vshrl.u32 2475754826, %v3833
    %v3837 = vor.u32 %v3835, %v3836
    %v3838 = vshll.u32 2475754826, %v3832
    %v3839 = vshrl.u32 2131351028, %v3833
    %v3840 = vor.u32 %v3838, %v3839
    %v3841 = vshll.u32 2131351028, %v3832
    %v3842 = vshrl.u32 2102212464, %v3833
    %v3843 = vor.u32 %v3841, %v3842
    %v3844 = vshll.u32 2102212464, %v3832
    %v3845 = vshrl.u32 920167782, %v3833
    %v3846 = vor.u32 %v3844, %v3845
    %v3847 = vshll.u32 920167782, %v3832
    %v3848 = vshrl.u32 1326507024, %v3833
    %v3849 = vor.u32 %v3847, %v3848
    %vm3850 = vcmp.lt.s32.totalorder %v3831, 1
    %vm3851 = vcmp.lt.s32.totalorder %v3831, 2
    %vm3852 = vcmp.lt.s32.totalorder %v3831, 3
    %vm3853 = vcmp.lt.s32.totalorder %v3831, 4
    %v3854 = vsel %vm3850, %v3834, %v3837
    %v3855 = vsel %vm3853, %v3843, 2102212464
    %v3856 = vsel %vm3852, %v3840, %v3855
    %v3857 = vsel %vm3851, %v3854, %v3856
    %v3858 = vsel %vm3850, %v3837, %v3840
    %v3859 = vsel %vm3853, %v3846, 920167782
    %v3860 = vsel %vm3852, %v3843, %v3859
    %v3861 = vsel %vm3851, %v3858, %v3860
    %v3862 = vsel %vm3850, %v3840, %v3843
    %v3863 = vsel %vm3853, %v3849, 1326507024
    %v3864 = vsel %vm3852, %v3846, %v3863
    %v3865 = vsel %vm3851, %v3862, %v3864
    %v3866 = vshll.u32 %v3826, 8
    %v3867 = vmul.u32.u64.compose %v3866, %v3865
    %v3868 = vextract.low.u32 %v3867
    %v3869 = vextract.high.u32 %v3867
    %v3870 = vmul.u32.u64.compose %v3866, %v3861
    %v3871 = vextract.low.u32 %v3870
    %v3872 = vextract.high.u32 %v3870
    %v3873 = vmul.u32 %v3866, %v3857
    %v3874 = vadd.s32 %v3869, %v3871
    %vm3875 = vc.u32 %v3869, %v3871
    %v3876 = vadd.s32 %v3872, 1
    %v3877 = vsel %vm3875, %v3876, %v3872
    %v3878 = vadd.s32 %v3873, %v3877
    %v3879 = vadd.s32 %v3878, 536870912
    %v3880 = vshrl.u32 %v3879, 30
    %v3881 = vshll.u32 %v3880, 30
    %v3882 = vsub.s32 %v3878, %v3881
    %vm3883 = vcmp.lt.s32.totalorder %v3882, 0
    %v3884 = vsub.s32 0, %v3882
    %v3885 = vsel %vm3883, %v3884, %v3882
    %v3886 = vclz %v3885
    %v3887 = vsub.s32 %v3886, 2
    %vm3888 = vcmp.gt.s32.totalorder 0, %v3887
    %v3889 = vsel %vm3888, 0, %v3887
    %v3890 = vsub.s32 32, %v3889
    %v3891 = vshll.u32 %v3882, %v3889
    %v3892 = vshrl.u32 %v3874, %v3890
    %v3893 = vor.u32 %v3891, %v3892
    %v3894 = vsub.s32 4294967266, %v3889
    %v3895 = vadd.s32 %v3894, 127
    %v3896 = vshll.u32 %v3895, 23
    %v3897 = vor.u32 4788187, %v3896
    %v3898 = vand.u32 2147483647, %v3897
    %v3900 = vcvt.s32.f32 %v3893
    %v3901 = vmul.f32 %v3900, %v3898
    %v3902 = vxor.u32 %v3901, 2147483648
    %v3903 = vsel %vm3820, %v3902, %v3901
    %v3904 = vsub.s32 4, %v3880
    %v3905 = vsel %vm3820, %v3904, %v3880
    %v3906 = vsel %vm3819, %v3580, %v3903
    %v3907 = vsel %vm3819, 0, %v3905
    %v3908 = vcosq.f32.pop %v3906
    %v3909 = vsinq.f32.pop %v3906
    %vm3910 = vweird.f32 %v3580
    %v3911 = vadd.s32 %v3907, 3
    %v3912 = vand.u32 %v3911, 3
    %vm3913 = vcmp.lt.s32.totalorder %v3912, 2
    %vm3914 = vcmp.eq.s32.totalorder %v3912, 0
    %v3915 = vxor.u32 %v3909, 2147483648
    %v3916 = vsel %vm3914, %v3908, %v3915
    %vm3917 = vcmp.eq.s32.totalorder %v3912, 2
    %v3918 = vxor.u32 %v3908, 2147483648
    %v3919 = vsel %vm3917, %v3918, %v3909
    %v3920 = vsel %vm3913, %v3916, %v3919
    %v3921 = vsel %vm3910, nan, %v3920
    %v3922 = vand.u32 2147483647, %v3581
    %vm3923 = vcmp.le.f32.partialorder %v3922, 0.7853982
    %vm3924 = vcmp.lt.s32.totalorder %v3581, 0
    %v3925 = vand.u32 %v3581, 2139095040
    %v3926 = vshrl.u32 %v3925, 23
    %v3927 = vsub.s32 %v3926, 127
    %v3928 = vand.u32 2147483647, %v3581
    %v3929 = vand.u32 %v3928, 8388607
    %v3930 = vor.u32 %v3929, 8388608
    %v3931 = vsub.s32 0, %v3930
    %v3932 = vadd.s32 %v3927, 1
    %vm3933 = vcmp.gt.s32.totalorder %v3932, 0
    %v3934 = vsel %vm3933, %v3932, 0
    %v3935 = vshrl.u32 %v3934, 5
    %v3936 = vand.u32 %v3934, 31
    %v3937 = vsub.s32 32, %v3936
    %v3938 = vshrl.u32 683565275, %v3937
    %v3939 = vshll.u32 683565275, %v3936
    %v3940 = vshrl.u32 2475754826, %v3937
    %v3941 = vor.u32 %v3939, %v3940
    %v3942 = vshll.u32 2475754826, %v3936
    %v3943 = vshrl.u32 2131351028, %v3937
    %v3944 = vor.u32 %v3942, %v3943
    %v3945 = vshll.u32 2131351028, %v3936
    %v3946 = vshrl.u32 2102212464, %v3937
    %v3947 = vor.u32 %v3945, %v3946
    %v3948 = vshll.u32 2102212464, %v3936
    %v3949 = vshrl.u32 920167782, %v3937
    %v3950 = vor.u32 %v3948, %v3949
    %v3951 = vshll.u32 920167782, %v3936
    %v3952 = vshrl.u32 1326507024, %v3937
    %v3953 = vor.u32 %v3951, %v3952
    %vm3954 = vcmp.lt.s32.totalorder %v3935, 1
    %vm3955 = vcmp.lt.s32.totalorder %v3935, 2
    %vm3956 = vcmp.lt.s32.totalorder %v3935, 3
    %vm3957 = vcmp.lt.s32.totalorder %v3935, 4
    %v3958 = vsel %vm3954, %v3938, %v3941
    %v3959 = vsel %vm3957, %v3947, 2102212464
    %v3960 = vsel %vm3956, %v3944, %v3959
    %v3961 = vsel %vm3955, %v3958, %v3960
    %v3962 = vsel %vm3954, %v3941, %v3944
    %v3963 = vsel %vm3957, %v3950, 920167782
    %v3964 = vsel %vm3956, %v3947, %v3963
    %v3965 = vsel %vm3955, %v3962, %v3964
    %v3966 = vsel %vm3954, %v3944, %v3947
    %v3967 = vsel %vm3957, %v3953, 1326507024
    %v3968 = vsel %vm3956, %v3950, %v3967
    %v3969 = vsel %vm3955, %v3966, %v3968
    %v3970 = vshll.u32 %v3930, 8
    %v3971 = vmul.u32.u64.compose %v3970, %v3969
    %v3972 = vextract.low.u32 %v3971
    %v3973 = vextract.high.u32 %v3971
    %v3974 = vmul.u32.u64.compose %v3970, %v3965
    %v3975 = vextract.low.u32 %v3974
    %v3976 = vextract.high.u32 %v3974
    %v3977 = vmul.u32 %v3970, %v3961
    %v3978 = vadd.s32 %v3973, %v3975
    %vm3979 = vc.u32 %v3973, %v3975
    %v3980 = vadd.s32 %v3976, 1
    %v3981 = vsel %vm3979, %v3980, %v3976
    %v3982 = vadd.s32 %v3977, %v3981
    %v3983 = vadd.s32 %v3982, 536870912
    %v3984 = vshrl.u32 %v3983, 30
    %v3985 = vshll.u32 %v3984, 30
    %v3986 = vsub.s32 %v3982, %v3985
    %vm3987 = vcmp.lt.s32.totalorder %v3986, 0
    %v3988 = vsub.s32 0, %v3986
    %v3989 = vsel %vm3987, %v3988, %v3986
    %v3990 = vclz %v3989
    %v3991 = vsub.s32 %v3990, 2
    %vm3992 = vcmp.gt.s32.totalorder 0, %v3991
    %v3993 = vsel %vm3992, 0, %v3991
    %v3994 = vsub.s32 32, %v3993
    %v3995 = vshll.u32 %v3986, %v3993
    %v3996 = vshrl.u32 %v3978, %v3994
    %v3997 = vor.u32 %v3995, %v3996
    %v3998 = vsub.s32 4294967266, %v3993
    %v3999 = vadd.s32 %v3998, 127
    %v4000 = vshll.u32 %v3999, 23
    %v4001 = vor.u32 4788187, %v4000
    %v4002 = vand.u32 2147483647, %v4001
    %v4004 = vcvt.s32.f32 %v3997
    %v4005 = vmul.f32 %v4004, %v4002
    %v4006 = vxor.u32 %v4005, 2147483648
    %v4007 = vsel %vm3924, %v4006, %v4005
    %v4008 = vsub.s32 4, %v3984
    %v4009 = vsel %vm3924, %v4008, %v3984
    %v4010 = vsel %vm3923, %v3581, %v4007
    %v4011 = vsel %vm3923, 0, %v4009
    %v4012 = vcosq.f32.pop %v4010
    %v4013 = vsinq.f32.pop %v4010
    %vm4014 = vweird.f32 %v3581
    %v4015 = vadd.s32 %v4011, 3
    %v4016 = vand.u32 %v4015, 3
    %vm4017 = vcmp.lt.s32.totalorder %v4016, 2
    %vm4018 = vcmp.eq.s32.totalorder %v4016, 0
    %v4019 = vxor.u32 %v4013, 2147483648
    %v4020 = vsel %vm4018, %v4012, %v4019
    %vm4021 = vcmp.eq.s32.totalorder %v4016, 2
    %v4022 = vxor.u32 %v4012, 2147483648
    %v4023 = vsel %vm4021, %v4022, %v4013
    %v4024 = vsel %vm4017, %v4020, %v4023
    %v4025 = vsel %vm4014, nan, %v4024
    %v4026 = vand.u32 2147483647, %v3582
    %vm4027 = vcmp.le.f32.partialorder %v4026, 0.7853982
    %vm4028 = vcmp.lt.s32.totalorder %v3582, 0
    %v4029 = vand.u32 %v3582, 2139095040
    %v4030 = vshrl.u32 %v4029, 23
    %v4031 = vsub.s32 %v4030, 127
    %v4032 = vand.u32 2147483647, %v3582
    %v4033 = vand.u32 %v4032, 8388607
    %v4034 = vor.u32 %v4033, 8388608
    %v4035 = vsub.s32 0, %v4034
    %v4036 = vadd.s32 %v4031, 1
    %vm4037 = vcmp.gt.s32.totalorder %v4036, 0
    %v4038 = vsel %vm4037, %v4036, 0
    %v4039 = vshrl.u32 %v4038, 5
    %v4040 = vand.u32 %v4038, 31
    %v4041 = vsub.s32 32, %v4040
    %v4042 = vshrl.u32 683565275, %v4041
    %v4043 = vshll.u32 683565275, %v4040
    %v4044 = vshrl.u32 2475754826, %v4041
    %v4045 = vor.u32 %v4043, %v4044
    %v4046 = vshll.u32 2475754826, %v4040
    %v4047 = vshrl.u32 2131351028, %v4041
    %v4048 = vor.u32 %v4046, %v4047
    %v4049 = vshll.u32 2131351028, %v4040
    %v4050 = vshrl.u32 2102212464, %v4041
    %v4051 = vor.u32 %v4049, %v4050
    %v4052 = vshll.u32 2102212464, %v4040
    %v4053 = vshrl.u32 920167782, %v4041
    %v4054 = vor.u32 %v4052, %v4053
    %v4055 = vshll.u32 920167782, %v4040
    %v4056 = vshrl.u32 1326507024, %v4041
    %v4057 = vor.u32 %v4055, %v4056
    %vm4058 = vcmp.lt.s32.totalorder %v4039, 1
    %vm4059 = vcmp.lt.s32.totalorder %v4039, 2
    %vm4060 = vcmp.lt.s32.totalorder %v4039, 3
    %vm4061 = vcmp.lt.s32.totalorder %v4039, 4
    %v4062 = vsel %vm4058, %v4042, %v4045
    %v4063 = vsel %vm4061, %v4051, 2102212464
    %v4064 = vsel %vm4060, %v4048, %v4063
    %v4065 = vsel %vm4059, %v4062, %v4064
    %v4066 = vsel %vm4058, %v4045, %v4048
    %v4067 = vsel %vm4061, %v4054, 920167782
    %v4068 = vsel %vm4060, %v4051, %v4067
    %v4069 = vsel %vm4059, %v4066, %v4068
    %v4070 = vsel %vm4058, %v4048, %v4051
    %v4071 = vsel %vm4061, %v4057, 1326507024
    %v4072 = vsel %vm4060, %v4054, %v4071
    %v4073 = vsel %vm4059, %v4070, %v4072
    %v4074 = vshll.u32 %v4034, 8
    %v4075 = vmul.u32.u64.compose %v4074, %v4073
    %v4076 = vextract.low.u32 %v4075
    %v4077 = vextract.high.u32 %v4075
    %v4078 = vmul.u32.u64.compose %v4074, %v4069
    %v4079 = vextract.low.u32 %v4078
    %v4080 = vextract.high.u32 %v4078
    %v4081 = vmul.u32 %v4074, %v4065
    %v4082 = vadd.s32 %v4077, %v4079
    %vm4083 = vc.u32 %v4077, %v4079
    %v4084 = vadd.s32 %v4080, 1
    %v4085 = vsel %vm4083, %v4084, %v4080
    %v4086 = vadd.s32 %v4081, %v4085
    %v4087 = vadd.s32 %v4086, 536870912
    %v4088 = vshrl.u32 %v4087, 30
    %v4089 = vshll.u32 %v4088, 30
    %v4090 = vsub.s32 %v4086, %v4089
    %vm4091 = vcmp.lt.s32.totalorder %v4090, 0
    %v4092 = vsub.s32 0, %v4090
    %v4093 = vsel %vm4091, %v4092, %v4090
    %v4094 = vclz %v4093
    %v4095 = vsub.s32 %v4094, 2
    %vm4096 = vcmp.gt.s32.totalorder 0, %v4095
    %v4097 = vsel %vm4096, 0, %v4095
    %v4098 = vsub.s32 32, %v4097
    %v4099 = vshll.u32 %v4090, %v4097
    %v4100 = vshrl.u32 %v4082, %v4098
    %v4101 = vor.u32 %v4099, %v4100
    %v4102 = vsub.s32 4294967266, %v4097
    %v4103 = vadd.s32 %v4102, 127
    %v4104 = vshll.u32 %v4103, 23
    %v4105 = vor.u32 4788187, %v4104
    %v4106 = vand.u32 2147483647, %v4105
    %v4108 = vcvt.s32.f32 %v4101
    %v4109 = vmul.f32 %v4108, %v4106
    %v4110 = vxor.u32 %v4109, 2147483648
    %v4111 = vsel %vm4028, %v4110, %v4109
    %v4112 = vsub.s32 4, %v4088
    %v4113 = vsel %vm4028, %v4112, %v4088
    %v4114 = vsel %vm4027, %v3582, %v4111
    %v4115 = vsel %vm4027, 0, %v4113
    %v4116 = vcosq.f32.pop %v4114
    %v4117 = vsinq.f32.pop %v4114
    %vm4118 = vweird.f32 %v3582
    %v4119 = vadd.s32 %v4115, 3
    %v4120 = vand.u32 %v4119, 3
    %vm4121 = vcmp.lt.s32.totalorder %v4120, 2
    %vm4122 = vcmp.eq.s32.totalorder %v4120, 0
    %v4123 = vxor.u32 %v4117, 2147483648
    %v4124 = vsel %vm4122, %v4116, %v4123
    %vm4125 = vcmp.eq.s32.totalorder %v4120, 2
    %v4126 = vxor.u32 %v4116, 2147483648
    %v4127 = vsel %vm4125, %v4126, %v4117
    %v4128 = vsel %vm4121, %v4124, %v4127
    %v4129 = vsel %vm4118, nan, %v4128
    %v4130 = vand.u32 2147483647, %v3583
    %vm4131 = vcmp.le.f32.partialorder %v4130, 0.7853982
    %vm4132 = vcmp.lt.s32.totalorder %v3583, 0
    %v4133 = vand.u32 %v3583, 2139095040
    %v4134 = vshrl.u32 %v4133, 23
    %v4135 = vsub.s32 %v4134, 127
    %v4136 = vand.u32 2147483647, %v3583
    %v4137 = vand.u32 %v4136, 8388607
    %v4138 = vor.u32 %v4137, 8388608
    %v4139 = vsub.s32 0, %v4138
    %v4140 = vadd.s32 %v4135, 1
    %vm4141 = vcmp.gt.s32.totalorder %v4140, 0
    %v4142 = vsel %vm4141, %v4140, 0
    %v4143 = vshrl.u32 %v4142, 5
    %v4144 = vand.u32 %v4142, 31
    %v4145 = vsub.s32 32, %v4144
    %v4146 = vshrl.u32 683565275, %v4145
    %v4147 = vshll.u32 683565275, %v4144
    %v4148 = vshrl.u32 2475754826, %v4145
    %v4149 = vor.u32 %v4147, %v4148
    %v4150 = vshll.u32 2475754826, %v4144
    %v4151 = vshrl.u32 2131351028, %v4145
    %v4152 = vor.u32 %v4150, %v4151
    %v4153 = vshll.u32 2131351028, %v4144
    %v4154 = vshrl.u32 2102212464, %v4145
    %v4155 = vor.u32 %v4153, %v4154
    %v4156 = vshll.u32 2102212464, %v4144
    %v4157 = vshrl.u32 920167782, %v4145
    %v4158 = vor.u32 %v4156, %v4157
    %v4159 = vshll.u32 920167782, %v4144
    %v4160 = vshrl.u32 1326507024, %v4145
    %v4161 = vor.u32 %v4159, %v4160
    %vm4162 = vcmp.lt.s32.totalorder %v4143, 1
    %vm4163 = vcmp.lt.s32.totalorder %v4143, 2
    %vm4164 = vcmp.lt.s32.totalorder %v4143, 3
    %vm4165 = vcmp.lt.s32.totalorder %v4143, 4
    %v4166 = vsel %vm4162, %v4146, %v4149
    %v4167 = vsel %vm4165, %v4155, 2102212464
    %v4168 = vsel %vm4164, %v4152, %v4167
    %v4169 = vsel %vm4163, %v4166, %v4168
    %v4170 = vsel %vm4162, %v4149, %v4152
    %v4171 = vsel %vm4165, %v4158, 920167782
    %v4172 = vsel %vm4164, %v4155, %v4171
    %v4173 = vsel %vm4163, %v4170, %v4172
    %v4174 = vsel %vm4162, %v4152, %v4155
    %v4175 = vsel %vm4165, %v4161, 1326507024
    %v4176 = vsel %vm4164, %v4158, %v4175
    %v4177 = vsel %vm4163, %v4174, %v4176
    %v4178 = vshll.u32 %v4138, 8
    %v4179 = vmul.u32.u64.compose %v4178, %v4177
    %v4180 = vextract.low.u32 %v4179
    %v4181 = vextract.high.u32 %v4179
    %v4182 = vmul.u32.u64.compose %v4178, %v4173
    %v4183 = vextract.low.u32 %v4182
    %v4184 = vextract.high.u32 %v4182
    %v4185 = vmul.u32 %v4178, %v4169
    %v4186 = vadd.s32 %v4181, %v4183
    %vm4187 = vc.u32 %v4181, %v4183
    %v4188 = vadd.s32 %v4184, 1
    %v4189 = vsel %vm4187, %v4188, %v4184
    %v4190 = vadd.s32 %v4185, %v4189
    %v4191 = vadd.s32 %v4190, 536870912
    %v4192 = vshrl.u32 %v4191, 30
    %v4193 = vshll.u32 %v4192, 30
    %v4194 = vsub.s32 %v4190, %v4193
    %vm4195 = vcmp.lt.s32.totalorder %v4194, 0
    %v4196 = vsub.s32 0, %v4194
    %v4197 = vsel %vm4195, %v4196, %v4194
    %v4198 = vclz %v4197
    %v4199 = vsub.s32 %v4198, 2
    %vm4200 = vcmp.gt.s32.totalorder 0, %v4199
    %v4201 = vsel %vm4200, 0, %v4199
    %v4202 = vsub.s32 32, %v4201
    %v4203 = vshll.u32 %v4194, %v4201
    %v4204 = vshrl.u32 %v4186, %v4202
    %v4205 = vor.u32 %v4203, %v4204
    %v4206 = vsub.s32 4294967266, %v4201
    %v4207 = vadd.s32 %v4206, 127
    %v4208 = vshll.u32 %v4207, 23
    %v4209 = vor.u32 4788187, %v4208
    %v4210 = vand.u32 2147483647, %v4209
    %v4212 = vcvt.s32.f32 %v4205
    %v4213 = vmul.f32 %v4212, %v4210
    %v4214 = vxor.u32 %v4213, 2147483648
    %v4215 = vsel %vm4132, %v4214, %v4213
    %v4216 = vsub.s32 4, %v4192
    %v4217 = vsel %vm4132, %v4216, %v4192
    %v4218 = vsel %vm4131, %v3583, %v4215
    %v4219 = vsel %vm4131, 0, %v4217
    %v4220 = vcosq.f32.pop %v4218
    %v4221 = vsinq.f32.pop %v4218
    %vm4222 = vweird.f32 %v3583
    %v4223 = vadd.s32 %v4219, 3
    %v4224 = vand.u32 %v4223, 3
    %vm4225 = vcmp.lt.s32.totalorder %v4224, 2
    %vm4226 = vcmp.eq.s32.totalorder %v4224, 0
    %v4227 = vxor.u32 %v4221, 2147483648
    %v4228 = vsel %vm4226, %v4220, %v4227
    %vm4229 = vcmp.eq.s32.totalorder %v4224, 2
    %v4230 = vxor.u32 %v4220, 2147483648
    %v4231 = vsel %vm4229, %v4230, %v4221
    %v4232 = vsel %vm4225, %v4228, %v4231
    %v4233 = vsel %vm4222, nan, %v4232
    %v4234 = vand.u32 2147483647, %v3584
    %vm4235 = vcmp.le.f32.partialorder %v4234, 0.7853982
    %vm4236 = vcmp.lt.s32.totalorder %v3584, 0
    %v4237 = vand.u32 %v3584, 2139095040
    %v4238 = vshrl.u32 %v4237, 23
    %v4239 = vsub.s32 %v4238, 127
    %v4240 = vand.u32 2147483647, %v3584
    %v4241 = vand.u32 %v4240, 8388607
    %v4242 = vor.u32 %v4241, 8388608
    %v4243 = vsub.s32 0, %v4242
    %v4244 = vadd.s32 %v4239, 1
    %vm4245 = vcmp.gt.s32.totalorder %v4244, 0
    %v4246 = vsel %vm4245, %v4244, 0
    %v4247 = vshrl.u32 %v4246, 5
    %v4248 = vand.u32 %v4246, 31
    %v4249 = vsub.s32 32, %v4248
    %v4250 = vshrl.u32 683565275, %v4249
    %v4251 = vshll.u32 683565275, %v4248
    %v4252 = vshrl.u32 2475754826, %v4249
    %v4253 = vor.u32 %v4251, %v4252
    %v4254 = vshll.u32 2475754826, %v4248
    %v4255 = vshrl.u32 2131351028, %v4249
    %v4256 = vor.u32 %v4254, %v4255
    %v4257 = vshll.u32 2131351028, %v4248
    %v4258 = vshrl.u32 2102212464, %v4249
    %v4259 = vor.u32 %v4257, %v4258
    %v4260 = vshll.u32 2102212464, %v4248
    %v4261 = vshrl.u32 920167782, %v4249
    %v4262 = vor.u32 %v4260, %v4261
    %v4263 = vshll.u32 920167782, %v4248
    %v4264 = vshrl.u32 1326507024, %v4249
    %v4265 = vor.u32 %v4263, %v4264
    %vm4266 = vcmp.lt.s32.totalorder %v4247, 1
    %vm4267 = vcmp.lt.s32.totalorder %v4247, 2
    %vm4268 = vcmp.lt.s32.totalorder %v4247, 3
    %vm4269 = vcmp.lt.s32.totalorder %v4247, 4
    %v4270 = vsel %vm4266, %v4250, %v4253
    %v4271 = vsel %vm4269, %v4259, 2102212464
    %v4272 = vsel %vm4268, %v4256, %v4271
    %v4273 = vsel %vm4267, %v4270, %v4272
    %v4274 = vsel %vm4266, %v4253, %v4256
    %v4275 = vsel %vm4269, %v4262, 920167782
    %v4276 = vsel %vm4268, %v4259, %v4275
    %v4277 = vsel %vm4267, %v4274, %v4276
    %v4278 = vsel %vm4266, %v4256, %v4259
    %v4279 = vsel %vm4269, %v4265, 1326507024
    %v4280 = vsel %vm4268, %v4262, %v4279
    %v4281 = vsel %vm4267, %v4278, %v4280
    %v4282 = vshll.u32 %v4242, 8
    %v4283 = vmul.u32.u64.compose %v4282, %v4281
    %v4284 = vextract.low.u32 %v4283
    %v4285 = vextract.high.u32 %v4283
    %v4286 = vmul.u32.u64.compose %v4282, %v4277
    %v4287 = vextract.low.u32 %v4286
    %v4288 = vextract.high.u32 %v4286
    %v4289 = vmul.u32 %v4282, %v4273
    %v4290 = vadd.s32 %v4285, %v4287
    %vm4291 = vc.u32 %v4285, %v4287
    %v4292 = vadd.s32 %v4288, 1
    %v4293 = vsel %vm4291, %v4292, %v4288
    %v4294 = vadd.s32 %v4289, %v4293
    %v4295 = vadd.s32 %v4294, 536870912
    %v4296 = vshrl.u32 %v4295, 30
    %v4297 = vshll.u32 %v4296, 30
    %v4298 = vsub.s32 %v4294, %v4297
    %vm4299 = vcmp.lt.s32.totalorder %v4298, 0
    %v4300 = vsub.s32 0, %v4298
    %v4301 = vsel %vm4299, %v4300, %v4298
    %v4302 = vclz %v4301
    %v4303 = vsub.s32 %v4302, 2
    %vm4304 = vcmp.gt.s32.totalorder 0, %v4303
    %v4305 = vsel %vm4304, 0, %v4303
    %v4306 = vsub.s32 32, %v4305
    %v4307 = vshll.u32 %v4298, %v4305
    %v4308 = vshrl.u32 %v4290, %v4306
    %v4309 = vor.u32 %v4307, %v4308
    %v4310 = vsub.s32 4294967266, %v4305
    %v4311 = vadd.s32 %v4310, 127
    %v4312 = vshll.u32 %v4311, 23
    %v4313 = vor.u32 4788187, %v4312
    %v4314 = vand.u32 2147483647, %v4313
    %v4316 = vcvt.s32.f32 %v4309
    %v4317 = vmul.f32 %v4316, %v4314
    %v4318 = vxor.u32 %v4317, 2147483648
    %v4319 = vsel %vm4236, %v4318, %v4317
    %v4320 = vsub.s32 4, %v4296
    %v4321 = vsel %vm4236, %v4320, %v4296
    %v4322 = vsel %vm4235, %v3584, %v4319
    %v4323 = vsel %vm4235, 0, %v4321
    %v4324 = vcosq.f32.pop %v4322
    %v4325 = vsinq.f32.pop %v4322
    %vm4326 = vweird.f32 %v3584
    %v4327 = vadd.s32 %v4323, 3
    %v4328 = vand.u32 %v4327, 3
    %vm4329 = vcmp.lt.s32.totalorder %v4328, 2
    %vm4330 = vcmp.eq.s32.totalorder %v4328, 0
    %v4331 = vxor.u32 %v4325, 2147483648
    %v4332 = vsel %vm4330, %v4324, %v4331
    %vm4333 = vcmp.eq.s32.totalorder %v4328, 2
    %v4334 = vxor.u32 %v4324, 2147483648
    %v4335 = vsel %vm4333, %v4334, %v4325
    %v4336 = vsel %vm4329, %v4332, %v4335
    %v4337 = vsel %vm4326, nan, %v4336
    %v4338 = vand.u32 2147483647, %v3585
    %vm4339 = vcmp.le.f32.partialorder %v4338, 0.7853982
    %vm4340 = vcmp.lt.s32.totalorder %v3585, 0
    %v4341 = vand.u32 %v3585, 2139095040
    %v4342 = vshrl.u32 %v4341, 23
    %v4343 = vsub.s32 %v4342, 127
    %v4344 = vand.u32 2147483647, %v3585
    %v4345 = vand.u32 %v4344, 8388607
    %v4346 = vor.u32 %v4345, 8388608
    %v4347 = vsub.s32 0, %v4346
    %v4348 = vadd.s32 %v4343, 1
    %vm4349 = vcmp.gt.s32.totalorder %v4348, 0
    %v4350 = vsel %vm4349, %v4348, 0
    %v4351 = vshrl.u32 %v4350, 5
    %v4352 = vand.u32 %v4350, 31
    %v4353 = vsub.s32 32, %v4352
    %v4354 = vshrl.u32 683565275, %v4353
    %v4355 = vshll.u32 683565275, %v4352
    %v4356 = vshrl.u32 2475754826, %v4353
    %v4357 = vor.u32 %v4355, %v4356
    %v4358 = vshll.u32 2475754826, %v4352
    %v4359 = vshrl.u32 2131351028, %v4353
    %v4360 = vor.u32 %v4358, %v4359
    %v4361 = vshll.u32 2131351028, %v4352
    %v4362 = vshrl.u32 2102212464, %v4353
    %v4363 = vor.u32 %v4361, %v4362
    %v4364 = vshll.u32 2102212464, %v4352
    %v4365 = vshrl.u32 920167782, %v4353
    %v4366 = vor.u32 %v4364, %v4365
    %v4367 = vshll.u32 920167782, %v4352
    %v4368 = vshrl.u32 1326507024, %v4353
    %v4369 = vor.u32 %v4367, %v4368
    %vm4370 = vcmp.lt.s32.totalorder %v4351, 1
    %vm4371 = vcmp.lt.s32.totalorder %v4351, 2
    %vm4372 = vcmp.lt.s32.totalorder %v4351, 3
    %vm4373 = vcmp.lt.s32.totalorder %v4351, 4
    %v4374 = vsel %vm4370, %v4354, %v4357
    %v4375 = vsel %vm4373, %v4363, 2102212464
    %v4376 = vsel %vm4372, %v4360, %v4375
    %v4377 = vsel %vm4371, %v4374, %v4376
    %v4378 = vsel %vm4370, %v4357, %v4360
    %v4379 = vsel %vm4373, %v4366, 920167782
    %v4380 = vsel %vm4372, %v4363, %v4379
    %v4381 = vsel %vm4371, %v4378, %v4380
    %v4382 = vsel %vm4370, %v4360, %v4363
    %v4383 = vsel %vm4373, %v4369, 1326507024
    %v4384 = vsel %vm4372, %v4366, %v4383
    %v4385 = vsel %vm4371, %v4382, %v4384
    %v4386 = vshll.u32 %v4346, 8
    %v4387 = vmul.u32.u64.compose %v4386, %v4385
    %v4388 = vextract.low.u32 %v4387
    %v4389 = vextract.high.u32 %v4387
    %v4390 = vmul.u32.u64.compose %v4386, %v4381
    %v4391 = vextract.low.u32 %v4390
    %v4392 = vextract.high.u32 %v4390
    %v4393 = vmul.u32 %v4386, %v4377
    %v4394 = vadd.s32 %v4389, %v4391
    %vm4395 = vc.u32 %v4389, %v4391
    %v4396 = vadd.s32 %v4392, 1
    %v4397 = vsel %vm4395, %v4396, %v4392
    %v4398 = vadd.s32 %v4393, %v4397
    %v4399 = vadd.s32 %v4398, 536870912
    %v4400 = vshrl.u32 %v4399, 30
    %v4401 = vshll.u32 %v4400, 30
    %v4402 = vsub.s32 %v4398, %v4401
    %vm4403 = vcmp.lt.s32.totalorder %v4402, 0
    %v4404 = vsub.s32 0, %v4402
    %v4405 = vsel %vm4403, %v4404, %v4402
    %v4406 = vclz %v4405
    %v4407 = vsub.s32 %v4406, 2
    %vm4408 = vcmp.gt.s32.totalorder 0, %v4407
    %v4409 = vsel %vm4408, 0, %v4407
    %v4410 = vsub.s32 32, %v4409
    %v4411 = vshll.u32 %v4402, %v4409
    %v4412 = vshrl.u32 %v4394, %v4410
    %v4413 = vor.u32 %v4411, %v4412
    %v4414 = vsub.s32 4294967266, %v4409
    %v4415 = vadd.s32 %v4414, 127
    %v4416 = vshll.u32 %v4415, 23
    %v4417 = vor.u32 4788187, %v4416
    %v4418 = vand.u32 2147483647, %v4417
    %v4420 = vcvt.s32.f32 %v4413
    %v4421 = vmul.f32 %v4420, %v4418
    %v4422 = vxor.u32 %v4421, 2147483648
    %v4423 = vsel %vm4340, %v4422, %v4421
    %v4424 = vsub.s32 4, %v4400
    %v4425 = vsel %vm4340, %v4424, %v4400
    %v4426 = vsel %vm4339, %v3585, %v4423
    %v4427 = vsel %vm4339, 0, %v4425
    %v4428 = vcosq.f32.pop %v4426
    %v4429 = vsinq.f32.pop %v4426
    %vm4430 = vweird.f32 %v3585
    %v4431 = vadd.s32 %v4427, 3
    %v4432 = vand.u32 %v4431, 3
    %vm4433 = vcmp.lt.s32.totalorder %v4432, 2
    %vm4434 = vcmp.eq.s32.totalorder %v4432, 0
    %v4435 = vxor.u32 %v4429, 2147483648
    %v4436 = vsel %vm4434, %v4428, %v4435
    %vm4437 = vcmp.eq.s32.totalorder %v4432, 2
    %v4438 = vxor.u32 %v4428, 2147483648
    %v4439 = vsel %vm4437, %v4438, %v4429
    %v4440 = vsel %vm4433, %v4436, %v4439
    %v4441 = vsel %vm4430, nan, %v4440
    %v4442 = vand.u32 2147483647, %v3586
    %vm4443 = vcmp.le.f32.partialorder %v4442, 0.7853982
    %vm4444 = vcmp.lt.s32.totalorder %v3586, 0
    %v4445 = vand.u32 %v3586, 2139095040
    %v4446 = vshrl.u32 %v4445, 23
    %v4447 = vsub.s32 %v4446, 127
    %v4448 = vand.u32 2147483647, %v3586
    %v4449 = vand.u32 %v4448, 8388607
    %v4450 = vor.u32 %v4449, 8388608
    %v4451 = vsub.s32 0, %v4450
    %v4452 = vadd.s32 %v4447, 1
    %vm4453 = vcmp.gt.s32.totalorder %v4452, 0
    %v4454 = vsel %vm4453, %v4452, 0
    %v4455 = vshrl.u32 %v4454, 5
    %v4456 = vand.u32 %v4454, 31
    %v4457 = vsub.s32 32, %v4456
    %v4458 = vshrl.u32 683565275, %v4457
    %v4459 = vshll.u32 683565275, %v4456
    %v4460 = vshrl.u32 2475754826, %v4457
    %v4461 = vor.u32 %v4459, %v4460
    %v4462 = vshll.u32 2475754826, %v4456
    %v4463 = vshrl.u32 2131351028, %v4457
    %v4464 = vor.u32 %v4462, %v4463
    %v4465 = vshll.u32 2131351028, %v4456
    %v4466 = vshrl.u32 2102212464, %v4457
    %v4467 = vor.u32 %v4465, %v4466
    %v4468 = vshll.u32 2102212464, %v4456
    %v4469 = vshrl.u32 920167782, %v4457
    %v4470 = vor.u32 %v4468, %v4469
    %v4471 = vshll.u32 920167782, %v4456
    %v4472 = vshrl.u32 1326507024, %v4457
    %v4473 = vor.u32 %v4471, %v4472
    %vm4474 = vcmp.lt.s32.totalorder %v4455, 1
    %vm4475 = vcmp.lt.s32.totalorder %v4455, 2
    %vm4476 = vcmp.lt.s32.totalorder %v4455, 3
    %vm4477 = vcmp.lt.s32.totalorder %v4455, 4
    %v4478 = vsel %vm4474, %v4458, %v4461
    %v4479 = vsel %vm4477, %v4467, 2102212464
    %v4480 = vsel %vm4476, %v4464, %v4479
    %v4481 = vsel %vm4475, %v4478, %v4480
    %v4482 = vsel %vm4474, %v4461, %v4464
    %v4483 = vsel %vm4477, %v4470, 920167782
    %v4484 = vsel %vm4476, %v4467, %v4483
    %v4485 = vsel %vm4475, %v4482, %v4484
    %v4486 = vsel %vm4474, %v4464, %v4467
    %v4487 = vsel %vm4477, %v4473, 1326507024
    %v4488 = vsel %vm4476, %v4470, %v4487
    %v4489 = vsel %vm4475, %v4486, %v4488
    %v4490 = vshll.u32 %v4450, 8
    %v4491 = vmul.u32.u64.compose %v4490, %v4489
    %v4492 = vextract.low.u32 %v4491
    %v4493 = vextract.high.u32 %v4491
    %v4494 = vmul.u32.u64.compose %v4490, %v4485
    %v4495 = vextract.low.u32 %v4494
    %v4496 = vextract.high.u32 %v4494
    %v4497 = vmul.u32 %v4490, %v4481
    %v4498 = vadd.s32 %v4493, %v4495
    %vm4499 = vc.u32 %v4493, %v4495
    %v4500 = vadd.s32 %v4496, 1
    %v4501 = vsel %vm4499, %v4500, %v4496
    %v4502 = vadd.s32 %v4497, %v4501
    %v4503 = vadd.s32 %v4502, 536870912
    %v4504 = vshrl.u32 %v4503, 30
    %v4505 = vshll.u32 %v4504, 30
    %v4506 = vsub.s32 %v4502, %v4505
    %vm4507 = vcmp.lt.s32.totalorder %v4506, 0
    %v4508 = vsub.s32 0, %v4506
    %v4509 = vsel %vm4507, %v4508, %v4506
    %v4510 = vclz %v4509
    %v4511 = vsub.s32 %v4510, 2
    %vm4512 = vcmp.gt.s32.totalorder 0, %v4511
    %v4513 = vsel %vm4512, 0, %v4511
    %v4514 = vsub.s32 32, %v4513
    %v4515 = vshll.u32 %v4506, %v4513
    %v4516 = vshrl.u32 %v4498, %v4514
    %v4517 = vor.u32 %v4515, %v4516
    %v4518 = vsub.s32 4294967266, %v4513
    %v4519 = vadd.s32 %v4518, 127
    %v4520 = vshll.u32 %v4519, 23
    %v4521 = vor.u32 4788187, %v4520
    %v4522 = vand.u32 2147483647, %v4521
    %v4524 = vcvt.s32.f32 %v4517
    %v4525 = vmul.f32 %v4524, %v4522
    %v4526 = vxor.u32 %v4525, 2147483648
    %v4527 = vsel %vm4444, %v4526, %v4525
    %v4528 = vsub.s32 4, %v4504
    %v4529 = vsel %vm4444, %v4528, %v4504
    %v4530 = vsel %vm4443, %v3586, %v4527
    %v4531 = vsel %vm4443, 0, %v4529
    %v4532 = vcosq.f32.pop %v4530
    %v4533 = vsinq.f32.pop %v4530
    %vm4534 = vweird.f32 %v3586
    %v4535 = vadd.s32 %v4531, 3
    %v4536 = vand.u32 %v4535, 3
    %vm4537 = vcmp.lt.s32.totalorder %v4536, 2
    %vm4538 = vcmp.eq.s32.totalorder %v4536, 0
    %v4539 = vxor.u32 %v4533, 2147483648
    %v4540 = vsel %vm4538, %v4532, %v4539
    %vm4541 = vcmp.eq.s32.totalorder %v4536, 2
    %v4542 = vxor.u32 %v4532, 2147483648
    %v4543 = vsel %vm4541, %v4542, %v4533
    %v4544 = vsel %vm4537, %v4540, %v4543
    %v4545 = vsel %vm4534, nan, %v4544
    %v4546 = vand.u32 2147483647, %v3587
    %vm4547 = vcmp.le.f32.partialorder %v4546, 0.7853982
    %vm4548 = vcmp.lt.s32.totalorder %v3587, 0
    %v4549 = vand.u32 %v3587, 2139095040
    %v4550 = vshrl.u32 %v4549, 23
    %v4551 = vsub.s32 %v4550, 127
    %v4552 = vand.u32 2147483647, %v3587
    %v4553 = vand.u32 %v4552, 8388607
    %v4554 = vor.u32 %v4553, 8388608
    %v4555 = vsub.s32 0, %v4554
    %v4556 = vadd.s32 %v4551, 1
    %vm4557 = vcmp.gt.s32.totalorder %v4556, 0
    %v4558 = vsel %vm4557, %v4556, 0
    %v4559 = vshrl.u32 %v4558, 5
    %v4560 = vand.u32 %v4558, 31
    %v4561 = vsub.s32 32, %v4560
    %v4562 = vshrl.u32 683565275, %v4561
    %v4563 = vshll.u32 683565275, %v4560
    %v4564 = vshrl.u32 2475754826, %v4561
    %v4565 = vor.u32 %v4563, %v4564
    %v4566 = vshll.u32 2475754826, %v4560
    %v4567 = vshrl.u32 2131351028, %v4561
    %v4568 = vor.u32 %v4566, %v4567
    %v4569 = vshll.u32 2131351028, %v4560
    %v4570 = vshrl.u32 2102212464, %v4561
    %v4571 = vor.u32 %v4569, %v4570
    %v4572 = vshll.u32 2102212464, %v4560
    %v4573 = vshrl.u32 920167782, %v4561
    %v4574 = vor.u32 %v4572, %v4573
    %v4575 = vshll.u32 920167782, %v4560
    %v4576 = vshrl.u32 1326507024, %v4561
    %v4577 = vor.u32 %v4575, %v4576
    %vm4578 = vcmp.lt.s32.totalorder %v4559, 1
    %vm4579 = vcmp.lt.s32.totalorder %v4559, 2
    %vm4580 = vcmp.lt.s32.totalorder %v4559, 3
    %vm4581 = vcmp.lt.s32.totalorder %v4559, 4
    %v4582 = vsel %vm4578, %v4562, %v4565
    %v4583 = vsel %vm4581, %v4571, 2102212464
    %v4584 = vsel %vm4580, %v4568, %v4583
    %v4585 = vsel %vm4579, %v4582, %v4584
    %v4586 = vsel %vm4578, %v4565, %v4568
    %v4587 = vsel %vm4581, %v4574, 920167782
    %v4588 = vsel %vm4580, %v4571, %v4587
    %v4589 = vsel %vm4579, %v4586, %v4588
    %v4590 = vsel %vm4578, %v4568, %v4571
    %v4591 = vsel %vm4581, %v4577, 1326507024
    %v4592 = vsel %vm4580, %v4574, %v4591
    %v4593 = vsel %vm4579, %v4590, %v4592
    %v4594 = vshll.u32 %v4554, 8
    %v4595 = vmul.u32.u64.compose %v4594, %v4593
    %v4596 = vextract.low.u32 %v4595
    %v4597 = vextract.high.u32 %v4595
    %v4598 = vmul.u32.u64.compose %v4594, %v4589
    %v4599 = vextract.low.u32 %v4598
    %v4600 = vextract.high.u32 %v4598
    %v4601 = vmul.u32 %v4594, %v4585
    %v4602 = vadd.s32 %v4597, %v4599
    %vm4603 = vc.u32 %v4597, %v4599
    %v4604 = vadd.s32 %v4600, 1
    %v4605 = vsel %vm4603, %v4604, %v4600
    %v4606 = vadd.s32 %v4601, %v4605
    %v4607 = vadd.s32 %v4606, 536870912
    %v4608 = vshrl.u32 %v4607, 30
    %v4609 = vshll.u32 %v4608, 30
    %v4610 = vsub.s32 %v4606, %v4609
    %vm4611 = vcmp.lt.s32.totalorder %v4610, 0
    %v4612 = vsub.s32 0, %v4610
    %v4613 = vsel %vm4611, %v4612, %v4610
    %v4614 = vclz %v4613
    %v4615 = vsub.s32 %v4614, 2
    %vm4616 = vcmp.gt.s32.totalorder 0, %v4615
    %v4617 = vsel %vm4616, 0, %v4615
    %v4618 = vsub.s32 32, %v4617
    %v4619 = vshll.u32 %v4610, %v4617
    %v4620 = vshrl.u32 %v4602, %v4618
    %v4621 = vor.u32 %v4619, %v4620
    %v4622 = vsub.s32 4294967266, %v4617
    %v4623 = vadd.s32 %v4622, 127
    %v4624 = vshll.u32 %v4623, 23
    %v4625 = vor.u32 4788187, %v4624
    %v4626 = vand.u32 2147483647, %v4625
    %v4628 = vcvt.s32.f32 %v4621
    %v4629 = vmul.f32 %v4628, %v4626
    %v4630 = vxor.u32 %v4629, 2147483648
    %v4631 = vsel %vm4548, %v4630, %v4629
    %v4632 = vsub.s32 4, %v4608
    %v4633 = vsel %vm4548, %v4632, %v4608
    %v4634 = vsel %vm4547, %v3587, %v4631
    %v4635 = vsel %vm4547, 0, %v4633
    %v4636 = vcosq.f32.pop %v4634
    %v4637 = vsinq.f32.pop %v4634
    %vm4638 = vweird.f32 %v3587
    %v4639 = vadd.s32 %v4635, 3
    %v4640 = vand.u32 %v4639, 3
    %vm4641 = vcmp.lt.s32.totalorder %v4640, 2
    %vm4642 = vcmp.eq.s32.totalorder %v4640, 0
    %v4643 = vxor.u32 %v4637, 2147483648
    %v4644 = vsel %vm4642, %v4636, %v4643
    %vm4645 = vcmp.eq.s32.totalorder %v4640, 2
    %v4646 = vxor.u32 %v4636, 2147483648
    %v4647 = vsel %vm4645, %v4646, %v4637
    %v4648 = vsel %vm4641, %v4644, %v4647
    %v4649 = vsel %vm4638, nan, %v4648
    %v4650 = vand.u32 2147483647, %v3588
    %vm4651 = vcmp.le.f32.partialorder %v4650, 0.7853982
    %vm4652 = vcmp.lt.s32.totalorder %v3588, 0
    %v4653 = vand.u32 %v3588, 2139095040
    %v4654 = vshrl.u32 %v4653, 23
    %v4655 = vsub.s32 %v4654, 127
    %v4656 = vand.u32 2147483647, %v3588
    %v4657 = vand.u32 %v4656, 8388607
    %v4658 = vor.u32 %v4657, 8388608
    %v4659 = vsub.s32 0, %v4658
    %v4660 = vadd.s32 %v4655, 1
    %vm4661 = vcmp.gt.s32.totalorder %v4660, 0
    %v4662 = vsel %vm4661, %v4660, 0
    %v4663 = vshrl.u32 %v4662, 5
    %v4664 = vand.u32 %v4662, 31
    %v4665 = vsub.s32 32, %v4664
    %v4666 = vshrl.u32 683565275, %v4665
    %v4667 = vshll.u32 683565275, %v4664
    %v4668 = vshrl.u32 2475754826, %v4665
    %v4669 = vor.u32 %v4667, %v4668
    %v4670 = vshll.u32 2475754826, %v4664
    %v4671 = vshrl.u32 2131351028, %v4665
    %v4672 = vor.u32 %v4670, %v4671
    %v4673 = vshll.u32 2131351028, %v4664
    %v4674 = vshrl.u32 2102212464, %v4665
    %v4675 = vor.u32 %v4673, %v4674
    %v4676 = vshll.u32 2102212464, %v4664
    %v4677 = vshrl.u32 920167782, %v4665
    %v4678 = vor.u32 %v4676, %v4677
    %v4679 = vshll.u32 920167782, %v4664
    %v4680 = vshrl.u32 1326507024, %v4665
    %v4681 = vor.u32 %v4679, %v4680
    %vm4682 = vcmp.lt.s32.totalorder %v4663, 1
    %vm4683 = vcmp.lt.s32.totalorder %v4663, 2
    %vm4684 = vcmp.lt.s32.totalorder %v4663, 3
    %vm4685 = vcmp.lt.s32.totalorder %v4663, 4
    %v4686 = vsel %vm4682, %v4666, %v4669
    %v4687 = vsel %vm4685, %v4675, 2102212464
    %v4688 = vsel %vm4684, %v4672, %v4687
    %v4689 = vsel %vm4683, %v4686, %v4688
    %v4690 = vsel %vm4682, %v4669, %v4672
    %v4691 = vsel %vm4685, %v4678, 920167782
    %v4692 = vsel %vm4684, %v4675, %v4691
    %v4693 = vsel %vm4683, %v4690, %v4692
    %v4694 = vsel %vm4682, %v4672, %v4675
    %v4695 = vsel %vm4685, %v4681, 1326507024
    %v4696 = vsel %vm4684, %v4678, %v4695
    %v4697 = vsel %vm4683, %v4694, %v4696
    %v4698 = vshll.u32 %v4658, 8
    %v4699 = vmul.u32.u64.compose %v4698, %v4697
    %v4700 = vextract.low.u32 %v4699
    %v4701 = vextract.high.u32 %v4699
    %v4702 = vmul.u32.u64.compose %v4698, %v4693
    %v4703 = vextract.low.u32 %v4702
    %v4704 = vextract.high.u32 %v4702
    %v4705 = vmul.u32 %v4698, %v4689
    %v4706 = vadd.s32 %v4701, %v4703
    %vm4707 = vc.u32 %v4701, %v4703
    %v4708 = vadd.s32 %v4704, 1
    %v4709 = vsel %vm4707, %v4708, %v4704
    %v4710 = vadd.s32 %v4705, %v4709
    %v4711 = vadd.s32 %v4710, 536870912
    %v4712 = vshrl.u32 %v4711, 30
    %v4713 = vshll.u32 %v4712, 30
    %v4714 = vsub.s32 %v4710, %v4713
    %vm4715 = vcmp.lt.s32.totalorder %v4714, 0
    %v4716 = vsub.s32 0, %v4714
    %v4717 = vsel %vm4715, %v4716, %v4714
    %v4718 = vclz %v4717
    %v4719 = vsub.s32 %v4718, 2
    %vm4720 = vcmp.gt.s32.totalorder 0, %v4719
    %v4721 = vsel %vm4720, 0, %v4719
    %v4722 = vsub.s32 32, %v4721
    %v4723 = vshll.u32 %v4714, %v4721
    %v4724 = vshrl.u32 %v4706, %v4722
    %v4725 = vor.u32 %v4723, %v4724
    %v4726 = vsub.s32 4294967266, %v4721
    %v4727 = vadd.s32 %v4726, 127
    %v4728 = vshll.u32 %v4727, 23
    %v4729 = vor.u32 4788187, %v4728
    %v4730 = vand.u32 2147483647, %v4729
    %v4732 = vcvt.s32.f32 %v4725
    %v4733 = vmul.f32 %v4732, %v4730
    %v4734 = vxor.u32 %v4733, 2147483648
    %v4735 = vsel %vm4652, %v4734, %v4733
    %v4736 = vsub.s32 4, %v4712
    %v4737 = vsel %vm4652, %v4736, %v4712
    %v4738 = vsel %vm4651, %v3588, %v4735
    %v4739 = vsel %vm4651, 0, %v4737
    %v4740 = vcosq.f32.pop %v4738
    %v4741 = vsinq.f32.pop %v4738
    %vm4742 = vweird.f32 %v3588
    %v4743 = vadd.s32 %v4739, 3
    %v4744 = vand.u32 %v4743, 3
    %vm4745 = vcmp.lt.s32.totalorder %v4744, 2
    %vm4746 = vcmp.eq.s32.totalorder %v4744, 0
    %v4747 = vxor.u32 %v4741, 2147483648
    %v4748 = vsel %vm4746, %v4740, %v4747
    %vm4749 = vcmp.eq.s32.totalorder %v4744, 2
    %v4750 = vxor.u32 %v4740, 2147483648
    %v4751 = vsel %vm4749, %v4750, %v4741
    %v4752 = vsel %vm4745, %v4748, %v4751
    %v4753 = vsel %vm4742, nan, %v4752
    %v4754 = vand.u32 2147483647, %v3589
    %vm4755 = vcmp.le.f32.partialorder %v4754, 0.7853982
    %vm4756 = vcmp.lt.s32.totalorder %v3589, 0
    %v4757 = vand.u32 %v3589, 2139095040
    %v4758 = vshrl.u32 %v4757, 23
    %v4759 = vsub.s32 %v4758, 127
    %v4760 = vand.u32 2147483647, %v3589
    %v4761 = vand.u32 %v4760, 8388607
    %v4762 = vor.u32 %v4761, 8388608
    %v4763 = vsub.s32 0, %v4762
    %v4764 = vadd.s32 %v4759, 1
    %vm4765 = vcmp.gt.s32.totalorder %v4764, 0
    %v4766 = vsel %vm4765, %v4764, 0
    %v4767 = vshrl.u32 %v4766, 5
    %v4768 = vand.u32 %v4766, 31
    %v4769 = vsub.s32 32, %v4768
    %v4770 = vshrl.u32 683565275, %v4769
    %v4771 = vshll.u32 683565275, %v4768
    %v4772 = vshrl.u32 2475754826, %v4769
    %v4773 = vor.u32 %v4771, %v4772
    %v4774 = vshll.u32 2475754826, %v4768
    %v4775 = vshrl.u32 2131351028, %v4769
    %v4776 = vor.u32 %v4774, %v4775
    %v4777 = vshll.u32 2131351028, %v4768
    %v4778 = vshrl.u32 2102212464, %v4769
    %v4779 = vor.u32 %v4777, %v4778
    %v4780 = vshll.u32 2102212464, %v4768
    %v4781 = vshrl.u32 920167782, %v4769
    %v4782 = vor.u32 %v4780, %v4781
    %v4783 = vshll.u32 920167782, %v4768
    %v4784 = vshrl.u32 1326507024, %v4769
    %v4785 = vor.u32 %v4783, %v4784
    %vm4786 = vcmp.lt.s32.totalorder %v4767, 1
    %vm4787 = vcmp.lt.s32.totalorder %v4767, 2
    %vm4788 = vcmp.lt.s32.totalorder %v4767, 3
    %vm4789 = vcmp.lt.s32.totalorder %v4767, 4
    %v4790 = vsel %vm4786, %v4770, %v4773
    %v4791 = vsel %vm4789, %v4779, 2102212464
    %v4792 = vsel %vm4788, %v4776, %v4791
    %v4793 = vsel %vm4787, %v4790, %v4792
    %v4794 = vsel %vm4786, %v4773, %v4776
    %v4795 = vsel %vm4789, %v4782, 920167782
    %v4796 = vsel %vm4788, %v4779, %v4795
    %v4797 = vsel %vm4787, %v4794, %v4796
    %v4798 = vsel %vm4786, %v4776, %v4779
    %v4799 = vsel %vm4789, %v4785, 1326507024
    %v4800 = vsel %vm4788, %v4782, %v4799
    %v4801 = vsel %vm4787, %v4798, %v4800
    %v4802 = vshll.u32 %v4762, 8
    %v4803 = vmul.u32.u64.compose %v4802, %v4801
    %v4804 = vextract.low.u32 %v4803
    %v4805 = vextract.high.u32 %v4803
    %v4806 = vmul.u32.u64.compose %v4802, %v4797
    %v4807 = vextract.low.u32 %v4806
    %v4808 = vextract.high.u32 %v4806
    %v4809 = vmul.u32 %v4802, %v4793
    %v4810 = vadd.s32 %v4805, %v4807
    %vm4811 = vc.u32 %v4805, %v4807
    %v4812 = vadd.s32 %v4808, 1
    %v4813 = vsel %vm4811, %v4812, %v4808
    %v4814 = vadd.s32 %v4809, %v4813
    %v4815 = vadd.s32 %v4814, 536870912
    %v4816 = vshrl.u32 %v4815, 30
    %v4817 = vshll.u32 %v4816, 30
    %v4818 = vsub.s32 %v4814, %v4817
    %vm4819 = vcmp.lt.s32.totalorder %v4818, 0
    %v4820 = vsub.s32 0, %v4818
    %v4821 = vsel %vm4819, %v4820, %v4818
    %v4822 = vclz %v4821
    %v4823 = vsub.s32 %v4822, 2
    %vm4824 = vcmp.gt.s32.totalorder 0, %v4823
    %v4825 = vsel %vm4824, 0, %v4823
    %v4826 = vsub.s32 32, %v4825
    %v4827 = vshll.u32 %v4818, %v4825
    %v4828 = vshrl.u32 %v4810, %v4826
    %v4829 = vor.u32 %v4827, %v4828
    %v4830 = vsub.s32 4294967266, %v4825
    %v4831 = vadd.s32 %v4830, 127
    %v4832 = vshll.u32 %v4831, 23
    %v4833 = vor.u32 4788187, %v4832
    %v4834 = vand.u32 2147483647, %v4833
    %v4836 = vcvt.s32.f32 %v4829
    %v4837 = vmul.f32 %v4836, %v4834
    %v4838 = vxor.u32 %v4837, 2147483648
    %v4839 = vsel %vm4756, %v4838, %v4837
    %v4840 = vsub.s32 4, %v4816
    %v4841 = vsel %vm4756, %v4840, %v4816
    %v4842 = vsel %vm4755, %v3589, %v4839
    %v4843 = vsel %vm4755, 0, %v4841
    %v4844 = vcosq.f32.pop %v4842
    %v4845 = vsinq.f32.pop %v4842
    %vm4846 = vweird.f32 %v3589
    %v4847 = vadd.s32 %v4843, 3
    %v4848 = vand.u32 %v4847, 3
    %vm4849 = vcmp.lt.s32.totalorder %v4848, 2
    %vm4850 = vcmp.eq.s32.totalorder %v4848, 0
    %v4851 = vxor.u32 %v4845, 2147483648
    %v4852 = vsel %vm4850, %v4844, %v4851
    %vm4853 = vcmp.eq.s32.totalorder %v4848, 2
    %v4854 = vxor.u32 %v4844, 2147483648
    %v4855 = vsel %vm4853, %v4854, %v4845
    %v4856 = vsel %vm4849, %v4852, %v4855
    %v4857 = vsel %vm4846, nan, %v4856
    %v4858 = vand.u32 2147483647, %v3590
    %vm4859 = vcmp.le.f32.partialorder %v4858, 0.7853982
    %vm4860 = vcmp.lt.s32.totalorder %v3590, 0
    %v4861 = vand.u32 %v3590, 2139095040
    %v4862 = vshrl.u32 %v4861, 23
    %v4863 = vsub.s32 %v4862, 127
    %v4864 = vand.u32 2147483647, %v3590
    %v4865 = vand.u32 %v4864, 8388607
    %v4866 = vor.u32 %v4865, 8388608
    %v4867 = vsub.s32 0, %v4866
    %v4868 = vadd.s32 %v4863, 1
    %vm4869 = vcmp.gt.s32.totalorder %v4868, 0
    %v4870 = vsel %vm4869, %v4868, 0
    %v4871 = vshrl.u32 %v4870, 5
    %v4872 = vand.u32 %v4870, 31
    %v4873 = vsub.s32 32, %v4872
    %v4874 = vshrl.u32 683565275, %v4873
    %v4875 = vshll.u32 683565275, %v4872
    %v4876 = vshrl.u32 2475754826, %v4873
    %v4877 = vor.u32 %v4875, %v4876
    %v4878 = vshll.u32 2475754826, %v4872
    %v4879 = vshrl.u32 2131351028, %v4873
    %v4880 = vor.u32 %v4878, %v4879
    %v4881 = vshll.u32 2131351028, %v4872
    %v4882 = vshrl.u32 2102212464, %v4873
    %v4883 = vor.u32 %v4881, %v4882
    %v4884 = vshll.u32 2102212464, %v4872
    %v4885 = vshrl.u32 920167782, %v4873
    %v4886 = vor.u32 %v4884, %v4885
    %v4887 = vshll.u32 920167782, %v4872
    %v4888 = vshrl.u32 1326507024, %v4873
    %v4889 = vor.u32 %v4887, %v4888
    %vm4890 = vcmp.lt.s32.totalorder %v4871, 1
    %vm4891 = vcmp.lt.s32.totalorder %v4871, 2
    %vm4892 = vcmp.lt.s32.totalorder %v4871, 3
    %vm4893 = vcmp.lt.s32.totalorder %v4871, 4
    %v4894 = vsel %vm4890, %v4874, %v4877
    %v4895 = vsel %vm4893, %v4883, 2102212464
    %v4896 = vsel %vm4892, %v4880, %v4895
    %v4897 = vsel %vm4891, %v4894, %v4896
    %v4898 = vsel %vm4890, %v4877, %v4880
    %v4899 = vsel %vm4893, %v4886, 920167782
    %v4900 = vsel %vm4892, %v4883, %v4899
    %v4901 = vsel %vm4891, %v4898, %v4900
    %v4902 = vsel %vm4890, %v4880, %v4883
    %v4903 = vsel %vm4893, %v4889, 1326507024
    %v4904 = vsel %vm4892, %v4886, %v4903
    %v4905 = vsel %vm4891, %v4902, %v4904
    %v4906 = vshll.u32 %v4866, 8
    %v4907 = vmul.u32.u64.compose %v4906, %v4905
    %v4908 = vextract.low.u32 %v4907
    %v4909 = vextract.high.u32 %v4907
    %v4910 = vmul.u32.u64.compose %v4906, %v4901
    %v4911 = vextract.low.u32 %v4910
    %v4912 = vextract.high.u32 %v4910
    %v4913 = vmul.u32 %v4906, %v4897
    %v4914 = vadd.s32 %v4909, %v4911
    %vm4915 = vc.u32 %v4909, %v4911
    %v4916 = vadd.s32 %v4912, 1
    %v4917 = vsel %vm4915, %v4916, %v4912
    %v4918 = vadd.s32 %v4913, %v4917
    %v4919 = vadd.s32 %v4918, 536870912
    %v4920 = vshrl.u32 %v4919, 30
    %v4921 = vshll.u32 %v4920, 30
    %v4922 = vsub.s32 %v4918, %v4921
    %vm4923 = vcmp.lt.s32.totalorder %v4922, 0
    %v4924 = vsub.s32 0, %v4922
    %v4925 = vsel %vm4923, %v4924, %v4922
    %v4926 = vclz %v4925
    %v4927 = vsub.s32 %v4926, 2
    %vm4928 = vcmp.gt.s32.totalorder 0, %v4927
    %v4929 = vsel %vm4928, 0, %v4927
    %v4930 = vsub.s32 32, %v4929
    %v4931 = vshll.u32 %v4922, %v4929
    %v4932 = vshrl.u32 %v4914, %v4930
    %v4933 = vor.u32 %v4931, %v4932
    %v4934 = vsub.s32 4294967266, %v4929
    %v4935 = vadd.s32 %v4934, 127
    %v4936 = vshll.u32 %v4935, 23
    %v4937 = vor.u32 4788187, %v4936
    %v4938 = vand.u32 2147483647, %v4937
    %v4940 = vcvt.s32.f32 %v4933
    %v4941 = vmul.f32 %v4940, %v4938
    %v4942 = vxor.u32 %v4941, 2147483648
    %v4943 = vsel %vm4860, %v4942, %v4941
    %v4944 = vsub.s32 4, %v4920
    %v4945 = vsel %vm4860, %v4944, %v4920
    %v4946 = vsel %vm4859, %v3590, %v4943
    %v4947 = vsel %vm4859, 0, %v4945
    %v4948 = vcosq.f32.pop %v4946
    %v4949 = vsinq.f32.pop %v4946
    %vm4950 = vweird.f32 %v3590
    %v4951 = vadd.s32 %v4947, 3
    %v4952 = vand.u32 %v4951, 3
    %vm4953 = vcmp.lt.s32.totalorder %v4952, 2
    %vm4954 = vcmp.eq.s32.totalorder %v4952, 0
    %v4955 = vxor.u32 %v4949, 2147483648
    %v4956 = vsel %vm4954, %v4948, %v4955
    %vm4957 = vcmp.eq.s32.totalorder %v4952, 2
    %v4958 = vxor.u32 %v4948, 2147483648
    %v4959 = vsel %vm4957, %v4958, %v4949
    %v4960 = vsel %vm4953, %v4956, %v4959
    %v4961 = vsel %vm4950, nan, %v4960
    %v4962 = vand.u32 2147483647, %v3591
    %vm4963 = vcmp.le.f32.partialorder %v4962, 0.7853982
    %vm4964 = vcmp.lt.s32.totalorder %v3591, 0
    %v4965 = vand.u32 %v3591, 2139095040
    %v4966 = vshrl.u32 %v4965, 23
    %v4967 = vsub.s32 %v4966, 127
    %v4968 = vand.u32 2147483647, %v3591
    %v4969 = vand.u32 %v4968, 8388607
    %v4970 = vor.u32 %v4969, 8388608
    %v4971 = vsub.s32 0, %v4970
    %v4972 = vadd.s32 %v4967, 1
    %vm4973 = vcmp.gt.s32.totalorder %v4972, 0
    %v4974 = vsel %vm4973, %v4972, 0
    %v4975 = vshrl.u32 %v4974, 5
    %v4976 = vand.u32 %v4974, 31
    %v4977 = vsub.s32 32, %v4976
    %v4978 = vshrl.u32 683565275, %v4977
    %v4979 = vshll.u32 683565275, %v4976
    %v4980 = vshrl.u32 2475754826, %v4977
    %v4981 = vor.u32 %v4979, %v4980
    %v4982 = vshll.u32 2475754826, %v4976
    %v4983 = vshrl.u32 2131351028, %v4977
    %v4984 = vor.u32 %v4982, %v4983
    %v4985 = vshll.u32 2131351028, %v4976
    %v4986 = vshrl.u32 2102212464, %v4977
    %v4987 = vor.u32 %v4985, %v4986
    %v4988 = vshll.u32 2102212464, %v4976
    %v4989 = vshrl.u32 920167782, %v4977
    %v4990 = vor.u32 %v4988, %v4989
    %v4991 = vshll.u32 920167782, %v4976
    %v4992 = vshrl.u32 1326507024, %v4977
    %v4993 = vor.u32 %v4991, %v4992
    %vm4994 = vcmp.lt.s32.totalorder %v4975, 1
    %vm4995 = vcmp.lt.s32.totalorder %v4975, 2
    %vm4996 = vcmp.lt.s32.totalorder %v4975, 3
    %vm4997 = vcmp.lt.s32.totalorder %v4975, 4
    %v4998 = vsel %vm4994, %v4978, %v4981
    %v4999 = vsel %vm4997, %v4987, 2102212464
    %v5000 = vsel %vm4996, %v4984, %v4999
    %v5001 = vsel %vm4995, %v4998, %v5000
    %v5002 = vsel %vm4994, %v4981, %v4984
    %v5003 = vsel %vm4997, %v4990, 920167782
    %v5004 = vsel %vm4996, %v4987, %v5003
    %v5005 = vsel %vm4995, %v5002, %v5004
    %v5006 = vsel %vm4994, %v4984, %v4987
    %v5007 = vsel %vm4997, %v4993, 1326507024
    %v5008 = vsel %vm4996, %v4990, %v5007
    %v5009 = vsel %vm4995, %v5006, %v5008
    %v5010 = vshll.u32 %v4970, 8
    %v5011 = vmul.u32.u64.compose %v5010, %v5009
    %v5012 = vextract.low.u32 %v5011
    %v5013 = vextract.high.u32 %v5011
    %v5014 = vmul.u32.u64.compose %v5010, %v5005
    %v5015 = vextract.low.u32 %v5014
    %v5016 = vextract.high.u32 %v5014
    %v5017 = vmul.u32 %v5010, %v5001
    %v5018 = vadd.s32 %v5013, %v5015
    %vm5019 = vc.u32 %v5013, %v5015
    %v5020 = vadd.s32 %v5016, 1
    %v5021 = vsel %vm5019, %v5020, %v5016
    %v5022 = vadd.s32 %v5017, %v5021
    %v5023 = vadd.s32 %v5022, 536870912
    %v5024 = vshrl.u32 %v5023, 30
    %v5025 = vshll.u32 %v5024, 30
    %v5026 = vsub.s32 %v5022, %v5025
    %vm5027 = vcmp.lt.s32.totalorder %v5026, 0
    %v5028 = vsub.s32 0, %v5026
    %v5029 = vsel %vm5027, %v5028, %v5026
    %v5030 = vclz %v5029
    %v5031 = vsub.s32 %v5030, 2
    %vm5032 = vcmp.gt.s32.totalorder 0, %v5031
    %v5033 = vsel %vm5032, 0, %v5031
    %v5034 = vsub.s32 32, %v5033
    %v5035 = vshll.u32 %v5026, %v5033
    %v5036 = vshrl.u32 %v5018, %v5034
    %v5037 = vor.u32 %v5035, %v5036
    %v5038 = vsub.s32 4294967266, %v5033
    %v5039 = vadd.s32 %v5038, 127
    %v5040 = vshll.u32 %v5039, 23
    %v5041 = vor.u32 4788187, %v5040
    %v5042 = vand.u32 2147483647, %v5041
    %v5044 = vcvt.s32.f32 %v5037
    %v5045 = vmul.f32 %v5044, %v5042
    %v5046 = vxor.u32 %v5045, 2147483648
    %v5047 = vsel %vm4964, %v5046, %v5045
    %v5048 = vsub.s32 4, %v5024
    %v5049 = vsel %vm4964, %v5048, %v5024
    %v5050 = vsel %vm4963, %v3591, %v5047
    %v5051 = vsel %vm4963, 0, %v5049
    %v5052 = vcosq.f32.pop %v5050
    %v5053 = vsinq.f32.pop %v5050
    %vm5054 = vweird.f32 %v3591
    %v5055 = vadd.s32 %v5051, 3
    %v5056 = vand.u32 %v5055, 3
    %vm5057 = vcmp.lt.s32.totalorder %v5056, 2
    %vm5058 = vcmp.eq.s32.totalorder %v5056, 0
    %v5059 = vxor.u32 %v5053, 2147483648
    %v5060 = vsel %vm5058, %v5052, %v5059
    %vm5061 = vcmp.eq.s32.totalorder %v5056, 2
    %v5062 = vxor.u32 %v5052, 2147483648
    %v5063 = vsel %vm5061, %v5062, %v5053
    %v5064 = vsel %vm5057, %v5060, %v5063
    %v5065 = vsel %vm5054, nan, %v5064
    %v5066 = vand.u32 2147483647, %v3592
    %vm5067 = vcmp.le.f32.partialorder %v5066, 0.7853982
    %vm5068 = vcmp.lt.s32.totalorder %v3592, 0
    %v5069 = vand.u32 %v3592, 2139095040
    %v5070 = vshrl.u32 %v5069, 23
    %v5071 = vsub.s32 %v5070, 127
    %v5072 = vand.u32 2147483647, %v3592
    %v5073 = vand.u32 %v5072, 8388607
    %v5074 = vor.u32 %v5073, 8388608
    %v5075 = vsub.s32 0, %v5074
    %v5076 = vadd.s32 %v5071, 1
    %vm5077 = vcmp.gt.s32.totalorder %v5076, 0
    %v5078 = vsel %vm5077, %v5076, 0
    %v5079 = vshrl.u32 %v5078, 5
    %v5080 = vand.u32 %v5078, 31
    %v5081 = vsub.s32 32, %v5080
    %v5082 = vshrl.u32 683565275, %v5081
    %v5083 = vshll.u32 683565275, %v5080
    %v5084 = vshrl.u32 2475754826, %v5081
    %v5085 = vor.u32 %v5083, %v5084
    %v5086 = vshll.u32 2475754826, %v5080
    %v5087 = vshrl.u32 2131351028, %v5081
    %v5088 = vor.u32 %v5086, %v5087
    %v5089 = vshll.u32 2131351028, %v5080
    %v5090 = vshrl.u32 2102212464, %v5081
    %v5091 = vor.u32 %v5089, %v5090
    %v5092 = vshll.u32 2102212464, %v5080
    %v5093 = vshrl.u32 920167782, %v5081
    %v5094 = vor.u32 %v5092, %v5093
    %v5095 = vshll.u32 920167782, %v5080
    %v5096 = vshrl.u32 1326507024, %v5081
    %v5097 = vor.u32 %v5095, %v5096
    %vm5098 = vcmp.lt.s32.totalorder %v5079, 1
    %vm5099 = vcmp.lt.s32.totalorder %v5079, 2
    %vm5100 = vcmp.lt.s32.totalorder %v5079, 3
    %vm5101 = vcmp.lt.s32.totalorder %v5079, 4
    %v5102 = vsel %vm5098, %v5082, %v5085
    %v5103 = vsel %vm5101, %v5091, 2102212464
    %v5104 = vsel %vm5100, %v5088, %v5103
    %v5105 = vsel %vm5099, %v5102, %v5104
    %v5106 = vsel %vm5098, %v5085, %v5088
    %v5107 = vsel %vm5101, %v5094, 920167782
    %v5108 = vsel %vm5100, %v5091, %v5107
    %v5109 = vsel %vm5099, %v5106, %v5108
    %v5110 = vsel %vm5098, %v5088, %v5091
    %v5111 = vsel %vm5101, %v5097, 1326507024
    %v5112 = vsel %vm5100, %v5094, %v5111
    %v5113 = vsel %vm5099, %v5110, %v5112
    %v5114 = vshll.u32 %v5074, 8
    %v5115 = vmul.u32.u64.compose %v5114, %v5113
    %v5116 = vextract.low.u32 %v5115
    %v5117 = vextract.high.u32 %v5115
    %v5118 = vmul.u32.u64.compose %v5114, %v5109
    %v5119 = vextract.low.u32 %v5118
    %v5120 = vextract.high.u32 %v5118
    %v5121 = vmul.u32 %v5114, %v5105
    %v5122 = vadd.s32 %v5117, %v5119
    %vm5123 = vc.u32 %v5117, %v5119
    %v5124 = vadd.s32 %v5120, 1
    %v5125 = vsel %vm5123, %v5124, %v5120
    %v5126 = vadd.s32 %v5121, %v5125
    %v5127 = vadd.s32 %v5126, 536870912
    %v5128 = vshrl.u32 %v5127, 30
    %v5129 = vshll.u32 %v5128, 30
    %v5130 = vsub.s32 %v5126, %v5129
    %vm5131 = vcmp.lt.s32.totalorder %v5130, 0
    %v5132 = vsub.s32 0, %v5130
    %v5133 = vsel %vm5131, %v5132, %v5130
    %v5134 = vclz %v5133
    %v5135 = vsub.s32 %v5134, 2
    %vm5136 = vcmp.gt.s32.totalorder 0, %v5135
    %v5137 = vsel %vm5136, 0, %v5135
    %v5138 = vsub.s32 32, %v5137
    %v5139 = vshll.u32 %v5130, %v5137
    %v5140 = vshrl.u32 %v5122, %v5138
    %v5141 = vor.u32 %v5139, %v5140
    %v5142 = vsub.s32 4294967266, %v5137
    %v5143 = vadd.s32 %v5142, 127
    %v5144 = vshll.u32 %v5143, 23
    %v5145 = vor.u32 4788187, %v5144
    %v5146 = vand.u32 2147483647, %v5145
    %v5148 = vcvt.s32.f32 %v5141
    %v5149 = vmul.f32 %v5148, %v5146
    %v5150 = vxor.u32 %v5149, 2147483648
    %v5151 = vsel %vm5068, %v5150, %v5149
    %v5152 = vsub.s32 4, %v5128
    %v5153 = vsel %vm5068, %v5152, %v5128
    %v5154 = vsel %vm5067, %v3592, %v5151
    %v5155 = vsel %vm5067, 0, %v5153
    %v5156 = vcosq.f32.pop %v5154
    %v5157 = vsinq.f32.pop %v5154
    %vm5158 = vweird.f32 %v3592
    %v5159 = vadd.s32 %v5155, 3
    %v5160 = vand.u32 %v5159, 3
    %vm5161 = vcmp.lt.s32.totalorder %v5160, 2
    %vm5162 = vcmp.eq.s32.totalorder %v5160, 0
    %v5163 = vxor.u32 %v5157, 2147483648
    %v5164 = vsel %vm5162, %v5156, %v5163
    %vm5165 = vcmp.eq.s32.totalorder %v5160, 2
    %v5166 = vxor.u32 %v5156, 2147483648
    %v5167 = vsel %vm5165, %v5166, %v5157
    %v5168 = vsel %vm5161, %v5164, %v5167
    %v5169 = vsel %vm5158, nan, %v5168
    %v5170 = vand.u32 2147483647, %v3593
    %vm5171 = vcmp.le.f32.partialorder %v5170, 0.7853982
    %vm5172 = vcmp.lt.s32.totalorder %v3593, 0
    %v5173 = vand.u32 %v3593, 2139095040
    %v5174 = vshrl.u32 %v5173, 23
    %v5175 = vsub.s32 %v5174, 127
    %v5176 = vand.u32 2147483647, %v3593
    %v5177 = vand.u32 %v5176, 8388607
    %v5178 = vor.u32 %v5177, 8388608
    %v5179 = vsub.s32 0, %v5178
    %v5180 = vadd.s32 %v5175, 1
    %vm5181 = vcmp.gt.s32.totalorder %v5180, 0
    %v5182 = vsel %vm5181, %v5180, 0
    %v5183 = vshrl.u32 %v5182, 5
    %v5184 = vand.u32 %v5182, 31
    %v5185 = vsub.s32 32, %v5184
    %v5186 = vshrl.u32 683565275, %v5185
    %v5187 = vshll.u32 683565275, %v5184
    %v5188 = vshrl.u32 2475754826, %v5185
    %v5189 = vor.u32 %v5187, %v5188
    %v5190 = vshll.u32 2475754826, %v5184
    %v5191 = vshrl.u32 2131351028, %v5185
    %v5192 = vor.u32 %v5190, %v5191
    %v5193 = vshll.u32 2131351028, %v5184
    %v5194 = vshrl.u32 2102212464, %v5185
    %v5195 = vor.u32 %v5193, %v5194
    %v5196 = vshll.u32 2102212464, %v5184
    %v5197 = vshrl.u32 920167782, %v5185
    %v5198 = vor.u32 %v5196, %v5197
    %v5199 = vshll.u32 920167782, %v5184
    %v5200 = vshrl.u32 1326507024, %v5185
    %v5201 = vor.u32 %v5199, %v5200
    %vm5202 = vcmp.lt.s32.totalorder %v5183, 1
    %vm5203 = vcmp.lt.s32.totalorder %v5183, 2
    %vm5204 = vcmp.lt.s32.totalorder %v5183, 3
    %vm5205 = vcmp.lt.s32.totalorder %v5183, 4
    %v5206 = vsel %vm5202, %v5186, %v5189
    %v5207 = vsel %vm5205, %v5195, 2102212464
    %v5208 = vsel %vm5204, %v5192, %v5207
    %v5209 = vsel %vm5203, %v5206, %v5208
    %v5210 = vsel %vm5202, %v5189, %v5192
    %v5211 = vsel %vm5205, %v5198, 920167782
    %v5212 = vsel %vm5204, %v5195, %v5211
    %v5213 = vsel %vm5203, %v5210, %v5212
    %v5214 = vsel %vm5202, %v5192, %v5195
    %v5215 = vsel %vm5205, %v5201, 1326507024
    %v5216 = vsel %vm5204, %v5198, %v5215
    %v5217 = vsel %vm5203, %v5214, %v5216
    %v5218 = vshll.u32 %v5178, 8
    %v5219 = vmul.u32.u64.compose %v5218, %v5217
    %v5220 = vextract.low.u32 %v5219
    %v5221 = vextract.high.u32 %v5219
    %v5222 = vmul.u32.u64.compose %v5218, %v5213
    %v5223 = vextract.low.u32 %v5222
    %v5224 = vextract.high.u32 %v5222
    %v5225 = vmul.u32 %v5218, %v5209
    %v5226 = vadd.s32 %v5221, %v5223
    %vm5227 = vc.u32 %v5221, %v5223
    %v5228 = vadd.s32 %v5224, 1
    %v5229 = vsel %vm5227, %v5228, %v5224
    %v5230 = vadd.s32 %v5225, %v5229
    %v5231 = vadd.s32 %v5230, 536870912
    %v5232 = vshrl.u32 %v5231, 30
    %v5233 = vshll.u32 %v5232, 30
    %v5234 = vsub.s32 %v5230, %v5233
    %vm5235 = vcmp.lt.s32.totalorder %v5234, 0
    %v5236 = vsub.s32 0, %v5234
    %v5237 = vsel %vm5235, %v5236, %v5234
    %v5238 = vclz %v5237
    %v5239 = vsub.s32 %v5238, 2
    %vm5240 = vcmp.gt.s32.totalorder 0, %v5239
    %v5241 = vsel %vm5240, 0, %v5239
    %v5242 = vsub.s32 32, %v5241
    %v5243 = vshll.u32 %v5234, %v5241
    %v5244 = vshrl.u32 %v5226, %v5242
    %v5245 = vor.u32 %v5243, %v5244
    %v5246 = vsub.s32 4294967266, %v5241
    %v5247 = vadd.s32 %v5246, 127
    %v5248 = vshll.u32 %v5247, 23
    %v5249 = vor.u32 4788187, %v5248
    %v5250 = vand.u32 2147483647, %v5249
    %v5252 = vcvt.s32.f32 %v5245
    %v5253 = vmul.f32 %v5252, %v5250
    %v5254 = vxor.u32 %v5253, 2147483648
    %v5255 = vsel %vm5172, %v5254, %v5253
    %v5256 = vsub.s32 4, %v5232
    %v5257 = vsel %vm5172, %v5256, %v5232
    %v5258 = vsel %vm5171, %v3593, %v5255
    %v5259 = vsel %vm5171, 0, %v5257
    %v5260 = vcosq.f32.pop %v5258
    %v5261 = vsinq.f32.pop %v5258
    %vm5262 = vweird.f32 %v3593
    %v5263 = vadd.s32 %v5259, 3
    %v5264 = vand.u32 %v5263, 3
    %vm5265 = vcmp.lt.s32.totalorder %v5264, 2
    %vm5266 = vcmp.eq.s32.totalorder %v5264, 0
    %v5267 = vxor.u32 %v5261, 2147483648
    %v5268 = vsel %vm5266, %v5260, %v5267
    %vm5269 = vcmp.eq.s32.totalorder %v5264, 2
    %v5270 = vxor.u32 %v5260, 2147483648
    %v5271 = vsel %vm5269, %v5270, %v5261
    %v5272 = vsel %vm5265, %v5268, %v5271
    %v5273 = vsel %vm5262, nan, %v5272
    %v5274 = vand.u32 2147483647, %v3594
    %vm5275 = vcmp.le.f32.partialorder %v5274, 0.7853982
    %vm5276 = vcmp.lt.s32.totalorder %v3594, 0
    %v5277 = vand.u32 %v3594, 2139095040
    %v5278 = vshrl.u32 %v5277, 23
    %v5279 = vsub.s32 %v5278, 127
    %v5280 = vand.u32 2147483647, %v3594
    %v5281 = vand.u32 %v5280, 8388607
    %v5282 = vor.u32 %v5281, 8388608
    %v5283 = vsub.s32 0, %v5282
    %v5284 = vadd.s32 %v5279, 1
    %vm5285 = vcmp.gt.s32.totalorder %v5284, 0
    %v5286 = vsel %vm5285, %v5284, 0
    %v5287 = vshrl.u32 %v5286, 5
    %v5288 = vand.u32 %v5286, 31
    %v5289 = vsub.s32 32, %v5288
    %v5290 = vshrl.u32 683565275, %v5289
    %v5291 = vshll.u32 683565275, %v5288
    %v5292 = vshrl.u32 2475754826, %v5289
    %v5293 = vor.u32 %v5291, %v5292
    %v5294 = vshll.u32 2475754826, %v5288
    %v5295 = vshrl.u32 2131351028, %v5289
    %v5296 = vor.u32 %v5294, %v5295
    %v5297 = vshll.u32 2131351028, %v5288
    %v5298 = vshrl.u32 2102212464, %v5289
    %v5299 = vor.u32 %v5297, %v5298
    %v5300 = vshll.u32 2102212464, %v5288
    %v5301 = vshrl.u32 920167782, %v5289
    %v5302 = vor.u32 %v5300, %v5301
    %v5303 = vshll.u32 920167782, %v5288
    %v5304 = vshrl.u32 1326507024, %v5289
    %v5305 = vor.u32 %v5303, %v5304
    %vm5306 = vcmp.lt.s32.totalorder %v5287, 1
    %vm5307 = vcmp.lt.s32.totalorder %v5287, 2
    %vm5308 = vcmp.lt.s32.totalorder %v5287, 3
    %vm5309 = vcmp.lt.s32.totalorder %v5287, 4
    %v5310 = vsel %vm5306, %v5290, %v5293
    %v5311 = vsel %vm5309, %v5299, 2102212464
    %v5312 = vsel %vm5308, %v5296, %v5311
    %v5313 = vsel %vm5307, %v5310, %v5312
    %v5314 = vsel %vm5306, %v5293, %v5296
    %v5315 = vsel %vm5309, %v5302, 920167782
    %v5316 = vsel %vm5308, %v5299, %v5315
    %v5317 = vsel %vm5307, %v5314, %v5316
    %v5318 = vsel %vm5306, %v5296, %v5299
    %v5319 = vsel %vm5309, %v5305, 1326507024
    %v5320 = vsel %vm5308, %v5302, %v5319
    %v5321 = vsel %vm5307, %v5318, %v5320
    %v5322 = vshll.u32 %v5282, 8
    %v5323 = vmul.u32.u64.compose %v5322, %v5321
    %v5324 = vextract.low.u32 %v5323
    %v5325 = vextract.high.u32 %v5323
    %v5326 = vmul.u32.u64.compose %v5322, %v5317
    %v5327 = vextract.low.u32 %v5326
    %v5328 = vextract.high.u32 %v5326
    %v5329 = vmul.u32 %v5322, %v5313
    %v5330 = vadd.s32 %v5325, %v5327
    %vm5331 = vc.u32 %v5325, %v5327
    %v5332 = vadd.s32 %v5328, 1
    %v5333 = vsel %vm5331, %v5332, %v5328
    %v5334 = vadd.s32 %v5329, %v5333
    %v5335 = vadd.s32 %v5334, 536870912
    %v5336 = vshrl.u32 %v5335, 30
    %v5337 = vshll.u32 %v5336, 30
    %v5338 = vsub.s32 %v5334, %v5337
    %vm5339 = vcmp.lt.s32.totalorder %v5338, 0
    %v5340 = vsub.s32 0, %v5338
    %v5341 = vsel %vm5339, %v5340, %v5338
    %v5342 = vclz %v5341
    %v5343 = vsub.s32 %v5342, 2
    %vm5344 = vcmp.gt.s32.totalorder 0, %v5343
    %v5345 = vsel %vm5344, 0, %v5343
    %v5346 = vsub.s32 32, %v5345
    %v5347 = vshll.u32 %v5338, %v5345
    %v5348 = vshrl.u32 %v5330, %v5346
    %v5349 = vor.u32 %v5347, %v5348
    %v5350 = vsub.s32 4294967266, %v5345
    %v5351 = vadd.s32 %v5350, 127
    %v5352 = vshll.u32 %v5351, 23
    %v5353 = vor.u32 4788187, %v5352
    %v5354 = vand.u32 2147483647, %v5353
    %v5356 = vcvt.s32.f32 %v5349
    %v5357 = vmul.f32 %v5356, %v5354
    %v5358 = vxor.u32 %v5357, 2147483648
    %v5359 = vsel %vm5276, %v5358, %v5357
    %v5360 = vsub.s32 4, %v5336
    %v5361 = vsel %vm5276, %v5360, %v5336
    %v5362 = vsel %vm5275, %v3594, %v5359
    %v5363 = vsel %vm5275, 0, %v5361
    %v5364 = vcosq.f32.pop %v5362
    %v5365 = vsinq.f32.pop %v5362
    %vm5366 = vweird.f32 %v3594
    %v5367 = vadd.s32 %v5363, 3
    %v5368 = vand.u32 %v5367, 3
    %vm5369 = vcmp.lt.s32.totalorder %v5368, 2
    %vm5370 = vcmp.eq.s32.totalorder %v5368, 0
    %v5371 = vxor.u32 %v5365, 2147483648
    %v5372 = vsel %vm5370, %v5364, %v5371
    %vm5373 = vcmp.eq.s32.totalorder %v5368, 2
    %v5374 = vxor.u32 %v5364, 2147483648
    %v5375 = vsel %vm5373, %v5374, %v5365
    %v5376 = vsel %vm5369, %v5372, %v5375
    %v5377 = vsel %vm5366, nan, %v5376
    %v5378 = vand.u32 2147483647, %v3595
    %vm5379 = vcmp.le.f32.partialorder %v5378, 0.7853982
    %vm5380 = vcmp.lt.s32.totalorder %v3595, 0
    %v5381 = vand.u32 %v3595, 2139095040
    %v5382 = vshrl.u32 %v5381, 23
    %v5383 = vsub.s32 %v5382, 127
    %v5384 = vand.u32 2147483647, %v3595
    %v5385 = vand.u32 %v5384, 8388607
    %v5386 = vor.u32 %v5385, 8388608
    %v5387 = vsub.s32 0, %v5386
    %v5388 = vadd.s32 %v5383, 1
    %vm5389 = vcmp.gt.s32.totalorder %v5388, 0
    %v5390 = vsel %vm5389, %v5388, 0
    %v5391 = vshrl.u32 %v5390, 5
    %v5392 = vand.u32 %v5390, 31
    %v5393 = vsub.s32 32, %v5392
    %v5394 = vshrl.u32 683565275, %v5393
    %v5395 = vshll.u32 683565275, %v5392
    %v5396 = vshrl.u32 2475754826, %v5393
    %v5397 = vor.u32 %v5395, %v5396
    %v5398 = vshll.u32 2475754826, %v5392
    %v5399 = vshrl.u32 2131351028, %v5393
    %v5400 = vor.u32 %v5398, %v5399
    %v5401 = vshll.u32 2131351028, %v5392
    %v5402 = vshrl.u32 2102212464, %v5393
    %v5403 = vor.u32 %v5401, %v5402
    %v5404 = vshll.u32 2102212464, %v5392
    %v5405 = vshrl.u32 920167782, %v5393
    %v5406 = vor.u32 %v5404, %v5405
    %v5407 = vshll.u32 920167782, %v5392
    %v5408 = vshrl.u32 1326507024, %v5393
    %v5409 = vor.u32 %v5407, %v5408
    %vm5410 = vcmp.lt.s32.totalorder %v5391, 1
    %vm5411 = vcmp.lt.s32.totalorder %v5391, 2
    %vm5412 = vcmp.lt.s32.totalorder %v5391, 3
    %vm5413 = vcmp.lt.s32.totalorder %v5391, 4
    %v5414 = vsel %vm5410, %v5394, %v5397
    %v5415 = vsel %vm5413, %v5403, 2102212464
    %v5416 = vsel %vm5412, %v5400, %v5415
    %v5417 = vsel %vm5411, %v5414, %v5416
    %v5418 = vsel %vm5410, %v5397, %v5400
    %v5419 = vsel %vm5413, %v5406, 920167782
    %v5420 = vsel %vm5412, %v5403, %v5419
    %v5421 = vsel %vm5411, %v5418, %v5420
    %v5422 = vsel %vm5410, %v5400, %v5403
    %v5423 = vsel %vm5413, %v5409, 1326507024
    %v5424 = vsel %vm5412, %v5406, %v5423
    %v5425 = vsel %vm5411, %v5422, %v5424
    %v5426 = vshll.u32 %v5386, 8
    %v5427 = vmul.u32.u64.compose %v5426, %v5425
    %v5428 = vextract.low.u32 %v5427
    %v5429 = vextract.high.u32 %v5427
    %v5430 = vmul.u32.u64.compose %v5426, %v5421
    %v5431 = vextract.low.u32 %v5430
    %v5432 = vextract.high.u32 %v5430
    %v5433 = vmul.u32 %v5426, %v5417
    %v5434 = vadd.s32 %v5429, %v5431
    %vm5435 = vc.u32 %v5429, %v5431
    %v5436 = vadd.s32 %v5432, 1
    %v5437 = vsel %vm5435, %v5436, %v5432
    %v5438 = vadd.s32 %v5433, %v5437
    %v5439 = vadd.s32 %v5438, 536870912
    %v5440 = vshrl.u32 %v5439, 30
    %v5441 = vshll.u32 %v5440, 30
    %v5442 = vsub.s32 %v5438, %v5441
    %vm5443 = vcmp.lt.s32.totalorder %v5442, 0
    %v5444 = vsub.s32 0, %v5442
    %v5445 = vsel %vm5443, %v5444, %v5442
    %v5446 = vclz %v5445
    %v5447 = vsub.s32 %v5446, 2
    %vm5448 = vcmp.gt.s32.totalorder 0, %v5447
    %v5449 = vsel %vm5448, 0, %v5447
    %v5450 = vsub.s32 32, %v5449
    %v5451 = vshll.u32 %v5442, %v5449
    %v5452 = vshrl.u32 %v5434, %v5450
    %v5453 = vor.u32 %v5451, %v5452
    %v5454 = vsub.s32 4294967266, %v5449
    %v5455 = vadd.s32 %v5454, 127
    %v5456 = vshll.u32 %v5455, 23
    %v5457 = vor.u32 4788187, %v5456
    %v5458 = vand.u32 2147483647, %v5457
    %v5460 = vcvt.s32.f32 %v5453
    %v5461 = vmul.f32 %v5460, %v5458
    %v5462 = vxor.u32 %v5461, 2147483648
    %v5463 = vsel %vm5380, %v5462, %v5461
    %v5464 = vsub.s32 4, %v5440
    %v5465 = vsel %vm5380, %v5464, %v5440
    %v5466 = vsel %vm5379, %v3595, %v5463
    %v5467 = vsel %vm5379, 0, %v5465
    %v5468 = vcosq.f32.pop %v5466
    %v5469 = vsinq.f32.pop %v5466
    %vm5470 = vweird.f32 %v3595
    %v5471 = vadd.s32 %v5467, 3
    %v5472 = vand.u32 %v5471, 3
    %vm5473 = vcmp.lt.s32.totalorder %v5472, 2
    %vm5474 = vcmp.eq.s32.totalorder %v5472, 0
    %v5475 = vxor.u32 %v5469, 2147483648
    %v5476 = vsel %vm5474, %v5468, %v5475
    %vm5477 = vcmp.eq.s32.totalorder %v5472, 2
    %v5478 = vxor.u32 %v5468, 2147483648
    %v5479 = vsel %vm5477, %v5478, %v5469
    %v5480 = vsel %vm5473, %v5476, %v5479
    %v5481 = vsel %vm5470, nan, %v5480
    %v5482 = vand.u32 2147483647, %v3596
    %vm5483 = vcmp.le.f32.partialorder %v5482, 0.7853982
    %vm5484 = vcmp.lt.s32.totalorder %v3596, 0
    %v5485 = vand.u32 %v3596, 2139095040
    %v5486 = vshrl.u32 %v5485, 23
    %v5487 = vsub.s32 %v5486, 127
    %v5488 = vand.u32 2147483647, %v3596
    %v5489 = vand.u32 %v5488, 8388607
    %v5490 = vor.u32 %v5489, 8388608
    %v5491 = vsub.s32 0, %v5490
    %v5492 = vadd.s32 %v5487, 1
    %vm5493 = vcmp.gt.s32.totalorder %v5492, 0
    %v5494 = vsel %vm5493, %v5492, 0
    %v5495 = vshrl.u32 %v5494, 5
    %v5496 = vand.u32 %v5494, 31
    %v5497 = vsub.s32 32, %v5496
    %v5498 = vshrl.u32 683565275, %v5497
    %v5499 = vshll.u32 683565275, %v5496
    %v5500 = vshrl.u32 2475754826, %v5497
    %v5501 = vor.u32 %v5499, %v5500
    %v5502 = vshll.u32 2475754826, %v5496
    %v5503 = vshrl.u32 2131351028, %v5497
    %v5504 = vor.u32 %v5502, %v5503
    %v5505 = vshll.u32 2131351028, %v5496
    %v5506 = vshrl.u32 2102212464, %v5497
    %v5507 = vor.u32 %v5505, %v5506
    %v5508 = vshll.u32 2102212464, %v5496
    %v5509 = vshrl.u32 920167782, %v5497
    %v5510 = vor.u32 %v5508, %v5509
    %v5511 = vshll.u32 920167782, %v5496
    %v5512 = vshrl.u32 1326507024, %v5497
    %v5513 = vor.u32 %v5511, %v5512
    %vm5514 = vcmp.lt.s32.totalorder %v5495, 1
    %vm5515 = vcmp.lt.s32.totalorder %v5495, 2
    %vm5516 = vcmp.lt.s32.totalorder %v5495, 3
    %vm5517 = vcmp.lt.s32.totalorder %v5495, 4
    %v5518 = vsel %vm5514, %v5498, %v5501
    %v5519 = vsel %vm5517, %v5507, 2102212464
    %v5520 = vsel %vm5516, %v5504, %v5519
    %v5521 = vsel %vm5515, %v5518, %v5520
    %v5522 = vsel %vm5514, %v5501, %v5504
    %v5523 = vsel %vm5517, %v5510, 920167782
    %v5524 = vsel %vm5516, %v5507, %v5523
    %v5525 = vsel %vm5515, %v5522, %v5524
    %v5526 = vsel %vm5514, %v5504, %v5507
    %v5527 = vsel %vm5517, %v5513, 1326507024
    %v5528 = vsel %vm5516, %v5510, %v5527
    %v5529 = vsel %vm5515, %v5526, %v5528
    %v5530 = vshll.u32 %v5490, 8
    %v5531 = vmul.u32.u64.compose %v5530, %v5529
    %v5532 = vextract.low.u32 %v5531
    %v5533 = vextract.high.u32 %v5531
    %v5534 = vmul.u32.u64.compose %v5530, %v5525
    %v5535 = vextract.low.u32 %v5534
    %v5536 = vextract.high.u32 %v5534
    %v5537 = vmul.u32 %v5530, %v5521
    %v5538 = vadd.s32 %v5533, %v5535
    %vm5539 = vc.u32 %v5533, %v5535
    %v5540 = vadd.s32 %v5536, 1
    %v5541 = vsel %vm5539, %v5540, %v5536
    %v5542 = vadd.s32 %v5537, %v5541
    %v5543 = vadd.s32 %v5542, 536870912
    %v5544 = vshrl.u32 %v5543, 30
    %v5545 = vshll.u32 %v5544, 30
    %v5546 = vsub.s32 %v5542, %v5545
    %vm5547 = vcmp.lt.s32.totalorder %v5546, 0
    %v5548 = vsub.s32 0, %v5546
    %v5549 = vsel %vm5547, %v5548, %v5546
    %v5550 = vclz %v5549
    %v5551 = vsub.s32 %v5550, 2
    %vm5552 = vcmp.gt.s32.totalorder 0, %v5551
    %v5553 = vsel %vm5552, 0, %v5551
    %v5554 = vsub.s32 32, %v5553
    %v5555 = vshll.u32 %v5546, %v5553
    %v5556 = vshrl.u32 %v5538, %v5554
    %v5557 = vor.u32 %v5555, %v5556
    %v5558 = vsub.s32 4294967266, %v5553
    %v5559 = vadd.s32 %v5558, 127
    %v5560 = vshll.u32 %v5559, 23
    %v5561 = vor.u32 4788187, %v5560
    %v5562 = vand.u32 2147483647, %v5561
    %v5564 = vcvt.s32.f32 %v5557
    %v5565 = vmul.f32 %v5564, %v5562
    %v5566 = vxor.u32 %v5565, 2147483648
    %v5567 = vsel %vm5484, %v5566, %v5565
    %v5568 = vsub.s32 4, %v5544
    %v5569 = vsel %vm5484, %v5568, %v5544
    %v5570 = vsel %vm5483, %v3596, %v5567
    %v5571 = vsel %vm5483, 0, %v5569
    %v5572 = vcosq.f32.pop %v5570
    %v5573 = vsinq.f32.pop %v5570
    %vm5574 = vweird.f32 %v3596
    %v5575 = vadd.s32 %v5571, 3
    %v5576 = vand.u32 %v5575, 3
    %vm5577 = vcmp.lt.s32.totalorder %v5576, 2
    %vm5578 = vcmp.eq.s32.totalorder %v5576, 0
    %v5579 = vxor.u32 %v5573, 2147483648
    %v5580 = vsel %vm5578, %v5572, %v5579
    %vm5581 = vcmp.eq.s32.totalorder %v5576, 2
    %v5582 = vxor.u32 %v5572, 2147483648
    %v5583 = vsel %vm5581, %v5582, %v5573
    %v5584 = vsel %vm5577, %v5580, %v5583
    %v5585 = vsel %vm5574, nan, %v5584
    %v5586 = vand.u32 2147483647, %v3597
    %vm5587 = vcmp.le.f32.partialorder %v5586, 0.7853982
    %vm5588 = vcmp.lt.s32.totalorder %v3597, 0
    %v5589 = vand.u32 %v3597, 2139095040
    %v5590 = vshrl.u32 %v5589, 23
    %v5591 = vsub.s32 %v5590, 127
    %v5592 = vand.u32 2147483647, %v3597
    %v5593 = vand.u32 %v5592, 8388607
    %v5594 = vor.u32 %v5593, 8388608
    %v5595 = vsub.s32 0, %v5594
    %v5596 = vadd.s32 %v5591, 1
    %vm5597 = vcmp.gt.s32.totalorder %v5596, 0
    %v5598 = vsel %vm5597, %v5596, 0
    %v5599 = vshrl.u32 %v5598, 5
    %v5600 = vand.u32 %v5598, 31
    %v5601 = vsub.s32 32, %v5600
    %v5602 = vshrl.u32 683565275, %v5601
    %v5603 = vshll.u32 683565275, %v5600
    %v5604 = vshrl.u32 2475754826, %v5601
    %v5605 = vor.u32 %v5603, %v5604
    %v5606 = vshll.u32 2475754826, %v5600
    %v5607 = vshrl.u32 2131351028, %v5601
    %v5608 = vor.u32 %v5606, %v5607
    %v5609 = vshll.u32 2131351028, %v5600
    %v5610 = vshrl.u32 2102212464, %v5601
    %v5611 = vor.u32 %v5609, %v5610
    %v5612 = vshll.u32 2102212464, %v5600
    %v5613 = vshrl.u32 920167782, %v5601
    %v5614 = vor.u32 %v5612, %v5613
    %v5615 = vshll.u32 920167782, %v5600
    %v5616 = vshrl.u32 1326507024, %v5601
    %v5617 = vor.u32 %v5615, %v5616
    %vm5618 = vcmp.lt.s32.totalorder %v5599, 1
    %vm5619 = vcmp.lt.s32.totalorder %v5599, 2
    %vm5620 = vcmp.lt.s32.totalorder %v5599, 3
    %vm5621 = vcmp.lt.s32.totalorder %v5599, 4
    %v5622 = vsel %vm5618, %v5602, %v5605
    %v5623 = vsel %vm5621, %v5611, 2102212464
    %v5624 = vsel %vm5620, %v5608, %v5623
    %v5625 = vsel %vm5619, %v5622, %v5624
    %v5626 = vsel %vm5618, %v5605, %v5608
    %v5627 = vsel %vm5621, %v5614, 920167782
    %v5628 = vsel %vm5620, %v5611, %v5627
    %v5629 = vsel %vm5619, %v5626, %v5628
    %v5630 = vsel %vm5618, %v5608, %v5611
    %v5631 = vsel %vm5621, %v5617, 1326507024
    %v5632 = vsel %vm5620, %v5614, %v5631
    %v5633 = vsel %vm5619, %v5630, %v5632
    %v5634 = vshll.u32 %v5594, 8
    %v5635 = vmul.u32.u64.compose %v5634, %v5633
    %v5636 = vextract.low.u32 %v5635
    %v5637 = vextract.high.u32 %v5635
    %v5638 = vmul.u32.u64.compose %v5634, %v5629
    %v5639 = vextract.low.u32 %v5638
    %v5640 = vextract.high.u32 %v5638
    %v5641 = vmul.u32 %v5634, %v5625
    %v5642 = vadd.s32 %v5637, %v5639
    %vm5643 = vc.u32 %v5637, %v5639
    %v5644 = vadd.s32 %v5640, 1
    %v5645 = vsel %vm5643, %v5644, %v5640
    %v5646 = vadd.s32 %v5641, %v5645
    %v5647 = vadd.s32 %v5646, 536870912
    %v5648 = vshrl.u32 %v5647, 30
    %v5649 = vshll.u32 %v5648, 30
    %v5650 = vsub.s32 %v5646, %v5649
    %vm5651 = vcmp.lt.s32.totalorder %v5650, 0
    %v5652 = vsub.s32 0, %v5650
    %v5653 = vsel %vm5651, %v5652, %v5650
    %v5654 = vclz %v5653
    %v5655 = vsub.s32 %v5654, 2
    %vm5656 = vcmp.gt.s32.totalorder 0, %v5655
    %v5657 = vsel %vm5656, 0, %v5655
    %v5658 = vsub.s32 32, %v5657
    %v5659 = vshll.u32 %v5650, %v5657
    %v5660 = vshrl.u32 %v5642, %v5658
    %v5661 = vor.u32 %v5659, %v5660
    %v5662 = vsub.s32 4294967266, %v5657
    %v5663 = vadd.s32 %v5662, 127
    %v5664 = vshll.u32 %v5663, 23
    %v5665 = vor.u32 4788187, %v5664
    %v5666 = vand.u32 2147483647, %v5665
    %v5668 = vcvt.s32.f32 %v5661
    %v5669 = vmul.f32 %v5668, %v5666
    %v5670 = vxor.u32 %v5669, 2147483648
    %v5671 = vsel %vm5588, %v5670, %v5669
    %v5672 = vsub.s32 4, %v5648
    %v5673 = vsel %vm5588, %v5672, %v5648
    %v5674 = vsel %vm5587, %v3597, %v5671
    %v5675 = vsel %vm5587, 0, %v5673
    %v5676 = vcosq.f32.pop %v5674
    %v5677 = vsinq.f32.pop %v5674
    %vm5678 = vweird.f32 %v3597
    %v5679 = vadd.s32 %v5675, 3
    %v5680 = vand.u32 %v5679, 3
    %vm5681 = vcmp.lt.s32.totalorder %v5680, 2
    %vm5682 = vcmp.eq.s32.totalorder %v5680, 0
    %v5683 = vxor.u32 %v5677, 2147483648
    %v5684 = vsel %vm5682, %v5676, %v5683
    %vm5685 = vcmp.eq.s32.totalorder %v5680, 2
    %v5686 = vxor.u32 %v5676, 2147483648
    %v5687 = vsel %vm5685, %v5686, %v5677
    %v5688 = vsel %vm5681, %v5684, %v5687
    %v5689 = vsel %vm5678, nan, %v5688
    %v5690 = vand.u32 2147483647, %v3598
    %vm5691 = vcmp.le.f32.partialorder %v5690, 0.7853982
    %vm5692 = vcmp.lt.s32.totalorder %v3598, 0
    %v5693 = vand.u32 %v3598, 2139095040
    %v5694 = vshrl.u32 %v5693, 23
    %v5695 = vsub.s32 %v5694, 127
    %v5696 = vand.u32 2147483647, %v3598
    %v5697 = vand.u32 %v5696, 8388607
    %v5698 = vor.u32 %v5697, 8388608
    %v5699 = vsub.s32 0, %v5698
    %v5700 = vadd.s32 %v5695, 1
    %vm5701 = vcmp.gt.s32.totalorder %v5700, 0
    %v5702 = vsel %vm5701, %v5700, 0
    %v5703 = vshrl.u32 %v5702, 5
    %v5704 = vand.u32 %v5702, 31
    %v5705 = vsub.s32 32, %v5704
    %v5706 = vshrl.u32 683565275, %v5705
    %v5707 = vshll.u32 683565275, %v5704
    %v5708 = vshrl.u32 2475754826, %v5705
    %v5709 = vor.u32 %v5707, %v5708
    %v5710 = vshll.u32 2475754826, %v5704
    %v5711 = vshrl.u32 2131351028, %v5705
    %v5712 = vor.u32 %v5710, %v5711
    %v5713 = vshll.u32 2131351028, %v5704
    %v5714 = vshrl.u32 2102212464, %v5705
    %v5715 = vor.u32 %v5713, %v5714
    %v5716 = vshll.u32 2102212464, %v5704
    %v5717 = vshrl.u32 920167782, %v5705
    %v5718 = vor.u32 %v5716, %v5717
    %v5719 = vshll.u32 920167782, %v5704
    %v5720 = vshrl.u32 1326507024, %v5705
    %v5721 = vor.u32 %v5719, %v5720
    %vm5722 = vcmp.lt.s32.totalorder %v5703, 1
    %vm5723 = vcmp.lt.s32.totalorder %v5703, 2
    %vm5724 = vcmp.lt.s32.totalorder %v5703, 3
    %vm5725 = vcmp.lt.s32.totalorder %v5703, 4
    %v5726 = vsel %vm5722, %v5706, %v5709
    %v5727 = vsel %vm5725, %v5715, 2102212464
    %v5728 = vsel %vm5724, %v5712, %v5727
    %v5729 = vsel %vm5723, %v5726, %v5728
    %v5730 = vsel %vm5722, %v5709, %v5712
    %v5731 = vsel %vm5725, %v5718, 920167782
    %v5732 = vsel %vm5724, %v5715, %v5731
    %v5733 = vsel %vm5723, %v5730, %v5732
    %v5734 = vsel %vm5722, %v5712, %v5715
    %v5735 = vsel %vm5725, %v5721, 1326507024
    %v5736 = vsel %vm5724, %v5718, %v5735
    %v5737 = vsel %vm5723, %v5734, %v5736
    %v5738 = vshll.u32 %v5698, 8
    %v5739 = vmul.u32.u64.compose %v5738, %v5737
    %v5740 = vextract.low.u32 %v5739
    %v5741 = vextract.high.u32 %v5739
    %v5742 = vmul.u32.u64.compose %v5738, %v5733
    %v5743 = vextract.low.u32 %v5742
    %v5744 = vextract.high.u32 %v5742
    %v5745 = vmul.u32 %v5738, %v5729
    %v5746 = vadd.s32 %v5741, %v5743
    %vm5747 = vc.u32 %v5741, %v5743
    %v5748 = vadd.s32 %v5744, 1
    %v5749 = vsel %vm5747, %v5748, %v5744
    %v5750 = vadd.s32 %v5745, %v5749
    %v5751 = vadd.s32 %v5750, 536870912
    %v5752 = vshrl.u32 %v5751, 30
    %v5753 = vshll.u32 %v5752, 30
    %v5754 = vsub.s32 %v5750, %v5753
    %vm5755 = vcmp.lt.s32.totalorder %v5754, 0
    %v5756 = vsub.s32 0, %v5754
    %v5757 = vsel %vm5755, %v5756, %v5754
    %v5758 = vclz %v5757
    %v5759 = vsub.s32 %v5758, 2
    %vm5760 = vcmp.gt.s32.totalorder 0, %v5759
    %v5761 = vsel %vm5760, 0, %v5759
    %v5762 = vsub.s32 32, %v5761
    %v5763 = vshll.u32 %v5754, %v5761
    %v5764 = vshrl.u32 %v5746, %v5762
    %v5765 = vor.u32 %v5763, %v5764
    %v5766 = vsub.s32 4294967266, %v5761
    %v5767 = vadd.s32 %v5766, 127
    %v5768 = vshll.u32 %v5767, 23
    %v5769 = vor.u32 4788187, %v5768
    %v5770 = vand.u32 2147483647, %v5769
    %v5772 = vcvt.s32.f32 %v5765
    %v5773 = vmul.f32 %v5772, %v5770
    %v5774 = vxor.u32 %v5773, 2147483648
    %v5775 = vsel %vm5692, %v5774, %v5773
    %v5776 = vsub.s32 4, %v5752
    %v5777 = vsel %vm5692, %v5776, %v5752
    %v5778 = vsel %vm5691, %v3598, %v5775
    %v5779 = vsel %vm5691, 0, %v5777
    %v5780 = vcosq.f32.pop %v5778
    %v5781 = vsinq.f32.pop %v5778
    %vm5782 = vweird.f32 %v3598
    %v5783 = vadd.s32 %v5779, 3
    %v5784 = vand.u32 %v5783, 3
    %vm5785 = vcmp.lt.s32.totalorder %v5784, 2
    %vm5786 = vcmp.eq.s32.totalorder %v5784, 0
    %v5787 = vxor.u32 %v5781, 2147483648
    %v5788 = vsel %vm5786, %v5780, %v5787
    %vm5789 = vcmp.eq.s32.totalorder %v5784, 2
    %v5790 = vxor.u32 %v5780, 2147483648
    %v5791 = vsel %vm5789, %v5790, %v5781
    %v5792 = vsel %vm5785, %v5788, %v5791
    %v5793 = vsel %vm5782, nan, %v5792
    %v5794 = vand.u32 2147483647, %v3599
    %vm5795 = vcmp.le.f32.partialorder %v5794, 0.7853982
    %vm5796 = vcmp.lt.s32.totalorder %v3599, 0
    %v5797 = vand.u32 %v3599, 2139095040
    %v5798 = vshrl.u32 %v5797, 23
    %v5799 = vsub.s32 %v5798, 127
    %v5800 = vand.u32 2147483647, %v3599
    %v5801 = vand.u32 %v5800, 8388607
    %v5802 = vor.u32 %v5801, 8388608
    %v5803 = vsub.s32 0, %v5802
    %v5804 = vadd.s32 %v5799, 1
    %vm5805 = vcmp.gt.s32.totalorder %v5804, 0
    %v5806 = vsel %vm5805, %v5804, 0
    %v5807 = vshrl.u32 %v5806, 5
    %v5808 = vand.u32 %v5806, 31
    %v5809 = vsub.s32 32, %v5808
    %v5810 = vshrl.u32 683565275, %v5809
    %v5811 = vshll.u32 683565275, %v5808
    %v5812 = vshrl.u32 2475754826, %v5809
    %v5813 = vor.u32 %v5811, %v5812
    %v5814 = vshll.u32 2475754826, %v5808
    %v5815 = vshrl.u32 2131351028, %v5809
    %v5816 = vor.u32 %v5814, %v5815
    %v5817 = vshll.u32 2131351028, %v5808
    %v5818 = vshrl.u32 2102212464, %v5809
    %v5819 = vor.u32 %v5817, %v5818
    %v5820 = vshll.u32 2102212464, %v5808
    %v5821 = vshrl.u32 920167782, %v5809
    %v5822 = vor.u32 %v5820, %v5821
    %v5823 = vshll.u32 920167782, %v5808
    %v5824 = vshrl.u32 1326507024, %v5809
    %v5825 = vor.u32 %v5823, %v5824
    %vm5826 = vcmp.lt.s32.totalorder %v5807, 1
    %vm5827 = vcmp.lt.s32.totalorder %v5807, 2
    %vm5828 = vcmp.lt.s32.totalorder %v5807, 3
    %vm5829 = vcmp.lt.s32.totalorder %v5807, 4
    %v5830 = vsel %vm5826, %v5810, %v5813
    %v5831 = vsel %vm5829, %v5819, 2102212464
    %v5832 = vsel %vm5828, %v5816, %v5831
    %v5833 = vsel %vm5827, %v5830, %v5832
    %v5834 = vsel %vm5826, %v5813, %v5816
    %v5835 = vsel %vm5829, %v5822, 920167782
    %v5836 = vsel %vm5828, %v5819, %v5835
    %v5837 = vsel %vm5827, %v5834, %v5836
    %v5838 = vsel %vm5826, %v5816, %v5819
    %v5839 = vsel %vm5829, %v5825, 1326507024
    %v5840 = vsel %vm5828, %v5822, %v5839
    %v5841 = vsel %vm5827, %v5838, %v5840
    %v5842 = vshll.u32 %v5802, 8
    %v5843 = vmul.u32.u64.compose %v5842, %v5841
    %v5844 = vextract.low.u32 %v5843
    %v5845 = vextract.high.u32 %v5843
    %v5846 = vmul.u32.u64.compose %v5842, %v5837
    %v5847 = vextract.low.u32 %v5846
    %v5848 = vextract.high.u32 %v5846
    %v5849 = vmul.u32 %v5842, %v5833
    %v5850 = vadd.s32 %v5845, %v5847
    %vm5851 = vc.u32 %v5845, %v5847
    %v5852 = vadd.s32 %v5848, 1
    %v5853 = vsel %vm5851, %v5852, %v5848
    %v5854 = vadd.s32 %v5849, %v5853
    %v5855 = vadd.s32 %v5854, 536870912
    %v5856 = vshrl.u32 %v5855, 30
    %v5857 = vshll.u32 %v5856, 30
    %v5858 = vsub.s32 %v5854, %v5857
    %vm5859 = vcmp.lt.s32.totalorder %v5858, 0
    %v5860 = vsub.s32 0, %v5858
    %v5861 = vsel %vm5859, %v5860, %v5858
    %v5862 = vclz %v5861
    %v5863 = vsub.s32 %v5862, 2
    %vm5864 = vcmp.gt.s32.totalorder 0, %v5863
    %v5865 = vsel %vm5864, 0, %v5863
    %v5866 = vsub.s32 32, %v5865
    %v5867 = vshll.u32 %v5858, %v5865
    %v5868 = vshrl.u32 %v5850, %v5866
    %v5869 = vor.u32 %v5867, %v5868
    %v5870 = vsub.s32 4294967266, %v5865
    %v5871 = vadd.s32 %v5870, 127
    %v5872 = vshll.u32 %v5871, 23
    %v5873 = vor.u32 4788187, %v5872
    %v5874 = vand.u32 2147483647, %v5873
    %v5876 = vcvt.s32.f32 %v5869
    %v5877 = vmul.f32 %v5876, %v5874
    %v5878 = vxor.u32 %v5877, 2147483648
    %v5879 = vsel %vm5796, %v5878, %v5877
    %v5880 = vsub.s32 4, %v5856
    %v5881 = vsel %vm5796, %v5880, %v5856
    %v5882 = vsel %vm5795, %v3599, %v5879
    %v5883 = vsel %vm5795, 0, %v5881
    %v5884 = vcosq.f32.pop %v5882
    %v5885 = vsinq.f32.pop %v5882
    %vm5886 = vweird.f32 %v3599
    %v5887 = vadd.s32 %v5883, 3
    %v5888 = vand.u32 %v5887, 3
    %vm5889 = vcmp.lt.s32.totalorder %v5888, 2
    %vm5890 = vcmp.eq.s32.totalorder %v5888, 0
    %v5891 = vxor.u32 %v5885, 2147483648
    %v5892 = vsel %vm5890, %v5884, %v5891
    %vm5893 = vcmp.eq.s32.totalorder %v5888, 2
    %v5894 = vxor.u32 %v5884, 2147483648
    %v5895 = vsel %vm5893, %v5894, %v5885
    %v5896 = vsel %vm5889, %v5892, %v5895
    %v5897 = vsel %vm5886, nan, %v5896
    %v5898 = vand.u32 2147483647, %v3600
    %vm5899 = vcmp.le.f32.partialorder %v5898, 0.7853982
    %vm5900 = vcmp.lt.s32.totalorder %v3600, 0
    %v5901 = vand.u32 %v3600, 2139095040
    %v5902 = vshrl.u32 %v5901, 23
    %v5903 = vsub.s32 %v5902, 127
    %v5904 = vand.u32 2147483647, %v3600
    %v5905 = vand.u32 %v5904, 8388607
    %v5906 = vor.u32 %v5905, 8388608
    %v5907 = vsub.s32 0, %v5906
    %v5908 = vadd.s32 %v5903, 1
    %vm5909 = vcmp.gt.s32.totalorder %v5908, 0
    %v5910 = vsel %vm5909, %v5908, 0
    %v5911 = vshrl.u32 %v5910, 5
    %v5912 = vand.u32 %v5910, 31
    %v5913 = vsub.s32 32, %v5912
    %v5914 = vshrl.u32 683565275, %v5913
    %v5915 = vshll.u32 683565275, %v5912
    %v5916 = vshrl.u32 2475754826, %v5913
    %v5917 = vor.u32 %v5915, %v5916
    %v5918 = vshll.u32 2475754826, %v5912
    %v5919 = vshrl.u32 2131351028, %v5913
    %v5920 = vor.u32 %v5918, %v5919
    %v5921 = vshll.u32 2131351028, %v5912
    %v5922 = vshrl.u32 2102212464, %v5913
    %v5923 = vor.u32 %v5921, %v5922
    %v5924 = vshll.u32 2102212464, %v5912
    %v5925 = vshrl.u32 920167782, %v5913
    %v5926 = vor.u32 %v5924, %v5925
    %v5927 = vshll.u32 920167782, %v5912
    %v5928 = vshrl.u32 1326507024, %v5913
    %v5929 = vor.u32 %v5927, %v5928
    %vm5930 = vcmp.lt.s32.totalorder %v5911, 1
    %vm5931 = vcmp.lt.s32.totalorder %v5911, 2
    %vm5932 = vcmp.lt.s32.totalorder %v5911, 3
    %vm5933 = vcmp.lt.s32.totalorder %v5911, 4
    %v5934 = vsel %vm5930, %v5914, %v5917
    %v5935 = vsel %vm5933, %v5923, 2102212464
    %v5936 = vsel %vm5932, %v5920, %v5935
    %v5937 = vsel %vm5931, %v5934, %v5936
    %v5938 = vsel %vm5930, %v5917, %v5920
    %v5939 = vsel %vm5933, %v5926, 920167782
    %v5940 = vsel %vm5932, %v5923, %v5939
    %v5941 = vsel %vm5931, %v5938, %v5940
    %v5942 = vsel %vm5930, %v5920, %v5923
    %v5943 = vsel %vm5933, %v5929, 1326507024
    %v5944 = vsel %vm5932, %v5926, %v5943
    %v5945 = vsel %vm5931, %v5942, %v5944
    %v5946 = vshll.u32 %v5906, 8
    %v5947 = vmul.u32.u64.compose %v5946, %v5945
    %v5948 = vextract.low.u32 %v5947
    %v5949 = vextract.high.u32 %v5947
    %v5950 = vmul.u32.u64.compose %v5946, %v5941
    %v5951 = vextract.low.u32 %v5950
    %v5952 = vextract.high.u32 %v5950
    %v5953 = vmul.u32 %v5946, %v5937
    %v5954 = vadd.s32 %v5949, %v5951
    %vm5955 = vc.u32 %v5949, %v5951
    %v5956 = vadd.s32 %v5952, 1
    %v5957 = vsel %vm5955, %v5956, %v5952
    %v5958 = vadd.s32 %v5953, %v5957
    %v5959 = vadd.s32 %v5958, 536870912
    %v5960 = vshrl.u32 %v5959, 30
    %v5961 = vshll.u32 %v5960, 30
    %v5962 = vsub.s32 %v5958, %v5961
    %vm5963 = vcmp.lt.s32.totalorder %v5962, 0
    %v5964 = vsub.s32 0, %v5962
    %v5965 = vsel %vm5963, %v5964, %v5962
    %v5966 = vclz %v5965
    %v5967 = vsub.s32 %v5966, 2
    %vm5968 = vcmp.gt.s32.totalorder 0, %v5967
    %v5969 = vsel %vm5968, 0, %v5967
    %v5970 = vsub.s32 32, %v5969
    %v5971 = vshll.u32 %v5962, %v5969
    %v5972 = vshrl.u32 %v5954, %v5970
    %v5973 = vor.u32 %v5971, %v5972
    %v5974 = vsub.s32 4294967266, %v5969
    %v5975 = vadd.s32 %v5974, 127
    %v5976 = vshll.u32 %v5975, 23
    %v5977 = vor.u32 4788187, %v5976
    %v5978 = vand.u32 2147483647, %v5977
    %v5980 = vcvt.s32.f32 %v5973
    %v5981 = vmul.f32 %v5980, %v5978
    %v5982 = vxor.u32 %v5981, 2147483648
    %v5983 = vsel %vm5900, %v5982, %v5981
    %v5984 = vsub.s32 4, %v5960
    %v5985 = vsel %vm5900, %v5984, %v5960
    %v5986 = vsel %vm5899, %v3600, %v5983
    %v5987 = vsel %vm5899, 0, %v5985
    %v5988 = vcosq.f32.pop %v5986
    %v5989 = vsinq.f32.pop %v5986
    %vm5990 = vweird.f32 %v3600
    %v5991 = vadd.s32 %v5987, 3
    %v5992 = vand.u32 %v5991, 3
    %vm5993 = vcmp.lt.s32.totalorder %v5992, 2
    %vm5994 = vcmp.eq.s32.totalorder %v5992, 0
    %v5995 = vxor.u32 %v5989, 2147483648
    %v5996 = vsel %vm5994, %v5988, %v5995
    %vm5997 = vcmp.eq.s32.totalorder %v5992, 2
    %v5998 = vxor.u32 %v5988, 2147483648
    %v5999 = vsel %vm5997, %v5998, %v5989
    %v6000 = vsel %vm5993, %v5996, %v5999
    %v6001 = vsel %vm5990, nan, %v6000
    %v6002 = vand.u32 2147483647, %v3601
    %vm6003 = vcmp.le.f32.partialorder %v6002, 0.7853982
    %vm6004 = vcmp.lt.s32.totalorder %v3601, 0
    %v6005 = vand.u32 %v3601, 2139095040
    %v6006 = vshrl.u32 %v6005, 23
    %v6007 = vsub.s32 %v6006, 127
    %v6008 = vand.u32 2147483647, %v3601
    %v6009 = vand.u32 %v6008, 8388607
    %v6010 = vor.u32 %v6009, 8388608
    %v6011 = vsub.s32 0, %v6010
    %v6012 = vadd.s32 %v6007, 1
    %vm6013 = vcmp.gt.s32.totalorder %v6012, 0
    %v6014 = vsel %vm6013, %v6012, 0
    %v6015 = vshrl.u32 %v6014, 5
    %v6016 = vand.u32 %v6014, 31
    %v6017 = vsub.s32 32, %v6016
    %v6018 = vshrl.u32 683565275, %v6017
    %v6019 = vshll.u32 683565275, %v6016
    %v6020 = vshrl.u32 2475754826, %v6017
    %v6021 = vor.u32 %v6019, %v6020
    %v6022 = vshll.u32 2475754826, %v6016
    %v6023 = vshrl.u32 2131351028, %v6017
    %v6024 = vor.u32 %v6022, %v6023
    %v6025 = vshll.u32 2131351028, %v6016
    %v6026 = vshrl.u32 2102212464, %v6017
    %v6027 = vor.u32 %v6025, %v6026
    %v6028 = vshll.u32 2102212464, %v6016
    %v6029 = vshrl.u32 920167782, %v6017
    %v6030 = vor.u32 %v6028, %v6029
    %v6031 = vshll.u32 920167782, %v6016
    %v6032 = vshrl.u32 1326507024, %v6017
    %v6033 = vor.u32 %v6031, %v6032
    %vm6034 = vcmp.lt.s32.totalorder %v6015, 1
    %vm6035 = vcmp.lt.s32.totalorder %v6015, 2
    %vm6036 = vcmp.lt.s32.totalorder %v6015, 3
    %vm6037 = vcmp.lt.s32.totalorder %v6015, 4
    %v6038 = vsel %vm6034, %v6018, %v6021
    %v6039 = vsel %vm6037, %v6027, 2102212464
    %v6040 = vsel %vm6036, %v6024, %v6039
    %v6041 = vsel %vm6035, %v6038, %v6040
    %v6042 = vsel %vm6034, %v6021, %v6024
    %v6043 = vsel %vm6037, %v6030, 920167782
    %v6044 = vsel %vm6036, %v6027, %v6043
    %v6045 = vsel %vm6035, %v6042, %v6044
    %v6046 = vsel %vm6034, %v6024, %v6027
    %v6047 = vsel %vm6037, %v6033, 1326507024
    %v6048 = vsel %vm6036, %v6030, %v6047
    %v6049 = vsel %vm6035, %v6046, %v6048
    %v6050 = vshll.u32 %v6010, 8
    %v6051 = vmul.u32.u64.compose %v6050, %v6049
    %v6052 = vextract.low.u32 %v6051
    %v6053 = vextract.high.u32 %v6051
    %v6054 = vmul.u32.u64.compose %v6050, %v6045
    %v6055 = vextract.low.u32 %v6054
    %v6056 = vextract.high.u32 %v6054
    %v6057 = vmul.u32 %v6050, %v6041
    %v6058 = vadd.s32 %v6053, %v6055
    %vm6059 = vc.u32 %v6053, %v6055
    %v6060 = vadd.s32 %v6056, 1
    %v6061 = vsel %vm6059, %v6060, %v6056
    %v6062 = vadd.s32 %v6057, %v6061
    %v6063 = vadd.s32 %v6062, 536870912
    %v6064 = vshrl.u32 %v6063, 30
    %v6065 = vshll.u32 %v6064, 30
    %v6066 = vsub.s32 %v6062, %v6065
    %vm6067 = vcmp.lt.s32.totalorder %v6066, 0
    %v6068 = vsub.s32 0, %v6066
    %v6069 = vsel %vm6067, %v6068, %v6066
    %v6070 = vclz %v6069
    %v6071 = vsub.s32 %v6070, 2
    %vm6072 = vcmp.gt.s32.totalorder 0, %v6071
    %v6073 = vsel %vm6072, 0, %v6071
    %v6074 = vsub.s32 32, %v6073
    %v6075 = vshll.u32 %v6066, %v6073
    %v6076 = vshrl.u32 %v6058, %v6074
    %v6077 = vor.u32 %v6075, %v6076
    %v6078 = vsub.s32 4294967266, %v6073
    %v6079 = vadd.s32 %v6078, 127
    %v6080 = vshll.u32 %v6079, 23
    %v6081 = vor.u32 4788187, %v6080
    %v6082 = vand.u32 2147483647, %v6081
    %v6084 = vcvt.s32.f32 %v6077
    %v6085 = vmul.f32 %v6084, %v6082
    %v6086 = vxor.u32 %v6085, 2147483648
    %v6087 = vsel %vm6004, %v6086, %v6085
    %v6088 = vsub.s32 4, %v6064
    %v6089 = vsel %vm6004, %v6088, %v6064
    %v6090 = vsel %vm6003, %v3601, %v6087
    %v6091 = vsel %vm6003, 0, %v6089
    %v6092 = vcosq.f32.pop %v6090
    %v6093 = vsinq.f32.pop %v6090
    %vm6094 = vweird.f32 %v3601
    %v6095 = vadd.s32 %v6091, 3
    %v6096 = vand.u32 %v6095, 3
    %vm6097 = vcmp.lt.s32.totalorder %v6096, 2
    %vm6098 = vcmp.eq.s32.totalorder %v6096, 0
    %v6099 = vxor.u32 %v6093, 2147483648
    %v6100 = vsel %vm6098, %v6092, %v6099
    %vm6101 = vcmp.eq.s32.totalorder %v6096, 2
    %v6102 = vxor.u32 %v6092, 2147483648
    %v6103 = vsel %vm6101, %v6102, %v6093
    %v6104 = vsel %vm6097, %v6100, %v6103
    %v6105 = vsel %vm6094, nan, %v6104
    %v6106 = vand.u32 2147483647, %v3602
    %vm6107 = vcmp.le.f32.partialorder %v6106, 0.7853982
    %vm6108 = vcmp.lt.s32.totalorder %v3602, 0
    %v6109 = vand.u32 %v3602, 2139095040
    %v6110 = vshrl.u32 %v6109, 23
    %v6111 = vsub.s32 %v6110, 127
    %v6112 = vand.u32 2147483647, %v3602
    %v6113 = vand.u32 %v6112, 8388607
    %v6114 = vor.u32 %v6113, 8388608
    %v6115 = vsub.s32 0, %v6114
    %v6116 = vadd.s32 %v6111, 1
    %vm6117 = vcmp.gt.s32.totalorder %v6116, 0
    %v6118 = vsel %vm6117, %v6116, 0
    %v6119 = vshrl.u32 %v6118, 5
    %v6120 = vand.u32 %v6118, 31
    %v6121 = vsub.s32 32, %v6120
    %v6122 = vshrl.u32 683565275, %v6121
    %v6123 = vshll.u32 683565275, %v6120
    %v6124 = vshrl.u32 2475754826, %v6121
    %v6125 = vor.u32 %v6123, %v6124
    %v6126 = vshll.u32 2475754826, %v6120
    %v6127 = vshrl.u32 2131351028, %v6121
    %v6128 = vor.u32 %v6126, %v6127
    %v6129 = vshll.u32 2131351028, %v6120
    %v6130 = vshrl.u32 2102212464, %v6121
    %v6131 = vor.u32 %v6129, %v6130
    %v6132 = vshll.u32 2102212464, %v6120
    %v6133 = vshrl.u32 920167782, %v6121
    %v6134 = vor.u32 %v6132, %v6133
    %v6135 = vshll.u32 920167782, %v6120
    %v6136 = vshrl.u32 1326507024, %v6121
    %v6137 = vor.u32 %v6135, %v6136
    %vm6138 = vcmp.lt.s32.totalorder %v6119, 1
    %vm6139 = vcmp.lt.s32.totalorder %v6119, 2
    %vm6140 = vcmp.lt.s32.totalorder %v6119, 3
    %vm6141 = vcmp.lt.s32.totalorder %v6119, 4
    %v6142 = vsel %vm6138, %v6122, %v6125
    %v6143 = vsel %vm6141, %v6131, 2102212464
    %v6144 = vsel %vm6140, %v6128, %v6143
    %v6145 = vsel %vm6139, %v6142, %v6144
    %v6146 = vsel %vm6138, %v6125, %v6128
    %v6147 = vsel %vm6141, %v6134, 920167782
    %v6148 = vsel %vm6140, %v6131, %v6147
    %v6149 = vsel %vm6139, %v6146, %v6148
    %v6150 = vsel %vm6138, %v6128, %v6131
    %v6151 = vsel %vm6141, %v6137, 1326507024
    %v6152 = vsel %vm6140, %v6134, %v6151
    %v6153 = vsel %vm6139, %v6150, %v6152
    %v6154 = vshll.u32 %v6114, 8
    %v6155 = vmul.u32.u64.compose %v6154, %v6153
    %v6156 = vextract.low.u32 %v6155
    %v6157 = vextract.high.u32 %v6155
    %v6158 = vmul.u32.u64.compose %v6154, %v6149
    %v6159 = vextract.low.u32 %v6158
    %v6160 = vextract.high.u32 %v6158
    %v6161 = vmul.u32 %v6154, %v6145
    %v6162 = vadd.s32 %v6157, %v6159
    %vm6163 = vc.u32 %v6157, %v6159
    %v6164 = vadd.s32 %v6160, 1
    %v6165 = vsel %vm6163, %v6164, %v6160
    %v6166 = vadd.s32 %v6161, %v6165
    %v6167 = vadd.s32 %v6166, 536870912
    %v6168 = vshrl.u32 %v6167, 30
    %v6169 = vshll.u32 %v6168, 30
    %v6170 = vsub.s32 %v6166, %v6169
    %vm6171 = vcmp.lt.s32.totalorder %v6170, 0
    %v6172 = vsub.s32 0, %v6170
    %v6173 = vsel %vm6171, %v6172, %v6170
    %v6174 = vclz %v6173
    %v6175 = vsub.s32 %v6174, 2
    %vm6176 = vcmp.gt.s32.totalorder 0, %v6175
    %v6177 = vsel %vm6176, 0, %v6175
    %v6178 = vsub.s32 32, %v6177
    %v6179 = vshll.u32 %v6170, %v6177
    %v6180 = vshrl.u32 %v6162, %v6178
    %v6181 = vor.u32 %v6179, %v6180
    %v6182 = vsub.s32 4294967266, %v6177
    %v6183 = vadd.s32 %v6182, 127
    %v6184 = vshll.u32 %v6183, 23
    %v6185 = vor.u32 4788187, %v6184
    %v6186 = vand.u32 2147483647, %v6185
    %v6188 = vcvt.s32.f32 %v6181
    %v6189 = vmul.f32 %v6188, %v6186
    %v6190 = vxor.u32 %v6189, 2147483648
    %v6191 = vsel %vm6108, %v6190, %v6189
    %v6192 = vsub.s32 4, %v6168
    %v6193 = vsel %vm6108, %v6192, %v6168
    %v6194 = vsel %vm6107, %v3602, %v6191
    %v6195 = vsel %vm6107, 0, %v6193
    %v6196 = vcosq.f32.pop %v6194
    %v6197 = vsinq.f32.pop %v6194
    %vm6198 = vweird.f32 %v3602
    %v6199 = vadd.s32 %v6195, 3
    %v6200 = vand.u32 %v6199, 3
    %vm6201 = vcmp.lt.s32.totalorder %v6200, 2
    %vm6202 = vcmp.eq.s32.totalorder %v6200, 0
    %v6203 = vxor.u32 %v6197, 2147483648
    %v6204 = vsel %vm6202, %v6196, %v6203
    %vm6205 = vcmp.eq.s32.totalorder %v6200, 2
    %v6206 = vxor.u32 %v6196, 2147483648
    %v6207 = vsel %vm6205, %v6206, %v6197
    %v6208 = vsel %vm6201, %v6204, %v6207
    %v6209 = vsel %vm6198, nan, %v6208
    %v6210 = vand.u32 2147483647, %v3603
    %vm6211 = vcmp.le.f32.partialorder %v6210, 0.7853982
    %vm6212 = vcmp.lt.s32.totalorder %v3603, 0
    %v6213 = vand.u32 %v3603, 2139095040
    %v6214 = vshrl.u32 %v6213, 23
    %v6215 = vsub.s32 %v6214, 127
    %v6216 = vand.u32 2147483647, %v3603
    %v6217 = vand.u32 %v6216, 8388607
    %v6218 = vor.u32 %v6217, 8388608
    %v6219 = vsub.s32 0, %v6218
    %v6220 = vadd.s32 %v6215, 1
    %vm6221 = vcmp.gt.s32.totalorder %v6220, 0
    %v6222 = vsel %vm6221, %v6220, 0
    %v6223 = vshrl.u32 %v6222, 5
    %v6224 = vand.u32 %v6222, 31
    %v6225 = vsub.s32 32, %v6224
    %v6226 = vshrl.u32 683565275, %v6225
    %v6227 = vshll.u32 683565275, %v6224
    %v6228 = vshrl.u32 2475754826, %v6225
    %v6229 = vor.u32 %v6227, %v6228
    %v6230 = vshll.u32 2475754826, %v6224
    %v6231 = vshrl.u32 2131351028, %v6225
    %v6232 = vor.u32 %v6230, %v6231
    %v6233 = vshll.u32 2131351028, %v6224
    %v6234 = vshrl.u32 2102212464, %v6225
    %v6235 = vor.u32 %v6233, %v6234
    %v6236 = vshll.u32 2102212464, %v6224
    %v6237 = vshrl.u32 920167782, %v6225
    %v6238 = vor.u32 %v6236, %v6237
    %v6239 = vshll.u32 920167782, %v6224
    %v6240 = vshrl.u32 1326507024, %v6225
    %v6241 = vor.u32 %v6239, %v6240
    %vm6242 = vcmp.lt.s32.totalorder %v6223, 1
    %vm6243 = vcmp.lt.s32.totalorder %v6223, 2
    %vm6244 = vcmp.lt.s32.totalorder %v6223, 3
    %vm6245 = vcmp.lt.s32.totalorder %v6223, 4
    %v6246 = vsel %vm6242, %v6226, %v6229
    %v6247 = vsel %vm6245, %v6235, 2102212464
    %v6248 = vsel %vm6244, %v6232, %v6247
    %v6249 = vsel %vm6243, %v6246, %v6248
    %v6250 = vsel %vm6242, %v6229, %v6232
    %v6251 = vsel %vm6245, %v6238, 920167782
    %v6252 = vsel %vm6244, %v6235, %v6251
    %v6253 = vsel %vm6243, %v6250, %v6252
    %v6254 = vsel %vm6242, %v6232, %v6235
    %v6255 = vsel %vm6245, %v6241, 1326507024
    %v6256 = vsel %vm6244, %v6238, %v6255
    %v6257 = vsel %vm6243, %v6254, %v6256
    %v6258 = vshll.u32 %v6218, 8
    %v6259 = vmul.u32.u64.compose %v6258, %v6257
    %v6260 = vextract.low.u32 %v6259
    %v6261 = vextract.high.u32 %v6259
    %v6262 = vmul.u32.u64.compose %v6258, %v6253
    %v6263 = vextract.low.u32 %v6262
    %v6264 = vextract.high.u32 %v6262
    %v6265 = vmul.u32 %v6258, %v6249
    %v6266 = vadd.s32 %v6261, %v6263
    %vm6267 = vc.u32 %v6261, %v6263
    %v6268 = vadd.s32 %v6264, 1
    %v6269 = vsel %vm6267, %v6268, %v6264
    %v6270 = vadd.s32 %v6265, %v6269
    %v6271 = vadd.s32 %v6270, 536870912
    %v6272 = vshrl.u32 %v6271, 30
    %v6273 = vshll.u32 %v6272, 30
    %v6274 = vsub.s32 %v6270, %v6273
    %vm6275 = vcmp.lt.s32.totalorder %v6274, 0
    %v6276 = vsub.s32 0, %v6274
    %v6277 = vsel %vm6275, %v6276, %v6274
    %v6278 = vclz %v6277
    %v6279 = vsub.s32 %v6278, 2
    %vm6280 = vcmp.gt.s32.totalorder 0, %v6279
    %v6281 = vsel %vm6280, 0, %v6279
    %v6282 = vsub.s32 32, %v6281
    %v6283 = vshll.u32 %v6274, %v6281
    %v6284 = vshrl.u32 %v6266, %v6282
    %v6285 = vor.u32 %v6283, %v6284
    %v6286 = vsub.s32 4294967266, %v6281
    %v6287 = vadd.s32 %v6286, 127
    %v6288 = vshll.u32 %v6287, 23
    %v6289 = vor.u32 4788187, %v6288
    %v6290 = vand.u32 2147483647, %v6289
    %v6292 = vcvt.s32.f32 %v6285
    %v6293 = vmul.f32 %v6292, %v6290
    %v6294 = vxor.u32 %v6293, 2147483648
    %v6295 = vsel %vm6212, %v6294, %v6293
    %v6296 = vsub.s32 4, %v6272
    %v6297 = vsel %vm6212, %v6296, %v6272
    %v6298 = vsel %vm6211, %v3603, %v6295
    %v6299 = vsel %vm6211, 0, %v6297
    %v6300 = vcosq.f32.pop %v6298
    %v6301 = vsinq.f32.pop %v6298
    %vm6302 = vweird.f32 %v3603
    %v6303 = vadd.s32 %v6299, 3
    %v6304 = vand.u32 %v6303, 3
    %vm6305 = vcmp.lt.s32.totalorder %v6304, 2
    %vm6306 = vcmp.eq.s32.totalorder %v6304, 0
    %v6307 = vxor.u32 %v6301, 2147483648
    %v6308 = vsel %vm6306, %v6300, %v6307
    %vm6309 = vcmp.eq.s32.totalorder %v6304, 2
    %v6310 = vxor.u32 %v6300, 2147483648
    %v6311 = vsel %vm6309, %v6310, %v6301
    %v6312 = vsel %vm6305, %v6308, %v6311
    %v6313 = vsel %vm6302, nan, %v6312
    %v6314 = vand.u32 2147483647, %v3604
    %vm6315 = vcmp.le.f32.partialorder %v6314, 0.7853982
    %vm6316 = vcmp.lt.s32.totalorder %v3604, 0
    %v6317 = vand.u32 %v3604, 2139095040
    %v6318 = vshrl.u32 %v6317, 23
    %v6319 = vsub.s32 %v6318, 127
    %v6320 = vand.u32 2147483647, %v3604
    %v6321 = vand.u32 %v6320, 8388607
    %v6322 = vor.u32 %v6321, 8388608
    %v6323 = vsub.s32 0, %v6322
    %v6324 = vadd.s32 %v6319, 1
    %vm6325 = vcmp.gt.s32.totalorder %v6324, 0
    %v6326 = vsel %vm6325, %v6324, 0
    %v6327 = vshrl.u32 %v6326, 5
    %v6328 = vand.u32 %v6326, 31
    %v6329 = vsub.s32 32, %v6328
    %v6330 = vshrl.u32 683565275, %v6329
    %v6331 = vshll.u32 683565275, %v6328
    %v6332 = vshrl.u32 2475754826, %v6329
    %v6333 = vor.u32 %v6331, %v6332
    %v6334 = vshll.u32 2475754826, %v6328
    %v6335 = vshrl.u32 2131351028, %v6329
    %v6336 = vor.u32 %v6334, %v6335
    %v6337 = vshll.u32 2131351028, %v6328
    %v6338 = vshrl.u32 2102212464, %v6329
    %v6339 = vor.u32 %v6337, %v6338
    %v6340 = vshll.u32 2102212464, %v6328
    %v6341 = vshrl.u32 920167782, %v6329
    %v6342 = vor.u32 %v6340, %v6341
    %v6343 = vshll.u32 920167782, %v6328
    %v6344 = vshrl.u32 1326507024, %v6329
    %v6345 = vor.u32 %v6343, %v6344
    %vm6346 = vcmp.lt.s32.totalorder %v6327, 1
    %vm6347 = vcmp.lt.s32.totalorder %v6327, 2
    %vm6348 = vcmp.lt.s32.totalorder %v6327, 3
    %vm6349 = vcmp.lt.s32.totalorder %v6327, 4
    %v6350 = vsel %vm6346, %v6330, %v6333
    %v6351 = vsel %vm6349, %v6339, 2102212464
    %v6352 = vsel %vm6348, %v6336, %v6351
    %v6353 = vsel %vm6347, %v6350, %v6352
    %v6354 = vsel %vm6346, %v6333, %v6336
    %v6355 = vsel %vm6349, %v6342, 920167782
    %v6356 = vsel %vm6348, %v6339, %v6355
    %v6357 = vsel %vm6347, %v6354, %v6356
    %v6358 = vsel %vm6346, %v6336, %v6339
    %v6359 = vsel %vm6349, %v6345, 1326507024
    %v6360 = vsel %vm6348, %v6342, %v6359
    %v6361 = vsel %vm6347, %v6358, %v6360
    %v6362 = vshll.u32 %v6322, 8
    %v6363 = vmul.u32.u64.compose %v6362, %v6361
    %v6364 = vextract.low.u32 %v6363
    %v6365 = vextract.high.u32 %v6363
    %v6366 = vmul.u32.u64.compose %v6362, %v6357
    %v6367 = vextract.low.u32 %v6366
    %v6368 = vextract.high.u32 %v6366
    %v6369 = vmul.u32 %v6362, %v6353
    %v6370 = vadd.s32 %v6365, %v6367
    %vm6371 = vc.u32 %v6365, %v6367
    %v6372 = vadd.s32 %v6368, 1
    %v6373 = vsel %vm6371, %v6372, %v6368
    %v6374 = vadd.s32 %v6369, %v6373
    %v6375 = vadd.s32 %v6374, 536870912
    %v6376 = vshrl.u32 %v6375, 30
    %v6377 = vshll.u32 %v6376, 30
    %v6378 = vsub.s32 %v6374, %v6377
    %vm6379 = vcmp.lt.s32.totalorder %v6378, 0
    %v6380 = vsub.s32 0, %v6378
    %v6381 = vsel %vm6379, %v6380, %v6378
    %v6382 = vclz %v6381
    %v6383 = vsub.s32 %v6382, 2
    %vm6384 = vcmp.gt.s32.totalorder 0, %v6383
    %v6385 = vsel %vm6384, 0, %v6383
    %v6386 = vsub.s32 32, %v6385
    %v6387 = vshll.u32 %v6378, %v6385
    %v6388 = vshrl.u32 %v6370, %v6386
    %v6389 = vor.u32 %v6387, %v6388
    %v6390 = vsub.s32 4294967266, %v6385
    %v6391 = vadd.s32 %v6390, 127
    %v6392 = vshll.u32 %v6391, 23
    %v6393 = vor.u32 4788187, %v6392
    %v6394 = vand.u32 2147483647, %v6393
    %v6396 = vcvt.s32.f32 %v6389
    %v6397 = vmul.f32 %v6396, %v6394
    %v6398 = vxor.u32 %v6397, 2147483648
    %v6399 = vsel %vm6316, %v6398, %v6397
    %v6400 = vsub.s32 4, %v6376
    %v6401 = vsel %vm6316, %v6400, %v6376
    %v6402 = vsel %vm6315, %v3604, %v6399
    %v6403 = vsel %vm6315, 0, %v6401
    %v6404 = vcosq.f32.pop %v6402
    %v6405 = vsinq.f32.pop %v6402
    %vm6406 = vweird.f32 %v3604
    %v6407 = vadd.s32 %v6403, 3
    %v6408 = vand.u32 %v6407, 3
    %vm6409 = vcmp.lt.s32.totalorder %v6408, 2
    %vm6410 = vcmp.eq.s32.totalorder %v6408, 0
    %v6411 = vxor.u32 %v6405, 2147483648
    %v6412 = vsel %vm6410, %v6404, %v6411
    %vm6413 = vcmp.eq.s32.totalorder %v6408, 2
    %v6414 = vxor.u32 %v6404, 2147483648
    %v6415 = vsel %vm6413, %v6414, %v6405
    %v6416 = vsel %vm6409, %v6412, %v6415
    %v6417 = vsel %vm6406, nan, %v6416
    %v6418 = vand.u32 2147483647, %v3605
    %vm6419 = vcmp.le.f32.partialorder %v6418, 0.7853982
    %vm6420 = vcmp.lt.s32.totalorder %v3605, 0
    %v6421 = vand.u32 %v3605, 2139095040
    %v6422 = vshrl.u32 %v6421, 23
    %v6423 = vsub.s32 %v6422, 127
    %v6424 = vand.u32 2147483647, %v3605
    %v6425 = vand.u32 %v6424, 8388607
    %v6426 = vor.u32 %v6425, 8388608
    %v6427 = vsub.s32 0, %v6426
    %v6428 = vadd.s32 %v6423, 1
    %vm6429 = vcmp.gt.s32.totalorder %v6428, 0
    %v6430 = vsel %vm6429, %v6428, 0
    %v6431 = vshrl.u32 %v6430, 5
    %v6432 = vand.u32 %v6430, 31
    %v6433 = vsub.s32 32, %v6432
    %v6434 = vshrl.u32 683565275, %v6433
    %v6435 = vshll.u32 683565275, %v6432
    %v6436 = vshrl.u32 2475754826, %v6433
    %v6437 = vor.u32 %v6435, %v6436
    %v6438 = vshll.u32 2475754826, %v6432
    %v6439 = vshrl.u32 2131351028, %v6433
    %v6440 = vor.u32 %v6438, %v6439
    %v6441 = vshll.u32 2131351028, %v6432
    %v6442 = vshrl.u32 2102212464, %v6433
    %v6443 = vor.u32 %v6441, %v6442
    %v6444 = vshll.u32 2102212464, %v6432
    %v6445 = vshrl.u32 920167782, %v6433
    %v6446 = vor.u32 %v6444, %v6445
    %v6447 = vshll.u32 920167782, %v6432
    %v6448 = vshrl.u32 1326507024, %v6433
    %v6449 = vor.u32 %v6447, %v6448
    %vm6450 = vcmp.lt.s32.totalorder %v6431, 1
    %vm6451 = vcmp.lt.s32.totalorder %v6431, 2
    %vm6452 = vcmp.lt.s32.totalorder %v6431, 3
    %vm6453 = vcmp.lt.s32.totalorder %v6431, 4
    %v6454 = vsel %vm6450, %v6434, %v6437
    %v6455 = vsel %vm6453, %v6443, 2102212464
    %v6456 = vsel %vm6452, %v6440, %v6455
    %v6457 = vsel %vm6451, %v6454, %v6456
    %v6458 = vsel %vm6450, %v6437, %v6440
    %v6459 = vsel %vm6453, %v6446, 920167782
    %v6460 = vsel %vm6452, %v6443, %v6459
    %v6461 = vsel %vm6451, %v6458, %v6460
    %v6462 = vsel %vm6450, %v6440, %v6443
    %v6463 = vsel %vm6453, %v6449, 1326507024
    %v6464 = vsel %vm6452, %v6446, %v6463
    %v6465 = vsel %vm6451, %v6462, %v6464
    %v6466 = vshll.u32 %v6426, 8
    %v6467 = vmul.u32.u64.compose %v6466, %v6465
    %v6468 = vextract.low.u32 %v6467
    %v6469 = vextract.high.u32 %v6467
    %v6470 = vmul.u32.u64.compose %v6466, %v6461
    %v6471 = vextract.low.u32 %v6470
    %v6472 = vextract.high.u32 %v6470
    %v6473 = vmul.u32 %v6466, %v6457
    %v6474 = vadd.s32 %v6469, %v6471
    %vm6475 = vc.u32 %v6469, %v6471
    %v6476 = vadd.s32 %v6472, 1
    %v6477 = vsel %vm6475, %v6476, %v6472
    %v6478 = vadd.s32 %v6473, %v6477
    %v6479 = vadd.s32 %v6478, 536870912
    %v6480 = vshrl.u32 %v6479, 30
    %v6481 = vshll.u32 %v6480, 30
    %v6482 = vsub.s32 %v6478, %v6481
    %vm6483 = vcmp.lt.s32.totalorder %v6482, 0
    %v6484 = vsub.s32 0, %v6482
    %v6485 = vsel %vm6483, %v6484, %v6482
    %v6486 = vclz %v6485
    %v6487 = vsub.s32 %v6486, 2
    %vm6488 = vcmp.gt.s32.totalorder 0, %v6487
    %v6489 = vsel %vm6488, 0, %v6487
    %v6490 = vsub.s32 32, %v6489
    %v6491 = vshll.u32 %v6482, %v6489
    %v6492 = vshrl.u32 %v6474, %v6490
    %v6493 = vor.u32 %v6491, %v6492
    %v6494 = vsub.s32 4294967266, %v6489
    %v6495 = vadd.s32 %v6494, 127
    %v6496 = vshll.u32 %v6495, 23
    %v6497 = vor.u32 4788187, %v6496
    %v6498 = vand.u32 2147483647, %v6497
    %v6500 = vcvt.s32.f32 %v6493
    %v6501 = vmul.f32 %v6500, %v6498
    %v6502 = vxor.u32 %v6501, 2147483648
    %v6503 = vsel %vm6420, %v6502, %v6501
    %v6504 = vsub.s32 4, %v6480
    %v6505 = vsel %vm6420, %v6504, %v6480
    %v6506 = vsel %vm6419, %v3605, %v6503
    %v6507 = vsel %vm6419, 0, %v6505
    %v6508 = vcosq.f32.pop %v6506
    %v6509 = vsinq.f32.pop %v6506
    %vm6510 = vweird.f32 %v3605
    %v6511 = vadd.s32 %v6507, 3
    %v6512 = vand.u32 %v6511, 3
    %vm6513 = vcmp.lt.s32.totalorder %v6512, 2
    %vm6514 = vcmp.eq.s32.totalorder %v6512, 0
    %v6515 = vxor.u32 %v6509, 2147483648
    %v6516 = vsel %vm6514, %v6508, %v6515
    %vm6517 = vcmp.eq.s32.totalorder %v6512, 2
    %v6518 = vxor.u32 %v6508, 2147483648
    %v6519 = vsel %vm6517, %v6518, %v6509
    %v6520 = vsel %vm6513, %v6516, %v6519
    %v6521 = vsel %vm6510, nan, %v6520
    %v6522 = vand.u32 2147483647, %v3606
    %vm6523 = vcmp.le.f32.partialorder %v6522, 0.7853982
    %vm6524 = vcmp.lt.s32.totalorder %v3606, 0
    %v6525 = vand.u32 %v3606, 2139095040
    %v6526 = vshrl.u32 %v6525, 23
    %v6527 = vsub.s32 %v6526, 127
    %v6528 = vand.u32 2147483647, %v3606
    %v6529 = vand.u32 %v6528, 8388607
    %v6530 = vor.u32 %v6529, 8388608
    %v6531 = vsub.s32 0, %v6530
    %v6532 = vadd.s32 %v6527, 1
    %vm6533 = vcmp.gt.s32.totalorder %v6532, 0
    %v6534 = vsel %vm6533, %v6532, 0
    %v6535 = vshrl.u32 %v6534, 5
    %v6536 = vand.u32 %v6534, 31
    %v6537 = vsub.s32 32, %v6536
    %v6538 = vshrl.u32 683565275, %v6537
    %v6539 = vshll.u32 683565275, %v6536
    %v6540 = vshrl.u32 2475754826, %v6537
    %v6541 = vor.u32 %v6539, %v6540
    %v6542 = vshll.u32 2475754826, %v6536
    %v6543 = vshrl.u32 2131351028, %v6537
    %v6544 = vor.u32 %v6542, %v6543
    %v6545 = vshll.u32 2131351028, %v6536
    %v6546 = vshrl.u32 2102212464, %v6537
    %v6547 = vor.u32 %v6545, %v6546
    %v6548 = vshll.u32 2102212464, %v6536
    %v6549 = vshrl.u32 920167782, %v6537
    %v6550 = vor.u32 %v6548, %v6549
    %v6551 = vshll.u32 920167782, %v6536
    %v6552 = vshrl.u32 1326507024, %v6537
    %v6553 = vor.u32 %v6551, %v6552
    %vm6554 = vcmp.lt.s32.totalorder %v6535, 1
    %vm6555 = vcmp.lt.s32.totalorder %v6535, 2
    %vm6556 = vcmp.lt.s32.totalorder %v6535, 3
    %vm6557 = vcmp.lt.s32.totalorder %v6535, 4
    %v6558 = vsel %vm6554, %v6538, %v6541
    %v6559 = vsel %vm6557, %v6547, 2102212464
    %v6560 = vsel %vm6556, %v6544, %v6559
    %v6561 = vsel %vm6555, %v6558, %v6560
    %v6562 = vsel %vm6554, %v6541, %v6544
    %v6563 = vsel %vm6557, %v6550, 920167782
    %v6564 = vsel %vm6556, %v6547, %v6563
    %v6565 = vsel %vm6555, %v6562, %v6564
    %v6566 = vsel %vm6554, %v6544, %v6547
    %v6567 = vsel %vm6557, %v6553, 1326507024
    %v6568 = vsel %vm6556, %v6550, %v6567
    %v6569 = vsel %vm6555, %v6566, %v6568
    %v6570 = vshll.u32 %v6530, 8
    %v6571 = vmul.u32.u64.compose %v6570, %v6569
    %v6572 = vextract.low.u32 %v6571
    %v6573 = vextract.high.u32 %v6571
    %v6574 = vmul.u32.u64.compose %v6570, %v6565
    %v6575 = vextract.low.u32 %v6574
    %v6576 = vextract.high.u32 %v6574
    %v6577 = vmul.u32 %v6570, %v6561
    %v6578 = vadd.s32 %v6573, %v6575
    %vm6579 = vc.u32 %v6573, %v6575
    %v6580 = vadd.s32 %v6576, 1
    %v6581 = vsel %vm6579, %v6580, %v6576
    %v6582 = vadd.s32 %v6577, %v6581
    %v6583 = vadd.s32 %v6582, 536870912
    %v6584 = vshrl.u32 %v6583, 30
    %v6585 = vshll.u32 %v6584, 30
    %v6586 = vsub.s32 %v6582, %v6585
    %vm6587 = vcmp.lt.s32.totalorder %v6586, 0
    %v6588 = vsub.s32 0, %v6586
    %v6589 = vsel %vm6587, %v6588, %v6586
    %v6590 = vclz %v6589
    %v6591 = vsub.s32 %v6590, 2
    %vm6592 = vcmp.gt.s32.totalorder 0, %v6591
    %v6593 = vsel %vm6592, 0, %v6591
    %v6594 = vsub.s32 32, %v6593
    %v6595 = vshll.u32 %v6586, %v6593
    %v6596 = vshrl.u32 %v6578, %v6594
    %v6597 = vor.u32 %v6595, %v6596
    %v6598 = vsub.s32 4294967266, %v6593
    %v6599 = vadd.s32 %v6598, 127
    %v6600 = vshll.u32 %v6599, 23
    %v6601 = vor.u32 4788187, %v6600
    %v6602 = vand.u32 2147483647, %v6601
    %v6604 = vcvt.s32.f32 %v6597
    %v6605 = vmul.f32 %v6604, %v6602
    %v6606 = vxor.u32 %v6605, 2147483648
    %v6607 = vsel %vm6524, %v6606, %v6605
    %v6608 = vsub.s32 4, %v6584
    %v6609 = vsel %vm6524, %v6608, %v6584
    %v6610 = vsel %vm6523, %v3606, %v6607
    %v6611 = vsel %vm6523, 0, %v6609
    %v6612 = vcosq.f32.pop %v6610
    %v6613 = vsinq.f32.pop %v6610
    %vm6614 = vweird.f32 %v3606
    %v6615 = vadd.s32 %v6611, 3
    %v6616 = vand.u32 %v6615, 3
    %vm6617 = vcmp.lt.s32.totalorder %v6616, 2
    %vm6618 = vcmp.eq.s32.totalorder %v6616, 0
    %v6619 = vxor.u32 %v6613, 2147483648
    %v6620 = vsel %vm6618, %v6612, %v6619
    %vm6621 = vcmp.eq.s32.totalorder %v6616, 2
    %v6622 = vxor.u32 %v6612, 2147483648
    %v6623 = vsel %vm6621, %v6622, %v6613
    %v6624 = vsel %vm6617, %v6620, %v6623
    %v6625 = vsel %vm6614, nan, %v6624
    %v6626 = vand.u32 2147483647, %v3607
    %vm6627 = vcmp.le.f32.partialorder %v6626, 0.7853982
    %vm6628 = vcmp.lt.s32.totalorder %v3607, 0
    %v6629 = vand.u32 %v3607, 2139095040
    %v6630 = vshrl.u32 %v6629, 23
    %v6631 = vsub.s32 %v6630, 127
    %v6632 = vand.u32 2147483647, %v3607
    %v6633 = vand.u32 %v6632, 8388607
    %v6634 = vor.u32 %v6633, 8388608
    %v6635 = vsub.s32 0, %v6634
    %v6636 = vadd.s32 %v6631, 1
    %vm6637 = vcmp.gt.s32.totalorder %v6636, 0
    %v6638 = vsel %vm6637, %v6636, 0
    %v6639 = vshrl.u32 %v6638, 5
    %v6640 = vand.u32 %v6638, 31
    %v6641 = vsub.s32 32, %v6640
    %v6642 = vshrl.u32 683565275, %v6641
    %v6643 = vshll.u32 683565275, %v6640
    %v6644 = vshrl.u32 2475754826, %v6641
    %v6645 = vor.u32 %v6643, %v6644
    %v6646 = vshll.u32 2475754826, %v6640
    %v6647 = vshrl.u32 2131351028, %v6641
    %v6648 = vor.u32 %v6646, %v6647
    %v6649 = vshll.u32 2131351028, %v6640
    %v6650 = vshrl.u32 2102212464, %v6641
    %v6651 = vor.u32 %v6649, %v6650
    %v6652 = vshll.u32 2102212464, %v6640
    %v6653 = vshrl.u32 920167782, %v6641
    %v6654 = vor.u32 %v6652, %v6653
    %v6655 = vshll.u32 920167782, %v6640
    %v6656 = vshrl.u32 1326507024, %v6641
    %v6657 = vor.u32 %v6655, %v6656
    %vm6658 = vcmp.lt.s32.totalorder %v6639, 1
    %vm6659 = vcmp.lt.s32.totalorder %v6639, 2
    %vm6660 = vcmp.lt.s32.totalorder %v6639, 3
    %vm6661 = vcmp.lt.s32.totalorder %v6639, 4
    %v6662 = vsel %vm6658, %v6642, %v6645
    %v6663 = vsel %vm6661, %v6651, 2102212464
    %v6664 = vsel %vm6660, %v6648, %v6663
    %v6665 = vsel %vm6659, %v6662, %v6664
    %v6666 = vsel %vm6658, %v6645, %v6648
    %v6667 = vsel %vm6661, %v6654, 920167782
    %v6668 = vsel %vm6660, %v6651, %v6667
    %v6669 = vsel %vm6659, %v6666, %v6668
    %v6670 = vsel %vm6658, %v6648, %v6651
    %v6671 = vsel %vm6661, %v6657, 1326507024
    %v6672 = vsel %vm6660, %v6654, %v6671
    %v6673 = vsel %vm6659, %v6670, %v6672
    %v6674 = vshll.u32 %v6634, 8
    %v6675 = vmul.u32.u64.compose %v6674, %v6673
    %v6676 = vextract.low.u32 %v6675
    %v6677 = vextract.high.u32 %v6675
    %v6678 = vmul.u32.u64.compose %v6674, %v6669
    %v6679 = vextract.low.u32 %v6678
    %v6680 = vextract.high.u32 %v6678
    %v6681 = vmul.u32 %v6674, %v6665
    %v6682 = vadd.s32 %v6677, %v6679
    %vm6683 = vc.u32 %v6677, %v6679
    %v6684 = vadd.s32 %v6680, 1
    %v6685 = vsel %vm6683, %v6684, %v6680
    %v6686 = vadd.s32 %v6681, %v6685
    %v6687 = vadd.s32 %v6686, 536870912
    %v6688 = vshrl.u32 %v6687, 30
    %v6689 = vshll.u32 %v6688, 30
    %v6690 = vsub.s32 %v6686, %v6689
    %vm6691 = vcmp.lt.s32.totalorder %v6690, 0
    %v6692 = vsub.s32 0, %v6690
    %v6693 = vsel %vm6691, %v6692, %v6690
    %v6694 = vclz %v6693
    %v6695 = vsub.s32 %v6694, 2
    %vm6696 = vcmp.gt.s32.totalorder 0, %v6695
    %v6697 = vsel %vm6696, 0, %v6695
    %v6698 = vsub.s32 32, %v6697
    %v6699 = vshll.u32 %v6690, %v6697
    %v6700 = vshrl.u32 %v6682, %v6698
    %v6701 = vor.u32 %v6699, %v6700
    %v6702 = vsub.s32 4294967266, %v6697
    %v6703 = vadd.s32 %v6702, 127
    %v6704 = vshll.u32 %v6703, 23
    %v6705 = vor.u32 4788187, %v6704
    %v6706 = vand.u32 2147483647, %v6705
    %v6708 = vcvt.s32.f32 %v6701
    %v6709 = vmul.f32 %v6708, %v6706
    %v6710 = vxor.u32 %v6709, 2147483648
    %v6711 = vsel %vm6628, %v6710, %v6709
    %v6712 = vsub.s32 4, %v6688
    %v6713 = vsel %vm6628, %v6712, %v6688
    %v6714 = vsel %vm6627, %v3607, %v6711
    %v6715 = vsel %vm6627, 0, %v6713
    %v6716 = vcosq.f32.pop %v6714
    %v6717 = vsinq.f32.pop %v6714
    %vm6718 = vweird.f32 %v3607
    %v6719 = vadd.s32 %v6715, 3
    %v6720 = vand.u32 %v6719, 3
    %vm6721 = vcmp.lt.s32.totalorder %v6720, 2
    %vm6722 = vcmp.eq.s32.totalorder %v6720, 0
    %v6723 = vxor.u32 %v6717, 2147483648
    %v6724 = vsel %vm6722, %v6716, %v6723
    %vm6725 = vcmp.eq.s32.totalorder %v6720, 2
    %v6726 = vxor.u32 %v6716, 2147483648
    %v6727 = vsel %vm6725, %v6726, %v6717
    %v6728 = vsel %vm6721, %v6724, %v6727
    %v6729 = vsel %vm6718, nan, %v6728
    %v6730 = vand.u32 2147483647, %v3608
    %vm6731 = vcmp.le.f32.partialorder %v6730, 0.7853982
    %vm6732 = vcmp.lt.s32.totalorder %v3608, 0
    %v6733 = vand.u32 %v3608, 2139095040
    %v6734 = vshrl.u32 %v6733, 23
    %v6735 = vsub.s32 %v6734, 127
    %v6736 = vand.u32 2147483647, %v3608
    %v6737 = vand.u32 %v6736, 8388607
    %v6738 = vor.u32 %v6737, 8388608
    %v6739 = vsub.s32 0, %v6738
    %v6740 = vadd.s32 %v6735, 1
    %vm6741 = vcmp.gt.s32.totalorder %v6740, 0
    %v6742 = vsel %vm6741, %v6740, 0
    %v6743 = vshrl.u32 %v6742, 5
    %v6744 = vand.u32 %v6742, 31
    %v6745 = vsub.s32 32, %v6744
    %v6746 = vshrl.u32 683565275, %v6745
    %v6747 = vshll.u32 683565275, %v6744
    %v6748 = vshrl.u32 2475754826, %v6745
    %v6749 = vor.u32 %v6747, %v6748
    %v6750 = vshll.u32 2475754826, %v6744
    %v6751 = vshrl.u32 2131351028, %v6745
    %v6752 = vor.u32 %v6750, %v6751
    %v6753 = vshll.u32 2131351028, %v6744
    %v6754 = vshrl.u32 2102212464, %v6745
    %v6755 = vor.u32 %v6753, %v6754
    %v6756 = vshll.u32 2102212464, %v6744
    %v6757 = vshrl.u32 920167782, %v6745
    %v6758 = vor.u32 %v6756, %v6757
    %v6759 = vshll.u32 920167782, %v6744
    %v6760 = vshrl.u32 1326507024, %v6745
    %v6761 = vor.u32 %v6759, %v6760
    %vm6762 = vcmp.lt.s32.totalorder %v6743, 1
    %vm6763 = vcmp.lt.s32.totalorder %v6743, 2
    %vm6764 = vcmp.lt.s32.totalorder %v6743, 3
    %vm6765 = vcmp.lt.s32.totalorder %v6743, 4
    %v6766 = vsel %vm6762, %v6746, %v6749
    %v6767 = vsel %vm6765, %v6755, 2102212464
    %v6768 = vsel %vm6764, %v6752, %v6767
    %v6769 = vsel %vm6763, %v6766, %v6768
    %v6770 = vsel %vm6762, %v6749, %v6752
    %v6771 = vsel %vm6765, %v6758, 920167782
    %v6772 = vsel %vm6764, %v6755, %v6771
    %v6773 = vsel %vm6763, %v6770, %v6772
    %v6774 = vsel %vm6762, %v6752, %v6755
    %v6775 = vsel %vm6765, %v6761, 1326507024
    %v6776 = vsel %vm6764, %v6758, %v6775
    %v6777 = vsel %vm6763, %v6774, %v6776
    %v6778 = vshll.u32 %v6738, 8
    %v6779 = vmul.u32.u64.compose %v6778, %v6777
    %v6780 = vextract.low.u32 %v6779
    %v6781 = vextract.high.u32 %v6779
    %v6782 = vmul.u32.u64.compose %v6778, %v6773
    %v6783 = vextract.low.u32 %v6782
    %v6784 = vextract.high.u32 %v6782
    %v6785 = vmul.u32 %v6778, %v6769
    %v6786 = vadd.s32 %v6781, %v6783
    %vm6787 = vc.u32 %v6781, %v6783
    %v6788 = vadd.s32 %v6784, 1
    %v6789 = vsel %vm6787, %v6788, %v6784
    %v6790 = vadd.s32 %v6785, %v6789
    %v6791 = vadd.s32 %v6790, 536870912
    %v6792 = vshrl.u32 %v6791, 30
    %v6793 = vshll.u32 %v6792, 30
    %v6794 = vsub.s32 %v6790, %v6793
    %vm6795 = vcmp.lt.s32.totalorder %v6794, 0
    %v6796 = vsub.s32 0, %v6794
    %v6797 = vsel %vm6795, %v6796, %v6794
    %v6798 = vclz %v6797
    %v6799 = vsub.s32 %v6798, 2
    %vm6800 = vcmp.gt.s32.totalorder 0, %v6799
    %v6801 = vsel %vm6800, 0, %v6799
    %v6802 = vsub.s32 32, %v6801
    %v6803 = vshll.u32 %v6794, %v6801
    %v6804 = vshrl.u32 %v6786, %v6802
    %v6805 = vor.u32 %v6803, %v6804
    %v6806 = vsub.s32 4294967266, %v6801
    %v6807 = vadd.s32 %v6806, 127
    %v6808 = vshll.u32 %v6807, 23
    %v6809 = vor.u32 4788187, %v6808
    %v6810 = vand.u32 2147483647, %v6809
    %v6812 = vcvt.s32.f32 %v6805
    %v6813 = vmul.f32 %v6812, %v6810
    %v6814 = vxor.u32 %v6813, 2147483648
    %v6815 = vsel %vm6732, %v6814, %v6813
    %v6816 = vsub.s32 4, %v6792
    %v6817 = vsel %vm6732, %v6816, %v6792
    %v6818 = vsel %vm6731, %v3608, %v6815
    %v6819 = vsel %vm6731, 0, %v6817
    %v6820 = vcosq.f32.pop %v6818
    %v6821 = vsinq.f32.pop %v6818
    %vm6822 = vweird.f32 %v3608
    %v6823 = vadd.s32 %v6819, 3
    %v6824 = vand.u32 %v6823, 3
    %vm6825 = vcmp.lt.s32.totalorder %v6824, 2
    %vm6826 = vcmp.eq.s32.totalorder %v6824, 0
    %v6827 = vxor.u32 %v6821, 2147483648
    %v6828 = vsel %vm6826, %v6820, %v6827
    %vm6829 = vcmp.eq.s32.totalorder %v6824, 2
    %v6830 = vxor.u32 %v6820, 2147483648
    %v6831 = vsel %vm6829, %v6830, %v6821
    %v6832 = vsel %vm6825, %v6828, %v6831
    %v6833 = vsel %vm6822, nan, %v6832
    %v6834 = vand.u32 2147483647, %v3609
    %vm6835 = vcmp.le.f32.partialorder %v6834, 0.7853982
    %vm6836 = vcmp.lt.s32.totalorder %v3609, 0
    %v6837 = vand.u32 %v3609, 2139095040
    %v6838 = vshrl.u32 %v6837, 23
    %v6839 = vsub.s32 %v6838, 127
    %v6840 = vand.u32 2147483647, %v3609
    %v6841 = vand.u32 %v6840, 8388607
    %v6842 = vor.u32 %v6841, 8388608
    %v6843 = vsub.s32 0, %v6842
    %v6844 = vadd.s32 %v6839, 1
    %vm6845 = vcmp.gt.s32.totalorder %v6844, 0
    %v6846 = vsel %vm6845, %v6844, 0
    %v6847 = vshrl.u32 %v6846, 5
    %v6848 = vand.u32 %v6846, 31
    %v6849 = vsub.s32 32, %v6848
    %v6850 = vshrl.u32 683565275, %v6849
    %v6851 = vshll.u32 683565275, %v6848
    %v6852 = vshrl.u32 2475754826, %v6849
    %v6853 = vor.u32 %v6851, %v6852
    %v6854 = vshll.u32 2475754826, %v6848
    %v6855 = vshrl.u32 2131351028, %v6849
    %v6856 = vor.u32 %v6854, %v6855
    %v6857 = vshll.u32 2131351028, %v6848
    %v6858 = vshrl.u32 2102212464, %v6849
    %v6859 = vor.u32 %v6857, %v6858
    %v6860 = vshll.u32 2102212464, %v6848
    %v6861 = vshrl.u32 920167782, %v6849
    %v6862 = vor.u32 %v6860, %v6861
    %v6863 = vshll.u32 920167782, %v6848
    %v6864 = vshrl.u32 1326507024, %v6849
    %v6865 = vor.u32 %v6863, %v6864
    %vm6866 = vcmp.lt.s32.totalorder %v6847, 1
    %vm6867 = vcmp.lt.s32.totalorder %v6847, 2
    %vm6868 = vcmp.lt.s32.totalorder %v6847, 3
    %vm6869 = vcmp.lt.s32.totalorder %v6847, 4
    %v6870 = vsel %vm6866, %v6850, %v6853
    %v6871 = vsel %vm6869, %v6859, 2102212464
    %v6872 = vsel %vm6868, %v6856, %v6871
    %v6873 = vsel %vm6867, %v6870, %v6872
    %v6874 = vsel %vm6866, %v6853, %v6856
    %v6875 = vsel %vm6869, %v6862, 920167782
    %v6876 = vsel %vm6868, %v6859, %v6875
    %v6877 = vsel %vm6867, %v6874, %v6876
    %v6878 = vsel %vm6866, %v6856, %v6859
    %v6879 = vsel %vm6869, %v6865, 1326507024
    %v6880 = vsel %vm6868, %v6862, %v6879
    %v6881 = vsel %vm6867, %v6878, %v6880
    %v6882 = vshll.u32 %v6842, 8
    %v6883 = vmul.u32.u64.compose %v6882, %v6881
    %v6884 = vextract.low.u32 %v6883
    %v6885 = vextract.high.u32 %v6883
    %v6886 = vmul.u32.u64.compose %v6882, %v6877
    %v6887 = vextract.low.u32 %v6886
    %v6888 = vextract.high.u32 %v6886
    %v6889 = vmul.u32 %v6882, %v6873
    %v6890 = vadd.s32 %v6885, %v6887
    %vm6891 = vc.u32 %v6885, %v6887
    %v6892 = vadd.s32 %v6888, 1
    %v6893 = vsel %vm6891, %v6892, %v6888
    %v6894 = vadd.s32 %v6889, %v6893
    %v6895 = vadd.s32 %v6894, 536870912
    %v6896 = vshrl.u32 %v6895, 30
    %v6897 = vshll.u32 %v6896, 30
    %v6898 = vsub.s32 %v6894, %v6897
    %vm6899 = vcmp.lt.s32.totalorder %v6898, 0
    %v6900 = vsub.s32 0, %v6898
    %v6901 = vsel %vm6899, %v6900, %v6898
    %v6902 = vclz %v6901
    %v6903 = vsub.s32 %v6902, 2
    %vm6904 = vcmp.gt.s32.totalorder 0, %v6903
    %v6905 = vsel %vm6904, 0, %v6903
    %v6906 = vsub.s32 32, %v6905
    %v6907 = vshll.u32 %v6898, %v6905
    %v6908 = vshrl.u32 %v6890, %v6906
    %v6909 = vor.u32 %v6907, %v6908
    %v6910 = vsub.s32 4294967266, %v6905
    %v6911 = vadd.s32 %v6910, 127
    %v6912 = vshll.u32 %v6911, 23
    %v6913 = vor.u32 4788187, %v6912
    %v6914 = vand.u32 2147483647, %v6913
    %v6916 = vcvt.s32.f32 %v6909
    %v6917 = vmul.f32 %v6916, %v6914
    %v6918 = vxor.u32 %v6917, 2147483648
    %v6919 = vsel %vm6836, %v6918, %v6917
    %v6920 = vsub.s32 4, %v6896
    %v6921 = vsel %vm6836, %v6920, %v6896
    %v6922 = vsel %vm6835, %v3609, %v6919
    %v6923 = vsel %vm6835, 0, %v6921
    %v6924 = vcosq.f32.pop %v6922
    %v6925 = vsinq.f32.pop %v6922
    %vm6926 = vweird.f32 %v3609
    %v6927 = vadd.s32 %v6923, 3
    %v6928 = vand.u32 %v6927, 3
    %vm6929 = vcmp.lt.s32.totalorder %v6928, 2
    %vm6930 = vcmp.eq.s32.totalorder %v6928, 0
    %v6931 = vxor.u32 %v6925, 2147483648
    %v6932 = vsel %vm6930, %v6924, %v6931
    %vm6933 = vcmp.eq.s32.totalorder %v6928, 2
    %v6934 = vxor.u32 %v6924, 2147483648
    %v6935 = vsel %vm6933, %v6934, %v6925
    %v6936 = vsel %vm6929, %v6932, %v6935
    %v6937 = vsel %vm6926, nan, %v6936
    %v6938 = vmul.f32 %v106, %v117
    %v6939 = vmul.f32 %v107, %v117
    %v6940 = vmul.f32 %v108, %v117
    %v6941 = vmul.f32 %v109, %v117
    %v6942 = vmul.f32 %v110, %v117
    %v6943 = vmul.f32 %v111, %v117
    %v6944 = vmul.f32 %v112, %v117
    %v6945 = vmul.f32 %v113, %v117
    %v6946 = vmul.f32 %v106, %v122
    %v6947 = vmul.f32 %v107, %v122
    %v6948 = vmul.f32 %v108, %v122
    %v6949 = vmul.f32 %v109, %v122
    %v6950 = vmul.f32 %v110, %v122
    %v6951 = vmul.f32 %v111, %v122
    %v6952 = vmul.f32 %v112, %v122
    %v6953 = vmul.f32 %v113, %v122
    %v6954 = vmul.f32 %v106, %v127
    %v6955 = vmul.f32 %v107, %v127
    %v6956 = vmul.f32 %v108, %v127
    %v6957 = vmul.f32 %v109, %v127
    %v6958 = vmul.f32 %v110, %v127
    %v6959 = vmul.f32 %v111, %v127
    %v6960 = vmul.f32 %v112, %v127
    %v6961 = vmul.f32 %v113, %v127
    %v6962 = vmul.f32 %v106, %v132
    %v6963 = vmul.f32 %v107, %v132
    %v6964 = vmul.f32 %v108, %v132
    %v6965 = vmul.f32 %v109, %v132
    %v6966 = vmul.f32 %v110, %v132
    %v6967 = vmul.f32 %v111, %v132
    %v6968 = vmul.f32 %v112, %v132
    %v6969 = vmul.f32 %v113, %v132
    %v6970 = vadd.f32 %v6938, %v169
    %v6971 = vadd.f32 %v6939, %v169
    %v6972 = vadd.f32 %v6940, %v169
    %v6973 = vadd.f32 %v6941, %v169
    %v6974 = vadd.f32 %v6942, %v169
    %v6975 = vadd.f32 %v6943, %v169
    %v6976 = vadd.f32 %v6944, %v169
    %v6977 = vadd.f32 %v6945, %v169
    %v6978 = vadd.f32 %v6946, %v174
    %v6979 = vadd.f32 %v6947, %v174
    %v6980 = vadd.f32 %v6948, %v174
    %v6981 = vadd.f32 %v6949, %v174
    %v6982 = vadd.f32 %v6950, %v174
    %v6983 = vadd.f32 %v6951, %v174
    %v6984 = vadd.f32 %v6952, %v174
    %v6985 = vadd.f32 %v6953, %v174
    %v6986 = vadd.f32 %v6954, %v179
    %v6987 = vadd.f32 %v6955, %v179
    %v6988 = vadd.f32 %v6956, %v179
    %v6989 = vadd.f32 %v6957, %v179
    %v6990 = vadd.f32 %v6958, %v179
    %v6991 = vadd.f32 %v6959, %v179
    %v6992 = vadd.f32 %v6960, %v179
    %v6993 = vadd.f32 %v6961, %v179
    %v6994 = vadd.f32 %v6962, %v184
    %v6995 = vadd.f32 %v6963, %v184
    %v6996 = vadd.f32 %v6964, %v184
    %v6997 = vadd.f32 %v6965, %v184
    %v6998 = vadd.f32 %v6966, %v184
    %v6999 = vadd.f32 %v6967, %v184
    %v7000 = vadd.f32 %v6968, %v184
    %v7001 = vadd.f32 %v6969, %v184
    %v7002 = vand.u32 2147483647, %v6970
    %vm7003 = vcmp.le.f32.partialorder %v7002, 0.7853982
    %vm7004 = vcmp.lt.s32.totalorder %v6970, 0
    %v7005 = vand.u32 %v6970, 2139095040
    %v7006 = vshrl.u32 %v7005, 23
    %v7007 = vsub.s32 %v7006, 127
    %v7008 = vand.u32 2147483647, %v6970
    %v7009 = vand.u32 %v7008, 8388607
    %v7010 = vor.u32 %v7009, 8388608
    %v7011 = vsub.s32 0, %v7010
    %v7012 = vadd.s32 %v7007, 1
    %vm7013 = vcmp.gt.s32.totalorder %v7012, 0
    %v7014 = vsel %vm7013, %v7012, 0
    %v7015 = vshrl.u32 %v7014, 5
    %v7016 = vand.u32 %v7014, 31
    %v7017 = vsub.s32 32, %v7016
    %v7018 = vshrl.u32 683565275, %v7017
    %v7019 = vshll.u32 683565275, %v7016
    %v7020 = vshrl.u32 2475754826, %v7017
    %v7021 = vor.u32 %v7019, %v7020
    %v7022 = vshll.u32 2475754826, %v7016
    %v7023 = vshrl.u32 2131351028, %v7017
    %v7024 = vor.u32 %v7022, %v7023
    %v7025 = vshll.u32 2131351028, %v7016
    %v7026 = vshrl.u32 2102212464, %v7017
    %v7027 = vor.u32 %v7025, %v7026
    %v7028 = vshll.u32 2102212464, %v7016
    %v7029 = vshrl.u32 920167782, %v7017
    %v7030 = vor.u32 %v7028, %v7029
    %v7031 = vshll.u32 920167782, %v7016
    %v7032 = vshrl.u32 1326507024, %v7017
    %v7033 = vor.u32 %v7031, %v7032
    %vm7034 = vcmp.lt.s32.totalorder %v7015, 1
    %vm7035 = vcmp.lt.s32.totalorder %v7015, 2
    %vm7036 = vcmp.lt.s32.totalorder %v7015, 3
    %vm7037 = vcmp.lt.s32.totalorder %v7015, 4
    %v7038 = vsel %vm7034, %v7018, %v7021
    %v7039 = vsel %vm7037, %v7027, 2102212464
    %v7040 = vsel %vm7036, %v7024, %v7039
    %v7041 = vsel %vm7035, %v7038, %v7040
    %v7042 = vsel %vm7034, %v7021, %v7024
    %v7043 = vsel %vm7037, %v7030, 920167782
    %v7044 = vsel %vm7036, %v7027, %v7043
    %v7045 = vsel %vm7035, %v7042, %v7044
    %v7046 = vsel %vm7034, %v7024, %v7027
    %v7047 = vsel %vm7037, %v7033, 1326507024
    %v7048 = vsel %vm7036, %v7030, %v7047
    %v7049 = vsel %vm7035, %v7046, %v7048
    %v7050 = vshll.u32 %v7010, 8
    %v7051 = vmul.u32.u64.compose %v7050, %v7049
    %v7052 = vextract.low.u32 %v7051
    %v7053 = vextract.high.u32 %v7051
    %v7054 = vmul.u32.u64.compose %v7050, %v7045
    %v7055 = vextract.low.u32 %v7054
    %v7056 = vextract.high.u32 %v7054
    %v7057 = vmul.u32 %v7050, %v7041
    %v7058 = vadd.s32 %v7053, %v7055
    %vm7059 = vc.u32 %v7053, %v7055
    %v7060 = vadd.s32 %v7056, 1
    %v7061 = vsel %vm7059, %v7060, %v7056
    %v7062 = vadd.s32 %v7057, %v7061
    %v7063 = vadd.s32 %v7062, 536870912
    %v7064 = vshrl.u32 %v7063, 30
    %v7065 = vshll.u32 %v7064, 30
    %v7066 = vsub.s32 %v7062, %v7065
    %vm7067 = vcmp.lt.s32.totalorder %v7066, 0
    %v7068 = vsub.s32 0, %v7066
    %v7069 = vsel %vm7067, %v7068, %v7066
    %v7070 = vclz %v7069
    %v7071 = vsub.s32 %v7070, 2
    %vm7072 = vcmp.gt.s32.totalorder 0, %v7071
    %v7073 = vsel %vm7072, 0, %v7071
    %v7074 = vsub.s32 32, %v7073
    %v7075 = vshll.u32 %v7066, %v7073
    %v7076 = vshrl.u32 %v7058, %v7074
    %v7077 = vor.u32 %v7075, %v7076
    %v7078 = vsub.s32 4294967266, %v7073
    %v7079 = vadd.s32 %v7078, 127
    %v7080 = vshll.u32 %v7079, 23
    %v7081 = vor.u32 4788187, %v7080
    %v7082 = vand.u32 2147483647, %v7081
    %v7084 = vcvt.s32.f32 %v7077
    %v7085 = vmul.f32 %v7084, %v7082
    %v7086 = vxor.u32 %v7085, 2147483648
    %v7087 = vsel %vm7004, %v7086, %v7085
    %v7088 = vsub.s32 4, %v7064
    %v7089 = vsel %vm7004, %v7088, %v7064
    %v7090 = vsel %vm7003, %v6970, %v7087
    %v7091 = vsel %vm7003, 0, %v7089
    %v7092 = vcosq.f32.pop %v7090
    %v7093 = vsinq.f32.pop %v7090
    %vm7094 = vweird.f32 %v6970
    %v7095 = vadd.s32 %v7091, 3
    %v7096 = vand.u32 %v7095, 3
    %vm7097 = vcmp.lt.s32.totalorder %v7096, 2
    %vm7098 = vcmp.eq.s32.totalorder %v7096, 0
    %v7099 = vxor.u32 %v7093, 2147483648
    %v7100 = vsel %vm7098, %v7092, %v7099
    %vm7101 = vcmp.eq.s32.totalorder %v7096, 2
    %v7102 = vxor.u32 %v7092, 2147483648
    %v7103 = vsel %vm7101, %v7102, %v7093
    %v7104 = vsel %vm7097, %v7100, %v7103
    %v7105 = vsel %vm7094, nan, %v7104
    %v7106 = vand.u32 2147483647, %v6971
    %vm7107 = vcmp.le.f32.partialorder %v7106, 0.7853982
    %vm7108 = vcmp.lt.s32.totalorder %v6971, 0
    %v7109 = vand.u32 %v6971, 2139095040
    %v7110 = vshrl.u32 %v7109, 23
    %v7111 = vsub.s32 %v7110, 127
    %v7112 = vand.u32 2147483647, %v6971
    %v7113 = vand.u32 %v7112, 8388607
    %v7114 = vor.u32 %v7113, 8388608
    %v7115 = vsub.s32 0, %v7114
    %v7116 = vadd.s32 %v7111, 1
    %vm7117 = vcmp.gt.s32.totalorder %v7116, 0
    %v7118 = vsel %vm7117, %v7116, 0
    %v7119 = vshrl.u32 %v7118, 5
    %v7120 = vand.u32 %v7118, 31
    %v7121 = vsub.s32 32, %v7120
    %v7122 = vshrl.u32 683565275, %v7121
    %v7123 = vshll.u32 683565275, %v7120
    %v7124 = vshrl.u32 2475754826, %v7121
    %v7125 = vor.u32 %v7123, %v7124
    %v7126 = vshll.u32 2475754826, %v7120
    %v7127 = vshrl.u32 2131351028, %v7121
    %v7128 = vor.u32 %v7126, %v7127
    %v7129 = vshll.u32 2131351028, %v7120
    %v7130 = vshrl.u32 2102212464, %v7121
    %v7131 = vor.u32 %v7129, %v7130
    %v7132 = vshll.u32 2102212464, %v7120
    %v7133 = vshrl.u32 920167782, %v7121
    %v7134 = vor.u32 %v7132, %v7133
    %v7135 = vshll.u32 920167782, %v7120
    %v7136 = vshrl.u32 1326507024, %v7121
    %v7137 = vor.u32 %v7135, %v7136
    %vm7138 = vcmp.lt.s32.totalorder %v7119, 1
    %vm7139 = vcmp.lt.s32.totalorder %v7119, 2
    %vm7140 = vcmp.lt.s32.totalorder %v7119, 3
    %vm7141 = vcmp.lt.s32.totalorder %v7119, 4
    %v7142 = vsel %vm7138, %v7122, %v7125
    %v7143 = vsel %vm7141, %v7131, 2102212464
    %v7144 = vsel %vm7140, %v7128, %v7143
    %v7145 = vsel %vm7139, %v7142, %v7144
    %v7146 = vsel %vm7138, %v7125, %v7128
    %v7147 = vsel %vm7141, %v7134, 920167782
    %v7148 = vsel %vm7140, %v7131, %v7147
    %v7149 = vsel %vm7139, %v7146, %v7148
    %v7150 = vsel %vm7138, %v7128, %v7131
    %v7151 = vsel %vm7141, %v7137, 1326507024
    %v7152 = vsel %vm7140, %v7134, %v7151
    %v7153 = vsel %vm7139, %v7150, %v7152
    %v7154 = vshll.u32 %v7114, 8
    %v7155 = vmul.u32.u64.compose %v7154, %v7153
    %v7156 = vextract.low.u32 %v7155
    %v7157 = vextract.high.u32 %v7155
    %v7158 = vmul.u32.u64.compose %v7154, %v7149
    %v7159 = vextract.low.u32 %v7158
    %v7160 = vextract.high.u32 %v7158
    %v7161 = vmul.u32 %v7154, %v7145
    %v7162 = vadd.s32 %v7157, %v7159
    %vm7163 = vc.u32 %v7157, %v7159
    %v7164 = vadd.s32 %v7160, 1
    %v7165 = vsel %vm7163, %v7164, %v7160
    %v7166 = vadd.s32 %v7161, %v7165
    %v7167 = vadd.s32 %v7166, 536870912
    %v7168 = vshrl.u32 %v7167, 30
    %v7169 = vshll.u32 %v7168, 30
    %v7170 = vsub.s32 %v7166, %v7169
    %vm7171 = vcmp.lt.s32.totalorder %v7170, 0
    %v7172 = vsub.s32 0, %v7170
    %v7173 = vsel %vm7171, %v7172, %v7170
    %v7174 = vclz %v7173
    %v7175 = vsub.s32 %v7174, 2
    %vm7176 = vcmp.gt.s32.totalorder 0, %v7175
    %v7177 = vsel %vm7176, 0, %v7175
    %v7178 = vsub.s32 32, %v7177
    %v7179 = vshll.u32 %v7170, %v7177
    %v7180 = vshrl.u32 %v7162, %v7178
    %v7181 = vor.u32 %v7179, %v7180
    %v7182 = vsub.s32 4294967266, %v7177
    %v7183 = vadd.s32 %v7182, 127
    %v7184 = vshll.u32 %v7183, 23
    %v7185 = vor.u32 4788187, %v7184
    %v7186 = vand.u32 2147483647, %v7185
    %v7188 = vcvt.s32.f32 %v7181
    %v7189 = vmul.f32 %v7188, %v7186
    %v7190 = vxor.u32 %v7189, 2147483648
    %v7191 = vsel %vm7108, %v7190, %v7189
    %v7192 = vsub.s32 4, %v7168
    %v7193 = vsel %vm7108, %v7192, %v7168
    %v7194 = vsel %vm7107, %v6971, %v7191
    %v7195 = vsel %vm7107, 0, %v7193
    %v7196 = vcosq.f32.pop %v7194
    %v7197 = vsinq.f32.pop %v7194
    %vm7198 = vweird.f32 %v6971
    %v7199 = vadd.s32 %v7195, 3
    %v7200 = vand.u32 %v7199, 3
    %vm7201 = vcmp.lt.s32.totalorder %v7200, 2
    %vm7202 = vcmp.eq.s32.totalorder %v7200, 0
    %v7203 = vxor.u32 %v7197, 2147483648
    %v7204 = vsel %vm7202, %v7196, %v7203
    %vm7205 = vcmp.eq.s32.totalorder %v7200, 2
    %v7206 = vxor.u32 %v7196, 2147483648
    %v7207 = vsel %vm7205, %v7206, %v7197
    %v7208 = vsel %vm7201, %v7204, %v7207
    %v7209 = vsel %vm7198, nan, %v7208
    %v7210 = vand.u32 2147483647, %v6972
    %vm7211 = vcmp.le.f32.partialorder %v7210, 0.7853982
    %vm7212 = vcmp.lt.s32.totalorder %v6972, 0
    %v7213 = vand.u32 %v6972, 2139095040
    %v7214 = vshrl.u32 %v7213, 23
    %v7215 = vsub.s32 %v7214, 127
    %v7216 = vand.u32 2147483647, %v6972
    %v7217 = vand.u32 %v7216, 8388607
    %v7218 = vor.u32 %v7217, 8388608
    %v7219 = vsub.s32 0, %v7218
    %v7220 = vadd.s32 %v7215, 1
    %vm7221 = vcmp.gt.s32.totalorder %v7220, 0
    %v7222 = vsel %vm7221, %v7220, 0
    %v7223 = vshrl.u32 %v7222, 5
    %v7224 = vand.u32 %v7222, 31
    %v7225 = vsub.s32 32, %v7224
    %v7226 = vshrl.u32 683565275, %v7225
    %v7227 = vshll.u32 683565275, %v7224
    %v7228 = vshrl.u32 2475754826, %v7225
    %v7229 = vor.u32 %v7227, %v7228
    %v7230 = vshll.u32 2475754826, %v7224
    %v7231 = vshrl.u32 2131351028, %v7225
    %v7232 = vor.u32 %v7230, %v7231
    %v7233 = vshll.u32 2131351028, %v7224
    %v7234 = vshrl.u32 2102212464, %v7225
    %v7235 = vor.u32 %v7233, %v7234
    %v7236 = vshll.u32 2102212464, %v7224
    %v7237 = vshrl.u32 920167782, %v7225
    %v7238 = vor.u32 %v7236, %v7237
    %v7239 = vshll.u32 920167782, %v7224
    %v7240 = vshrl.u32 1326507024, %v7225
    %v7241 = vor.u32 %v7239, %v7240
    %vm7242 = vcmp.lt.s32.totalorder %v7223, 1
    %vm7243 = vcmp.lt.s32.totalorder %v7223, 2
    %vm7244 = vcmp.lt.s32.totalorder %v7223, 3
    %vm7245 = vcmp.lt.s32.totalorder %v7223, 4
    %v7246 = vsel %vm7242, %v7226, %v7229
    %v7247 = vsel %vm7245, %v7235, 2102212464
    %v7248 = vsel %vm7244, %v7232, %v7247
    %v7249 = vsel %vm7243, %v7246, %v7248
    %v7250 = vsel %vm7242, %v7229, %v7232
    %v7251 = vsel %vm7245, %v7238, 920167782
    %v7252 = vsel %vm7244, %v7235, %v7251
    %v7253 = vsel %vm7243, %v7250, %v7252
    %v7254 = vsel %vm7242, %v7232, %v7235
    %v7255 = vsel %vm7245, %v7241, 1326507024
    %v7256 = vsel %vm7244, %v7238, %v7255
    %v7257 = vsel %vm7243, %v7254, %v7256
    %v7258 = vshll.u32 %v7218, 8
    %v7259 = vmul.u32.u64.compose %v7258, %v7257
    %v7260 = vextract.low.u32 %v7259
    %v7261 = vextract.high.u32 %v7259
    %v7262 = vmul.u32.u64.compose %v7258, %v7253
    %v7263 = vextract.low.u32 %v7262
    %v7264 = vextract.high.u32 %v7262
    %v7265 = vmul.u32 %v7258, %v7249
    %v7266 = vadd.s32 %v7261, %v7263
    %vm7267 = vc.u32 %v7261, %v7263
    %v7268 = vadd.s32 %v7264, 1
    %v7269 = vsel %vm7267, %v7268, %v7264
    %v7270 = vadd.s32 %v7265, %v7269
    %v7271 = vadd.s32 %v7270, 536870912
    %v7272 = vshrl.u32 %v7271, 30
    %v7273 = vshll.u32 %v7272, 30
    %v7274 = vsub.s32 %v7270, %v7273
    %vm7275 = vcmp.lt.s32.totalorder %v7274, 0
    %v7276 = vsub.s32 0, %v7274
    %v7277 = vsel %vm7275, %v7276, %v7274
    %v7278 = vclz %v7277
    %v7279 = vsub.s32 %v7278, 2
    %vm7280 = vcmp.gt.s32.totalorder 0, %v7279
    %v7281 = vsel %vm7280, 0, %v7279
    %v7282 = vsub.s32 32, %v7281
    %v7283 = vshll.u32 %v7274, %v7281
    %v7284 = vshrl.u32 %v7266, %v7282
    %v7285 = vor.u32 %v7283, %v7284
    %v7286 = vsub.s32 4294967266, %v7281
    %v7287 = vadd.s32 %v7286, 127
    %v7288 = vshll.u32 %v7287, 23
    %v7289 = vor.u32 4788187, %v7288
    %v7290 = vand.u32 2147483647, %v7289
    %v7292 = vcvt.s32.f32 %v7285
    %v7293 = vmul.f32 %v7292, %v7290
    %v7294 = vxor.u32 %v7293, 2147483648
    %v7295 = vsel %vm7212, %v7294, %v7293
    %v7296 = vsub.s32 4, %v7272
    %v7297 = vsel %vm7212, %v7296, %v7272
    %v7298 = vsel %vm7211, %v6972, %v7295
    %v7299 = vsel %vm7211, 0, %v7297
    %v7300 = vcosq.f32.pop %v7298
    %v7301 = vsinq.f32.pop %v7298
    %vm7302 = vweird.f32 %v6972
    %v7303 = vadd.s32 %v7299, 3
    %v7304 = vand.u32 %v7303, 3
    %vm7305 = vcmp.lt.s32.totalorder %v7304, 2
    %vm7306 = vcmp.eq.s32.totalorder %v7304, 0
    %v7307 = vxor.u32 %v7301, 2147483648
    %v7308 = vsel %vm7306, %v7300, %v7307
    %vm7309 = vcmp.eq.s32.totalorder %v7304, 2
    %v7310 = vxor.u32 %v7300, 2147483648
    %v7311 = vsel %vm7309, %v7310, %v7301
    %v7312 = vsel %vm7305, %v7308, %v7311
    %v7313 = vsel %vm7302, nan, %v7312
    %v7314 = vand.u32 2147483647, %v6973
    %vm7315 = vcmp.le.f32.partialorder %v7314, 0.7853982
    %vm7316 = vcmp.lt.s32.totalorder %v6973, 0
    %v7317 = vand.u32 %v6973, 2139095040
    %v7318 = vshrl.u32 %v7317, 23
    %v7319 = vsub.s32 %v7318, 127
    %v7320 = vand.u32 2147483647, %v6973
    %v7321 = vand.u32 %v7320, 8388607
    %v7322 = vor.u32 %v7321, 8388608
    %v7323 = vsub.s32 0, %v7322
    %v7324 = vadd.s32 %v7319, 1
    %vm7325 = vcmp.gt.s32.totalorder %v7324, 0
    %v7326 = vsel %vm7325, %v7324, 0
    %v7327 = vshrl.u32 %v7326, 5
    %v7328 = vand.u32 %v7326, 31
    %v7329 = vsub.s32 32, %v7328
    %v7330 = vshrl.u32 683565275, %v7329
    %v7331 = vshll.u32 683565275, %v7328
    %v7332 = vshrl.u32 2475754826, %v7329
    %v7333 = vor.u32 %v7331, %v7332
    %v7334 = vshll.u32 2475754826, %v7328
    %v7335 = vshrl.u32 2131351028, %v7329
    %v7336 = vor.u32 %v7334, %v7335
    %v7337 = vshll.u32 2131351028, %v7328
    %v7338 = vshrl.u32 2102212464, %v7329
    %v7339 = vor.u32 %v7337, %v7338
    %v7340 = vshll.u32 2102212464, %v7328
    %v7341 = vshrl.u32 920167782, %v7329
    %v7342 = vor.u32 %v7340, %v7341
    %v7343 = vshll.u32 920167782, %v7328
    %v7344 = vshrl.u32 1326507024, %v7329
    %v7345 = vor.u32 %v7343, %v7344
    %vm7346 = vcmp.lt.s32.totalorder %v7327, 1
    %vm7347 = vcmp.lt.s32.totalorder %v7327, 2
    %vm7348 = vcmp.lt.s32.totalorder %v7327, 3
    %vm7349 = vcmp.lt.s32.totalorder %v7327, 4
    %v7350 = vsel %vm7346, %v7330, %v7333
    %v7351 = vsel %vm7349, %v7339, 2102212464
    %v7352 = vsel %vm7348, %v7336, %v7351
    %v7353 = vsel %vm7347, %v7350, %v7352
    %v7354 = vsel %vm7346, %v7333, %v7336
    %v7355 = vsel %vm7349, %v7342, 920167782
    %v7356 = vsel %vm7348, %v7339, %v7355
    %v7357 = vsel %vm7347, %v7354, %v7356
    %v7358 = vsel %vm7346, %v7336, %v7339
    %v7359 = vsel %vm7349, %v7345, 1326507024
    %v7360 = vsel %vm7348, %v7342, %v7359
    %v7361 = vsel %vm7347, %v7358, %v7360
    %v7362 = vshll.u32 %v7322, 8
    %v7363 = vmul.u32.u64.compose %v7362, %v7361
    %v7364 = vextract.low.u32 %v7363
    %v7365 = vextract.high.u32 %v7363
    %v7366 = vmul.u32.u64.compose %v7362, %v7357
    %v7367 = vextract.low.u32 %v7366
    %v7368 = vextract.high.u32 %v7366
    %v7369 = vmul.u32 %v7362, %v7353
    %v7370 = vadd.s32 %v7365, %v7367
    %vm7371 = vc.u32 %v7365, %v7367
    %v7372 = vadd.s32 %v7368, 1
    %v7373 = vsel %vm7371, %v7372, %v7368
    %v7374 = vadd.s32 %v7369, %v7373
    %v7375 = vadd.s32 %v7374, 536870912
    %v7376 = vshrl.u32 %v7375, 30
    %v7377 = vshll.u32 %v7376, 30
    %v7378 = vsub.s32 %v7374, %v7377
    %vm7379 = vcmp.lt.s32.totalorder %v7378, 0
    %v7380 = vsub.s32 0, %v7378
    %v7381 = vsel %vm7379, %v7380, %v7378
    %v7382 = vclz %v7381
    %v7383 = vsub.s32 %v7382, 2
    %vm7384 = vcmp.gt.s32.totalorder 0, %v7383
    %v7385 = vsel %vm7384, 0, %v7383
    %v7386 = vsub.s32 32, %v7385
    %v7387 = vshll.u32 %v7378, %v7385
    %v7388 = vshrl.u32 %v7370, %v7386
    %v7389 = vor.u32 %v7387, %v7388
    %v7390 = vsub.s32 4294967266, %v7385
    %v7391 = vadd.s32 %v7390, 127
    %v7392 = vshll.u32 %v7391, 23
    %v7393 = vor.u32 4788187, %v7392
    %v7394 = vand.u32 2147483647, %v7393
    %v7396 = vcvt.s32.f32 %v7389
    %v7397 = vmul.f32 %v7396, %v7394
    %v7398 = vxor.u32 %v7397, 2147483648
    %v7399 = vsel %vm7316, %v7398, %v7397
    %v7400 = vsub.s32 4, %v7376
    %v7401 = vsel %vm7316, %v7400, %v7376
    %v7402 = vsel %vm7315, %v6973, %v7399
    %v7403 = vsel %vm7315, 0, %v7401
    %v7404 = vcosq.f32.pop %v7402
    %v7405 = vsinq.f32.pop %v7402
    %vm7406 = vweird.f32 %v6973
    %v7407 = vadd.s32 %v7403, 3
    %v7408 = vand.u32 %v7407, 3
    %vm7409 = vcmp.lt.s32.totalorder %v7408, 2
    %vm7410 = vcmp.eq.s32.totalorder %v7408, 0
    %v7411 = vxor.u32 %v7405, 2147483648
    %v7412 = vsel %vm7410, %v7404, %v7411
    %vm7413 = vcmp.eq.s32.totalorder %v7408, 2
    %v7414 = vxor.u32 %v7404, 2147483648
    %v7415 = vsel %vm7413, %v7414, %v7405
    %v7416 = vsel %vm7409, %v7412, %v7415
    %v7417 = vsel %vm7406, nan, %v7416
    %v7418 = vand.u32 2147483647, %v6974
    %vm7419 = vcmp.le.f32.partialorder %v7418, 0.7853982
    %vm7420 = vcmp.lt.s32.totalorder %v6974, 0
    %v7421 = vand.u32 %v6974, 2139095040
    %v7422 = vshrl.u32 %v7421, 23
    %v7423 = vsub.s32 %v7422, 127
    %v7424 = vand.u32 2147483647, %v6974
    %v7425 = vand.u32 %v7424, 8388607
    %v7426 = vor.u32 %v7425, 8388608
    %v7427 = vsub.s32 0, %v7426
    %v7428 = vadd.s32 %v7423, 1
    %vm7429 = vcmp.gt.s32.totalorder %v7428, 0
    %v7430 = vsel %vm7429, %v7428, 0
    %v7431 = vshrl.u32 %v7430, 5
    %v7432 = vand.u32 %v7430, 31
    %v7433 = vsub.s32 32, %v7432
    %v7434 = vshrl.u32 683565275, %v7433
    %v7435 = vshll.u32 683565275, %v7432
    %v7436 = vshrl.u32 2475754826, %v7433
    %v7437 = vor.u32 %v7435, %v7436
    %v7438 = vshll.u32 2475754826, %v7432
    %v7439 = vshrl.u32 2131351028, %v7433
    %v7440 = vor.u32 %v7438, %v7439
    %v7441 = vshll.u32 2131351028, %v7432
    %v7442 = vshrl.u32 2102212464, %v7433
    %v7443 = vor.u32 %v7441, %v7442
    %v7444 = vshll.u32 2102212464, %v7432
    %v7445 = vshrl.u32 920167782, %v7433
    %v7446 = vor.u32 %v7444, %v7445
    %v7447 = vshll.u32 920167782, %v7432
    %v7448 = vshrl.u32 1326507024, %v7433
    %v7449 = vor.u32 %v7447, %v7448
    %vm7450 = vcmp.lt.s32.totalorder %v7431, 1
    %vm7451 = vcmp.lt.s32.totalorder %v7431, 2
    %vm7452 = vcmp.lt.s32.totalorder %v7431, 3
    %vm7453 = vcmp.lt.s32.totalorder %v7431, 4
    %v7454 = vsel %vm7450, %v7434, %v7437
    %v7455 = vsel %vm7453, %v7443, 2102212464
    %v7456 = vsel %vm7452, %v7440, %v7455
    %v7457 = vsel %vm7451, %v7454, %v7456
    %v7458 = vsel %vm7450, %v7437, %v7440
    %v7459 = vsel %vm7453, %v7446, 920167782
    %v7460 = vsel %vm7452, %v7443, %v7459
    %v7461 = vsel %vm7451, %v7458, %v7460
    %v7462 = vsel %vm7450, %v7440, %v7443
    %v7463 = vsel %vm7453, %v7449, 1326507024
    %v7464 = vsel %vm7452, %v7446, %v7463
    %v7465 = vsel %vm7451, %v7462, %v7464
    %v7466 = vshll.u32 %v7426, 8
    %v7467 = vmul.u32.u64.compose %v7466, %v7465
    %v7468 = vextract.low.u32 %v7467
    %v7469 = vextract.high.u32 %v7467
    %v7470 = vmul.u32.u64.compose %v7466, %v7461
    %v7471 = vextract.low.u32 %v7470
    %v7472 = vextract.high.u32 %v7470
    %v7473 = vmul.u32 %v7466, %v7457
    %v7474 = vadd.s32 %v7469, %v7471
    %vm7475 = vc.u32 %v7469, %v7471
    %v7476 = vadd.s32 %v7472, 1
    %v7477 = vsel %vm7475, %v7476, %v7472
    %v7478 = vadd.s32 %v7473, %v7477
    %v7479 = vadd.s32 %v7478, 536870912
    %v7480 = vshrl.u32 %v7479, 30
    %v7481 = vshll.u32 %v7480, 30
    %v7482 = vsub.s32 %v7478, %v7481
    %vm7483 = vcmp.lt.s32.totalorder %v7482, 0
    %v7484 = vsub.s32 0, %v7482
    %v7485 = vsel %vm7483, %v7484, %v7482
    %v7486 = vclz %v7485
    %v7487 = vsub.s32 %v7486, 2
    %vm7488 = vcmp.gt.s32.totalorder 0, %v7487
    %v7489 = vsel %vm7488, 0, %v7487
    %v7490 = vsub.s32 32, %v7489
    %v7491 = vshll.u32 %v7482, %v7489
    %v7492 = vshrl.u32 %v7474, %v7490
    %v7493 = vor.u32 %v7491, %v7492
    %v7494 = vsub.s32 4294967266, %v7489
    %v7495 = vadd.s32 %v7494, 127
    %v7496 = vshll.u32 %v7495, 23
    %v7497 = vor.u32 4788187, %v7496
    %v7498 = vand.u32 2147483647, %v7497
    %v7500 = vcvt.s32.f32 %v7493
    %v7501 = vmul.f32 %v7500, %v7498
    %v7502 = vxor.u32 %v7501, 2147483648
    %v7503 = vsel %vm7420, %v7502, %v7501
    %v7504 = vsub.s32 4, %v7480
    %v7505 = vsel %vm7420, %v7504, %v7480
    %v7506 = vsel %vm7419, %v6974, %v7503
    %v7507 = vsel %vm7419, 0, %v7505
    %v7508 = vcosq.f32.pop %v7506
    %v7509 = vsinq.f32.pop %v7506
    %vm7510 = vweird.f32 %v6974
    %v7511 = vadd.s32 %v7507, 3
    %v7512 = vand.u32 %v7511, 3
    %vm7513 = vcmp.lt.s32.totalorder %v7512, 2
    %vm7514 = vcmp.eq.s32.totalorder %v7512, 0
    %v7515 = vxor.u32 %v7509, 2147483648
    %v7516 = vsel %vm7514, %v7508, %v7515
    %vm7517 = vcmp.eq.s32.totalorder %v7512, 2
    %v7518 = vxor.u32 %v7508, 2147483648
    %v7519 = vsel %vm7517, %v7518, %v7509
    %v7520 = vsel %vm7513, %v7516, %v7519
    %v7521 = vsel %vm7510, nan, %v7520
    %v7522 = vand.u32 2147483647, %v6975
    %vm7523 = vcmp.le.f32.partialorder %v7522, 0.7853982
    %vm7524 = vcmp.lt.s32.totalorder %v6975, 0
    %v7525 = vand.u32 %v6975, 2139095040
    %v7526 = vshrl.u32 %v7525, 23
    %v7527 = vsub.s32 %v7526, 127
    %v7528 = vand.u32 2147483647, %v6975
    %v7529 = vand.u32 %v7528, 8388607
    %v7530 = vor.u32 %v7529, 8388608
    %v7531 = vsub.s32 0, %v7530
    %v7532 = vadd.s32 %v7527, 1
    %vm7533 = vcmp.gt.s32.totalorder %v7532, 0
    %v7534 = vsel %vm7533, %v7532, 0
    %v7535 = vshrl.u32 %v7534, 5
    %v7536 = vand.u32 %v7534, 31
    %v7537 = vsub.s32 32, %v7536
    %v7538 = vshrl.u32 683565275, %v7537
    %v7539 = vshll.u32 683565275, %v7536
    %v7540 = vshrl.u32 2475754826, %v7537
    %v7541 = vor.u32 %v7539, %v7540
    %v7542 = vshll.u32 2475754826, %v7536
    %v7543 = vshrl.u32 2131351028, %v7537
    %v7544 = vor.u32 %v7542, %v7543
    %v7545 = vshll.u32 2131351028, %v7536
    %v7546 = vshrl.u32 2102212464, %v7537
    %v7547 = vor.u32 %v7545, %v7546
    %v7548 = vshll.u32 2102212464, %v7536
    %v7549 = vshrl.u32 920167782, %v7537
    %v7550 = vor.u32 %v7548, %v7549
    %v7551 = vshll.u32 920167782, %v7536
    %v7552 = vshrl.u32 1326507024, %v7537
    %v7553 = vor.u32 %v7551, %v7552
    %vm7554 = vcmp.lt.s32.totalorder %v7535, 1
    %vm7555 = vcmp.lt.s32.totalorder %v7535, 2
    %vm7556 = vcmp.lt.s32.totalorder %v7535, 3
    %vm7557 = vcmp.lt.s32.totalorder %v7535, 4
    %v7558 = vsel %vm7554, %v7538, %v7541
    %v7559 = vsel %vm7557, %v7547, 2102212464
    %v7560 = vsel %vm7556, %v7544, %v7559
    %v7561 = vsel %vm7555, %v7558, %v7560
    %v7562 = vsel %vm7554, %v7541, %v7544
    %v7563 = vsel %vm7557, %v7550, 920167782
    %v7564 = vsel %vm7556, %v7547, %v7563
    %v7565 = vsel %vm7555, %v7562, %v7564
    %v7566 = vsel %vm7554, %v7544, %v7547
    %v7567 = vsel %vm7557, %v7553, 1326507024
    %v7568 = vsel %vm7556, %v7550, %v7567
    %v7569 = vsel %vm7555, %v7566, %v7568
    %v7570 = vshll.u32 %v7530, 8
    %v7571 = vmul.u32.u64.compose %v7570, %v7569
    %v7572 = vextract.low.u32 %v7571
    %v7573 = vextract.high.u32 %v7571
    %v7574 = vmul.u32.u64.compose %v7570, %v7565
    %v7575 = vextract.low.u32 %v7574
    %v7576 = vextract.high.u32 %v7574
    %v7577 = vmul.u32 %v7570, %v7561
    %v7578 = vadd.s32 %v7573, %v7575
    %vm7579 = vc.u32 %v7573, %v7575
    %v7580 = vadd.s32 %v7576, 1
    %v7581 = vsel %vm7579, %v7580, %v7576
    %v7582 = vadd.s32 %v7577, %v7581
    %v7583 = vadd.s32 %v7582, 536870912
    %v7584 = vshrl.u32 %v7583, 30
    %v7585 = vshll.u32 %v7584, 30
    %v7586 = vsub.s32 %v7582, %v7585
    %vm7587 = vcmp.lt.s32.totalorder %v7586, 0
    %v7588 = vsub.s32 0, %v7586
    %v7589 = vsel %vm7587, %v7588, %v7586
    %v7590 = vclz %v7589
    %v7591 = vsub.s32 %v7590, 2
    %vm7592 = vcmp.gt.s32.totalorder 0, %v7591
    %v7593 = vsel %vm7592, 0, %v7591
    %v7594 = vsub.s32 32, %v7593
    %v7595 = vshll.u32 %v7586, %v7593
    %v7596 = vshrl.u32 %v7578, %v7594
    %v7597 = vor.u32 %v7595, %v7596
    %v7598 = vsub.s32 4294967266, %v7593
    %v7599 = vadd.s32 %v7598, 127
    %v7600 = vshll.u32 %v7599, 23
    %v7601 = vor.u32 4788187, %v7600
    %v7602 = vand.u32 2147483647, %v7601
    %v7604 = vcvt.s32.f32 %v7597
    %v7605 = vmul.f32 %v7604, %v7602
    %v7606 = vxor.u32 %v7605, 2147483648
    %v7607 = vsel %vm7524, %v7606, %v7605
    %v7608 = vsub.s32 4, %v7584
    %v7609 = vsel %vm7524, %v7608, %v7584
    %v7610 = vsel %vm7523, %v6975, %v7607
    %v7611 = vsel %vm7523, 0, %v7609
    %v7612 = vcosq.f32.pop %v7610
    %v7613 = vsinq.f32.pop %v7610
    %vm7614 = vweird.f32 %v6975
    %v7615 = vadd.s32 %v7611, 3
    %v7616 = vand.u32 %v7615, 3
    %vm7617 = vcmp.lt.s32.totalorder %v7616, 2
    %vm7618 = vcmp.eq.s32.totalorder %v7616, 0
    %v7619 = vxor.u32 %v7613, 2147483648
    %v7620 = vsel %vm7618, %v7612, %v7619
    %vm7621 = vcmp.eq.s32.totalorder %v7616, 2
    %v7622 = vxor.u32 %v7612, 2147483648
    %v7623 = vsel %vm7621, %v7622, %v7613
    %v7624 = vsel %vm7617, %v7620, %v7623
    %v7625 = vsel %vm7614, nan, %v7624
    %v7626 = vand.u32 2147483647, %v6976
    %vm7627 = vcmp.le.f32.partialorder %v7626, 0.7853982
    %vm7628 = vcmp.lt.s32.totalorder %v6976, 0
    %v7629 = vand.u32 %v6976, 2139095040
    %v7630 = vshrl.u32 %v7629, 23
    %v7631 = vsub.s32 %v7630, 127
    %v7632 = vand.u32 2147483647, %v6976
    %v7633 = vand.u32 %v7632, 8388607
    %v7634 = vor.u32 %v7633, 8388608
    %v7635 = vsub.s32 0, %v7634
    %v7636 = vadd.s32 %v7631, 1
    %vm7637 = vcmp.gt.s32.totalorder %v7636, 0
    %v7638 = vsel %vm7637, %v7636, 0
    %v7639 = vshrl.u32 %v7638, 5
    %v7640 = vand.u32 %v7638, 31
    %v7641 = vsub.s32 32, %v7640
    %v7642 = vshrl.u32 683565275, %v7641
    %v7643 = vshll.u32 683565275, %v7640
    %v7644 = vshrl.u32 2475754826, %v7641
    %v7645 = vor.u32 %v7643, %v7644
    %v7646 = vshll.u32 2475754826, %v7640
    %v7647 = vshrl.u32 2131351028, %v7641
    %v7648 = vor.u32 %v7646, %v7647
    %v7649 = vshll.u32 2131351028, %v7640
    %v7650 = vshrl.u32 2102212464, %v7641
    %v7651 = vor.u32 %v7649, %v7650
    %v7652 = vshll.u32 2102212464, %v7640
    %v7653 = vshrl.u32 920167782, %v7641
    %v7654 = vor.u32 %v7652, %v7653
    %v7655 = vshll.u32 920167782, %v7640
    %v7656 = vshrl.u32 1326507024, %v7641
    %v7657 = vor.u32 %v7655, %v7656
    %vm7658 = vcmp.lt.s32.totalorder %v7639, 1
    %vm7659 = vcmp.lt.s32.totalorder %v7639, 2
    %vm7660 = vcmp.lt.s32.totalorder %v7639, 3
    %vm7661 = vcmp.lt.s32.totalorder %v7639, 4
    %v7662 = vsel %vm7658, %v7642, %v7645
    %v7663 = vsel %vm7661, %v7651, 2102212464
    %v7664 = vsel %vm7660, %v7648, %v7663
    %v7665 = vsel %vm7659, %v7662, %v7664
    %v7666 = vsel %vm7658, %v7645, %v7648
    %v7667 = vsel %vm7661, %v7654, 920167782
    %v7668 = vsel %vm7660, %v7651, %v7667
    %v7669 = vsel %vm7659, %v7666, %v7668
    %v7670 = vsel %vm7658, %v7648, %v7651
    %v7671 = vsel %vm7661, %v7657, 1326507024
    %v7672 = vsel %vm7660, %v7654, %v7671
    %v7673 = vsel %vm7659, %v7670, %v7672
    %v7674 = vshll.u32 %v7634, 8
    %v7675 = vmul.u32.u64.compose %v7674, %v7673
    %v7676 = vextract.low.u32 %v7675
    %v7677 = vextract.high.u32 %v7675
    %v7678 = vmul.u32.u64.compose %v7674, %v7669
    %v7679 = vextract.low.u32 %v7678
    %v7680 = vextract.high.u32 %v7678
    %v7681 = vmul.u32 %v7674, %v7665
    %v7682 = vadd.s32 %v7677, %v7679
    %vm7683 = vc.u32 %v7677, %v7679
    %v7684 = vadd.s32 %v7680, 1
    %v7685 = vsel %vm7683, %v7684, %v7680
    %v7686 = vadd.s32 %v7681, %v7685
    %v7687 = vadd.s32 %v7686, 536870912
    %v7688 = vshrl.u32 %v7687, 30
    %v7689 = vshll.u32 %v7688, 30
    %v7690 = vsub.s32 %v7686, %v7689
    %vm7691 = vcmp.lt.s32.totalorder %v7690, 0
    %v7692 = vsub.s32 0, %v7690
    %v7693 = vsel %vm7691, %v7692, %v7690
    %v7694 = vclz %v7693
    %v7695 = vsub.s32 %v7694, 2
    %vm7696 = vcmp.gt.s32.totalorder 0, %v7695
    %v7697 = vsel %vm7696, 0, %v7695
    %v7698 = vsub.s32 32, %v7697
    %v7699 = vshll.u32 %v7690, %v7697
    %v7700 = vshrl.u32 %v7682, %v7698
    %v7701 = vor.u32 %v7699, %v7700
    %v7702 = vsub.s32 4294967266, %v7697
    %v7703 = vadd.s32 %v7702, 127
    %v7704 = vshll.u32 %v7703, 23
    %v7705 = vor.u32 4788187, %v7704
    %v7706 = vand.u32 2147483647, %v7705
    %v7708 = vcvt.s32.f32 %v7701
    %v7709 = vmul.f32 %v7708, %v7706
    %v7710 = vxor.u32 %v7709, 2147483648
    %v7711 = vsel %vm7628, %v7710, %v7709
    %v7712 = vsub.s32 4, %v7688
    %v7713 = vsel %vm7628, %v7712, %v7688
    %v7714 = vsel %vm7627, %v6976, %v7711
    %v7715 = vsel %vm7627, 0, %v7713
    %v7716 = vcosq.f32.pop %v7714
    %v7717 = vsinq.f32.pop %v7714
    %vm7718 = vweird.f32 %v6976
    %v7719 = vadd.s32 %v7715, 3
    %v7720 = vand.u32 %v7719, 3
    %vm7721 = vcmp.lt.s32.totalorder %v7720, 2
    %vm7722 = vcmp.eq.s32.totalorder %v7720, 0
    %v7723 = vxor.u32 %v7717, 2147483648
    %v7724 = vsel %vm7722, %v7716, %v7723
    %vm7725 = vcmp.eq.s32.totalorder %v7720, 2
    %v7726 = vxor.u32 %v7716, 2147483648
    %v7727 = vsel %vm7725, %v7726, %v7717
    %v7728 = vsel %vm7721, %v7724, %v7727
    %v7729 = vsel %vm7718, nan, %v7728
    %v7730 = vand.u32 2147483647, %v6977
    %vm7731 = vcmp.le.f32.partialorder %v7730, 0.7853982
    %vm7732 = vcmp.lt.s32.totalorder %v6977, 0
    %v7733 = vand.u32 %v6977, 2139095040
    %v7734 = vshrl.u32 %v7733, 23
    %v7735 = vsub.s32 %v7734, 127
    %v7736 = vand.u32 2147483647, %v6977
    %v7737 = vand.u32 %v7736, 8388607
    %v7738 = vor.u32 %v7737, 8388608
    %v7739 = vsub.s32 0, %v7738
    %v7740 = vadd.s32 %v7735, 1
    %vm7741 = vcmp.gt.s32.totalorder %v7740, 0
    %v7742 = vsel %vm7741, %v7740, 0
    %v7743 = vshrl.u32 %v7742, 5
    %v7744 = vand.u32 %v7742, 31
    %v7745 = vsub.s32 32, %v7744
    %v7746 = vshrl.u32 683565275, %v7745
    %v7747 = vshll.u32 683565275, %v7744
    %v7748 = vshrl.u32 2475754826, %v7745
    %v7749 = vor.u32 %v7747, %v7748
    %v7750 = vshll.u32 2475754826, %v7744
    %v7751 = vshrl.u32 2131351028, %v7745
    %v7752 = vor.u32 %v7750, %v7751
    %v7753 = vshll.u32 2131351028, %v7744
    %v7754 = vshrl.u32 2102212464, %v7745
    %v7755 = vor.u32 %v7753, %v7754
    %v7756 = vshll.u32 2102212464, %v7744
    %v7757 = vshrl.u32 920167782, %v7745
    %v7758 = vor.u32 %v7756, %v7757
    %v7759 = vshll.u32 920167782, %v7744
    %v7760 = vshrl.u32 1326507024, %v7745
    %v7761 = vor.u32 %v7759, %v7760
    %vm7762 = vcmp.lt.s32.totalorder %v7743, 1
    %vm7763 = vcmp.lt.s32.totalorder %v7743, 2
    %vm7764 = vcmp.lt.s32.totalorder %v7743, 3
    %vm7765 = vcmp.lt.s32.totalorder %v7743, 4
    %v7766 = vsel %vm7762, %v7746, %v7749
    %v7767 = vsel %vm7765, %v7755, 2102212464
    %v7768 = vsel %vm7764, %v7752, %v7767
    %v7769 = vsel %vm7763, %v7766, %v7768
    %v7770 = vsel %vm7762, %v7749, %v7752
    %v7771 = vsel %vm7765, %v7758, 920167782
    %v7772 = vsel %vm7764, %v7755, %v7771
    %v7773 = vsel %vm7763, %v7770, %v7772
    %v7774 = vsel %vm7762, %v7752, %v7755
    %v7775 = vsel %vm7765, %v7761, 1326507024
    %v7776 = vsel %vm7764, %v7758, %v7775
    %v7777 = vsel %vm7763, %v7774, %v7776
    %v7778 = vshll.u32 %v7738, 8
    %v7779 = vmul.u32.u64.compose %v7778, %v7777
    %v7780 = vextract.low.u32 %v7779
    %v7781 = vextract.high.u32 %v7779
    %v7782 = vmul.u32.u64.compose %v7778, %v7773
    %v7783 = vextract.low.u32 %v7782
    %v7784 = vextract.high.u32 %v7782
    %v7785 = vmul.u32 %v7778, %v7769
    %v7786 = vadd.s32 %v7781, %v7783
    %vm7787 = vc.u32 %v7781, %v7783
    %v7788 = vadd.s32 %v7784, 1
    %v7789 = vsel %vm7787, %v7788, %v7784
    %v7790 = vadd.s32 %v7785, %v7789
    %v7791 = vadd.s32 %v7790, 536870912
    %v7792 = vshrl.u32 %v7791, 30
    %v7793 = vshll.u32 %v7792, 30
    %v7794 = vsub.s32 %v7790, %v7793
    %vm7795 = vcmp.lt.s32.totalorder %v7794, 0
    %v7796 = vsub.s32 0, %v7794
    %v7797 = vsel %vm7795, %v7796, %v7794
    %v7798 = vclz %v7797
    %v7799 = vsub.s32 %v7798, 2
    %vm7800 = vcmp.gt.s32.totalorder 0, %v7799
    %v7801 = vsel %vm7800, 0, %v7799
    %v7802 = vsub.s32 32, %v7801
    %v7803 = vshll.u32 %v7794, %v7801
    %v7804 = vshrl.u32 %v7786, %v7802
    %v7805 = vor.u32 %v7803, %v7804
    %v7806 = vsub.s32 4294967266, %v7801
    %v7807 = vadd.s32 %v7806, 127
    %v7808 = vshll.u32 %v7807, 23
    %v7809 = vor.u32 4788187, %v7808
    %v7810 = vand.u32 2147483647, %v7809
    %v7812 = vcvt.s32.f32 %v7805
    %v7813 = vmul.f32 %v7812, %v7810
    %v7814 = vxor.u32 %v7813, 2147483648
    %v7815 = vsel %vm7732, %v7814, %v7813
    %v7816 = vsub.s32 4, %v7792
    %v7817 = vsel %vm7732, %v7816, %v7792
    %v7818 = vsel %vm7731, %v6977, %v7815
    %v7819 = vsel %vm7731, 0, %v7817
    %v7820 = vcosq.f32.pop %v7818
    %v7821 = vsinq.f32.pop %v7818
    %vm7822 = vweird.f32 %v6977
    %v7823 = vadd.s32 %v7819, 3
    %v7824 = vand.u32 %v7823, 3
    %vm7825 = vcmp.lt.s32.totalorder %v7824, 2
    %vm7826 = vcmp.eq.s32.totalorder %v7824, 0
    %v7827 = vxor.u32 %v7821, 2147483648
    %v7828 = vsel %vm7826, %v7820, %v7827
    %vm7829 = vcmp.eq.s32.totalorder %v7824, 2
    %v7830 = vxor.u32 %v7820, 2147483648
    %v7831 = vsel %vm7829, %v7830, %v7821
    %v7832 = vsel %vm7825, %v7828, %v7831
    %v7833 = vsel %vm7822, nan, %v7832
    %v7834 = vand.u32 2147483647, %v6978
    %vm7835 = vcmp.le.f32.partialorder %v7834, 0.7853982
    %vm7836 = vcmp.lt.s32.totalorder %v6978, 0
    %v7837 = vand.u32 %v6978, 2139095040
    %v7838 = vshrl.u32 %v7837, 23
    %v7839 = vsub.s32 %v7838, 127
    %v7840 = vand.u32 2147483647, %v6978
    %v7841 = vand.u32 %v7840, 8388607
    %v7842 = vor.u32 %v7841, 8388608
    %v7843 = vsub.s32 0, %v7842
    %v7844 = vadd.s32 %v7839, 1
    %vm7845 = vcmp.gt.s32.totalorder %v7844, 0
    %v7846 = vsel %vm7845, %v7844, 0
    %v7847 = vshrl.u32 %v7846, 5
    %v7848 = vand.u32 %v7846, 31
    %v7849 = vsub.s32 32, %v7848
    %v7850 = vshrl.u32 683565275, %v7849
    %v7851 = vshll.u32 683565275, %v7848
    %v7852 = vshrl.u32 2475754826, %v7849
    %v7853 = vor.u32 %v7851, %v7852
    %v7854 = vshll.u32 2475754826, %v7848
    %v7855 = vshrl.u32 2131351028, %v7849
    %v7856 = vor.u32 %v7854, %v7855
    %v7857 = vshll.u32 2131351028, %v7848
    %v7858 = vshrl.u32 2102212464, %v7849
    %v7859 = vor.u32 %v7857, %v7858
    %v7860 = vshll.u32 2102212464, %v7848
    %v7861 = vshrl.u32 920167782, %v7849
    %v7862 = vor.u32 %v7860, %v7861
    %v7863 = vshll.u32 920167782, %v7848
    %v7864 = vshrl.u32 1326507024, %v7849
    %v7865 = vor.u32 %v7863, %v7864
    %vm7866 = vcmp.lt.s32.totalorder %v7847, 1
    %vm7867 = vcmp.lt.s32.totalorder %v7847, 2
    %vm7868 = vcmp.lt.s32.totalorder %v7847, 3
    %vm7869 = vcmp.lt.s32.totalorder %v7847, 4
    %v7870 = vsel %vm7866, %v7850, %v7853
    %v7871 = vsel %vm7869, %v7859, 2102212464
    %v7872 = vsel %vm7868, %v7856, %v7871
    %v7873 = vsel %vm7867, %v7870, %v7872
    %v7874 = vsel %vm7866, %v7853, %v7856
    %v7875 = vsel %vm7869, %v7862, 920167782
    %v7876 = vsel %vm7868, %v7859, %v7875
    %v7877 = vsel %vm7867, %v7874, %v7876
    %v7878 = vsel %vm7866, %v7856, %v7859
    %v7879 = vsel %vm7869, %v7865, 1326507024
    %v7880 = vsel %vm7868, %v7862, %v7879
    %v7881 = vsel %vm7867, %v7878, %v7880
    %v7882 = vshll.u32 %v7842, 8
    %v7883 = vmul.u32.u64.compose %v7882, %v7881
    %v7884 = vextract.low.u32 %v7883
    %v7885 = vextract.high.u32 %v7883
    %v7886 = vmul.u32.u64.compose %v7882, %v7877
    %v7887 = vextract.low.u32 %v7886
    %v7888 = vextract.high.u32 %v7886
    %v7889 = vmul.u32 %v7882, %v7873
    %v7890 = vadd.s32 %v7885, %v7887
    %vm7891 = vc.u32 %v7885, %v7887
    %v7892 = vadd.s32 %v7888, 1
    %v7893 = vsel %vm7891, %v7892, %v7888
    %v7894 = vadd.s32 %v7889, %v7893
    %v7895 = vadd.s32 %v7894, 536870912
    %v7896 = vshrl.u32 %v7895, 30
    %v7897 = vshll.u32 %v7896, 30
    %v7898 = vsub.s32 %v7894, %v7897
    %vm7899 = vcmp.lt.s32.totalorder %v7898, 0
    %v7900 = vsub.s32 0, %v7898
    %v7901 = vsel %vm7899, %v7900, %v7898
    %v7902 = vclz %v7901
    %v7903 = vsub.s32 %v7902, 2
    %vm7904 = vcmp.gt.s32.totalorder 0, %v7903
    %v7905 = vsel %vm7904, 0, %v7903
    %v7906 = vsub.s32 32, %v7905
    %v7907 = vshll.u32 %v7898, %v7905
    %v7908 = vshrl.u32 %v7890, %v7906
    %v7909 = vor.u32 %v7907, %v7908
    %v7910 = vsub.s32 4294967266, %v7905
    %v7911 = vadd.s32 %v7910, 127
    %v7912 = vshll.u32 %v7911, 23
    %v7913 = vor.u32 4788187, %v7912
    %v7914 = vand.u32 2147483647, %v7913
    %v7916 = vcvt.s32.f32 %v7909
    %v7917 = vmul.f32 %v7916, %v7914
    %v7918 = vxor.u32 %v7917, 2147483648
    %v7919 = vsel %vm7836, %v7918, %v7917
    %v7920 = vsub.s32 4, %v7896
    %v7921 = vsel %vm7836, %v7920, %v7896
    %v7922 = vsel %vm7835, %v6978, %v7919
    %v7923 = vsel %vm7835, 0, %v7921
    %v7924 = vcosq.f32.pop %v7922
    %v7925 = vsinq.f32.pop %v7922
    %vm7926 = vweird.f32 %v6978
    %v7927 = vadd.s32 %v7923, 3
    %v7928 = vand.u32 %v7927, 3
    %vm7929 = vcmp.lt.s32.totalorder %v7928, 2
    %vm7930 = vcmp.eq.s32.totalorder %v7928, 0
    %v7931 = vxor.u32 %v7925, 2147483648
    %v7932 = vsel %vm7930, %v7924, %v7931
    %vm7933 = vcmp.eq.s32.totalorder %v7928, 2
    %v7934 = vxor.u32 %v7924, 2147483648
    %v7935 = vsel %vm7933, %v7934, %v7925
    %v7936 = vsel %vm7929, %v7932, %v7935
    %v7937 = vsel %vm7926, nan, %v7936
    %v7938 = vand.u32 2147483647, %v6979
    %vm7939 = vcmp.le.f32.partialorder %v7938, 0.7853982
    %vm7940 = vcmp.lt.s32.totalorder %v6979, 0
    %v7941 = vand.u32 %v6979, 2139095040
    %v7942 = vshrl.u32 %v7941, 23
    %v7943 = vsub.s32 %v7942, 127
    %v7944 = vand.u32 2147483647, %v6979
    %v7945 = vand.u32 %v7944, 8388607
    %v7946 = vor.u32 %v7945, 8388608
    %v7947 = vsub.s32 0, %v7946
    %v7948 = vadd.s32 %v7943, 1
    %vm7949 = vcmp.gt.s32.totalorder %v7948, 0
    %v7950 = vsel %vm7949, %v7948, 0
    %v7951 = vshrl.u32 %v7950, 5
    %v7952 = vand.u32 %v7950, 31
    %v7953 = vsub.s32 32, %v7952
    %v7954 = vshrl.u32 683565275, %v7953
    %v7955 = vshll.u32 683565275, %v7952
    %v7956 = vshrl.u32 2475754826, %v7953
    %v7957 = vor.u32 %v7955, %v7956
    %v7958 = vshll.u32 2475754826, %v7952
    %v7959 = vshrl.u32 2131351028, %v7953
    %v7960 = vor.u32 %v7958, %v7959
    %v7961 = vshll.u32 2131351028, %v7952
    %v7962 = vshrl.u32 2102212464, %v7953
    %v7963 = vor.u32 %v7961, %v7962
    %v7964 = vshll.u32 2102212464, %v7952
    %v7965 = vshrl.u32 920167782, %v7953
    %v7966 = vor.u32 %v7964, %v7965
    %v7967 = vshll.u32 920167782, %v7952
    %v7968 = vshrl.u32 1326507024, %v7953
    %v7969 = vor.u32 %v7967, %v7968
    %vm7970 = vcmp.lt.s32.totalorder %v7951, 1
    %vm7971 = vcmp.lt.s32.totalorder %v7951, 2
    %vm7972 = vcmp.lt.s32.totalorder %v7951, 3
    %vm7973 = vcmp.lt.s32.totalorder %v7951, 4
    %v7974 = vsel %vm7970, %v7954, %v7957
    %v7975 = vsel %vm7973, %v7963, 2102212464
    %v7976 = vsel %vm7972, %v7960, %v7975
    %v7977 = vsel %vm7971, %v7974, %v7976
    %v7978 = vsel %vm7970, %v7957, %v7960
    %v7979 = vsel %vm7973, %v7966, 920167782
    %v7980 = vsel %vm7972, %v7963, %v7979
    %v7981 = vsel %vm7971, %v7978, %v7980
    %v7982 = vsel %vm7970, %v7960, %v7963
    %v7983 = vsel %vm7973, %v7969, 1326507024
    %v7984 = vsel %vm7972, %v7966, %v7983
    %v7985 = vsel %vm7971, %v7982, %v7984
    %v7986 = vshll.u32 %v7946, 8
    %v7987 = vmul.u32.u64.compose %v7986, %v7985
    %v7988 = vextract.low.u32 %v7987
    %v7989 = vextract.high.u32 %v7987
    %v7990 = vmul.u32.u64.compose %v7986, %v7981
    %v7991 = vextract.low.u32 %v7990
    %v7992 = vextract.high.u32 %v7990
    %v7993 = vmul.u32 %v7986, %v7977
    %v7994 = vadd.s32 %v7989, %v7991
    %vm7995 = vc.u32 %v7989, %v7991
    %v7996 = vadd.s32 %v7992, 1
    %v7997 = vsel %vm7995, %v7996, %v7992
    %v7998 = vadd.s32 %v7993, %v7997
    %v7999 = vadd.s32 %v7998, 536870912
    %v8000 = vshrl.u32 %v7999, 30
    %v8001 = vshll.u32 %v8000, 30
    %v8002 = vsub.s32 %v7998, %v8001
    %vm8003 = vcmp.lt.s32.totalorder %v8002, 0
    %v8004 = vsub.s32 0, %v8002
    %v8005 = vsel %vm8003, %v8004, %v8002
    %v8006 = vclz %v8005
    %v8007 = vsub.s32 %v8006, 2
    %vm8008 = vcmp.gt.s32.totalorder 0, %v8007
    %v8009 = vsel %vm8008, 0, %v8007
    %v8010 = vsub.s32 32, %v8009
    %v8011 = vshll.u32 %v8002, %v8009
    %v8012 = vshrl.u32 %v7994, %v8010
    %v8013 = vor.u32 %v8011, %v8012
    %v8014 = vsub.s32 4294967266, %v8009
    %v8015 = vadd.s32 %v8014, 127
    %v8016 = vshll.u32 %v8015, 23
    %v8017 = vor.u32 4788187, %v8016
    %v8018 = vand.u32 2147483647, %v8017
    %v8020 = vcvt.s32.f32 %v8013
    %v8021 = vmul.f32 %v8020, %v8018
    %v8022 = vxor.u32 %v8021, 2147483648
    %v8023 = vsel %vm7940, %v8022, %v8021
    %v8024 = vsub.s32 4, %v8000
    %v8025 = vsel %vm7940, %v8024, %v8000
    %v8026 = vsel %vm7939, %v6979, %v8023
    %v8027 = vsel %vm7939, 0, %v8025
    %v8028 = vcosq.f32.pop %v8026
    %v8029 = vsinq.f32.pop %v8026
    %vm8030 = vweird.f32 %v6979
    %v8031 = vadd.s32 %v8027, 3
    %v8032 = vand.u32 %v8031, 3
    %vm8033 = vcmp.lt.s32.totalorder %v8032, 2
    %vm8034 = vcmp.eq.s32.totalorder %v8032, 0
    %v8035 = vxor.u32 %v8029, 2147483648
    %v8036 = vsel %vm8034, %v8028, %v8035
    %vm8037 = vcmp.eq.s32.totalorder %v8032, 2
    %v8038 = vxor.u32 %v8028, 2147483648
    %v8039 = vsel %vm8037, %v8038, %v8029
    %v8040 = vsel %vm8033, %v8036, %v8039
    %v8041 = vsel %vm8030, nan, %v8040
    %v8042 = vand.u32 2147483647, %v6980
    %vm8043 = vcmp.le.f32.partialorder %v8042, 0.7853982
    %vm8044 = vcmp.lt.s32.totalorder %v6980, 0
    %v8045 = vand.u32 %v6980, 2139095040
    %v8046 = vshrl.u32 %v8045, 23
    %v8047 = vsub.s32 %v8046, 127
    %v8048 = vand.u32 2147483647, %v6980
    %v8049 = vand.u32 %v8048, 8388607
    %v8050 = vor.u32 %v8049, 8388608
    %v8051 = vsub.s32 0, %v8050
    %v8052 = vadd.s32 %v8047, 1
    %vm8053 = vcmp.gt.s32.totalorder %v8052, 0
    %v8054 = vsel %vm8053, %v8052, 0
    %v8055 = vshrl.u32 %v8054, 5
    %v8056 = vand.u32 %v8054, 31
    %v8057 = vsub.s32 32, %v8056
    %v8058 = vshrl.u32 683565275, %v8057
    %v8059 = vshll.u32 683565275, %v8056
    %v8060 = vshrl.u32 2475754826, %v8057
    %v8061 = vor.u32 %v8059, %v8060
    %v8062 = vshll.u32 2475754826, %v8056
    %v8063 = vshrl.u32 2131351028, %v8057
    %v8064 = vor.u32 %v8062, %v8063
    %v8065 = vshll.u32 2131351028, %v8056
    %v8066 = vshrl.u32 2102212464, %v8057
    %v8067 = vor.u32 %v8065, %v8066
    %v8068 = vshll.u32 2102212464, %v8056
    %v8069 = vshrl.u32 920167782, %v8057
    %v8070 = vor.u32 %v8068, %v8069
    %v8071 = vshll.u32 920167782, %v8056
    %v8072 = vshrl.u32 1326507024, %v8057
    %v8073 = vor.u32 %v8071, %v8072
    %vm8074 = vcmp.lt.s32.totalorder %v8055, 1
    %vm8075 = vcmp.lt.s32.totalorder %v8055, 2
    %vm8076 = vcmp.lt.s32.totalorder %v8055, 3
    %vm8077 = vcmp.lt.s32.totalorder %v8055, 4
    %v8078 = vsel %vm8074, %v8058, %v8061
    %v8079 = vsel %vm8077, %v8067, 2102212464
    %v8080 = vsel %vm8076, %v8064, %v8079
    %v8081 = vsel %vm8075, %v8078, %v8080
    %v8082 = vsel %vm8074, %v8061, %v8064
    %v8083 = vsel %vm8077, %v8070, 920167782
    %v8084 = vsel %vm8076, %v8067, %v8083
    %v8085 = vsel %vm8075, %v8082, %v8084
    %v8086 = vsel %vm8074, %v8064, %v8067
    %v8087 = vsel %vm8077, %v8073, 1326507024
    %v8088 = vsel %vm8076, %v8070, %v8087
    %v8089 = vsel %vm8075, %v8086, %v8088
    %v8090 = vshll.u32 %v8050, 8
    %v8091 = vmul.u32.u64.compose %v8090, %v8089
    %v8092 = vextract.low.u32 %v8091
    %v8093 = vextract.high.u32 %v8091
    %v8094 = vmul.u32.u64.compose %v8090, %v8085
    %v8095 = vextract.low.u32 %v8094
    %v8096 = vextract.high.u32 %v8094
    %v8097 = vmul.u32 %v8090, %v8081
    %v8098 = vadd.s32 %v8093, %v8095
    %vm8099 = vc.u32 %v8093, %v8095
    %v8100 = vadd.s32 %v8096, 1
    %v8101 = vsel %vm8099, %v8100, %v8096
    %v8102 = vadd.s32 %v8097, %v8101
    %v8103 = vadd.s32 %v8102, 536870912
    %v8104 = vshrl.u32 %v8103, 30
    %v8105 = vshll.u32 %v8104, 30
    %v8106 = vsub.s32 %v8102, %v8105
    %vm8107 = vcmp.lt.s32.totalorder %v8106, 0
    %v8108 = vsub.s32 0, %v8106
    %v8109 = vsel %vm8107, %v8108, %v8106
    %v8110 = vclz %v8109
    %v8111 = vsub.s32 %v8110, 2
    %vm8112 = vcmp.gt.s32.totalorder 0, %v8111
    %v8113 = vsel %vm8112, 0, %v8111
    %v8114 = vsub.s32 32, %v8113
    %v8115 = vshll.u32 %v8106, %v8113
    %v8116 = vshrl.u32 %v8098, %v8114
    %v8117 = vor.u32 %v8115, %v8116
    %v8118 = vsub.s32 4294967266, %v8113
    %v8119 = vadd.s32 %v8118, 127
    %v8120 = vshll.u32 %v8119, 23
    %v8121 = vor.u32 4788187, %v8120
    %v8122 = vand.u32 2147483647, %v8121
    %v8124 = vcvt.s32.f32 %v8117
    %v8125 = vmul.f32 %v8124, %v8122
    %v8126 = vxor.u32 %v8125, 2147483648
    %v8127 = vsel %vm8044, %v8126, %v8125
    %v8128 = vsub.s32 4, %v8104
    %v8129 = vsel %vm8044, %v8128, %v8104
    %v8130 = vsel %vm8043, %v6980, %v8127
    %v8131 = vsel %vm8043, 0, %v8129
    %v8132 = vcosq.f32.pop %v8130
    %v8133 = vsinq.f32.pop %v8130
    %vm8134 = vweird.f32 %v6980
    %v8135 = vadd.s32 %v8131, 3
    %v8136 = vand.u32 %v8135, 3
    %vm8137 = vcmp.lt.s32.totalorder %v8136, 2
    %vm8138 = vcmp.eq.s32.totalorder %v8136, 0
    %v8139 = vxor.u32 %v8133, 2147483648
    %v8140 = vsel %vm8138, %v8132, %v8139
    %vm8141 = vcmp.eq.s32.totalorder %v8136, 2
    %v8142 = vxor.u32 %v8132, 2147483648
    %v8143 = vsel %vm8141, %v8142, %v8133
    %v8144 = vsel %vm8137, %v8140, %v8143
    %v8145 = vsel %vm8134, nan, %v8144
    %v8146 = vand.u32 2147483647, %v6981
    %vm8147 = vcmp.le.f32.partialorder %v8146, 0.7853982
    %vm8148 = vcmp.lt.s32.totalorder %v6981, 0
    %v8149 = vand.u32 %v6981, 2139095040
    %v8150 = vshrl.u32 %v8149, 23
    %v8151 = vsub.s32 %v8150, 127
    %v8152 = vand.u32 2147483647, %v6981
    %v8153 = vand.u32 %v8152, 8388607
    %v8154 = vor.u32 %v8153, 8388608
    %v8155 = vsub.s32 0, %v8154
    %v8156 = vadd.s32 %v8151, 1
    %vm8157 = vcmp.gt.s32.totalorder %v8156, 0
    %v8158 = vsel %vm8157, %v8156, 0
    %v8159 = vshrl.u32 %v8158, 5
    %v8160 = vand.u32 %v8158, 31
    %v8161 = vsub.s32 32, %v8160
    %v8162 = vshrl.u32 683565275, %v8161
    %v8163 = vshll.u32 683565275, %v8160
    %v8164 = vshrl.u32 2475754826, %v8161
    %v8165 = vor.u32 %v8163, %v8164
    %v8166 = vshll.u32 2475754826, %v8160
    %v8167 = vshrl.u32 2131351028, %v8161
    %v8168 = vor.u32 %v8166, %v8167
    %v8169 = vshll.u32 2131351028, %v8160
    %v8170 = vshrl.u32 2102212464, %v8161
    %v8171 = vor.u32 %v8169, %v8170
    %v8172 = vshll.u32 2102212464, %v8160
    %v8173 = vshrl.u32 920167782, %v8161
    %v8174 = vor.u32 %v8172, %v8173
    %v8175 = vshll.u32 920167782, %v8160
    %v8176 = vshrl.u32 1326507024, %v8161
    %v8177 = vor.u32 %v8175, %v8176
    %vm8178 = vcmp.lt.s32.totalorder %v8159, 1
    %vm8179 = vcmp.lt.s32.totalorder %v8159, 2
    %vm8180 = vcmp.lt.s32.totalorder %v8159, 3
    %vm8181 = vcmp.lt.s32.totalorder %v8159, 4
    %v8182 = vsel %vm8178, %v8162, %v8165
    %v8183 = vsel %vm8181, %v8171, 2102212464
    %v8184 = vsel %vm8180, %v8168, %v8183
    %v8185 = vsel %vm8179, %v8182, %v8184
    %v8186 = vsel %vm8178, %v8165, %v8168
    %v8187 = vsel %vm8181, %v8174, 920167782
    %v8188 = vsel %vm8180, %v8171, %v8187
    %v8189 = vsel %vm8179, %v8186, %v8188
    %v8190 = vsel %vm8178, %v8168, %v8171
    %v8191 = vsel %vm8181, %v8177, 1326507024
    %v8192 = vsel %vm8180, %v8174, %v8191
    %v8193 = vsel %vm8179, %v8190, %v8192
    %v8194 = vshll.u32 %v8154, 8
    %v8195 = vmul.u32.u64.compose %v8194, %v8193
    %v8196 = vextract.low.u32 %v8195
    %v8197 = vextract.high.u32 %v8195
    %v8198 = vmul.u32.u64.compose %v8194, %v8189
    %v8199 = vextract.low.u32 %v8198
    %v8200 = vextract.high.u32 %v8198
    %v8201 = vmul.u32 %v8194, %v8185
    %v8202 = vadd.s32 %v8197, %v8199
    %vm8203 = vc.u32 %v8197, %v8199
    %v8204 = vadd.s32 %v8200, 1
    %v8205 = vsel %vm8203, %v8204, %v8200
    %v8206 = vadd.s32 %v8201, %v8205
    %v8207 = vadd.s32 %v8206, 536870912
    %v8208 = vshrl.u32 %v8207, 30
    %v8209 = vshll.u32 %v8208, 30
    %v8210 = vsub.s32 %v8206, %v8209
    %vm8211 = vcmp.lt.s32.totalorder %v8210, 0
    %v8212 = vsub.s32 0, %v8210
    %v8213 = vsel %vm8211, %v8212, %v8210
    %v8214 = vclz %v8213
    %v8215 = vsub.s32 %v8214, 2
    %vm8216 = vcmp.gt.s32.totalorder 0, %v8215
    %v8217 = vsel %vm8216, 0, %v8215
    %v8218 = vsub.s32 32, %v8217
    %v8219 = vshll.u32 %v8210, %v8217
    %v8220 = vshrl.u32 %v8202, %v8218
    %v8221 = vor.u32 %v8219, %v8220
    %v8222 = vsub.s32 4294967266, %v8217
    %v8223 = vadd.s32 %v8222, 127
    %v8224 = vshll.u32 %v8223, 23
    %v8225 = vor.u32 4788187, %v8224
    %v8226 = vand.u32 2147483647, %v8225
    %v8228 = vcvt.s32.f32 %v8221
    %v8229 = vmul.f32 %v8228, %v8226
    %v8230 = vxor.u32 %v8229, 2147483648
    %v8231 = vsel %vm8148, %v8230, %v8229
    %v8232 = vsub.s32 4, %v8208
    %v8233 = vsel %vm8148, %v8232, %v8208
    %v8234 = vsel %vm8147, %v6981, %v8231
    %v8235 = vsel %vm8147, 0, %v8233
    %v8236 = vcosq.f32.pop %v8234
    %v8237 = vsinq.f32.pop %v8234
    %vm8238 = vweird.f32 %v6981
    %v8239 = vadd.s32 %v8235, 3
    %v8240 = vand.u32 %v8239, 3
    %vm8241 = vcmp.lt.s32.totalorder %v8240, 2
    %vm8242 = vcmp.eq.s32.totalorder %v8240, 0
    %v8243 = vxor.u32 %v8237, 2147483648
    %v8244 = vsel %vm8242, %v8236, %v8243
    %vm8245 = vcmp.eq.s32.totalorder %v8240, 2
    %v8246 = vxor.u32 %v8236, 2147483648
    %v8247 = vsel %vm8245, %v8246, %v8237
    %v8248 = vsel %vm8241, %v8244, %v8247
    %v8249 = vsel %vm8238, nan, %v8248
    %v8250 = vand.u32 2147483647, %v6982
    %vm8251 = vcmp.le.f32.partialorder %v8250, 0.7853982
    %vm8252 = vcmp.lt.s32.totalorder %v6982, 0
    %v8253 = vand.u32 %v6982, 2139095040
    %v8254 = vshrl.u32 %v8253, 23
    %v8255 = vsub.s32 %v8254, 127
    %v8256 = vand.u32 2147483647, %v6982
    %v8257 = vand.u32 %v8256, 8388607
    %v8258 = vor.u32 %v8257, 8388608
    %v8259 = vsub.s32 0, %v8258
    %v8260 = vadd.s32 %v8255, 1
    %vm8261 = vcmp.gt.s32.totalorder %v8260, 0
    %v8262 = vsel %vm8261, %v8260, 0
    %v8263 = vshrl.u32 %v8262, 5
    %v8264 = vand.u32 %v8262, 31
    %v8265 = vsub.s32 32, %v8264
    %v8266 = vshrl.u32 683565275, %v8265
    %v8267 = vshll.u32 683565275, %v8264
    %v8268 = vshrl.u32 2475754826, %v8265
    %v8269 = vor.u32 %v8267, %v8268
    %v8270 = vshll.u32 2475754826, %v8264
    %v8271 = vshrl.u32 2131351028, %v8265
    %v8272 = vor.u32 %v8270, %v8271
    %v8273 = vshll.u32 2131351028, %v8264
    %v8274 = vshrl.u32 2102212464, %v8265
    %v8275 = vor.u32 %v8273, %v8274
    %v8276 = vshll.u32 2102212464, %v8264
    %v8277 = vshrl.u32 920167782, %v8265
    %v8278 = vor.u32 %v8276, %v8277
    %v8279 = vshll.u32 920167782, %v8264
    %v8280 = vshrl.u32 1326507024, %v8265
    %v8281 = vor.u32 %v8279, %v8280
    %vm8282 = vcmp.lt.s32.totalorder %v8263, 1
    %vm8283 = vcmp.lt.s32.totalorder %v8263, 2
    %vm8284 = vcmp.lt.s32.totalorder %v8263, 3
    %vm8285 = vcmp.lt.s32.totalorder %v8263, 4
    %v8286 = vsel %vm8282, %v8266, %v8269
    %v8287 = vsel %vm8285, %v8275, 2102212464
    %v8288 = vsel %vm8284, %v8272, %v8287
    %v8289 = vsel %vm8283, %v8286, %v8288
    %v8290 = vsel %vm8282, %v8269, %v8272
    %v8291 = vsel %vm8285, %v8278, 920167782
    %v8292 = vsel %vm8284, %v8275, %v8291
    %v8293 = vsel %vm8283, %v8290, %v8292
    %v8294 = vsel %vm8282, %v8272, %v8275
    %v8295 = vsel %vm8285, %v8281, 1326507024
    %v8296 = vsel %vm8284, %v8278, %v8295
    %v8297 = vsel %vm8283, %v8294, %v8296
    %v8298 = vshll.u32 %v8258, 8
    %v8299 = vmul.u32.u64.compose %v8298, %v8297
    %v8300 = vextract.low.u32 %v8299
    %v8301 = vextract.high.u32 %v8299
    %v8302 = vmul.u32.u64.compose %v8298, %v8293
    %v8303 = vextract.low.u32 %v8302
    %v8304 = vextract.high.u32 %v8302
    %v8305 = vmul.u32 %v8298, %v8289
    %v8306 = vadd.s32 %v8301, %v8303
    %vm8307 = vc.u32 %v8301, %v8303
    %v8308 = vadd.s32 %v8304, 1
    %v8309 = vsel %vm8307, %v8308, %v8304
    %v8310 = vadd.s32 %v8305, %v8309
    %v8311 = vadd.s32 %v8310, 536870912
    %v8312 = vshrl.u32 %v8311, 30
    %v8313 = vshll.u32 %v8312, 30
    %v8314 = vsub.s32 %v8310, %v8313
    %vm8315 = vcmp.lt.s32.totalorder %v8314, 0
    %v8316 = vsub.s32 0, %v8314
    %v8317 = vsel %vm8315, %v8316, %v8314
    %v8318 = vclz %v8317
    %v8319 = vsub.s32 %v8318, 2
    %vm8320 = vcmp.gt.s32.totalorder 0, %v8319
    %v8321 = vsel %vm8320, 0, %v8319
    %v8322 = vsub.s32 32, %v8321
    %v8323 = vshll.u32 %v8314, %v8321
    %v8324 = vshrl.u32 %v8306, %v8322
    %v8325 = vor.u32 %v8323, %v8324
    %v8326 = vsub.s32 4294967266, %v8321
    %v8327 = vadd.s32 %v8326, 127
    %v8328 = vshll.u32 %v8327, 23
    %v8329 = vor.u32 4788187, %v8328
    %v8330 = vand.u32 2147483647, %v8329
    %v8332 = vcvt.s32.f32 %v8325
    %v8333 = vmul.f32 %v8332, %v8330
    %v8334 = vxor.u32 %v8333, 2147483648
    %v8335 = vsel %vm8252, %v8334, %v8333
    %v8336 = vsub.s32 4, %v8312
    %v8337 = vsel %vm8252, %v8336, %v8312
    %v8338 = vsel %vm8251, %v6982, %v8335
    %v8339 = vsel %vm8251, 0, %v8337
    %v8340 = vcosq.f32.pop %v8338
    %v8341 = vsinq.f32.pop %v8338
    %vm8342 = vweird.f32 %v6982
    %v8343 = vadd.s32 %v8339, 3
    %v8344 = vand.u32 %v8343, 3
    %vm8345 = vcmp.lt.s32.totalorder %v8344, 2
    %vm8346 = vcmp.eq.s32.totalorder %v8344, 0
    %v8347 = vxor.u32 %v8341, 2147483648
    %v8348 = vsel %vm8346, %v8340, %v8347
    %vm8349 = vcmp.eq.s32.totalorder %v8344, 2
    %v8350 = vxor.u32 %v8340, 2147483648
    %v8351 = vsel %vm8349, %v8350, %v8341
    %v8352 = vsel %vm8345, %v8348, %v8351
    %v8353 = vsel %vm8342, nan, %v8352
    %v8354 = vand.u32 2147483647, %v6983
    %vm8355 = vcmp.le.f32.partialorder %v8354, 0.7853982
    %vm8356 = vcmp.lt.s32.totalorder %v6983, 0
    %v8357 = vand.u32 %v6983, 2139095040
    %v8358 = vshrl.u32 %v8357, 23
    %v8359 = vsub.s32 %v8358, 127
    %v8360 = vand.u32 2147483647, %v6983
    %v8361 = vand.u32 %v8360, 8388607
    %v8362 = vor.u32 %v8361, 8388608
    %v8363 = vsub.s32 0, %v8362
    %v8364 = vadd.s32 %v8359, 1
    %vm8365 = vcmp.gt.s32.totalorder %v8364, 0
    %v8366 = vsel %vm8365, %v8364, 0
    %v8367 = vshrl.u32 %v8366, 5
    %v8368 = vand.u32 %v8366, 31
    %v8369 = vsub.s32 32, %v8368
    %v8370 = vshrl.u32 683565275, %v8369
    %v8371 = vshll.u32 683565275, %v8368
    %v8372 = vshrl.u32 2475754826, %v8369
    %v8373 = vor.u32 %v8371, %v8372
    %v8374 = vshll.u32 2475754826, %v8368
    %v8375 = vshrl.u32 2131351028, %v8369
    %v8376 = vor.u32 %v8374, %v8375
    %v8377 = vshll.u32 2131351028, %v8368
    %v8378 = vshrl.u32 2102212464, %v8369
    %v8379 = vor.u32 %v8377, %v8378
    %v8380 = vshll.u32 2102212464, %v8368
    %v8381 = vshrl.u32 920167782, %v8369
    %v8382 = vor.u32 %v8380, %v8381
    %v8383 = vshll.u32 920167782, %v8368
    %v8384 = vshrl.u32 1326507024, %v8369
    %v8385 = vor.u32 %v8383, %v8384
    %vm8386 = vcmp.lt.s32.totalorder %v8367, 1
    %vm8387 = vcmp.lt.s32.totalorder %v8367, 2
    %vm8388 = vcmp.lt.s32.totalorder %v8367, 3
    %vm8389 = vcmp.lt.s32.totalorder %v8367, 4
    %v8390 = vsel %vm8386, %v8370, %v8373
    %v8391 = vsel %vm8389, %v8379, 2102212464
    %v8392 = vsel %vm8388, %v8376, %v8391
    %v8393 = vsel %vm8387, %v8390, %v8392
    %v8394 = vsel %vm8386, %v8373, %v8376
    %v8395 = vsel %vm8389, %v8382, 920167782
    %v8396 = vsel %vm8388, %v8379, %v8395
    %v8397 = vsel %vm8387, %v8394, %v8396
    %v8398 = vsel %vm8386, %v8376, %v8379
    %v8399 = vsel %vm8389, %v8385, 1326507024
    %v8400 = vsel %vm8388, %v8382, %v8399
    %v8401 = vsel %vm8387, %v8398, %v8400
    %v8402 = vshll.u32 %v8362, 8
    %v8403 = vmul.u32.u64.compose %v8402, %v8401
    %v8404 = vextract.low.u32 %v8403
    %v8405 = vextract.high.u32 %v8403
    %v8406 = vmul.u32.u64.compose %v8402, %v8397
    %v8407 = vextract.low.u32 %v8406
    %v8408 = vextract.high.u32 %v8406
    %v8409 = vmul.u32 %v8402, %v8393
    %v8410 = vadd.s32 %v8405, %v8407
    %vm8411 = vc.u32 %v8405, %v8407
    %v8412 = vadd.s32 %v8408, 1
    %v8413 = vsel %vm8411, %v8412, %v8408
    %v8414 = vadd.s32 %v8409, %v8413
    %v8415 = vadd.s32 %v8414, 536870912
    %v8416 = vshrl.u32 %v8415, 30
    %v8417 = vshll.u32 %v8416, 30
    %v8418 = vsub.s32 %v8414, %v8417
    %vm8419 = vcmp.lt.s32.totalorder %v8418, 0
    %v8420 = vsub.s32 0, %v8418
    %v8421 = vsel %vm8419, %v8420, %v8418
    %v8422 = vclz %v8421
    %v8423 = vsub.s32 %v8422, 2
    %vm8424 = vcmp.gt.s32.totalorder 0, %v8423
    %v8425 = vsel %vm8424, 0, %v8423
    %v8426 = vsub.s32 32, %v8425
    %v8427 = vshll.u32 %v8418, %v8425
    %v8428 = vshrl.u32 %v8410, %v8426
    %v8429 = vor.u32 %v8427, %v8428
    %v8430 = vsub.s32 4294967266, %v8425
    %v8431 = vadd.s32 %v8430, 127
    %v8432 = vshll.u32 %v8431, 23
    %v8433 = vor.u32 4788187, %v8432
    %v8434 = vand.u32 2147483647, %v8433
    %v8436 = vcvt.s32.f32 %v8429
    %v8437 = vmul.f32 %v8436, %v8434
    %v8438 = vxor.u32 %v8437, 2147483648
    %v8439 = vsel %vm8356, %v8438, %v8437
    %v8440 = vsub.s32 4, %v8416
    %v8441 = vsel %vm8356, %v8440, %v8416
    %v8442 = vsel %vm8355, %v6983, %v8439
    %v8443 = vsel %vm8355, 0, %v8441
    %v8444 = vcosq.f32.pop %v8442
    %v8445 = vsinq.f32.pop %v8442
    %vm8446 = vweird.f32 %v6983
    %v8447 = vadd.s32 %v8443, 3
    %v8448 = vand.u32 %v8447, 3
    %vm8449 = vcmp.lt.s32.totalorder %v8448, 2
    %vm8450 = vcmp.eq.s32.totalorder %v8448, 0
    %v8451 = vxor.u32 %v8445, 2147483648
    %v8452 = vsel %vm8450, %v8444, %v8451
    %vm8453 = vcmp.eq.s32.totalorder %v8448, 2
    %v8454 = vxor.u32 %v8444, 2147483648
    %v8455 = vsel %vm8453, %v8454, %v8445
    %v8456 = vsel %vm8449, %v8452, %v8455
    %v8457 = vsel %vm8446, nan, %v8456
    %v8458 = vand.u32 2147483647, %v6984
    %vm8459 = vcmp.le.f32.partialorder %v8458, 0.7853982
    %vm8460 = vcmp.lt.s32.totalorder %v6984, 0
    %v8461 = vand.u32 %v6984, 2139095040
    %v8462 = vshrl.u32 %v8461, 23
    %v8463 = vsub.s32 %v8462, 127
    %v8464 = vand.u32 2147483647, %v6984
    %v8465 = vand.u32 %v8464, 8388607
    %v8466 = vor.u32 %v8465, 8388608
    %v8467 = vsub.s32 0, %v8466
    %v8468 = vadd.s32 %v8463, 1
    %vm8469 = vcmp.gt.s32.totalorder %v8468, 0
    %v8470 = vsel %vm8469, %v8468, 0
    %v8471 = vshrl.u32 %v8470, 5
    %v8472 = vand.u32 %v8470, 31
    %v8473 = vsub.s32 32, %v8472
    %v8474 = vshrl.u32 683565275, %v8473
    %v8475 = vshll.u32 683565275, %v8472
    %v8476 = vshrl.u32 2475754826, %v8473
    %v8477 = vor.u32 %v8475, %v8476
    %v8478 = vshll.u32 2475754826, %v8472
    %v8479 = vshrl.u32 2131351028, %v8473
    %v8480 = vor.u32 %v8478, %v8479
    %v8481 = vshll.u32 2131351028, %v8472
    %v8482 = vshrl.u32 2102212464, %v8473
    %v8483 = vor.u32 %v8481, %v8482
    %v8484 = vshll.u32 2102212464, %v8472
    %v8485 = vshrl.u32 920167782, %v8473
    %v8486 = vor.u32 %v8484, %v8485
    %v8487 = vshll.u32 920167782, %v8472
    %v8488 = vshrl.u32 1326507024, %v8473
    %v8489 = vor.u32 %v8487, %v8488
    %vm8490 = vcmp.lt.s32.totalorder %v8471, 1
    %vm8491 = vcmp.lt.s32.totalorder %v8471, 2
    %vm8492 = vcmp.lt.s32.totalorder %v8471, 3
    %vm8493 = vcmp.lt.s32.totalorder %v8471, 4
    %v8494 = vsel %vm8490, %v8474, %v8477
    %v8495 = vsel %vm8493, %v8483, 2102212464
    %v8496 = vsel %vm8492, %v8480, %v8495
    %v8497 = vsel %vm8491, %v8494, %v8496
    %v8498 = vsel %vm8490, %v8477, %v8480
    %v8499 = vsel %vm8493, %v8486, 920167782
    %v8500 = vsel %vm8492, %v8483, %v8499
    %v8501 = vsel %vm8491, %v8498, %v8500
    %v8502 = vsel %vm8490, %v8480, %v8483
    %v8503 = vsel %vm8493, %v8489, 1326507024
    %v8504 = vsel %vm8492, %v8486, %v8503
    %v8505 = vsel %vm8491, %v8502, %v8504
    %v8506 = vshll.u32 %v8466, 8
    %v8507 = vmul.u32.u64.compose %v8506, %v8505
    %v8508 = vextract.low.u32 %v8507
    %v8509 = vextract.high.u32 %v8507
    %v8510 = vmul.u32.u64.compose %v8506, %v8501
    %v8511 = vextract.low.u32 %v8510
    %v8512 = vextract.high.u32 %v8510
    %v8513 = vmul.u32 %v8506, %v8497
    %v8514 = vadd.s32 %v8509, %v8511
    %vm8515 = vc.u32 %v8509, %v8511
    %v8516 = vadd.s32 %v8512, 1
    %v8517 = vsel %vm8515, %v8516, %v8512
    %v8518 = vadd.s32 %v8513, %v8517
    %v8519 = vadd.s32 %v8518, 536870912
    %v8520 = vshrl.u32 %v8519, 30
    %v8521 = vshll.u32 %v8520, 30
    %v8522 = vsub.s32 %v8518, %v8521
    %vm8523 = vcmp.lt.s32.totalorder %v8522, 0
    %v8524 = vsub.s32 0, %v8522
    %v8525 = vsel %vm8523, %v8524, %v8522
    %v8526 = vclz %v8525
    %v8527 = vsub.s32 %v8526, 2
    %vm8528 = vcmp.gt.s32.totalorder 0, %v8527
    %v8529 = vsel %vm8528, 0, %v8527
    %v8530 = vsub.s32 32, %v8529
    %v8531 = vshll.u32 %v8522, %v8529
    %v8532 = vshrl.u32 %v8514, %v8530
    %v8533 = vor.u32 %v8531, %v8532
    %v8534 = vsub.s32 4294967266, %v8529
    %v8535 = vadd.s32 %v8534, 127
    %v8536 = vshll.u32 %v8535, 23
    %v8537 = vor.u32 4788187, %v8536
    %v8538 = vand.u32 2147483647, %v8537
    %v8540 = vcvt.s32.f32 %v8533
    %v8541 = vmul.f32 %v8540, %v8538
    %v8542 = vxor.u32 %v8541, 2147483648
    %v8543 = vsel %vm8460, %v8542, %v8541
    %v8544 = vsub.s32 4, %v8520
    %v8545 = vsel %vm8460, %v8544, %v8520
    %v8546 = vsel %vm8459, %v6984, %v8543
    %v8547 = vsel %vm8459, 0, %v8545
    %v8548 = vcosq.f32.pop %v8546
    %v8549 = vsinq.f32.pop %v8546
    %vm8550 = vweird.f32 %v6984
    %v8551 = vadd.s32 %v8547, 3
    %v8552 = vand.u32 %v8551, 3
    %vm8553 = vcmp.lt.s32.totalorder %v8552, 2
    %vm8554 = vcmp.eq.s32.totalorder %v8552, 0
    %v8555 = vxor.u32 %v8549, 2147483648
    %v8556 = vsel %vm8554, %v8548, %v8555
    %vm8557 = vcmp.eq.s32.totalorder %v8552, 2
    %v8558 = vxor.u32 %v8548, 2147483648
    %v8559 = vsel %vm8557, %v8558, %v8549
    %v8560 = vsel %vm8553, %v8556, %v8559
    %v8561 = vsel %vm8550, nan, %v8560
    %v8562 = vand.u32 2147483647, %v6985
    %vm8563 = vcmp.le.f32.partialorder %v8562, 0.7853982
    %vm8564 = vcmp.lt.s32.totalorder %v6985, 0
    %v8565 = vand.u32 %v6985, 2139095040
    %v8566 = vshrl.u32 %v8565, 23
    %v8567 = vsub.s32 %v8566, 127
    %v8568 = vand.u32 2147483647, %v6985
    %v8569 = vand.u32 %v8568, 8388607
    %v8570 = vor.u32 %v8569, 8388608
    %v8571 = vsub.s32 0, %v8570
    %v8572 = vadd.s32 %v8567, 1
    %vm8573 = vcmp.gt.s32.totalorder %v8572, 0
    %v8574 = vsel %vm8573, %v8572, 0
    %v8575 = vshrl.u32 %v8574, 5
    %v8576 = vand.u32 %v8574, 31
    %v8577 = vsub.s32 32, %v8576
    %v8578 = vshrl.u32 683565275, %v8577
    %v8579 = vshll.u32 683565275, %v8576
    %v8580 = vshrl.u32 2475754826, %v8577
    %v8581 = vor.u32 %v8579, %v8580
    %v8582 = vshll.u32 2475754826, %v8576
    %v8583 = vshrl.u32 2131351028, %v8577
    %v8584 = vor.u32 %v8582, %v8583
    %v8585 = vshll.u32 2131351028, %v8576
    %v8586 = vshrl.u32 2102212464, %v8577
    %v8587 = vor.u32 %v8585, %v8586
    %v8588 = vshll.u32 2102212464, %v8576
    %v8589 = vshrl.u32 920167782, %v8577
    %v8590 = vor.u32 %v8588, %v8589
    %v8591 = vshll.u32 920167782, %v8576
    %v8592 = vshrl.u32 1326507024, %v8577
    %v8593 = vor.u32 %v8591, %v8592
    %vm8594 = vcmp.lt.s32.totalorder %v8575, 1
    %vm8595 = vcmp.lt.s32.totalorder %v8575, 2
    %vm8596 = vcmp.lt.s32.totalorder %v8575, 3
    %vm8597 = vcmp.lt.s32.totalorder %v8575, 4
    %v8598 = vsel %vm8594, %v8578, %v8581
    %v8599 = vsel %vm8597, %v8587, 2102212464
    %v8600 = vsel %vm8596, %v8584, %v8599
    %v8601 = vsel %vm8595, %v8598, %v8600
    %v8602 = vsel %vm8594, %v8581, %v8584
    %v8603 = vsel %vm8597, %v8590, 920167782
    %v8604 = vsel %vm8596, %v8587, %v8603
    %v8605 = vsel %vm8595, %v8602, %v8604
    %v8606 = vsel %vm8594, %v8584, %v8587
    %v8607 = vsel %vm8597, %v8593, 1326507024
    %v8608 = vsel %vm8596, %v8590, %v8607
    %v8609 = vsel %vm8595, %v8606, %v8608
    %v8610 = vshll.u32 %v8570, 8
    %v8611 = vmul.u32.u64.compose %v8610, %v8609
    %v8612 = vextract.low.u32 %v8611
    %v8613 = vextract.high.u32 %v8611
    %v8614 = vmul.u32.u64.compose %v8610, %v8605
    %v8615 = vextract.low.u32 %v8614
    %v8616 = vextract.high.u32 %v8614
    %v8617 = vmul.u32 %v8610, %v8601
    %v8618 = vadd.s32 %v8613, %v8615
    %vm8619 = vc.u32 %v8613, %v8615
    %v8620 = vadd.s32 %v8616, 1
    %v8621 = vsel %vm8619, %v8620, %v8616
    %v8622 = vadd.s32 %v8617, %v8621
    %v8623 = vadd.s32 %v8622, 536870912
    %v8624 = vshrl.u32 %v8623, 30
    %v8625 = vshll.u32 %v8624, 30
    %v8626 = vsub.s32 %v8622, %v8625
    %vm8627 = vcmp.lt.s32.totalorder %v8626, 0
    %v8628 = vsub.s32 0, %v8626
    %v8629 = vsel %vm8627, %v8628, %v8626
    %v8630 = vclz %v8629
    %v8631 = vsub.s32 %v8630, 2
    %vm8632 = vcmp.gt.s32.totalorder 0, %v8631
    %v8633 = vsel %vm8632, 0, %v8631
    %v8634 = vsub.s32 32, %v8633
    %v8635 = vshll.u32 %v8626, %v8633
    %v8636 = vshrl.u32 %v8618, %v8634
    %v8637 = vor.u32 %v8635, %v8636
    %v8638 = vsub.s32 4294967266, %v8633
    %v8639 = vadd.s32 %v8638, 127
    %v8640 = vshll.u32 %v8639, 23
    %v8641 = vor.u32 4788187, %v8640
    %v8642 = vand.u32 2147483647, %v8641
    %v8644 = vcvt.s32.f32 %v8637
    %v8645 = vmul.f32 %v8644, %v8642
    %v8646 = vxor.u32 %v8645, 2147483648
    %v8647 = vsel %vm8564, %v8646, %v8645
    %v8648 = vsub.s32 4, %v8624
    %v8649 = vsel %vm8564, %v8648, %v8624
    %v8650 = vsel %vm8563, %v6985, %v8647
    %v8651 = vsel %vm8563, 0, %v8649
    %v8652 = vcosq.f32.pop %v8650
    %v8653 = vsinq.f32.pop %v8650
    %vm8654 = vweird.f32 %v6985
    %v8655 = vadd.s32 %v8651, 3
    %v8656 = vand.u32 %v8655, 3
    %vm8657 = vcmp.lt.s32.totalorder %v8656, 2
    %vm8658 = vcmp.eq.s32.totalorder %v8656, 0
    %v8659 = vxor.u32 %v8653, 2147483648
    %v8660 = vsel %vm8658, %v8652, %v8659
    %vm8661 = vcmp.eq.s32.totalorder %v8656, 2
    %v8662 = vxor.u32 %v8652, 2147483648
    %v8663 = vsel %vm8661, %v8662, %v8653
    %v8664 = vsel %vm8657, %v8660, %v8663
    %v8665 = vsel %vm8654, nan, %v8664
    %v8666 = vand.u32 2147483647, %v6986
    %vm8667 = vcmp.le.f32.partialorder %v8666, 0.7853982
    %vm8668 = vcmp.lt.s32.totalorder %v6986, 0
    %v8669 = vand.u32 %v6986, 2139095040
    %v8670 = vshrl.u32 %v8669, 23
    %v8671 = vsub.s32 %v8670, 127
    %v8672 = vand.u32 2147483647, %v6986
    %v8673 = vand.u32 %v8672, 8388607
    %v8674 = vor.u32 %v8673, 8388608
    %v8675 = vsub.s32 0, %v8674
    %v8676 = vadd.s32 %v8671, 1
    %vm8677 = vcmp.gt.s32.totalorder %v8676, 0
    %v8678 = vsel %vm8677, %v8676, 0
    %v8679 = vshrl.u32 %v8678, 5
    %v8680 = vand.u32 %v8678, 31
    %v8681 = vsub.s32 32, %v8680
    %v8682 = vshrl.u32 683565275, %v8681
    %v8683 = vshll.u32 683565275, %v8680
    %v8684 = vshrl.u32 2475754826, %v8681
    %v8685 = vor.u32 %v8683, %v8684
    %v8686 = vshll.u32 2475754826, %v8680
    %v8687 = vshrl.u32 2131351028, %v8681
    %v8688 = vor.u32 %v8686, %v8687
    %v8689 = vshll.u32 2131351028, %v8680
    %v8690 = vshrl.u32 2102212464, %v8681
    %v8691 = vor.u32 %v8689, %v8690
    %v8692 = vshll.u32 2102212464, %v8680
    %v8693 = vshrl.u32 920167782, %v8681
    %v8694 = vor.u32 %v8692, %v8693
    %v8695 = vshll.u32 920167782, %v8680
    %v8696 = vshrl.u32 1326507024, %v8681
    %v8697 = vor.u32 %v8695, %v8696
    %vm8698 = vcmp.lt.s32.totalorder %v8679, 1
    %vm8699 = vcmp.lt.s32.totalorder %v8679, 2
    %vm8700 = vcmp.lt.s32.totalorder %v8679, 3
    %vm8701 = vcmp.lt.s32.totalorder %v8679, 4
    %v8702 = vsel %vm8698, %v8682, %v8685
    %v8703 = vsel %vm8701, %v8691, 2102212464
    %v8704 = vsel %vm8700, %v8688, %v8703
    %v8705 = vsel %vm8699, %v8702, %v8704
    %v8706 = vsel %vm8698, %v8685, %v8688
    %v8707 = vsel %vm8701, %v8694, 920167782
    %v8708 = vsel %vm8700, %v8691, %v8707
    %v8709 = vsel %vm8699, %v8706, %v8708
    %v8710 = vsel %vm8698, %v8688, %v8691
    %v8711 = vsel %vm8701, %v8697, 1326507024
    %v8712 = vsel %vm8700, %v8694, %v8711
    %v8713 = vsel %vm8699, %v8710, %v8712
    %v8714 = vshll.u32 %v8674, 8
    %v8715 = vmul.u32.u64.compose %v8714, %v8713
    %v8716 = vextract.low.u32 %v8715
    %v8717 = vextract.high.u32 %v8715
    %v8718 = vmul.u32.u64.compose %v8714, %v8709
    %v8719 = vextract.low.u32 %v8718
    %v8720 = vextract.high.u32 %v8718
    %v8721 = vmul.u32 %v8714, %v8705
    %v8722 = vadd.s32 %v8717, %v8719
    %vm8723 = vc.u32 %v8717, %v8719
    %v8724 = vadd.s32 %v8720, 1
    %v8725 = vsel %vm8723, %v8724, %v8720
    %v8726 = vadd.s32 %v8721, %v8725
    %v8727 = vadd.s32 %v8726, 536870912
    %v8728 = vshrl.u32 %v8727, 30
    %v8729 = vshll.u32 %v8728, 30
    %v8730 = vsub.s32 %v8726, %v8729
    %vm8731 = vcmp.lt.s32.totalorder %v8730, 0
    %v8732 = vsub.s32 0, %v8730
    %v8733 = vsel %vm8731, %v8732, %v8730
    %v8734 = vclz %v8733
    %v8735 = vsub.s32 %v8734, 2
    %vm8736 = vcmp.gt.s32.totalorder 0, %v8735
    %v8737 = vsel %vm8736, 0, %v8735
    %v8738 = vsub.s32 32, %v8737
    %v8739 = vshll.u32 %v8730, %v8737
    %v8740 = vshrl.u32 %v8722, %v8738
    %v8741 = vor.u32 %v8739, %v8740
    %v8742 = vsub.s32 4294967266, %v8737
    %v8743 = vadd.s32 %v8742, 127
    %v8744 = vshll.u32 %v8743, 23
    %v8745 = vor.u32 4788187, %v8744
    %v8746 = vand.u32 2147483647, %v8745
    %v8748 = vcvt.s32.f32 %v8741
    %v8749 = vmul.f32 %v8748, %v8746
    %v8750 = vxor.u32 %v8749, 2147483648
    %v8751 = vsel %vm8668, %v8750, %v8749
    %v8752 = vsub.s32 4, %v8728
    %v8753 = vsel %vm8668, %v8752, %v8728
    %v8754 = vsel %vm8667, %v6986, %v8751
    %v8755 = vsel %vm8667, 0, %v8753
    %v8756 = vcosq.f32.pop %v8754
    %v8757 = vsinq.f32.pop %v8754
    %vm8758 = vweird.f32 %v6986
    %v8759 = vadd.s32 %v8755, 3
    %v8760 = vand.u32 %v8759, 3
    %vm8761 = vcmp.lt.s32.totalorder %v8760, 2
    %vm8762 = vcmp.eq.s32.totalorder %v8760, 0
    %v8763 = vxor.u32 %v8757, 2147483648
    %v8764 = vsel %vm8762, %v8756, %v8763
    %vm8765 = vcmp.eq.s32.totalorder %v8760, 2
    %v8766 = vxor.u32 %v8756, 2147483648
    %v8767 = vsel %vm8765, %v8766, %v8757
    %v8768 = vsel %vm8761, %v8764, %v8767
    %v8769 = vsel %vm8758, nan, %v8768
    %v8770 = vand.u32 2147483647, %v6987
    %vm8771 = vcmp.le.f32.partialorder %v8770, 0.7853982
    %vm8772 = vcmp.lt.s32.totalorder %v6987, 0
    %v8773 = vand.u32 %v6987, 2139095040
    %v8774 = vshrl.u32 %v8773, 23
    %v8775 = vsub.s32 %v8774, 127
    %v8776 = vand.u32 2147483647, %v6987
    %v8777 = vand.u32 %v8776, 8388607
    %v8778 = vor.u32 %v8777, 8388608
    %v8779 = vsub.s32 0, %v8778
    %v8780 = vadd.s32 %v8775, 1
    %vm8781 = vcmp.gt.s32.totalorder %v8780, 0
    %v8782 = vsel %vm8781, %v8780, 0
    %v8783 = vshrl.u32 %v8782, 5
    %v8784 = vand.u32 %v8782, 31
    %v8785 = vsub.s32 32, %v8784
    %v8786 = vshrl.u32 683565275, %v8785
    %v8787 = vshll.u32 683565275, %v8784
    %v8788 = vshrl.u32 2475754826, %v8785
    %v8789 = vor.u32 %v8787, %v8788
    %v8790 = vshll.u32 2475754826, %v8784
    %v8791 = vshrl.u32 2131351028, %v8785
    %v8792 = vor.u32 %v8790, %v8791
    %v8793 = vshll.u32 2131351028, %v8784
    %v8794 = vshrl.u32 2102212464, %v8785
    %v8795 = vor.u32 %v8793, %v8794
    %v8796 = vshll.u32 2102212464, %v8784
    %v8797 = vshrl.u32 920167782, %v8785
    %v8798 = vor.u32 %v8796, %v8797
    %v8799 = vshll.u32 920167782, %v8784
    %v8800 = vshrl.u32 1326507024, %v8785
    %v8801 = vor.u32 %v8799, %v8800
    %vm8802 = vcmp.lt.s32.totalorder %v8783, 1
    %vm8803 = vcmp.lt.s32.totalorder %v8783, 2
    %vm8804 = vcmp.lt.s32.totalorder %v8783, 3
    %vm8805 = vcmp.lt.s32.totalorder %v8783, 4
    %v8806 = vsel %vm8802, %v8786, %v8789
    %v8807 = vsel %vm8805, %v8795, 2102212464
    %v8808 = vsel %vm8804, %v8792, %v8807
    %v8809 = vsel %vm8803, %v8806, %v8808
    %v8810 = vsel %vm8802, %v8789, %v8792
    %v8811 = vsel %vm8805, %v8798, 920167782
    %v8812 = vsel %vm8804, %v8795, %v8811
    %v8813 = vsel %vm8803, %v8810, %v8812
    %v8814 = vsel %vm8802, %v8792, %v8795
    %v8815 = vsel %vm8805, %v8801, 1326507024
    %v8816 = vsel %vm8804, %v8798, %v8815
    %v8817 = vsel %vm8803, %v8814, %v8816
    %v8818 = vshll.u32 %v8778, 8
    %v8819 = vmul.u32.u64.compose %v8818, %v8817
    %v8820 = vextract.low.u32 %v8819
    %v8821 = vextract.high.u32 %v8819
    %v8822 = vmul.u32.u64.compose %v8818, %v8813
    %v8823 = vextract.low.u32 %v8822
    %v8824 = vextract.high.u32 %v8822
    %v8825 = vmul.u32 %v8818, %v8809
    %v8826 = vadd.s32 %v8821, %v8823
    %vm8827 = vc.u32 %v8821, %v8823
    %v8828 = vadd.s32 %v8824, 1
    %v8829 = vsel %vm8827, %v8828, %v8824
    %v8830 = vadd.s32 %v8825, %v8829
    %v8831 = vadd.s32 %v8830, 536870912
    %v8832 = vshrl.u32 %v8831, 30
    %v8833 = vshll.u32 %v8832, 30
    %v8834 = vsub.s32 %v8830, %v8833
    %vm8835 = vcmp.lt.s32.totalorder %v8834, 0
    %v8836 = vsub.s32 0, %v8834
    %v8837 = vsel %vm8835, %v8836, %v8834
    %v8838 = vclz %v8837
    %v8839 = vsub.s32 %v8838, 2
    %vm8840 = vcmp.gt.s32.totalorder 0, %v8839
    %v8841 = vsel %vm8840, 0, %v8839
    %v8842 = vsub.s32 32, %v8841
    %v8843 = vshll.u32 %v8834, %v8841
    %v8844 = vshrl.u32 %v8826, %v8842
    %v8845 = vor.u32 %v8843, %v8844
    %v8846 = vsub.s32 4294967266, %v8841
    %v8847 = vadd.s32 %v8846, 127
    %v8848 = vshll.u32 %v8847, 23
    %v8849 = vor.u32 4788187, %v8848
    %v8850 = vand.u32 2147483647, %v8849
    %v8852 = vcvt.s32.f32 %v8845
    %v8853 = vmul.f32 %v8852, %v8850
    %v8854 = vxor.u32 %v8853, 2147483648
    %v8855 = vsel %vm8772, %v8854, %v8853
    %v8856 = vsub.s32 4, %v8832
    %v8857 = vsel %vm8772, %v8856, %v8832
    %v8858 = vsel %vm8771, %v6987, %v8855
    %v8859 = vsel %vm8771, 0, %v8857
    %v8860 = vcosq.f32.pop %v8858
    %v8861 = vsinq.f32.pop %v8858
    %vm8862 = vweird.f32 %v6987
    %v8863 = vadd.s32 %v8859, 3
    %v8864 = vand.u32 %v8863, 3
    %vm8865 = vcmp.lt.s32.totalorder %v8864, 2
    %vm8866 = vcmp.eq.s32.totalorder %v8864, 0
    %v8867 = vxor.u32 %v8861, 2147483648
    %v8868 = vsel %vm8866, %v8860, %v8867
    %vm8869 = vcmp.eq.s32.totalorder %v8864, 2
    %v8870 = vxor.u32 %v8860, 2147483648
    %v8871 = vsel %vm8869, %v8870, %v8861
    %v8872 = vsel %vm8865, %v8868, %v8871
    %v8873 = vsel %vm8862, nan, %v8872
    %v8874 = vand.u32 2147483647, %v6988
    %vm8875 = vcmp.le.f32.partialorder %v8874, 0.7853982
    %vm8876 = vcmp.lt.s32.totalorder %v6988, 0
    %v8877 = vand.u32 %v6988, 2139095040
    %v8878 = vshrl.u32 %v8877, 23
    %v8879 = vsub.s32 %v8878, 127
    %v8880 = vand.u32 2147483647, %v6988
    %v8881 = vand.u32 %v8880, 8388607
    %v8882 = vor.u32 %v8881, 8388608
    %v8883 = vsub.s32 0, %v8882
    %v8884 = vadd.s32 %v8879, 1
    %vm8885 = vcmp.gt.s32.totalorder %v8884, 0
    %v8886 = vsel %vm8885, %v8884, 0
    %v8887 = vshrl.u32 %v8886, 5
    %v8888 = vand.u32 %v8886, 31
    %v8889 = vsub.s32 32, %v8888
    %v8890 = vshrl.u32 683565275, %v8889
    %v8891 = vshll.u32 683565275, %v8888
    %v8892 = vshrl.u32 2475754826, %v8889
    %v8893 = vor.u32 %v8891, %v8892
    %v8894 = vshll.u32 2475754826, %v8888
    %v8895 = vshrl.u32 2131351028, %v8889
    %v8896 = vor.u32 %v8894, %v8895
    %v8897 = vshll.u32 2131351028, %v8888
    %v8898 = vshrl.u32 2102212464, %v8889
    %v8899 = vor.u32 %v8897, %v8898
    %v8900 = vshll.u32 2102212464, %v8888
    %v8901 = vshrl.u32 920167782, %v8889
    %v8902 = vor.u32 %v8900, %v8901
    %v8903 = vshll.u32 920167782, %v8888
    %v8904 = vshrl.u32 1326507024, %v8889
    %v8905 = vor.u32 %v8903, %v8904
    %vm8906 = vcmp.lt.s32.totalorder %v8887, 1
    %vm8907 = vcmp.lt.s32.totalorder %v8887, 2
    %vm8908 = vcmp.lt.s32.totalorder %v8887, 3
    %vm8909 = vcmp.lt.s32.totalorder %v8887, 4
    %v8910 = vsel %vm8906, %v8890, %v8893
    %v8911 = vsel %vm8909, %v8899, 2102212464
    %v8912 = vsel %vm8908, %v8896, %v8911
    %v8913 = vsel %vm8907, %v8910, %v8912
    %v8914 = vsel %vm8906, %v8893, %v8896
    %v8915 = vsel %vm8909, %v8902, 920167782
    %v8916 = vsel %vm8908, %v8899, %v8915
    %v8917 = vsel %vm8907, %v8914, %v8916
    %v8918 = vsel %vm8906, %v8896, %v8899
    %v8919 = vsel %vm8909, %v8905, 1326507024
    %v8920 = vsel %vm8908, %v8902, %v8919
    %v8921 = vsel %vm8907, %v8918, %v8920
    %v8922 = vshll.u32 %v8882, 8
    %v8923 = vmul.u32.u64.compose %v8922, %v8921
    %v8924 = vextract.low.u32 %v8923
    %v8925 = vextract.high.u32 %v8923
    %v8926 = vmul.u32.u64.compose %v8922, %v8917
    %v8927 = vextract.low.u32 %v8926
    %v8928 = vextract.high.u32 %v8926
    %v8929 = vmul.u32 %v8922, %v8913
    %v8930 = vadd.s32 %v8925, %v8927
    %vm8931 = vc.u32 %v8925, %v8927
    %v8932 = vadd.s32 %v8928, 1
    %v8933 = vsel %vm8931, %v8932, %v8928
    %v8934 = vadd.s32 %v8929, %v8933
    %v8935 = vadd.s32 %v8934, 536870912
    %v8936 = vshrl.u32 %v8935, 30
    %v8937 = vshll.u32 %v8936, 30
    %v8938 = vsub.s32 %v8934, %v8937
    %vm8939 = vcmp.lt.s32.totalorder %v8938, 0
    %v8940 = vsub.s32 0, %v8938
    %v8941 = vsel %vm8939, %v8940, %v8938
    %v8942 = vclz %v8941
    %v8943 = vsub.s32 %v8942, 2
    %vm8944 = vcmp.gt.s32.totalorder 0, %v8943
    %v8945 = vsel %vm8944, 0, %v8943
    %v8946 = vsub.s32 32, %v8945
    %v8947 = vshll.u32 %v8938, %v8945
    %v8948 = vshrl.u32 %v8930, %v8946
    %v8949 = vor.u32 %v8947, %v8948
    %v8950 = vsub.s32 4294967266, %v8945
    %v8951 = vadd.s32 %v8950, 127
    %v8952 = vshll.u32 %v8951, 23
    %v8953 = vor.u32 4788187, %v8952
    %v8954 = vand.u32 2147483647, %v8953
    %v8956 = vcvt.s32.f32 %v8949
    %v8957 = vmul.f32 %v8956, %v8954
    %v8958 = vxor.u32 %v8957, 2147483648
    %v8959 = vsel %vm8876, %v8958, %v8957
    %v8960 = vsub.s32 4, %v8936
    %v8961 = vsel %vm8876, %v8960, %v8936
    %v8962 = vsel %vm8875, %v6988, %v8959
    %v8963 = vsel %vm8875, 0, %v8961
    %v8964 = vcosq.f32.pop %v8962
    %v8965 = vsinq.f32.pop %v8962
    %vm8966 = vweird.f32 %v6988
    %v8967 = vadd.s32 %v8963, 3
    %v8968 = vand.u32 %v8967, 3
    %vm8969 = vcmp.lt.s32.totalorder %v8968, 2
    %vm8970 = vcmp.eq.s32.totalorder %v8968, 0
    %v8971 = vxor.u32 %v8965, 2147483648
    %v8972 = vsel %vm8970, %v8964, %v8971
    %vm8973 = vcmp.eq.s32.totalorder %v8968, 2
    %v8974 = vxor.u32 %v8964, 2147483648
    %v8975 = vsel %vm8973, %v8974, %v8965
    %v8976 = vsel %vm8969, %v8972, %v8975
    %v8977 = vsel %vm8966, nan, %v8976
    %v8978 = vand.u32 2147483647, %v6989
    %vm8979 = vcmp.le.f32.partialorder %v8978, 0.7853982
    %vm8980 = vcmp.lt.s32.totalorder %v6989, 0
    %v8981 = vand.u32 %v6989, 2139095040
    %v8982 = vshrl.u32 %v8981, 23
    %v8983 = vsub.s32 %v8982, 127
    %v8984 = vand.u32 2147483647, %v6989
    %v8985 = vand.u32 %v8984, 8388607
    %v8986 = vor.u32 %v8985, 8388608
    %v8987 = vsub.s32 0, %v8986
    %v8988 = vadd.s32 %v8983, 1
    %vm8989 = vcmp.gt.s32.totalorder %v8988, 0
    %v8990 = vsel %vm8989, %v8988, 0
    %v8991 = vshrl.u32 %v8990, 5
    %v8992 = vand.u32 %v8990, 31
    %v8993 = vsub.s32 32, %v8992
    %v8994 = vshrl.u32 683565275, %v8993
    %v8995 = vshll.u32 683565275, %v8992
    %v8996 = vshrl.u32 2475754826, %v8993
    %v8997 = vor.u32 %v8995, %v8996
    %v8998 = vshll.u32 2475754826, %v8992
    %v8999 = vshrl.u32 2131351028, %v8993
    %v9000 = vor.u32 %v8998, %v8999
    %v9001 = vshll.u32 2131351028, %v8992
    %v9002 = vshrl.u32 2102212464, %v8993
    %v9003 = vor.u32 %v9001, %v9002
    %v9004 = vshll.u32 2102212464, %v8992
    %v9005 = vshrl.u32 920167782, %v8993
    %v9006 = vor.u32 %v9004, %v9005
    %v9007 = vshll.u32 920167782, %v8992
    %v9008 = vshrl.u32 1326507024, %v8993
    %v9009 = vor.u32 %v9007, %v9008
    %vm9010 = vcmp.lt.s32.totalorder %v8991, 1
    %vm9011 = vcmp.lt.s32.totalorder %v8991, 2
    %vm9012 = vcmp.lt.s32.totalorder %v8991, 3
    %vm9013 = vcmp.lt.s32.totalorder %v8991, 4
    %v9014 = vsel %vm9010, %v8994, %v8997
    %v9015 = vsel %vm9013, %v9003, 2102212464
    %v9016 = vsel %vm9012, %v9000, %v9015
    %v9017 = vsel %vm9011, %v9014, %v9016
    %v9018 = vsel %vm9010, %v8997, %v9000
    %v9019 = vsel %vm9013, %v9006, 920167782
    %v9020 = vsel %vm9012, %v9003, %v9019
    %v9021 = vsel %vm9011, %v9018, %v9020
    %v9022 = vsel %vm9010, %v9000, %v9003
    %v9023 = vsel %vm9013, %v9009, 1326507024
    %v9024 = vsel %vm9012, %v9006, %v9023
    %v9025 = vsel %vm9011, %v9022, %v9024
    %v9026 = vshll.u32 %v8986, 8
    %v9027 = vmul.u32.u64.compose %v9026, %v9025
    %v9028 = vextract.low.u32 %v9027
    %v9029 = vextract.high.u32 %v9027
    %v9030 = vmul.u32.u64.compose %v9026, %v9021
    %v9031 = vextract.low.u32 %v9030
    %v9032 = vextract.high.u32 %v9030
    %v9033 = vmul.u32 %v9026, %v9017
    %v9034 = vadd.s32 %v9029, %v9031
    %vm9035 = vc.u32 %v9029, %v9031
    %v9036 = vadd.s32 %v9032, 1
    %v9037 = vsel %vm9035, %v9036, %v9032
    %v9038 = vadd.s32 %v9033, %v9037
    %v9039 = vadd.s32 %v9038, 536870912
    %v9040 = vshrl.u32 %v9039, 30
    %v9041 = vshll.u32 %v9040, 30
    %v9042 = vsub.s32 %v9038, %v9041
    %vm9043 = vcmp.lt.s32.totalorder %v9042, 0
    %v9044 = vsub.s32 0, %v9042
    %v9045 = vsel %vm9043, %v9044, %v9042
    %v9046 = vclz %v9045
    %v9047 = vsub.s32 %v9046, 2
    %vm9048 = vcmp.gt.s32.totalorder 0, %v9047
    %v9049 = vsel %vm9048, 0, %v9047
    %v9050 = vsub.s32 32, %v9049
    %v9051 = vshll.u32 %v9042, %v9049
    %v9052 = vshrl.u32 %v9034, %v9050
    %v9053 = vor.u32 %v9051, %v9052
    %v9054 = vsub.s32 4294967266, %v9049
    %v9055 = vadd.s32 %v9054, 127
    %v9056 = vshll.u32 %v9055, 23
    %v9057 = vor.u32 4788187, %v9056
    %v9058 = vand.u32 2147483647, %v9057
    %v9060 = vcvt.s32.f32 %v9053
    %v9061 = vmul.f32 %v9060, %v9058
    %v9062 = vxor.u32 %v9061, 2147483648
    %v9063 = vsel %vm8980, %v9062, %v9061
    %v9064 = vsub.s32 4, %v9040
    %v9065 = vsel %vm8980, %v9064, %v9040
    %v9066 = vsel %vm8979, %v6989, %v9063
    %v9067 = vsel %vm8979, 0, %v9065
    %v9068 = vcosq.f32.pop %v9066
    %v9069 = vsinq.f32.pop %v9066
    %vm9070 = vweird.f32 %v6989
    %v9071 = vadd.s32 %v9067, 3
    %v9072 = vand.u32 %v9071, 3
    %vm9073 = vcmp.lt.s32.totalorder %v9072, 2
    %vm9074 = vcmp.eq.s32.totalorder %v9072, 0
    %v9075 = vxor.u32 %v9069, 2147483648
    %v9076 = vsel %vm9074, %v9068, %v9075
    %vm9077 = vcmp.eq.s32.totalorder %v9072, 2
    %v9078 = vxor.u32 %v9068, 2147483648
    %v9079 = vsel %vm9077, %v9078, %v9069
    %v9080 = vsel %vm9073, %v9076, %v9079
    %v9081 = vsel %vm9070, nan, %v9080
    %v9082 = vand.u32 2147483647, %v6990
    %vm9083 = vcmp.le.f32.partialorder %v9082, 0.7853982
    %vm9084 = vcmp.lt.s32.totalorder %v6990, 0
    %v9085 = vand.u32 %v6990, 2139095040
    %v9086 = vshrl.u32 %v9085, 23
    %v9087 = vsub.s32 %v9086, 127
    %v9088 = vand.u32 2147483647, %v6990
    %v9089 = vand.u32 %v9088, 8388607
    %v9090 = vor.u32 %v9089, 8388608
    %v9091 = vsub.s32 0, %v9090
    %v9092 = vadd.s32 %v9087, 1
    %vm9093 = vcmp.gt.s32.totalorder %v9092, 0
    %v9094 = vsel %vm9093, %v9092, 0
    %v9095 = vshrl.u32 %v9094, 5
    %v9096 = vand.u32 %v9094, 31
    %v9097 = vsub.s32 32, %v9096
    %v9098 = vshrl.u32 683565275, %v9097
    %v9099 = vshll.u32 683565275, %v9096
    %v9100 = vshrl.u32 2475754826, %v9097
    %v9101 = vor.u32 %v9099, %v9100
    %v9102 = vshll.u32 2475754826, %v9096
    %v9103 = vshrl.u32 2131351028, %v9097
    %v9104 = vor.u32 %v9102, %v9103
    %v9105 = vshll.u32 2131351028, %v9096
    %v9106 = vshrl.u32 2102212464, %v9097
    %v9107 = vor.u32 %v9105, %v9106
    %v9108 = vshll.u32 2102212464, %v9096
    %v9109 = vshrl.u32 920167782, %v9097
    %v9110 = vor.u32 %v9108, %v9109
    %v9111 = vshll.u32 920167782, %v9096
    %v9112 = vshrl.u32 1326507024, %v9097
    %v9113 = vor.u32 %v9111, %v9112
    %vm9114 = vcmp.lt.s32.totalorder %v9095, 1
    %vm9115 = vcmp.lt.s32.totalorder %v9095, 2
    %vm9116 = vcmp.lt.s32.totalorder %v9095, 3
    %vm9117 = vcmp.lt.s32.totalorder %v9095, 4
    %v9118 = vsel %vm9114, %v9098, %v9101
    %v9119 = vsel %vm9117, %v9107, 2102212464
    %v9120 = vsel %vm9116, %v9104, %v9119
    %v9121 = vsel %vm9115, %v9118, %v9120
    %v9122 = vsel %vm9114, %v9101, %v9104
    %v9123 = vsel %vm9117, %v9110, 920167782
    %v9124 = vsel %vm9116, %v9107, %v9123
    %v9125 = vsel %vm9115, %v9122, %v9124
    %v9126 = vsel %vm9114, %v9104, %v9107
    %v9127 = vsel %vm9117, %v9113, 1326507024
    %v9128 = vsel %vm9116, %v9110, %v9127
    %v9129 = vsel %vm9115, %v9126, %v9128
    %v9130 = vshll.u32 %v9090, 8
    %v9131 = vmul.u32.u64.compose %v9130, %v9129
    %v9132 = vextract.low.u32 %v9131
    %v9133 = vextract.high.u32 %v9131
    %v9134 = vmul.u32.u64.compose %v9130, %v9125
    %v9135 = vextract.low.u32 %v9134
    %v9136 = vextract.high.u32 %v9134
    %v9137 = vmul.u32 %v9130, %v9121
    %v9138 = vadd.s32 %v9133, %v9135
    %vm9139 = vc.u32 %v9133, %v9135
    %v9140 = vadd.s32 %v9136, 1
    %v9141 = vsel %vm9139, %v9140, %v9136
    %v9142 = vadd.s32 %v9137, %v9141
    %v9143 = vadd.s32 %v9142, 536870912
    %v9144 = vshrl.u32 %v9143, 30
    %v9145 = vshll.u32 %v9144, 30
    %v9146 = vsub.s32 %v9142, %v9145
    %vm9147 = vcmp.lt.s32.totalorder %v9146, 0
    %v9148 = vsub.s32 0, %v9146
    %v9149 = vsel %vm9147, %v9148, %v9146
    %v9150 = vclz %v9149
    %v9151 = vsub.s32 %v9150, 2
    %vm9152 = vcmp.gt.s32.totalorder 0, %v9151
    %v9153 = vsel %vm9152, 0, %v9151
    %v9154 = vsub.s32 32, %v9153
    %v9155 = vshll.u32 %v9146, %v9153
    %v9156 = vshrl.u32 %v9138, %v9154
    %v9157 = vor.u32 %v9155, %v9156
    %v9158 = vsub.s32 4294967266, %v9153
    %v9159 = vadd.s32 %v9158, 127
    %v9160 = vshll.u32 %v9159, 23
    %v9161 = vor.u32 4788187, %v9160
    %v9162 = vand.u32 2147483647, %v9161
    %v9164 = vcvt.s32.f32 %v9157
    %v9165 = vmul.f32 %v9164, %v9162
    %v9166 = vxor.u32 %v9165, 2147483648
    %v9167 = vsel %vm9084, %v9166, %v9165
    %v9168 = vsub.s32 4, %v9144
    %v9169 = vsel %vm9084, %v9168, %v9144
    %v9170 = vsel %vm9083, %v6990, %v9167
    %v9171 = vsel %vm9083, 0, %v9169
    %v9172 = vcosq.f32.pop %v9170
    %v9173 = vsinq.f32.pop %v9170
    %vm9174 = vweird.f32 %v6990
    %v9175 = vadd.s32 %v9171, 3
    %v9176 = vand.u32 %v9175, 3
    %vm9177 = vcmp.lt.s32.totalorder %v9176, 2
    %vm9178 = vcmp.eq.s32.totalorder %v9176, 0
    %v9179 = vxor.u32 %v9173, 2147483648
    %v9180 = vsel %vm9178, %v9172, %v9179
    %vm9181 = vcmp.eq.s32.totalorder %v9176, 2
    %v9182 = vxor.u32 %v9172, 2147483648
    %v9183 = vsel %vm9181, %v9182, %v9173
    %v9184 = vsel %vm9177, %v9180, %v9183
    %v9185 = vsel %vm9174, nan, %v9184
    %v9186 = vand.u32 2147483647, %v6991
    %vm9187 = vcmp.le.f32.partialorder %v9186, 0.7853982
    %vm9188 = vcmp.lt.s32.totalorder %v6991, 0
    %v9189 = vand.u32 %v6991, 2139095040
    %v9190 = vshrl.u32 %v9189, 23
    %v9191 = vsub.s32 %v9190, 127
    %v9192 = vand.u32 2147483647, %v6991
    %v9193 = vand.u32 %v9192, 8388607
    %v9194 = vor.u32 %v9193, 8388608
    %v9195 = vsub.s32 0, %v9194
    %v9196 = vadd.s32 %v9191, 1
    %vm9197 = vcmp.gt.s32.totalorder %v9196, 0
    %v9198 = vsel %vm9197, %v9196, 0
    %v9199 = vshrl.u32 %v9198, 5
    %v9200 = vand.u32 %v9198, 31
    %v9201 = vsub.s32 32, %v9200
    %v9202 = vshrl.u32 683565275, %v9201
    %v9203 = vshll.u32 683565275, %v9200
    %v9204 = vshrl.u32 2475754826, %v9201
    %v9205 = vor.u32 %v9203, %v9204
    %v9206 = vshll.u32 2475754826, %v9200
    %v9207 = vshrl.u32 2131351028, %v9201
    %v9208 = vor.u32 %v9206, %v9207
    %v9209 = vshll.u32 2131351028, %v9200
    %v9210 = vshrl.u32 2102212464, %v9201
    %v9211 = vor.u32 %v9209, %v9210
    %v9212 = vshll.u32 2102212464, %v9200
    %v9213 = vshrl.u32 920167782, %v9201
    %v9214 = vor.u32 %v9212, %v9213
    %v9215 = vshll.u32 920167782, %v9200
    %v9216 = vshrl.u32 1326507024, %v9201
    %v9217 = vor.u32 %v9215, %v9216
    %vm9218 = vcmp.lt.s32.totalorder %v9199, 1
    %vm9219 = vcmp.lt.s32.totalorder %v9199, 2
    %vm9220 = vcmp.lt.s32.totalorder %v9199, 3
    %vm9221 = vcmp.lt.s32.totalorder %v9199, 4
    %v9222 = vsel %vm9218, %v9202, %v9205
    %v9223 = vsel %vm9221, %v9211, 2102212464
    %v9224 = vsel %vm9220, %v9208, %v9223
    %v9225 = vsel %vm9219, %v9222, %v9224
    %v9226 = vsel %vm9218, %v9205, %v9208
    %v9227 = vsel %vm9221, %v9214, 920167782
    %v9228 = vsel %vm9220, %v9211, %v9227
    %v9229 = vsel %vm9219, %v9226, %v9228
    %v9230 = vsel %vm9218, %v9208, %v9211
    %v9231 = vsel %vm9221, %v9217, 1326507024
    %v9232 = vsel %vm9220, %v9214, %v9231
    %v9233 = vsel %vm9219, %v9230, %v9232
    %v9234 = vshll.u32 %v9194, 8
    %v9235 = vmul.u32.u64.compose %v9234, %v9233
    %v9236 = vextract.low.u32 %v9235
    %v9237 = vextract.high.u32 %v9235
    %v9238 = vmul.u32.u64.compose %v9234, %v9229
    %v9239 = vextract.low.u32 %v9238
    %v9240 = vextract.high.u32 %v9238
    %v9241 = vmul.u32 %v9234, %v9225
    %v9242 = vadd.s32 %v9237, %v9239
    %vm9243 = vc.u32 %v9237, %v9239
    %v9244 = vadd.s32 %v9240, 1
    %v9245 = vsel %vm9243, %v9244, %v9240
    %v9246 = vadd.s32 %v9241, %v9245
    %v9247 = vadd.s32 %v9246, 536870912
    %v9248 = vshrl.u32 %v9247, 30
    %v9249 = vshll.u32 %v9248, 30
    %v9250 = vsub.s32 %v9246, %v9249
    %vm9251 = vcmp.lt.s32.totalorder %v9250, 0
    %v9252 = vsub.s32 0, %v9250
    %v9253 = vsel %vm9251, %v9252, %v9250
    %v9254 = vclz %v9253
    %v9255 = vsub.s32 %v9254, 2
    %vm9256 = vcmp.gt.s32.totalorder 0, %v9255
    %v9257 = vsel %vm9256, 0, %v9255
    %v9258 = vsub.s32 32, %v9257
    %v9259 = vshll.u32 %v9250, %v9257
    %v9260 = vshrl.u32 %v9242, %v9258
    %v9261 = vor.u32 %v9259, %v9260
    %v9262 = vsub.s32 4294967266, %v9257
    %v9263 = vadd.s32 %v9262, 127
    %v9264 = vshll.u32 %v9263, 23
    %v9265 = vor.u32 4788187, %v9264
    %v9266 = vand.u32 2147483647, %v9265
    %v9268 = vcvt.s32.f32 %v9261
    %v9269 = vmul.f32 %v9268, %v9266
    %v9270 = vxor.u32 %v9269, 2147483648
    %v9271 = vsel %vm9188, %v9270, %v9269
    %v9272 = vsub.s32 4, %v9248
    %v9273 = vsel %vm9188, %v9272, %v9248
    %v9274 = vsel %vm9187, %v6991, %v9271
    %v9275 = vsel %vm9187, 0, %v9273
    %v9276 = vcosq.f32.pop %v9274
    %v9277 = vsinq.f32.pop %v9274
    %vm9278 = vweird.f32 %v6991
    %v9279 = vadd.s32 %v9275, 3
    %v9280 = vand.u32 %v9279, 3
    %vm9281 = vcmp.lt.s32.totalorder %v9280, 2
    %vm9282 = vcmp.eq.s32.totalorder %v9280, 0
    %v9283 = vxor.u32 %v9277, 2147483648
    %v9284 = vsel %vm9282, %v9276, %v9283
    %vm9285 = vcmp.eq.s32.totalorder %v9280, 2
    %v9286 = vxor.u32 %v9276, 2147483648
    %v9287 = vsel %vm9285, %v9286, %v9277
    %v9288 = vsel %vm9281, %v9284, %v9287
    %v9289 = vsel %vm9278, nan, %v9288
    %v9290 = vand.u32 2147483647, %v6992
    %vm9291 = vcmp.le.f32.partialorder %v9290, 0.7853982
    %vm9292 = vcmp.lt.s32.totalorder %v6992, 0
    %v9293 = vand.u32 %v6992, 2139095040
    %v9294 = vshrl.u32 %v9293, 23
    %v9295 = vsub.s32 %v9294, 127
    %v9296 = vand.u32 2147483647, %v6992
    %v9297 = vand.u32 %v9296, 8388607
    %v9298 = vor.u32 %v9297, 8388608
    %v9299 = vsub.s32 0, %v9298
    %v9300 = vadd.s32 %v9295, 1
    %vm9301 = vcmp.gt.s32.totalorder %v9300, 0
    %v9302 = vsel %vm9301, %v9300, 0
    %v9303 = vshrl.u32 %v9302, 5
    %v9304 = vand.u32 %v9302, 31
    %v9305 = vsub.s32 32, %v9304
    %v9306 = vshrl.u32 683565275, %v9305
    %v9307 = vshll.u32 683565275, %v9304
    %v9308 = vshrl.u32 2475754826, %v9305
    %v9309 = vor.u32 %v9307, %v9308
    %v9310 = vshll.u32 2475754826, %v9304
    %v9311 = vshrl.u32 2131351028, %v9305
    %v9312 = vor.u32 %v9310, %v9311
    %v9313 = vshll.u32 2131351028, %v9304
    %v9314 = vshrl.u32 2102212464, %v9305
    %v9315 = vor.u32 %v9313, %v9314
    %v9316 = vshll.u32 2102212464, %v9304
    %v9317 = vshrl.u32 920167782, %v9305
    %v9318 = vor.u32 %v9316, %v9317
    %v9319 = vshll.u32 920167782, %v9304
    %v9320 = vshrl.u32 1326507024, %v9305
    %v9321 = vor.u32 %v9319, %v9320
    %vm9322 = vcmp.lt.s32.totalorder %v9303, 1
    %vm9323 = vcmp.lt.s32.totalorder %v9303, 2
    %vm9324 = vcmp.lt.s32.totalorder %v9303, 3
    %vm9325 = vcmp.lt.s32.totalorder %v9303, 4
    %v9326 = vsel %vm9322, %v9306, %v9309
    %v9327 = vsel %vm9325, %v9315, 2102212464
    %v9328 = vsel %vm9324, %v9312, %v9327
    %v9329 = vsel %vm9323, %v9326, %v9328
    %v9330 = vsel %vm9322, %v9309, %v9312
    %v9331 = vsel %vm9325, %v9318, 920167782
    %v9332 = vsel %vm9324, %v9315, %v9331
    %v9333 = vsel %vm9323, %v9330, %v9332
    %v9334 = vsel %vm9322, %v9312, %v9315
    %v9335 = vsel %vm9325, %v9321, 1326507024
    %v9336 = vsel %vm9324, %v9318, %v9335
    %v9337 = vsel %vm9323, %v9334, %v9336
    %v9338 = vshll.u32 %v9298, 8
    %v9339 = vmul.u32.u64.compose %v9338, %v9337
    %v9340 = vextract.low.u32 %v9339
    %v9341 = vextract.high.u32 %v9339
    %v9342 = vmul.u32.u64.compose %v9338, %v9333
    %v9343 = vextract.low.u32 %v9342
    %v9344 = vextract.high.u32 %v9342
    %v9345 = vmul.u32 %v9338, %v9329
    %v9346 = vadd.s32 %v9341, %v9343
    %vm9347 = vc.u32 %v9341, %v9343
    %v9348 = vadd.s32 %v9344, 1
    %v9349 = vsel %vm9347, %v9348, %v9344
    %v9350 = vadd.s32 %v9345, %v9349
    %v9351 = vadd.s32 %v9350, 536870912
    %v9352 = vshrl.u32 %v9351, 30
    %v9353 = vshll.u32 %v9352, 30
    %v9354 = vsub.s32 %v9350, %v9353
    %vm9355 = vcmp.lt.s32.totalorder %v9354, 0
    %v9356 = vsub.s32 0, %v9354
    %v9357 = vsel %vm9355, %v9356, %v9354
    %v9358 = vclz %v9357
    %v9359 = vsub.s32 %v9358, 2
    %vm9360 = vcmp.gt.s32.totalorder 0, %v9359
    %v9361 = vsel %vm9360, 0, %v9359
    %v9362 = vsub.s32 32, %v9361
    %v9363 = vshll.u32 %v9354, %v9361
    %v9364 = vshrl.u32 %v9346, %v9362
    %v9365 = vor.u32 %v9363, %v9364
    %v9366 = vsub.s32 4294967266, %v9361
    %v9367 = vadd.s32 %v9366, 127
    %v9368 = vshll.u32 %v9367, 23
    %v9369 = vor.u32 4788187, %v9368
    %v9370 = vand.u32 2147483647, %v9369
    %v9372 = vcvt.s32.f32 %v9365
    %v9373 = vmul.f32 %v9372, %v9370
    %v9374 = vxor.u32 %v9373, 2147483648
    %v9375 = vsel %vm9292, %v9374, %v9373
    %v9376 = vsub.s32 4, %v9352
    %v9377 = vsel %vm9292, %v9376, %v9352
    %v9378 = vsel %vm9291, %v6992, %v9375
    %v9379 = vsel %vm9291, 0, %v9377
    %v9380 = vcosq.f32.pop %v9378
    %v9381 = vsinq.f32.pop %v9378
    %vm9382 = vweird.f32 %v6992
    %v9383 = vadd.s32 %v9379, 3
    %v9384 = vand.u32 %v9383, 3
    %vm9385 = vcmp.lt.s32.totalorder %v9384, 2
    %vm9386 = vcmp.eq.s32.totalorder %v9384, 0
    %v9387 = vxor.u32 %v9381, 2147483648
    %v9388 = vsel %vm9386, %v9380, %v9387
    %vm9389 = vcmp.eq.s32.totalorder %v9384, 2
    %v9390 = vxor.u32 %v9380, 2147483648
    %v9391 = vsel %vm9389, %v9390, %v9381
    %v9392 = vsel %vm9385, %v9388, %v9391
    %v9393 = vsel %vm9382, nan, %v9392
    %v9394 = vand.u32 2147483647, %v6993
    %vm9395 = vcmp.le.f32.partialorder %v9394, 0.7853982
    %vm9396 = vcmp.lt.s32.totalorder %v6993, 0
    %v9397 = vand.u32 %v6993, 2139095040
    %v9398 = vshrl.u32 %v9397, 23
    %v9399 = vsub.s32 %v9398, 127
    %v9400 = vand.u32 2147483647, %v6993
    %v9401 = vand.u32 %v9400, 8388607
    %v9402 = vor.u32 %v9401, 8388608
    %v9403 = vsub.s32 0, %v9402
    %v9404 = vadd.s32 %v9399, 1
    %vm9405 = vcmp.gt.s32.totalorder %v9404, 0
    %v9406 = vsel %vm9405, %v9404, 0
    %v9407 = vshrl.u32 %v9406, 5
    %v9408 = vand.u32 %v9406, 31
    %v9409 = vsub.s32 32, %v9408
    %v9410 = vshrl.u32 683565275, %v9409
    %v9411 = vshll.u32 683565275, %v9408
    %v9412 = vshrl.u32 2475754826, %v9409
    %v9413 = vor.u32 %v9411, %v9412
    %v9414 = vshll.u32 2475754826, %v9408
    %v9415 = vshrl.u32 2131351028, %v9409
    %v9416 = vor.u32 %v9414, %v9415
    %v9417 = vshll.u32 2131351028, %v9408
    %v9418 = vshrl.u32 2102212464, %v9409
    %v9419 = vor.u32 %v9417, %v9418
    %v9420 = vshll.u32 2102212464, %v9408
    %v9421 = vshrl.u32 920167782, %v9409
    %v9422 = vor.u32 %v9420, %v9421
    %v9423 = vshll.u32 920167782, %v9408
    %v9424 = vshrl.u32 1326507024, %v9409
    %v9425 = vor.u32 %v9423, %v9424
    %vm9426 = vcmp.lt.s32.totalorder %v9407, 1
    %vm9427 = vcmp.lt.s32.totalorder %v9407, 2
    %vm9428 = vcmp.lt.s32.totalorder %v9407, 3
    %vm9429 = vcmp.lt.s32.totalorder %v9407, 4
    %v9430 = vsel %vm9426, %v9410, %v9413
    %v9431 = vsel %vm9429, %v9419, 2102212464
    %v9432 = vsel %vm9428, %v9416, %v9431
    %v9433 = vsel %vm9427, %v9430, %v9432
    %v9434 = vsel %vm9426, %v9413, %v9416
    %v9435 = vsel %vm9429, %v9422, 920167782
    %v9436 = vsel %vm9428, %v9419, %v9435
    %v9437 = vsel %vm9427, %v9434, %v9436
    %v9438 = vsel %vm9426, %v9416, %v9419
    %v9439 = vsel %vm9429, %v9425, 1326507024
    %v9440 = vsel %vm9428, %v9422, %v9439
    %v9441 = vsel %vm9427, %v9438, %v9440
    %v9442 = vshll.u32 %v9402, 8
    %v9443 = vmul.u32.u64.compose %v9442, %v9441
    %v9444 = vextract.low.u32 %v9443
    %v9445 = vextract.high.u32 %v9443
    %v9446 = vmul.u32.u64.compose %v9442, %v9437
    %v9447 = vextract.low.u32 %v9446
    %v9448 = vextract.high.u32 %v9446
    %v9449 = vmul.u32 %v9442, %v9433
    %v9450 = vadd.s32 %v9445, %v9447
    %vm9451 = vc.u32 %v9445, %v9447
    %v9452 = vadd.s32 %v9448, 1
    %v9453 = vsel %vm9451, %v9452, %v9448
    %v9454 = vadd.s32 %v9449, %v9453
    %v9455 = vadd.s32 %v9454, 536870912
    %v9456 = vshrl.u32 %v9455, 30
    %v9457 = vshll.u32 %v9456, 30
    %v9458 = vsub.s32 %v9454, %v9457
    %vm9459 = vcmp.lt.s32.totalorder %v9458, 0
    %v9460 = vsub.s32 0, %v9458
    %v9461 = vsel %vm9459, %v9460, %v9458
    %v9462 = vclz %v9461
    %v9463 = vsub.s32 %v9462, 2
    %vm9464 = vcmp.gt.s32.totalorder 0, %v9463
    %v9465 = vsel %vm9464, 0, %v9463
    %v9466 = vsub.s32 32, %v9465
    %v9467 = vshll.u32 %v9458, %v9465
    %v9468 = vshrl.u32 %v9450, %v9466
    %v9469 = vor.u32 %v9467, %v9468
    %v9470 = vsub.s32 4294967266, %v9465
    %v9471 = vadd.s32 %v9470, 127
    %v9472 = vshll.u32 %v9471, 23
    %v9473 = vor.u32 4788187, %v9472
    %v9474 = vand.u32 2147483647, %v9473
    %v9476 = vcvt.s32.f32 %v9469
    %v9477 = vmul.f32 %v9476, %v9474
    %v9478 = vxor.u32 %v9477, 2147483648
    %v9479 = vsel %vm9396, %v9478, %v9477
    %v9480 = vsub.s32 4, %v9456
    %v9481 = vsel %vm9396, %v9480, %v9456
    %v9482 = vsel %vm9395, %v6993, %v9479
    %v9483 = vsel %vm9395, 0, %v9481
    %v9484 = vcosq.f32.pop %v9482
    %v9485 = vsinq.f32.pop %v9482
    %vm9486 = vweird.f32 %v6993
    %v9487 = vadd.s32 %v9483, 3
    %v9488 = vand.u32 %v9487, 3
    %vm9489 = vcmp.lt.s32.totalorder %v9488, 2
    %vm9490 = vcmp.eq.s32.totalorder %v9488, 0
    %v9491 = vxor.u32 %v9485, 2147483648
    %v9492 = vsel %vm9490, %v9484, %v9491
    %vm9493 = vcmp.eq.s32.totalorder %v9488, 2
    %v9494 = vxor.u32 %v9484, 2147483648
    %v9495 = vsel %vm9493, %v9494, %v9485
    %v9496 = vsel %vm9489, %v9492, %v9495
    %v9497 = vsel %vm9486, nan, %v9496
    %v9498 = vand.u32 2147483647, %v6994
    %vm9499 = vcmp.le.f32.partialorder %v9498, 0.7853982
    %vm9500 = vcmp.lt.s32.totalorder %v6994, 0
    %v9501 = vand.u32 %v6994, 2139095040
    %v9502 = vshrl.u32 %v9501, 23
    %v9503 = vsub.s32 %v9502, 127
    %v9504 = vand.u32 2147483647, %v6994
    %v9505 = vand.u32 %v9504, 8388607
    %v9506 = vor.u32 %v9505, 8388608
    %v9507 = vsub.s32 0, %v9506
    %v9508 = vadd.s32 %v9503, 1
    %vm9509 = vcmp.gt.s32.totalorder %v9508, 0
    %v9510 = vsel %vm9509, %v9508, 0
    %v9511 = vshrl.u32 %v9510, 5
    %v9512 = vand.u32 %v9510, 31
    %v9513 = vsub.s32 32, %v9512
    %v9514 = vshrl.u32 683565275, %v9513
    %v9515 = vshll.u32 683565275, %v9512
    %v9516 = vshrl.u32 2475754826, %v9513
    %v9517 = vor.u32 %v9515, %v9516
    %v9518 = vshll.u32 2475754826, %v9512
    %v9519 = vshrl.u32 2131351028, %v9513
    %v9520 = vor.u32 %v9518, %v9519
    %v9521 = vshll.u32 2131351028, %v9512
    %v9522 = vshrl.u32 2102212464, %v9513
    %v9523 = vor.u32 %v9521, %v9522
    %v9524 = vshll.u32 2102212464, %v9512
    %v9525 = vshrl.u32 920167782, %v9513
    %v9526 = vor.u32 %v9524, %v9525
    %v9527 = vshll.u32 920167782, %v9512
    %v9528 = vshrl.u32 1326507024, %v9513
    %v9529 = vor.u32 %v9527, %v9528
    %vm9530 = vcmp.lt.s32.totalorder %v9511, 1
    %vm9531 = vcmp.lt.s32.totalorder %v9511, 2
    %vm9532 = vcmp.lt.s32.totalorder %v9511, 3
    %vm9533 = vcmp.lt.s32.totalorder %v9511, 4
    %v9534 = vsel %vm9530, %v9514, %v9517
    %v9535 = vsel %vm9533, %v9523, 2102212464
    %v9536 = vsel %vm9532, %v9520, %v9535
    %v9537 = vsel %vm9531, %v9534, %v9536
    %v9538 = vsel %vm9530, %v9517, %v9520
    %v9539 = vsel %vm9533, %v9526, 920167782
    %v9540 = vsel %vm9532, %v9523, %v9539
    %v9541 = vsel %vm9531, %v9538, %v9540
    %v9542 = vsel %vm9530, %v9520, %v9523
    %v9543 = vsel %vm9533, %v9529, 1326507024
    %v9544 = vsel %vm9532, %v9526, %v9543
    %v9545 = vsel %vm9531, %v9542, %v9544
    %v9546 = vshll.u32 %v9506, 8
    %v9547 = vmul.u32.u64.compose %v9546, %v9545
    %v9548 = vextract.low.u32 %v9547
    %v9549 = vextract.high.u32 %v9547
    %v9550 = vmul.u32.u64.compose %v9546, %v9541
    %v9551 = vextract.low.u32 %v9550
    %v9552 = vextract.high.u32 %v9550
    %v9553 = vmul.u32 %v9546, %v9537
    %v9554 = vadd.s32 %v9549, %v9551
    %vm9555 = vc.u32 %v9549, %v9551
    %v9556 = vadd.s32 %v9552, 1
    %v9557 = vsel %vm9555, %v9556, %v9552
    %v9558 = vadd.s32 %v9553, %v9557
    %v9559 = vadd.s32 %v9558, 536870912
    %v9560 = vshrl.u32 %v9559, 30
    %v9561 = vshll.u32 %v9560, 30
    %v9562 = vsub.s32 %v9558, %v9561
    %vm9563 = vcmp.lt.s32.totalorder %v9562, 0
    %v9564 = vsub.s32 0, %v9562
    %v9565 = vsel %vm9563, %v9564, %v9562
    %v9566 = vclz %v9565
    %v9567 = vsub.s32 %v9566, 2
    %vm9568 = vcmp.gt.s32.totalorder 0, %v9567
    %v9569 = vsel %vm9568, 0, %v9567
    %v9570 = vsub.s32 32, %v9569
    %v9571 = vshll.u32 %v9562, %v9569
    %v9572 = vshrl.u32 %v9554, %v9570
    %v9573 = vor.u32 %v9571, %v9572
    %v9574 = vsub.s32 4294967266, %v9569
    %v9575 = vadd.s32 %v9574, 127
    %v9576 = vshll.u32 %v9575, 23
    %v9577 = vor.u32 4788187, %v9576
    %v9578 = vand.u32 2147483647, %v9577
    %v9580 = vcvt.s32.f32 %v9573
    %v9581 = vmul.f32 %v9580, %v9578
    %v9582 = vxor.u32 %v9581, 2147483648
    %v9583 = vsel %vm9500, %v9582, %v9581
    %v9584 = vsub.s32 4, %v9560
    %v9585 = vsel %vm9500, %v9584, %v9560
    %v9586 = vsel %vm9499, %v6994, %v9583
    %v9587 = vsel %vm9499, 0, %v9585
    %v9588 = vcosq.f32.pop %v9586
    %v9589 = vsinq.f32.pop %v9586
    %vm9590 = vweird.f32 %v6994
    %v9591 = vadd.s32 %v9587, 3
    %v9592 = vand.u32 %v9591, 3
    %vm9593 = vcmp.lt.s32.totalorder %v9592, 2
    %vm9594 = vcmp.eq.s32.totalorder %v9592, 0
    %v9595 = vxor.u32 %v9589, 2147483648
    %v9596 = vsel %vm9594, %v9588, %v9595
    %vm9597 = vcmp.eq.s32.totalorder %v9592, 2
    %v9598 = vxor.u32 %v9588, 2147483648
    %v9599 = vsel %vm9597, %v9598, %v9589
    %v9600 = vsel %vm9593, %v9596, %v9599
    %v9601 = vsel %vm9590, nan, %v9600
    %v9602 = vand.u32 2147483647, %v6995
    %vm9603 = vcmp.le.f32.partialorder %v9602, 0.7853982
    %vm9604 = vcmp.lt.s32.totalorder %v6995, 0
    %v9605 = vand.u32 %v6995, 2139095040
    %v9606 = vshrl.u32 %v9605, 23
    %v9607 = vsub.s32 %v9606, 127
    %v9608 = vand.u32 2147483647, %v6995
    %v9609 = vand.u32 %v9608, 8388607
    %v9610 = vor.u32 %v9609, 8388608
    %v9611 = vsub.s32 0, %v9610
    %v9612 = vadd.s32 %v9607, 1
    %vm9613 = vcmp.gt.s32.totalorder %v9612, 0
    %v9614 = vsel %vm9613, %v9612, 0
    %v9615 = vshrl.u32 %v9614, 5
    %v9616 = vand.u32 %v9614, 31
    %v9617 = vsub.s32 32, %v9616
    %v9618 = vshrl.u32 683565275, %v9617
    %v9619 = vshll.u32 683565275, %v9616
    %v9620 = vshrl.u32 2475754826, %v9617
    %v9621 = vor.u32 %v9619, %v9620
    %v9622 = vshll.u32 2475754826, %v9616
    %v9623 = vshrl.u32 2131351028, %v9617
    %v9624 = vor.u32 %v9622, %v9623
    %v9625 = vshll.u32 2131351028, %v9616
    %v9626 = vshrl.u32 2102212464, %v9617
    %v9627 = vor.u32 %v9625, %v9626
    %v9628 = vshll.u32 2102212464, %v9616
    %v9629 = vshrl.u32 920167782, %v9617
    %v9630 = vor.u32 %v9628, %v9629
    %v9631 = vshll.u32 920167782, %v9616
    %v9632 = vshrl.u32 1326507024, %v9617
    %v9633 = vor.u32 %v9631, %v9632
    %vm9634 = vcmp.lt.s32.totalorder %v9615, 1
    %vm9635 = vcmp.lt.s32.totalorder %v9615, 2
    %vm9636 = vcmp.lt.s32.totalorder %v9615, 3
    %vm9637 = vcmp.lt.s32.totalorder %v9615, 4
    %v9638 = vsel %vm9634, %v9618, %v9621
    %v9639 = vsel %vm9637, %v9627, 2102212464
    %v9640 = vsel %vm9636, %v9624, %v9639
    %v9641 = vsel %vm9635, %v9638, %v9640
    %v9642 = vsel %vm9634, %v9621, %v9624
    %v9643 = vsel %vm9637, %v9630, 920167782
    %v9644 = vsel %vm9636, %v9627, %v9643
    %v9645 = vsel %vm9635, %v9642, %v9644
    %v9646 = vsel %vm9634, %v9624, %v9627
    %v9647 = vsel %vm9637, %v9633, 1326507024
    %v9648 = vsel %vm9636, %v9630, %v9647
    %v9649 = vsel %vm9635, %v9646, %v9648
    %v9650 = vshll.u32 %v9610, 8
    %v9651 = vmul.u32.u64.compose %v9650, %v9649
    %v9652 = vextract.low.u32 %v9651
    %v9653 = vextract.high.u32 %v9651
    %v9654 = vmul.u32.u64.compose %v9650, %v9645
    %v9655 = vextract.low.u32 %v9654
    %v9656 = vextract.high.u32 %v9654
    %v9657 = vmul.u32 %v9650, %v9641
    %v9658 = vadd.s32 %v9653, %v9655
    %vm9659 = vc.u32 %v9653, %v9655
    %v9660 = vadd.s32 %v9656, 1
    %v9661 = vsel %vm9659, %v9660, %v9656
    %v9662 = vadd.s32 %v9657, %v9661
    %v9663 = vadd.s32 %v9662, 536870912
    %v9664 = vshrl.u32 %v9663, 30
    %v9665 = vshll.u32 %v9664, 30
    %v9666 = vsub.s32 %v9662, %v9665
    %vm9667 = vcmp.lt.s32.totalorder %v9666, 0
    %v9668 = vsub.s32 0, %v9666
    %v9669 = vsel %vm9667, %v9668, %v9666
    %v9670 = vclz %v9669
    %v9671 = vsub.s32 %v9670, 2
    %vm9672 = vcmp.gt.s32.totalorder 0, %v9671
    %v9673 = vsel %vm9672, 0, %v9671
    %v9674 = vsub.s32 32, %v9673
    %v9675 = vshll.u32 %v9666, %v9673
    %v9676 = vshrl.u32 %v9658, %v9674
    %v9677 = vor.u32 %v9675, %v9676
    %v9678 = vsub.s32 4294967266, %v9673
    %v9679 = vadd.s32 %v9678, 127
    %v9680 = vshll.u32 %v9679, 23
    %v9681 = vor.u32 4788187, %v9680
    %v9682 = vand.u32 2147483647, %v9681
    %v9684 = vcvt.s32.f32 %v9677
    %v9685 = vmul.f32 %v9684, %v9682
    %v9686 = vxor.u32 %v9685, 2147483648
    %v9687 = vsel %vm9604, %v9686, %v9685
    %v9688 = vsub.s32 4, %v9664
    %v9689 = vsel %vm9604, %v9688, %v9664
    %v9690 = vsel %vm9603, %v6995, %v9687
    %v9691 = vsel %vm9603, 0, %v9689
    %v9692 = vcosq.f32.pop %v9690
    %v9693 = vsinq.f32.pop %v9690
    %vm9694 = vweird.f32 %v6995
    %v9695 = vadd.s32 %v9691, 3
    %v9696 = vand.u32 %v9695, 3
    %vm9697 = vcmp.lt.s32.totalorder %v9696, 2
    %vm9698 = vcmp.eq.s32.totalorder %v9696, 0
    %v9699 = vxor.u32 %v9693, 2147483648
    %v9700 = vsel %vm9698, %v9692, %v9699
    %vm9701 = vcmp.eq.s32.totalorder %v9696, 2
    %v9702 = vxor.u32 %v9692, 2147483648
    %v9703 = vsel %vm9701, %v9702, %v9693
    %v9704 = vsel %vm9697, %v9700, %v9703
    %v9705 = vsel %vm9694, nan, %v9704
    %v9706 = vand.u32 2147483647, %v6996
    %vm9707 = vcmp.le.f32.partialorder %v9706, 0.7853982
    %vm9708 = vcmp.lt.s32.totalorder %v6996, 0
    %v9709 = vand.u32 %v6996, 2139095040
    %v9710 = vshrl.u32 %v9709, 23
    %v9711 = vsub.s32 %v9710, 127
    %v9712 = vand.u32 2147483647, %v6996
    %v9713 = vand.u32 %v9712, 8388607
    %v9714 = vor.u32 %v9713, 8388608
    %v9715 = vsub.s32 0, %v9714
    %v9716 = vadd.s32 %v9711, 1
    %vm9717 = vcmp.gt.s32.totalorder %v9716, 0
    %v9718 = vsel %vm9717, %v9716, 0
    %v9719 = vshrl.u32 %v9718, 5
    %v9720 = vand.u32 %v9718, 31
    %v9721 = vsub.s32 32, %v9720
    %v9722 = vshrl.u32 683565275, %v9721
    %v9723 = vshll.u32 683565275, %v9720
    %v9724 = vshrl.u32 2475754826, %v9721
    %v9725 = vor.u32 %v9723, %v9724
    %v9726 = vshll.u32 2475754826, %v9720
    %v9727 = vshrl.u32 2131351028, %v9721
    %v9728 = vor.u32 %v9726, %v9727
    %v9729 = vshll.u32 2131351028, %v9720
    %v9730 = vshrl.u32 2102212464, %v9721
    %v9731 = vor.u32 %v9729, %v9730
    %v9732 = vshll.u32 2102212464, %v9720
    %v9733 = vshrl.u32 920167782, %v9721
    %v9734 = vor.u32 %v9732, %v9733
    %v9735 = vshll.u32 920167782, %v9720
    %v9736 = vshrl.u32 1326507024, %v9721
    %v9737 = vor.u32 %v9735, %v9736
    %vm9738 = vcmp.lt.s32.totalorder %v9719, 1
    %vm9739 = vcmp.lt.s32.totalorder %v9719, 2
    %vm9740 = vcmp.lt.s32.totalorder %v9719, 3
    %vm9741 = vcmp.lt.s32.totalorder %v9719, 4
    %v9742 = vsel %vm9738, %v9722, %v9725
    %v9743 = vsel %vm9741, %v9731, 2102212464
    %v9744 = vsel %vm9740, %v9728, %v9743
    %v9745 = vsel %vm9739, %v9742, %v9744
    %v9746 = vsel %vm9738, %v9725, %v9728
    %v9747 = vsel %vm9741, %v9734, 920167782
    %v9748 = vsel %vm9740, %v9731, %v9747
    %v9749 = vsel %vm9739, %v9746, %v9748
    %v9750 = vsel %vm9738, %v9728, %v9731
    %v9751 = vsel %vm9741, %v9737, 1326507024
    %v9752 = vsel %vm9740, %v9734, %v9751
    %v9753 = vsel %vm9739, %v9750, %v9752
    %v9754 = vshll.u32 %v9714, 8
    %v9755 = vmul.u32.u64.compose %v9754, %v9753
    %v9756 = vextract.low.u32 %v9755
    %v9757 = vextract.high.u32 %v9755
    %v9758 = vmul.u32.u64.compose %v9754, %v9749
    %v9759 = vextract.low.u32 %v9758
    %v9760 = vextract.high.u32 %v9758
    %v9761 = vmul.u32 %v9754, %v9745
    %v9762 = vadd.s32 %v9757, %v9759
    %vm9763 = vc.u32 %v9757, %v9759
    %v9764 = vadd.s32 %v9760, 1
    %v9765 = vsel %vm9763, %v9764, %v9760
    %v9766 = vadd.s32 %v9761, %v9765
    %v9767 = vadd.s32 %v9766, 536870912
    %v9768 = vshrl.u32 %v9767, 30
    %v9769 = vshll.u32 %v9768, 30
    %v9770 = vsub.s32 %v9766, %v9769
    %vm9771 = vcmp.lt.s32.totalorder %v9770, 0
    %v9772 = vsub.s32 0, %v9770
    %v9773 = vsel %vm9771, %v9772, %v9770
    %v9774 = vclz %v9773
    %v9775 = vsub.s32 %v9774, 2
    %vm9776 = vcmp.gt.s32.totalorder 0, %v9775
    %v9777 = vsel %vm9776, 0, %v9775
    %v9778 = vsub.s32 32, %v9777
    %v9779 = vshll.u32 %v9770, %v9777
    %v9780 = vshrl.u32 %v9762, %v9778
    %v9781 = vor.u32 %v9779, %v9780
    %v9782 = vsub.s32 4294967266, %v9777
    %v9783 = vadd.s32 %v9782, 127
    %v9784 = vshll.u32 %v9783, 23
    %v9785 = vor.u32 4788187, %v9784
    %v9786 = vand.u32 2147483647, %v9785
    %v9788 = vcvt.s32.f32 %v9781
    %v9789 = vmul.f32 %v9788, %v9786
    %v9790 = vxor.u32 %v9789, 2147483648
    %v9791 = vsel %vm9708, %v9790, %v9789
    %v9792 = vsub.s32 4, %v9768
    %v9793 = vsel %vm9708, %v9792, %v9768
    %v9794 = vsel %vm9707, %v6996, %v9791
    %v9795 = vsel %vm9707, 0, %v9793
    %v9796 = vcosq.f32.pop %v9794
    %v9797 = vsinq.f32.pop %v9794
    %vm9798 = vweird.f32 %v6996
    %v9799 = vadd.s32 %v9795, 3
    %v9800 = vand.u32 %v9799, 3
    %vm9801 = vcmp.lt.s32.totalorder %v9800, 2
    %vm9802 = vcmp.eq.s32.totalorder %v9800, 0
    %v9803 = vxor.u32 %v9797, 2147483648
    %v9804 = vsel %vm9802, %v9796, %v9803
    %vm9805 = vcmp.eq.s32.totalorder %v9800, 2
    %v9806 = vxor.u32 %v9796, 2147483648
    %v9807 = vsel %vm9805, %v9806, %v9797
    %v9808 = vsel %vm9801, %v9804, %v9807
    %v9809 = vsel %vm9798, nan, %v9808
    %v9810 = vand.u32 2147483647, %v6997
    %vm9811 = vcmp.le.f32.partialorder %v9810, 0.7853982
    %vm9812 = vcmp.lt.s32.totalorder %v6997, 0
    %v9813 = vand.u32 %v6997, 2139095040
    %v9814 = vshrl.u32 %v9813, 23
    %v9815 = vsub.s32 %v9814, 127
    %v9816 = vand.u32 2147483647, %v6997
    %v9817 = vand.u32 %v9816, 8388607
    %v9818 = vor.u32 %v9817, 8388608
    %v9819 = vsub.s32 0, %v9818
    %v9820 = vadd.s32 %v9815, 1
    %vm9821 = vcmp.gt.s32.totalorder %v9820, 0
    %v9822 = vsel %vm9821, %v9820, 0
    %v9823 = vshrl.u32 %v9822, 5
    %v9824 = vand.u32 %v9822, 31
    %v9825 = vsub.s32 32, %v9824
    %v9826 = vshrl.u32 683565275, %v9825
    %v9827 = vshll.u32 683565275, %v9824
    %v9828 = vshrl.u32 2475754826, %v9825
    %v9829 = vor.u32 %v9827, %v9828
    %v9830 = vshll.u32 2475754826, %v9824
    %v9831 = vshrl.u32 2131351028, %v9825
    %v9832 = vor.u32 %v9830, %v9831
    %v9833 = vshll.u32 2131351028, %v9824
    %v9834 = vshrl.u32 2102212464, %v9825
    %v9835 = vor.u32 %v9833, %v9834
    %v9836 = vshll.u32 2102212464, %v9824
    %v9837 = vshrl.u32 920167782, %v9825
    %v9838 = vor.u32 %v9836, %v9837
    %v9839 = vshll.u32 920167782, %v9824
    %v9840 = vshrl.u32 1326507024, %v9825
    %v9841 = vor.u32 %v9839, %v9840
    %vm9842 = vcmp.lt.s32.totalorder %v9823, 1
    %vm9843 = vcmp.lt.s32.totalorder %v9823, 2
    %vm9844 = vcmp.lt.s32.totalorder %v9823, 3
    %vm9845 = vcmp.lt.s32.totalorder %v9823, 4
    %v9846 = vsel %vm9842, %v9826, %v9829
    %v9847 = vsel %vm9845, %v9835, 2102212464
    %v9848 = vsel %vm9844, %v9832, %v9847
    %v9849 = vsel %vm9843, %v9846, %v9848
    %v9850 = vsel %vm9842, %v9829, %v9832
    %v9851 = vsel %vm9845, %v9838, 920167782
    %v9852 = vsel %vm9844, %v9835, %v9851
    %v9853 = vsel %vm9843, %v9850, %v9852
    %v9854 = vsel %vm9842, %v9832, %v9835
    %v9855 = vsel %vm9845, %v9841, 1326507024
    %v9856 = vsel %vm9844, %v9838, %v9855
    %v9857 = vsel %vm9843, %v9854, %v9856
    %v9858 = vshll.u32 %v9818, 8
    %v9859 = vmul.u32.u64.compose %v9858, %v9857
    %v9860 = vextract.low.u32 %v9859
    %v9861 = vextract.high.u32 %v9859
    %v9862 = vmul.u32.u64.compose %v9858, %v9853
    %v9863 = vextract.low.u32 %v9862
    %v9864 = vextract.high.u32 %v9862
    %v9865 = vmul.u32 %v9858, %v9849
    %v9866 = vadd.s32 %v9861, %v9863
    %vm9867 = vc.u32 %v9861, %v9863
    %v9868 = vadd.s32 %v9864, 1
    %v9869 = vsel %vm9867, %v9868, %v9864
    %v9870 = vadd.s32 %v9865, %v9869
    %v9871 = vadd.s32 %v9870, 536870912
    %v9872 = vshrl.u32 %v9871, 30
    %v9873 = vshll.u32 %v9872, 30
    %v9874 = vsub.s32 %v9870, %v9873
    %vm9875 = vcmp.lt.s32.totalorder %v9874, 0
    %v9876 = vsub.s32 0, %v9874
    %v9877 = vsel %vm9875, %v9876, %v9874
    %v9878 = vclz %v9877
    %v9879 = vsub.s32 %v9878, 2
    %vm9880 = vcmp.gt.s32.totalorder 0, %v9879
    %v9881 = vsel %vm9880, 0, %v9879
    %v9882 = vsub.s32 32, %v9881
    %v9883 = vshll.u32 %v9874, %v9881
    %v9884 = vshrl.u32 %v9866, %v9882
    %v9885 = vor.u32 %v9883, %v9884
    %v9886 = vsub.s32 4294967266, %v9881
    %v9887 = vadd.s32 %v9886, 127
    %v9888 = vshll.u32 %v9887, 23
    %v9889 = vor.u32 4788187, %v9888
    %v9890 = vand.u32 2147483647, %v9889
    %v9892 = vcvt.s32.f32 %v9885
    %v9893 = vmul.f32 %v9892, %v9890
    %v9894 = vxor.u32 %v9893, 2147483648
    %v9895 = vsel %vm9812, %v9894, %v9893
    %v9896 = vsub.s32 4, %v9872
    %v9897 = vsel %vm9812, %v9896, %v9872
    %v9898 = vsel %vm9811, %v6997, %v9895
    %v9899 = vsel %vm9811, 0, %v9897
    %v9900 = vcosq.f32.pop %v9898
    %v9901 = vsinq.f32.pop %v9898
    %vm9902 = vweird.f32 %v6997
    %v9903 = vadd.s32 %v9899, 3
    %v9904 = vand.u32 %v9903, 3
    %vm9905 = vcmp.lt.s32.totalorder %v9904, 2
    %vm9906 = vcmp.eq.s32.totalorder %v9904, 0
    %v9907 = vxor.u32 %v9901, 2147483648
    %v9908 = vsel %vm9906, %v9900, %v9907
    %vm9909 = vcmp.eq.s32.totalorder %v9904, 2
    %v9910 = vxor.u32 %v9900, 2147483648
    %v9911 = vsel %vm9909, %v9910, %v9901
    %v9912 = vsel %vm9905, %v9908, %v9911
    %v9913 = vsel %vm9902, nan, %v9912
    %v9914 = vand.u32 2147483647, %v6998
    %vm9915 = vcmp.le.f32.partialorder %v9914, 0.7853982
    %vm9916 = vcmp.lt.s32.totalorder %v6998, 0
    %v9917 = vand.u32 %v6998, 2139095040
    %v9918 = vshrl.u32 %v9917, 23
    %v9919 = vsub.s32 %v9918, 127
    %v9920 = vand.u32 2147483647, %v6998
    %v9921 = vand.u32 %v9920, 8388607
    %v9922 = vor.u32 %v9921, 8388608
    %v9923 = vsub.s32 0, %v9922
    %v9924 = vadd.s32 %v9919, 1
    %vm9925 = vcmp.gt.s32.totalorder %v9924, 0
    %v9926 = vsel %vm9925, %v9924, 0
    %v9927 = vshrl.u32 %v9926, 5
    %v9928 = vand.u32 %v9926, 31
    %v9929 = vsub.s32 32, %v9928
    %v9930 = vshrl.u32 683565275, %v9929
    %v9931 = vshll.u32 683565275, %v9928
    %v9932 = vshrl.u32 2475754826, %v9929
    %v9933 = vor.u32 %v9931, %v9932
    %v9934 = vshll.u32 2475754826, %v9928
    %v9935 = vshrl.u32 2131351028, %v9929
    %v9936 = vor.u32 %v9934, %v9935
    %v9937 = vshll.u32 2131351028, %v9928
    %v9938 = vshrl.u32 2102212464, %v9929
    %v9939 = vor.u32 %v9937, %v9938
    %v9940 = vshll.u32 2102212464, %v9928
    %v9941 = vshrl.u32 920167782, %v9929
    %v9942 = vor.u32 %v9940, %v9941
    %v9943 = vshll.u32 920167782, %v9928
    %v9944 = vshrl.u32 1326507024, %v9929
    %v9945 = vor.u32 %v9943, %v9944
    %vm9946 = vcmp.lt.s32.totalorder %v9927, 1
    %vm9947 = vcmp.lt.s32.totalorder %v9927, 2
    %vm9948 = vcmp.lt.s32.totalorder %v9927, 3
    %vm9949 = vcmp.lt.s32.totalorder %v9927, 4
    %v9950 = vsel %vm9946, %v9930, %v9933
    %v9951 = vsel %vm9949, %v9939, 2102212464
    %v9952 = vsel %vm9948, %v9936, %v9951
    %v9953 = vsel %vm9947, %v9950, %v9952
    %v9954 = vsel %vm9946, %v9933, %v9936
    %v9955 = vsel %vm9949, %v9942, 920167782
    %v9956 = vsel %vm9948, %v9939, %v9955
    %v9957 = vsel %vm9947, %v9954, %v9956
    %v9958 = vsel %vm9946, %v9936, %v9939
    %v9959 = vsel %vm9949, %v9945, 1326507024
    %v9960 = vsel %vm9948, %v9942, %v9959
    %v9961 = vsel %vm9947, %v9958, %v9960
    %v9962 = vshll.u32 %v9922, 8
    %v9963 = vmul.u32.u64.compose %v9962, %v9961
    %v9964 = vextract.low.u32 %v9963
    %v9965 = vextract.high.u32 %v9963
    %v9966 = vmul.u32.u64.compose %v9962, %v9957
    %v9967 = vextract.low.u32 %v9966
    %v9968 = vextract.high.u32 %v9966
    %v9969 = vmul.u32 %v9962, %v9953
    %v9970 = vadd.s32 %v9965, %v9967
    %vm9971 = vc.u32 %v9965, %v9967
    %v9972 = vadd.s32 %v9968, 1
    %v9973 = vsel %vm9971, %v9972, %v9968
    %v9974 = vadd.s32 %v9969, %v9973
    %v9975 = vadd.s32 %v9974, 536870912
    %v9976 = vshrl.u32 %v9975, 30
    %v9977 = vshll.u32 %v9976, 30
    %v9978 = vsub.s32 %v9974, %v9977
    %vm9979 = vcmp.lt.s32.totalorder %v9978, 0
    %v9980 = vsub.s32 0, %v9978
    %v9981 = vsel %vm9979, %v9980, %v9978
    %v9982 = vclz %v9981
    %v9983 = vsub.s32 %v9982, 2
    %vm9984 = vcmp.gt.s32.totalorder 0, %v9983
    %v9985 = vsel %vm9984, 0, %v9983
    %v9986 = vsub.s32 32, %v9985
    %v9987 = vshll.u32 %v9978, %v9985
    %v9988 = vshrl.u32 %v9970, %v9986
    %v9989 = vor.u32 %v9987, %v9988
    %v9990 = vsub.s32 4294967266, %v9985
    %v9991 = vadd.s32 %v9990, 127
    %v9992 = vshll.u32 %v9991, 23
    %v9993 = vor.u32 4788187, %v9992
    %v9994 = vand.u32 2147483647, %v9993
    %v9996 = vcvt.s32.f32 %v9989
    %v9997 = vmul.f32 %v9996, %v9994
    %v9998 = vxor.u32 %v9997, 2147483648
    %v9999 = vsel %vm9916, %v9998, %v9997
    %v10000 = vsub.s32 4, %v9976
    %v10001 = vsel %vm9916, %v10000, %v9976
    %v10002 = vsel %vm9915, %v6998, %v9999
    %v10003 = vsel %vm9915, 0, %v10001
    %v10004 = vcosq.f32.pop %v10002
    %v10005 = vsinq.f32.pop %v10002
    %vm10006 = vweird.f32 %v6998
    %v10007 = vadd.s32 %v10003, 3
    %v10008 = vand.u32 %v10007, 3
    %vm10009 = vcmp.lt.s32.totalorder %v10008, 2
    %vm10010 = vcmp.eq.s32.totalorder %v10008, 0
    %v10011 = vxor.u32 %v10005, 2147483648
    %v10012 = vsel %vm10010, %v10004, %v10011
    %vm10013 = vcmp.eq.s32.totalorder %v10008, 2
    %v10014 = vxor.u32 %v10004, 2147483648
    %v10015 = vsel %vm10013, %v10014, %v10005
    %v10016 = vsel %vm10009, %v10012, %v10015
    %v10017 = vsel %vm10006, nan, %v10016
    %v10018 = vand.u32 2147483647, %v6999
    %vm10019 = vcmp.le.f32.partialorder %v10018, 0.7853982
    %vm10020 = vcmp.lt.s32.totalorder %v6999, 0
    %v10021 = vand.u32 %v6999, 2139095040
    %v10022 = vshrl.u32 %v10021, 23
    %v10023 = vsub.s32 %v10022, 127
    %v10024 = vand.u32 2147483647, %v6999
    %v10025 = vand.u32 %v10024, 8388607
    %v10026 = vor.u32 %v10025, 8388608
    %v10027 = vsub.s32 0, %v10026
    %v10028 = vadd.s32 %v10023, 1
    %vm10029 = vcmp.gt.s32.totalorder %v10028, 0
    %v10030 = vsel %vm10029, %v10028, 0
    %v10031 = vshrl.u32 %v10030, 5
    %v10032 = vand.u32 %v10030, 31
    %v10033 = vsub.s32 32, %v10032
    %v10034 = vshrl.u32 683565275, %v10033
    %v10035 = vshll.u32 683565275, %v10032
    %v10036 = vshrl.u32 2475754826, %v10033
    %v10037 = vor.u32 %v10035, %v10036
    %v10038 = vshll.u32 2475754826, %v10032
    %v10039 = vshrl.u32 2131351028, %v10033
    %v10040 = vor.u32 %v10038, %v10039
    %v10041 = vshll.u32 2131351028, %v10032
    %v10042 = vshrl.u32 2102212464, %v10033
    %v10043 = vor.u32 %v10041, %v10042
    %v10044 = vshll.u32 2102212464, %v10032
    %v10045 = vshrl.u32 920167782, %v10033
    %v10046 = vor.u32 %v10044, %v10045
    %v10047 = vshll.u32 920167782, %v10032
    %v10048 = vshrl.u32 1326507024, %v10033
    %v10049 = vor.u32 %v10047, %v10048
    %vm10050 = vcmp.lt.s32.totalorder %v10031, 1
    %vm10051 = vcmp.lt.s32.totalorder %v10031, 2
    %vm10052 = vcmp.lt.s32.totalorder %v10031, 3
    %vm10053 = vcmp.lt.s32.totalorder %v10031, 4
    %v10054 = vsel %vm10050, %v10034, %v10037
    %v10055 = vsel %vm10053, %v10043, 2102212464
    %v10056 = vsel %vm10052, %v10040, %v10055
    %v10057 = vsel %vm10051, %v10054, %v10056
    %v10058 = vsel %vm10050, %v10037, %v10040
    %v10059 = vsel %vm10053, %v10046, 920167782
    %v10060 = vsel %vm10052, %v10043, %v10059
    %v10061 = vsel %vm10051, %v10058, %v10060
    %v10062 = vsel %vm10050, %v10040, %v10043
    %v10063 = vsel %vm10053, %v10049, 1326507024
    %v10064 = vsel %vm10052, %v10046, %v10063
    %v10065 = vsel %vm10051, %v10062, %v10064
    %v10066 = vshll.u32 %v10026, 8
    %v10067 = vmul.u32.u64.compose %v10066, %v10065
    %v10068 = vextract.low.u32 %v10067
    %v10069 = vextract.high.u32 %v10067
    %v10070 = vmul.u32.u64.compose %v10066, %v10061
    %v10071 = vextract.low.u32 %v10070
    %v10072 = vextract.high.u32 %v10070
    %v10073 = vmul.u32 %v10066, %v10057
    %v10074 = vadd.s32 %v10069, %v10071
    %vm10075 = vc.u32 %v10069, %v10071
    %v10076 = vadd.s32 %v10072, 1
    %v10077 = vsel %vm10075, %v10076, %v10072
    %v10078 = vadd.s32 %v10073, %v10077
    %v10079 = vadd.s32 %v10078, 536870912
    %v10080 = vshrl.u32 %v10079, 30
    %v10081 = vshll.u32 %v10080, 30
    %v10082 = vsub.s32 %v10078, %v10081
    %vm10083 = vcmp.lt.s32.totalorder %v10082, 0
    %v10084 = vsub.s32 0, %v10082
    %v10085 = vsel %vm10083, %v10084, %v10082
    %v10086 = vclz %v10085
    %v10087 = vsub.s32 %v10086, 2
    %vm10088 = vcmp.gt.s32.totalorder 0, %v10087
    %v10089 = vsel %vm10088, 0, %v10087
    %v10090 = vsub.s32 32, %v10089
    %v10091 = vshll.u32 %v10082, %v10089
    %v10092 = vshrl.u32 %v10074, %v10090
    %v10093 = vor.u32 %v10091, %v10092
    %v10094 = vsub.s32 4294967266, %v10089
    %v10095 = vadd.s32 %v10094, 127
    %v10096 = vshll.u32 %v10095, 23
    %v10097 = vor.u32 4788187, %v10096
    %v10098 = vand.u32 2147483647, %v10097
    %v10100 = vcvt.s32.f32 %v10093
    %v10101 = vmul.f32 %v10100, %v10098
    %v10102 = vxor.u32 %v10101, 2147483648
    %v10103 = vsel %vm10020, %v10102, %v10101
    %v10104 = vsub.s32 4, %v10080
    %v10105 = vsel %vm10020, %v10104, %v10080
    %v10106 = vsel %vm10019, %v6999, %v10103
    %v10107 = vsel %vm10019, 0, %v10105
    %v10108 = vcosq.f32.pop %v10106
    %v10109 = vsinq.f32.pop %v10106
    %vm10110 = vweird.f32 %v6999
    %v10111 = vadd.s32 %v10107, 3
    %v10112 = vand.u32 %v10111, 3
    %vm10113 = vcmp.lt.s32.totalorder %v10112, 2
    %vm10114 = vcmp.eq.s32.totalorder %v10112, 0
    %v10115 = vxor.u32 %v10109, 2147483648
    %v10116 = vsel %vm10114, %v10108, %v10115
    %vm10117 = vcmp.eq.s32.totalorder %v10112, 2
    %v10118 = vxor.u32 %v10108, 2147483648
    %v10119 = vsel %vm10117, %v10118, %v10109
    %v10120 = vsel %vm10113, %v10116, %v10119
    %v10121 = vsel %vm10110, nan, %v10120
    %v10122 = vand.u32 2147483647, %v7000
    %vm10123 = vcmp.le.f32.partialorder %v10122, 0.7853982
    %vm10124 = vcmp.lt.s32.totalorder %v7000, 0
    %v10125 = vand.u32 %v7000, 2139095040
    %v10126 = vshrl.u32 %v10125, 23
    %v10127 = vsub.s32 %v10126, 127
    %v10128 = vand.u32 2147483647, %v7000
    %v10129 = vand.u32 %v10128, 8388607
    %v10130 = vor.u32 %v10129, 8388608
    %v10131 = vsub.s32 0, %v10130
    %v10132 = vadd.s32 %v10127, 1
    %vm10133 = vcmp.gt.s32.totalorder %v10132, 0
    %v10134 = vsel %vm10133, %v10132, 0
    %v10135 = vshrl.u32 %v10134, 5
    %v10136 = vand.u32 %v10134, 31
    %v10137 = vsub.s32 32, %v10136
    %v10138 = vshrl.u32 683565275, %v10137
    %v10139 = vshll.u32 683565275, %v10136
    %v10140 = vshrl.u32 2475754826, %v10137
    %v10141 = vor.u32 %v10139, %v10140
    %v10142 = vshll.u32 2475754826, %v10136
    %v10143 = vshrl.u32 2131351028, %v10137
    %v10144 = vor.u32 %v10142, %v10143
    %v10145 = vshll.u32 2131351028, %v10136
    %v10146 = vshrl.u32 2102212464, %v10137
    %v10147 = vor.u32 %v10145, %v10146
    %v10148 = vshll.u32 2102212464, %v10136
    %v10149 = vshrl.u32 920167782, %v10137
    %v10150 = vor.u32 %v10148, %v10149
    %v10151 = vshll.u32 920167782, %v10136
    %v10152 = vshrl.u32 1326507024, %v10137
    %v10153 = vor.u32 %v10151, %v10152
    %vm10154 = vcmp.lt.s32.totalorder %v10135, 1
    %vm10155 = vcmp.lt.s32.totalorder %v10135, 2
    %vm10156 = vcmp.lt.s32.totalorder %v10135, 3
    %vm10157 = vcmp.lt.s32.totalorder %v10135, 4
    %v10158 = vsel %vm10154, %v10138, %v10141
    %v10159 = vsel %vm10157, %v10147, 2102212464
    %v10160 = vsel %vm10156, %v10144, %v10159
    %v10161 = vsel %vm10155, %v10158, %v10160
    %v10162 = vsel %vm10154, %v10141, %v10144
    %v10163 = vsel %vm10157, %v10150, 920167782
    %v10164 = vsel %vm10156, %v10147, %v10163
    %v10165 = vsel %vm10155, %v10162, %v10164
    %v10166 = vsel %vm10154, %v10144, %v10147
    %v10167 = vsel %vm10157, %v10153, 1326507024
    %v10168 = vsel %vm10156, %v10150, %v10167
    %v10169 = vsel %vm10155, %v10166, %v10168
    %v10170 = vshll.u32 %v10130, 8
    %v10171 = vmul.u32.u64.compose %v10170, %v10169
    %v10172 = vextract.low.u32 %v10171
    %v10173 = vextract.high.u32 %v10171
    %v10174 = vmul.u32.u64.compose %v10170, %v10165
    %v10175 = vextract.low.u32 %v10174
    %v10176 = vextract.high.u32 %v10174
    %v10177 = vmul.u32 %v10170, %v10161
    %v10178 = vadd.s32 %v10173, %v10175
    %vm10179 = vc.u32 %v10173, %v10175
    %v10180 = vadd.s32 %v10176, 1
    %v10181 = vsel %vm10179, %v10180, %v10176
    %v10182 = vadd.s32 %v10177, %v10181
    %v10183 = vadd.s32 %v10182, 536870912
    %v10184 = vshrl.u32 %v10183, 30
    %v10185 = vshll.u32 %v10184, 30
    %v10186 = vsub.s32 %v10182, %v10185
    %vm10187 = vcmp.lt.s32.totalorder %v10186, 0
    %v10188 = vsub.s32 0, %v10186
    %v10189 = vsel %vm10187, %v10188, %v10186
    %v10190 = vclz %v10189
    %v10191 = vsub.s32 %v10190, 2
    %vm10192 = vcmp.gt.s32.totalorder 0, %v10191
    %v10193 = vsel %vm10192, 0, %v10191
    %v10194 = vsub.s32 32, %v10193
    %v10195 = vshll.u32 %v10186, %v10193
    %v10196 = vshrl.u32 %v10178, %v10194
    %v10197 = vor.u32 %v10195, %v10196
    %v10198 = vsub.s32 4294967266, %v10193
    %v10199 = vadd.s32 %v10198, 127
    %v10200 = vshll.u32 %v10199, 23
    %v10201 = vor.u32 4788187, %v10200
    %v10202 = vand.u32 2147483647, %v10201
    %v10204 = vcvt.s32.f32 %v10197
    %v10205 = vmul.f32 %v10204, %v10202
    %v10206 = vxor.u32 %v10205, 2147483648
    %v10207 = vsel %vm10124, %v10206, %v10205
    %v10208 = vsub.s32 4, %v10184
    %v10209 = vsel %vm10124, %v10208, %v10184
    %v10210 = vsel %vm10123, %v7000, %v10207
    %v10211 = vsel %vm10123, 0, %v10209
    %v10212 = vcosq.f32.pop %v10210
    %v10213 = vsinq.f32.pop %v10210
    %vm10214 = vweird.f32 %v7000
    %v10215 = vadd.s32 %v10211, 3
    %v10216 = vand.u32 %v10215, 3
    %vm10217 = vcmp.lt.s32.totalorder %v10216, 2
    %vm10218 = vcmp.eq.s32.totalorder %v10216, 0
    %v10219 = vxor.u32 %v10213, 2147483648
    %v10220 = vsel %vm10218, %v10212, %v10219
    %vm10221 = vcmp.eq.s32.totalorder %v10216, 2
    %v10222 = vxor.u32 %v10212, 2147483648
    %v10223 = vsel %vm10221, %v10222, %v10213
    %v10224 = vsel %vm10217, %v10220, %v10223
    %v10225 = vsel %vm10214, nan, %v10224
    %v10226 = vand.u32 2147483647, %v7001
    %vm10227 = vcmp.le.f32.partialorder %v10226, 0.7853982
    %vm10228 = vcmp.lt.s32.totalorder %v7001, 0
    %v10229 = vand.u32 %v7001, 2139095040
    %v10230 = vshrl.u32 %v10229, 23
    %v10231 = vsub.s32 %v10230, 127
    %v10232 = vand.u32 2147483647, %v7001
    %v10233 = vand.u32 %v10232, 8388607
    %v10234 = vor.u32 %v10233, 8388608
    %v10235 = vsub.s32 0, %v10234
    %v10236 = vadd.s32 %v10231, 1
    %vm10237 = vcmp.gt.s32.totalorder %v10236, 0
    %v10238 = vsel %vm10237, %v10236, 0
    %v10239 = vshrl.u32 %v10238, 5
    %v10240 = vand.u32 %v10238, 31
    %v10241 = vsub.s32 32, %v10240
    %v10242 = vshrl.u32 683565275, %v10241
    %v10243 = vshll.u32 683565275, %v10240
    %v10244 = vshrl.u32 2475754826, %v10241
    %v10245 = vor.u32 %v10243, %v10244
    %v10246 = vshll.u32 2475754826, %v10240
    %v10247 = vshrl.u32 2131351028, %v10241
    %v10248 = vor.u32 %v10246, %v10247
    %v10249 = vshll.u32 2131351028, %v10240
    %v10250 = vshrl.u32 2102212464, %v10241
    %v10251 = vor.u32 %v10249, %v10250
    %v10252 = vshll.u32 2102212464, %v10240
    %v10253 = vshrl.u32 920167782, %v10241
    %v10254 = vor.u32 %v10252, %v10253
    %v10255 = vshll.u32 920167782, %v10240
    %v10256 = vshrl.u32 1326507024, %v10241
    %v10257 = vor.u32 %v10255, %v10256
    %vm10258 = vcmp.lt.s32.totalorder %v10239, 1
    %vm10259 = vcmp.lt.s32.totalorder %v10239, 2
    %vm10260 = vcmp.lt.s32.totalorder %v10239, 3
    %vm10261 = vcmp.lt.s32.totalorder %v10239, 4
    %v10262 = vsel %vm10258, %v10242, %v10245
    %v10263 = vsel %vm10261, %v10251, 2102212464
    %v10264 = vsel %vm10260, %v10248, %v10263
    %v10265 = vsel %vm10259, %v10262, %v10264
    %v10266 = vsel %vm10258, %v10245, %v10248
    %v10267 = vsel %vm10261, %v10254, 920167782
    %v10268 = vsel %vm10260, %v10251, %v10267
    %v10269 = vsel %vm10259, %v10266, %v10268
    %v10270 = vsel %vm10258, %v10248, %v10251
    %v10271 = vsel %vm10261, %v10257, 1326507024
    %v10272 = vsel %vm10260, %v10254, %v10271
    %v10273 = vsel %vm10259, %v10270, %v10272
    %v10274 = vshll.u32 %v10234, 8
    %v10275 = vmul.u32.u64.compose %v10274, %v10273
    %v10276 = vextract.low.u32 %v10275
    %v10277 = vextract.high.u32 %v10275
    %v10278 = vmul.u32.u64.compose %v10274, %v10269
    %v10279 = vextract.low.u32 %v10278
    %v10280 = vextract.high.u32 %v10278
    %v10281 = vmul.u32 %v10274, %v10265
    %v10282 = vadd.s32 %v10277, %v10279
    %vm10283 = vc.u32 %v10277, %v10279
    %v10284 = vadd.s32 %v10280, 1
    %v10285 = vsel %vm10283, %v10284, %v10280
    %v10286 = vadd.s32 %v10281, %v10285
    %v10287 = vadd.s32 %v10286, 536870912
    %v10288 = vshrl.u32 %v10287, 30
    %v10289 = vshll.u32 %v10288, 30
    %v10290 = vsub.s32 %v10286, %v10289
    %vm10291 = vcmp.lt.s32.totalorder %v10290, 0
    %v10292 = vsub.s32 0, %v10290
    %v10293 = vsel %vm10291, %v10292, %v10290
    %v10294 = vclz %v10293
    %v10295 = vsub.s32 %v10294, 2
    %vm10296 = vcmp.gt.s32.totalorder 0, %v10295
    %v10297 = vsel %vm10296, 0, %v10295
    %v10298 = vsub.s32 32, %v10297
    %v10299 = vshll.u32 %v10290, %v10297
    %v10300 = vshrl.u32 %v10282, %v10298
    %v10301 = vor.u32 %v10299, %v10300
    %v10302 = vsub.s32 4294967266, %v10297
    %v10303 = vadd.s32 %v10302, 127
    %v10304 = vshll.u32 %v10303, 23
    %v10305 = vor.u32 4788187, %v10304
    %v10306 = vand.u32 2147483647, %v10305
    %v10308 = vcvt.s32.f32 %v10301
    %v10309 = vmul.f32 %v10308, %v10306
    %v10310 = vxor.u32 %v10309, 2147483648
    %v10311 = vsel %vm10228, %v10310, %v10309
    %v10312 = vsub.s32 4, %v10288
    %v10313 = vsel %vm10228, %v10312, %v10288
    %v10314 = vsel %vm10227, %v7001, %v10311
    %v10315 = vsel %vm10227, 0, %v10313
    %v10316 = vcosq.f32.pop %v10314
    %v10317 = vsinq.f32.pop %v10314
    %vm10318 = vweird.f32 %v7001
    %v10319 = vadd.s32 %v10315, 3
    %v10320 = vand.u32 %v10319, 3
    %vm10321 = vcmp.lt.s32.totalorder %v10320, 2
    %vm10322 = vcmp.eq.s32.totalorder %v10320, 0
    %v10323 = vxor.u32 %v10317, 2147483648
    %v10324 = vsel %vm10322, %v10316, %v10323
    %vm10325 = vcmp.eq.s32.totalorder %v10320, 2
    %v10326 = vxor.u32 %v10316, 2147483648
    %v10327 = vsel %vm10325, %v10326, %v10317
    %v10328 = vsel %vm10321, %v10324, %v10327
    %v10329 = vsel %vm10318, nan, %v10328
    %v10330 = vadd.f32 %v321, %v3713
    %v10331 = vadd.f32 %v425, %v3817
    %v10332 = vadd.f32 %v529, %v3921
    %v10333 = vadd.f32 %v633, %v4025
    %v10334 = vadd.f32 %v737, %v4129
    %v10335 = vadd.f32 %v841, %v4233
    %v10336 = vadd.f32 %v945, %v4337
    %v10337 = vadd.f32 %v1049, %v4441
    %v10338 = vadd.f32 %v1153, %v4545
    %v10339 = vadd.f32 %v1257, %v4649
    %v10340 = vadd.f32 %v1361, %v4753
    %v10341 = vadd.f32 %v1465, %v4857
    %v10342 = vadd.f32 %v1569, %v4961
    %v10343 = vadd.f32 %v1673, %v5065
    %v10344 = vadd.f32 %v1777, %v5169
    %v10345 = vadd.f32 %v1881, %v5273
    %v10346 = vadd.f32 %v1985, %v5377
    %v10347 = vadd.f32 %v2089, %v5481
    %v10348 = vadd.f32 %v2193, %v5585
    %v10349 = vadd.f32 %v2297, %v5689
    %v10350 = vadd.f32 %v2401, %v5793
    %v10351 = vadd.f32 %v2505, %v5897
    %v10352 = vadd.f32 %v2609, %v6001
    %v10353 = vadd.f32 %v2713, %v6105
    %v10354 = vadd.f32 %v2817, %v6209
    %v10355 = vadd.f32 %v2921, %v6313
    %v10356 = vadd.f32 %v3025, %v6417
    %v10357 = vadd.f32 %v3129, %v6521
    %v10358 = vadd.f32 %v3233, %v6625
    %v10359 = vadd.f32 %v3337, %v6729
    %v10360 = vadd.f32 %v3441, %v6833
    %v10361 = vadd.f32 %v3545, %v6937
    %v10362 = vadd.f32 %v10330, %v7105
    %v10363 = vadd.f32 %v10331, %v7209
    %v10364 = vadd.f32 %v10332, %v7313
    %v10365 = vadd.f32 %v10333, %v7417
    %v10366 = vadd.f32 %v10334, %v7521
    %v10367 = vadd.f32 %v10335, %v7625
    %v10368 = vadd.f32 %v10336, %v7729
    %v10369 = vadd.f32 %v10337, %v7833
    %v10370 = vadd.f32 %v10338, %v7937
    %v10371 = vadd.f32 %v10339, %v8041
    %v10372 = vadd.f32 %v10340, %v8145
    %v10373 = vadd.f32 %v10341, %v8249
    %v10374 = vadd.f32 %v10342, %v8353
    %v10375 = vadd.f32 %v10343, %v8457
    %v10376 = vadd.f32 %v10344, %v8561
    %v10377 = vadd.f32 %v10345, %v8665
    %v10378 = vadd.f32 %v10346, %v8769
    %v10379 = vadd.f32 %v10347, %v8873
    %v10380 = vadd.f32 %v10348, %v8977
    %v10381 = vadd.f32 %v10349, %v9081
    %v10382 = vadd.f32 %v10350, %v9185
    %v10383 = vadd.f32 %v10351, %v9289
    %v10384 = vadd.f32 %v10352, %v9393
    %v10385 = vadd.f32 %v10353, %v9497
    %v10386 = vadd.f32 %v10354, %v9601
    %v10387 = vadd.f32 %v10355, %v9705
    %v10388 = vadd.f32 %v10356, %v9809
    %v10389 = vadd.f32 %v10357, %v9913
    %v10390 = vadd.f32 %v10358, %v10017
    %v10391 = vadd.f32 %v10359, %v10121
    %v10392 = vadd.f32 %v10360, %v10225
    %v10393 = vadd.f32 %v10361, %v10329
    %v10394 = vmul.f32 %v10362, 0.33333334
    %v10395 = vmul.f32 %v10363, 0.33333334
    %v10396 = vmul.f32 %v10364, 0.33333334
    %v10397 = vmul.f32 %v10365, 0.33333334
    %v10398 = vmul.f32 %v10366, 0.33333334
    %v10399 = vmul.f32 %v10367, 0.33333334
    %v10400 = vmul.f32 %v10368, 0.33333334
    %v10401 = vmul.f32 %v10369, 0.33333334
    %v10402 = vmul.f32 %v10370, 0.33333334
    %v10403 = vmul.f32 %v10371, 0.33333334
    %v10404 = vmul.f32 %v10372, 0.33333334
    %v10405 = vmul.f32 %v10373, 0.33333334
    %v10406 = vmul.f32 %v10374, 0.33333334
    %v10407 = vmul.f32 %v10375, 0.33333334
    %v10408 = vmul.f32 %v10376, 0.33333334
    %v10409 = vmul.f32 %v10377, 0.33333334
    %v10410 = vmul.f32 %v10378, 0.33333334
    %v10411 = vmul.f32 %v10379, 0.33333334
    %v10412 = vmul.f32 %v10380, 0.33333334
    %v10413 = vmul.f32 %v10381, 0.33333334
    %v10414 = vmul.f32 %v10382, 0.33333334
    %v10415 = vmul.f32 %v10383, 0.33333334
    %v10416 = vmul.f32 %v10384, 0.33333334
    %v10417 = vmul.f32 %v10385, 0.33333334
    %v10418 = vmul.f32 %v10386, 0.33333334
    %v10419 = vmul.f32 %v10387, 0.33333334
    %v10420 = vmul.f32 %v10388, 0.33333334
    %v10421 = vmul.f32 %v10389, 0.33333334
    %v10422 = vmul.f32 %v10390, 0.33333334
    %v10423 = vmul.f32 %v10391, 0.33333334
    %v10424 = vmul.f32 %v10392, 0.33333334
    %v10425 = vmul.f32 %v10393, 0.33333334
    %10426 = vst [vmem:[#allocation2] sm:$0xff] %v10394
    %10427 = vst [vmem:[#allocation2 + $0x8] sm:$0xff] %v10395
    %10428 = vst [vmem:[#allocation2 + $0x10] sm:$0xff] %v10396
    %10429 = vst [vmem:[#allocation2 + $0x18] sm:$0xff] %v10397
    %10430 = vst [vmem:[#allocation2 + $0x20] sm:$0xff] %v10398
    %10431 = vst [vmem:[#allocation2 + $0x28] sm:$0xff] %v10399
    %10432 = vst [vmem:[#allocation2 + $0x30] sm:$0xff] %v10400
    %10433 = vst [vmem:[#allocation2 + $0x38] sm:$0xff] %v10401
    %10434 = vst [vmem:[#allocation2 + $0x40] sm:$0xff] %v10402
    %10435 = vst [vmem:[#allocation2 + $0x48] sm:$0xff] %v10403
    %10436 = vst [vmem:[#allocation2 + $0x50] sm:$0xff] %v10404
    %10437 = vst [vmem:[#allocation2 + $0x58] sm:$0xff] %v10405
    %10438 = vst [vmem:[#allocation2 + $0x60] sm:$0xff] %v10406
    %10439 = vst [vmem:[#allocation2 + $0x68] sm:$0xff] %v10407
    %10440 = vst [vmem:[#allocation2 + $0x70] sm:$0xff] %v10408
    %10441 = vst [vmem:[#allocation2 + $0x78] sm:$0xff] %v10409
    %10442 = vst [vmem:[#allocation2 + $0x80] sm:$0xff] %v10410
    %10443 = vst [vmem:[#allocation2 + $0x88] sm:$0xff] %v10411
    %10444 = vst [vmem:[#allocation2 + $0x90] sm:$0xff] %v10412
    %10445 = vst [vmem:[#allocation2 + $0x98] sm:$0xff] %v10413
    %10446 = vst [vmem:[#allocation2 + $0xa0] sm:$0xff] %v10414
    %10447 = vst [vmem:[#allocation2 + $0xa8] sm:$0xff] %v10415
    %10448 = vst [vmem:[#allocation2 + $0xb0] sm:$0xff] %v10416
    %10449 = vst [vmem:[#allocation2 + $0xb8] sm:$0xff] %v10417
    %10450 = vst [vmem:[#allocation2 + $0xc0] sm:$0xff] %v10418
    %10451 = vst [vmem:[#allocation2 + $0xc8] sm:$0xff] %v10419
    %10452 = vst [vmem:[#allocation2 + $0xd0] sm:$0xff] %v10420
    %10453 = vst [vmem:[#allocation2 + $0xd8] sm:$0xff] %v10421
    %10454 = vst [vmem:[#allocation2 + $0xe0] sm:$0xff] %v10422
    %10455 = vst [vmem:[#allocation2 + $0xe8] sm:$0xff] %v10423
    %10456 = vst [vmem:[#allocation2 + $0xf0] sm:$0xff] %v10424
    %10457 = vst [vmem:[#allocation2 + $0xf8] sm:$0xff] %v10425
    // Predicated region
    $region10: #{tpu_custom_call.1} parent=1 // pred_check
      _
    $region11: #{tpu_custom_call.1} parent=1 // pred_check_branch
      %10459 = sbr.rel (0) target = $region13
    $region12: #{tpu_custom_call.1} parent=1 // pred_region
      %s10461 = ssub.s32 4096, 4096
      %10462 = vsyncadd [#allocation3], %s10461
      %s10463 = sshll.u32 [#allocation2], 4
      %s10464 = int_to_ptr.vmem [resolvable:$true] %s10463
      %10469 = dma.vmem_to_hbm [thread:$0]  %s10464, 4096, %s2, [#allocation3], 1024, 1024, 64
    $region13: #{tpu_custom_call.1} parent=1 // pred_fallthru
      _
    // Predicated region
    $region14: #{tpu_custom_call.1} parent=1 // pred_check
      _
    $region15: #{tpu_custom_call.1} parent=1 // pred_check_branch
      %10471 = sbr.rel (0) target = $region17
    $region16: #{tpu_custom_call.1} parent=1 // pred_region
      %10472 = dma.done [#allocation3], 4096
    $region17: #{tpu_custom_call.1} parent=1 // pred_fallthru
      _
    %10473 = vsyncpa [#allocation3], 1

</llo_original>
